<compile_context>
chip_gen: v7x
topology: tpu7x:2x2x1
jax: 0.10.0
libtpu: 0.0.40
codegen_flags: <defaults>
</compile_context>

<pallas_src>
import functools
import math

import jax
import jax.numpy as jnp
from jax.experimental import pallas as pl
from jax.experimental.pallas import tpu as pltpu


# ----------------------------------------------------------------------------
# Fused forward kernel: Bank -> in_layer -> 3 SpeakerEncoderBlocks -> GAP ->
# 2 Connection blocks.  One grid step per batch sample; tile layout (T, C).
# ----------------------------------------------------------------------------
def speaker_encoder_kernel(x_ref, w_bank_ref, b_bank_ref, w_in_a_ref, w_in_b_ref,
                           b_in_ref, w3_ref, w4_ref, b_blk_ref, w_conn_ref,
                           b_conn_ref, o_ref, pad_ref, *, dim, base, T, mxu_dtype):
    f32 = jnp.float32

    def cast(a):
        return a.astype(mxu_dtype)

    def conv_s1_relu(h, K, C_in, w_tap, b_row, Tb):
        """'same'-padded stride-1 conv + bias + ReLU as K shifted-window matmuls.

        The f32 input tile is written ONCE into the zero-haloed pad scratch
        (only the 2*P fringe rows are zeroed, not the whole buffer); tap k is a
        contiguous row-shifted load feeding one MXU matmul with contraction
        C_in, accumulated in f32 vregs.  w_tap(k): (C_in, C_out) in mxu_dtype.
        """
        P = (K - 1) // 2
        zeros = jnp.zeros((P, C_in), f32)
        pad_ref[0:P, 0:C_in] = zeros                        # left halo only
        pad_ref[P + Tb:2 * P + Tb, 0:C_in] = zeros          # right halo only
        pad_ref[P:P + Tb, 0:C_in] = h                       # single store of the tile
        acc = jnp.dot(cast(pad_ref[0:Tb, 0:C_in]), w_tap(0),
                      preferred_element_type=f32)
        for k in range(1, K):
            acc = acc + jnp.dot(cast(pad_ref[k:k + Tb, 0:C_in]), w_tap(k),
                                preferred_element_type=f32)
        return jnp.maximum(acc + b_row, 0.0)

    def conv_s2_relu(y, bi, b_row, Tb):
        """kernel=4 / stride=2 / pad=1 conv + bias + ReLU -> (Tb//2, base).

        The stride-2 tap gather is 4 strided ref loads (O(T*C)), replacing the
        old O(T^2*C) selection-matrix matmuls.  Row r of the pad scratch holds
        y[r-1] with zero rows at r=0 and r=Tb+1, so tap j for output t reads
        row 2t+j  ==  y[2t + j - 1]  (exactly Conv1d(4, 2, padding=1)).
        """
        To = Tb // 2
        zrow = jnp.zeros((1, base), f32)
        pad_ref[0:1, 0:base] = zrow
        pad_ref[Tb + 1:Tb + 2, 0:base] = zrow
        pad_ref[1:Tb + 1, 0:base] = y
        acc = jnp.dot(cast(pad_ref[pl.ds(0, To, stride=2), 0:base]),
                      w4_ref[bi, 0], preferred_element_type=f32)
        for j in range(1, 4):
            acc = acc + jnp.dot(cast(pad_ref[pl.ds(j, To, stride=2), 0:base]),
                                w4_ref[bi, j], preferred_element_type=f32)
        return jnp.maximum(acc + b_row, 0.0)

    def avg_pool2(x0, Tb):
        """AvgPool1d(2, 2): even/odd strided loads, exact f32 (residual path)."""
        To = Tb // 2
        pad_ref[0:Tb, 0:base] = x0
        even = pad_ref[pl.ds(0, To, stride=2), 0:base]      # x0[2t]
        odd = pad_ref[pl.ds(1, To, stride=2), 0:base]       # x0[2t+1]
        return 0.5 * (even + odd)

    x = x_ref[0]                                            # (T, dim) f32

    # --- Bank: 4 convs (k=3,5,7,9) zero-embedded into one fused k=9 tap set.
    h_bank = conv_s1_relu(x, 9, dim, lambda k: w_bank_ref[k],
                          b_bank_ref[...], T)               # (T, 4*base)

    # --- in_layer: 1x1 conv over concat([bank outputs, x]) (split; no concat).
    h = jnp.maximum(
        jnp.dot(cast(h_bank), w_in_a_ref[...], preferred_element_type=f32)
        + jnp.dot(cast(x), w_in_b_ref[...], preferred_element_type=f32)
        + b_in_ref[...], 0.0)                               # (T, base)

    # --- 3 SpeakerEncoderBlocks (residual-after-ReLU, as in the module).
    Tb = T
    for bi in range(3):
        x0 = h
        pool = avg_pool2(x0, Tb)                            # value; pad reused after
        y = conv_s1_relu(h, 3, base, lambda k, j=3 * bi + 0: w3_ref[j, k],
                         b_blk_ref[4 * bi + 0:4 * bi + 1, :], Tb)
        h = conv_s1_relu(y, 3, base, lambda k, j=3 * bi + 1: w3_ref[j, k],
                         b_blk_ref[4 * bi + 1:4 * bi + 2, :], Tb) + x0
        y = conv_s1_relu(h, 3, base, lambda k, j=3 * bi + 2: w3_ref[j, k],
                         b_blk_ref[4 * bi + 2:4 * bi + 3, :], Tb)
        h = conv_s2_relu(y, bi, b_blk_ref[4 * bi + 3:4 * bi + 4, :], Tb) + pool
        Tb //= 2

    # --- Global average pool over time + 2 Connection blocks.
    g = jnp.mean(h, axis=0, keepdims=True)                  # (1, base) f32
    for ci in range(2):
        w1_t, w2_t = w_conn_ref[2 * ci + 0], w_conn_ref[2 * ci + 1]
        b1 = b_conn_ref[2 * ci + 0:2 * ci + 1, :]
        b2 = b_conn_ref[2 * ci + 1:2 * ci + 2, :]
        z = jnp.maximum(jnp.dot(cast(g), w1_t, preferred_element_type=f32) + b1, 0.0)
        z = jnp.maximum(jnp.dot(cast(z), w2_t, preferred_element_type=f32) + b2, 0.0)
        g = z + g
    o_ref[0] = g.astype(o_ref.dtype)                        # (1, base)


# ----------------------------------------------------------------------------
# One-time parameter repack: per-tap (K, C_in, C_out) MXU operands, fused bank,
# pre-transposed Linear weights, packed biases, optional bf16 cast.
# ----------------------------------------------------------------------------
def prepare_params(p, dim, base, mxu_dtype=jnp.float32):
    def tap_t(w):
        # torch (C_out, C_in, K) -> (K, C_in, C_out): one MXU operand per tap.
        return jnp.transpose(w, (2, 1, 0))

    # Bank: zero-embed k=3/5/7/9 into a symmetric k=9 window, stack out-channels.
    taps = []
    for i, K in enumerate((3, 5, 7, 9)):
        off = (9 - K) // 2
        w9 = jnp.pad(p[f'bank{i}_w'], ((0, 0), (0, 0), (off, 9 - K - off)))
        taps.append(tap_t(w9))                               # (9, dim, base)
    w_bank = jnp.concatenate(taps, axis=2)                   # (9, dim, 4*base)
    b_bank = jnp.concatenate([p[f'bank{i}_b'] for i in range(4)]).reshape(1, 4 * base)

    # in_layer 1x1 conv, split into bank-part and identity-part (no concat needed).
    w_in = p['in_w'][:, :, 0]                                # (base, 8*base)
    w_in_a = w_in[:, :4 * base].T                            # (4*base, base)
    w_in_b = w_in[:, 4 * base:].T                            # (dim,   base)
    b_in = p['in_b'].reshape(1, base)

    w3 = jnp.stack([tap_t(p['blocks'][bi][f'{n}_w'])
                    for bi in range(3) for n in ('c0_0', 'c0_1', 'c1_0')])  # (9,3,base,base)
    w4 = jnp.stack([tap_t(p['blocks'][bi]['c1_1_w'])
                    for bi in range(3)])                                    # (3,4,base,base)
    b_blk = jnp.stack([p['blocks'][bi][f'{n}_b']
                       for bi in range(3)
                       for n in ('c0_0', 'c0_1', 'c1_0', 'c1_1')])          # (12, base)

    w_conn = jnp.stack([p['conn'][ci][k].T for ci in range(2) for k in ('w1', 'w2')])
    b_conn = jnp.stack([p['conn'][ci][k] for ci in range(2) for k in ('b1', 'b2')])

    cast = lambda a: a.astype(mxu_dtype)
    return dict(w_bank=cast(w_bank), b_bank=b_bank,
                w_in_a=cast(w_in_a), w_in_b=cast(w_in_b), b_in=b_in,
                w3=cast(w3), w4=cast(w4), b_blk=b_blk,
                w_conn=cast(w_conn), b_conn=b_conn)


# ----------------------------------------------------------------------------
# Forward wrapper: one pallas_call, grid over batch.
# ----------------------------------------------------------------------------
def speaker_encoder_forward(prep, x, *, dim, base, mxu_dtype=jnp.float32):
    N, dim_, T = x.shape
    assert dim_ == dim == 4 * base, "in_layer requires dim == 4*base"
    assert T % 8 == 0, "three stride-2 stages need T to be a multiple of 8"

    x_t = jnp.transpose(x, (0, 2, 1))                        # NCW -> NWC (once)
    kern = functools.partial(speaker_encoder_kernel,
                             dim=dim, base=base, T=T, mxu_dtype=mxu_dtype)

    def wspec(shape):
        # Constant-index weight blocks: the pipeliner DMAs them once (index map
        # never changes across the batch grid).
        return pl.BlockSpec(shape, lambda n: (0,) * len(shape))

    out = pl.pallas_call(
        kern,
        out_shape=jax.ShapeDtypeStruct((N, 1, base), jnp.float32),
        grid=(N,),
        in_specs=[
            pl.BlockSpec((1, T, dim), lambda n: (n, 0, 0)),  # x (per sample)
            wspec((9, dim, 4 * base)), wspec((1, 4 * base)),            # fused bank
            wspec((4 * base, base)), wspec((dim, base)), wspec((1, base)),  # in_layer
            wspec((9, 3, base, base)), wspec((3, 4, base, base)),       # block convs
            wspec((12, base)),                                          # block biases
            wspec((4, base, base)), wspec((4, base)),                   # connections
        ],
        out_specs=pl.BlockSpec((1, 1, base), lambda n: (n, 0, 0)),
        # Single small zero-haloed pad scratch shared by every conv/pool stage
        # (replaces the old (T, 9*dim) f32 im2col buffer).
        scratch_shapes=[pltpu.VMEM((T + 8, dim), jnp.float32)],
        compiler_params=pltpu.CompilerParams(
            dimension_semantics=("parallel",),
            vmem_limit_bytes=48 * 1024 * 1024),
    )(x_t, prep['w_bank'], prep['b_bank'], prep['w_in_a'], prep['w_in_b'],
      prep['b_in'], prep['w3'], prep['w4'], prep['b_blk'],
      prep['w_conn'], prep['b_conn'])
    return out[:, 0, :]


# ----------------------------------------------------------------------------
# Pure-JAX reference (optionally with the same bf16-operand / f32-accum scheme).
# ----------------------------------------------------------------------------
def speaker_encoder_ref(p, x, mxu_dtype=jnp.float32):
    def conv(x, w, b, stride, padding):
        y = jax.lax.conv_general_dilated(
            x.astype(mxu_dtype), w.astype(mxu_dtype),
            window_strides=(stride,), padding=[(padding, padding)],
            dimension_numbers=('NCH', 'OIH', 'NCH'),
            preferred_element_type=jnp.float32)
        return jnp.maximum(y + b[None, :, None], 0.0)

    hs = [conv(x, p[f'bank{i}_w'], p[f'bank{i}_b'], 1, (K - 1) // 2)
          for i, K in enumerate((3, 5, 7, 9))]
    hs.append(x)
    h = jnp.concatenate(hs, axis=1)
    h = conv(h, p['in_w'], p['in_b'], 1, 0)
    for bi in range(3):
        bp = p['blocks'][bi]
        x0 = h
        h = conv(h, bp['c0_0_w'], bp['c0_0_b'], 1, 1)
        h = conv(h, bp['c0_1_w'], bp['c0_1_b'], 1, 1) + x0
        h = conv(h, bp['c1_0_w'], bp['c1_0_b'], 1, 1)
        pool = 0.5 * (x0[:, :, 0::2] + x0[:, :, 1::2])
        h = conv(h, bp['c1_1_w'], bp['c1_1_b'], 2, 1) + pool
    g = jnp.mean(h, axis=-1)
    for ci in range(2):
        cp = p['conn'][ci]
        y = jnp.maximum(jnp.dot(g.astype(mxu_dtype), cp['w1'].T.astype(mxu_dtype),
                                preferred_element_type=jnp.float32) + cp['b1'], 0.0)
        y = jnp.maximum(jnp.dot(y.astype(mxu_dtype), cp['w2'].T.astype(mxu_dtype),
                                preferred_element_type=jnp.float32) + cp['b2'], 0.0)
        g = y + g
    return g


# ----------------------------------------------------------------------------
# Deterministic parameter init (same shapes as the nn.Module __init__).
# ----------------------------------------------------------------------------
def init_params(key, dim, base):
    keys = iter(jax.random.split(key, 64))

    def u(shape, fan_in):
        bound = 1.0 / math.sqrt(fan_in)
        return jax.random.uniform(next(keys), shape, jnp.float32, -bound, bound)

    p = {}
    for i, K in enumerate((3, 5, 7, 9)):                     # Bank
        p[f'bank{i}_w'] = u((base, dim, K), dim * K)
        p[f'bank{i}_b'] = u((base,), dim * K)
    p['in_w'] = u((base, 8 * base, 1), 8 * base)             # in_layer
    p['in_b'] = u((base,), 8 * base)
    blocks = []
    for _ in range(3):                                       # SpeakerEncoderBlocks
        bp = {}
        for name, K in (('c0_0', 3), ('c0_1', 3), ('c1_0', 3), ('c1_1', 4)):
            bp[f'{name}_w'] = u((base, base, K), base * K)
            bp[f'{name}_b'] = u((base,), base * K)
        blocks.append(bp)
    p['blocks'] = blocks
    conns = []
    for _ in range(2):                                       # Connection x2
        conns.append({'w1': u((base, base), base), 'b1': u((base,), base),
                      'w2': u((base, base), base), 'b2': u((base,), base)})
    p['conn'] = conns
    return p


# ----------------------------------------------------------------------------
if __name__ == "__main__":
    # Shapes consistent with the module: in_layer expects 8*base channels after
    # the Bank concat, which forces dim == 4*base.  (Dropout p=0.0 is identity.)
    N, base = 2, 16
    dim, T = 4 * base, 16                                    # x: (N, dim, T)

    key = jax.random.PRNGKey(0)
    kx, kp = jax.random.split(key)
    x = jax.random.normal(kx, (N, dim, T), jnp.float32)
    params = init_params(kp, dim, base)

    # ---- f32 MXU-operand path: tight check against the XLA reference.
    prep32 = prepare_params(params, dim, base, jnp.float32)
    fwd32 = jax.jit(functools.partial(speaker_encoder_forward,
                                      dim=dim, base=base, mxu_dtype=jnp.float32))
    out32 = jax.block_until_ready(fwd32(prep32, x))
    ref32 = speaker_encoder_ref(params, x, jnp.float32)
    assert out32.shape == (N, base), out32.shape
    err32 = float(jnp.max(jnp.abs(out32 - ref32)))
    assert err32 < 1e-3, f"f32 max abs error vs reference: {err32}"

    # ---- bf16 MXU-operand path (good on v5e/v6e/v7x): bf16 weights & matmul
    # operands, f32 accumulation, f32 bias/ReLU/residual/pool math.
    prep16 = prepare_params(params, dim, base, jnp.bfloat16)
    fwd16 = jax.jit(functools.partial(speaker_encoder_forward,
                                      dim=dim, base=base, mxu_dtype=jnp.bfloat16))
    out16 = jax.block_until_ready(fwd16(prep16, x))
    ref16 = speaker_encoder_ref(params, x, jnp.bfloat16)
    err16 = float(jnp.max(jnp.abs(out16 - ref16)))
    assert err16 < 5e-2, f"bf16 max abs error vs bf16 reference: {err16}"

    print("KERNEL_OK")
</pallas_src>

<mosaic_0001>
module attributes {stable_mosaic.version = 11 : i64} {
  func.func @speaker_encoder_kernel(%arg0: i32, %arg1: memref<1x16x64xf32, #tpu.memory_space<vmem>>, %arg2: memref<9x64x64xf32, #tpu.memory_space<vmem>>, %arg3: memref<1x64xf32, #tpu.memory_space<vmem>>, %arg4: memref<64x16xf32, #tpu.memory_space<vmem>>, %arg5: memref<64x16xf32, #tpu.memory_space<vmem>>, %arg6: memref<1x16xf32, #tpu.memory_space<vmem>>, %arg7: memref<9x3x16x16xf32, #tpu.memory_space<vmem>>, %arg8: memref<3x4x16x16xf32, #tpu.memory_space<vmem>>, %arg9: memref<12x16xf32, #tpu.memory_space<vmem>>, %arg10: memref<4x16x16xf32, #tpu.memory_space<vmem>>, %arg11: memref<4x16xf32, #tpu.memory_space<vmem>>, %arg12: memref<1x1x16xf32, #tpu.memory_space<vmem>>, %arg13: memref<24x64xf32, #tpu.memory_space<vmem>>) attributes {dimension_semantics = [#tpu.dimension_semantics<parallel>], iteration_bounds = array<i64: 2>, scalar_prefetch = 0 : i64, scratch_operands = 1 : i64, tpu.core_type = #tpu.core_type<tc>, window_params = [{transform_indices = @transform_0, window_bounds = array<i64: 1, 16, 64>}, {pipeline_mode = #tpu.pipeline_mode<synchronous>, transform_indices = @transform_1, window_bounds = array<i64: 9, 64, 64>}, {pipeline_mode = #tpu.pipeline_mode<synchronous>, transform_indices = @transform_2, window_bounds = array<i64: 1, 64>}, {pipeline_mode = #tpu.pipeline_mode<synchronous>, transform_indices = @transform_3, window_bounds = array<i64: 64, 16>}, {pipeline_mode = #tpu.pipeline_mode<synchronous>, transform_indices = @transform_4, window_bounds = array<i64: 64, 16>}, {pipeline_mode = #tpu.pipeline_mode<synchronous>, transform_indices = @transform_5, window_bounds = array<i64: 1, 16>}, {pipeline_mode = #tpu.pipeline_mode<synchronous>, transform_indices = @transform_6, window_bounds = array<i64: 9, 3, 16, 16>}, {pipeline_mode = #tpu.pipeline_mode<synchronous>, transform_indices = @transform_7, window_bounds = array<i64: 3, 4, 16, 16>}, {pipeline_mode = #tpu.pipeline_mode<synchronous>, transform_indices = @transform_8, window_bounds = array<i64: 12, 16>}, {pipeline_mode = #tpu.pipeline_mode<synchronous>, transform_indices = @transform_9, window_bounds = array<i64: 4, 16, 16>}, {pipeline_mode = #tpu.pipeline_mode<synchronous>, transform_indices = @transform_10, window_bounds = array<i64: 4, 16>}, {transform_indices = @transform_11, window_bounds = array<i64: 1, 1, 16>}]} {
    %c0 = arith.constant 0 : index
    %c0_0 = arith.constant 0 : index
    %c0_1 = arith.constant 0 : index
    %0 = vector.load %arg1[%c0, %c0_0, %c0_1] : memref<1x16x64xf32, #tpu.memory_space<vmem>>, vector<1x16x64xf32>
    %1 = vector.shape_cast %0 : vector<1x16x64xf32> to vector<16x64xf32>
    %c0_2 = arith.constant 0 : index
    %c0_3 = arith.constant 0 : index
    %2 = vector.load %arg3[%c0_2, %c0_3] : memref<1x64xf32, #tpu.memory_space<vmem>>, vector<1x64xf32>
    %cst = arith.constant 0.000000e+00 : f32
    %3 = vector.broadcast %cst : f32 to vector<4x64xf32>
    %c0_4 = arith.constant 0 : index
    %c0_5 = arith.constant 0 : index
    %4 = vector.load %arg13[%c0_4, %c0_5] : memref<24x64xf32, #tpu.memory_space<vmem>>, vector<4x64xf32>
    tpu.vector_store %arg13[%c0_4, %c0_5], %3 {strides = array<i32>} : memref<24x64xf32, #tpu.memory_space<vmem>>, vector<4x64xf32>,
    %c20 = arith.constant 20 : index
    %c0_6 = arith.constant 0 : index
    %5 = vector.load %arg13[%c20, %c0_6] : memref<24x64xf32, #tpu.memory_space<vmem>>, vector<4x64xf32>
    tpu.vector_store %arg13[%c20, %c0_6], %3 {strides = array<i32>} : memref<24x64xf32, #tpu.memory_space<vmem>>, vector<4x64xf32>,
    %c4 = arith.constant 4 : index
    %c0_7 = arith.constant 0 : index
    %6 = vector.load %arg13[%c4, %c0_7] : memref<24x64xf32, #tpu.memory_space<vmem>>, vector<16x64xf32>
    tpu.vector_store %arg13[%c4, %c0_7], %1 {strides = array<i32>} : memref<24x64xf32, #tpu.memory_space<vmem>>, vector<16x64xf32>,
    %c0_8 = arith.constant 0 : index
    %c0_9 = arith.constant 0 : index
    %7 = vector.load %arg13[%c0_8, %c0_9] : memref<24x64xf32, #tpu.memory_space<vmem>>, vector<16x64xf32>
    %c0_10 = arith.constant 0 : index
    %c0_11 = arith.constant 0 : index
    %c0_12 = arith.constant 0 : index
    %8 = vector.load %arg2[%c0_10, %c0_11, %c0_12] : memref<9x64x64xf32, #tpu.memory_space<vmem>>, vector<1x64x64xf32>
    %9 = vector.shape_cast %8 : vector<1x64x64xf32> to vector<64x64xf32>
    %cst_13 = arith.constant dense<0.000000e+00> : vector<16x64xf32>
    %10 = tpu.matmul %7, %9, %cst_13 {dimension_numbers = #tpu.dot_dimension_numbers<[1], [0], [0], [1], [0, 0, 1, 1], [], []>} : vector<16x64xf32>, vector<64x64xf32>, vector<16x64xf32> -> vector<16x64xf32>
    %c1 = arith.constant 1 : index
    %c0_14 = arith.constant 0 : index
    %11 = vector.load %arg13[%c1, %c0_14] : memref<24x64xf32, #tpu.memory_space<vmem>>, vector<16x64xf32>
    %c1_15 = arith.constant 1 : index
    %c0_16 = arith.constant 0 : index
    %c0_17 = arith.constant 0 : index
    %12 = vector.load %arg2[%c1_15, %c0_16, %c0_17] : memref<9x64x64xf32, #tpu.memory_space<vmem>>, vector<1x64x64xf32>
    %13 = vector.shape_cast %12 : vector<1x64x64xf32> to vector<64x64xf32>
    %cst_18 = arith.constant dense<0.000000e+00> : vector<16x64xf32>
    %14 = tpu.matmul %11, %13, %cst_18 {dimension_numbers = #tpu.dot_dimension_numbers<[1], [0], [0], [1], [0, 0, 1, 1], [], []>} : vector<16x64xf32>, vector<64x64xf32>, vector<16x64xf32> -> vector<16x64xf32>
    %15 = arith.addf %10, %14 : vector<16x64xf32>
    %c2 = arith.constant 2 : index
    %c0_19 = arith.constant 0 : index
    %16 = vector.load %arg13[%c2, %c0_19] : memref<24x64xf32, #tpu.memory_space<vmem>>, vector<16x64xf32>
    %c2_20 = arith.constant 2 : index
    %c0_21 = arith.constant 0 : index
    %c0_22 = arith.constant 0 : index
    %17 = vector.load %arg2[%c2_20, %c0_21, %c0_22] : memref<9x64x64xf32, #tpu.memory_space<vmem>>, vector<1x64x64xf32>
    %18 = vector.shape_cast %17 : vector<1x64x64xf32> to vector<64x64xf32>
    %cst_23 = arith.constant dense<0.000000e+00> : vector<16x64xf32>
    %19 = tpu.matmul %16, %18, %cst_23 {dimension_numbers = #tpu.dot_dimension_numbers<[1], [0], [0], [1], [0, 0, 1, 1], [], []>} : vector<16x64xf32>, vector<64x64xf32>, vector<16x64xf32> -> vector<16x64xf32>
    %20 = arith.addf %15, %19 : vector<16x64xf32>
    %c3 = arith.constant 3 : index
    %c0_24 = arith.constant 0 : index
    %21 = vector.load %arg13[%c3, %c0_24] : memref<24x64xf32, #tpu.memory_space<vmem>>, vector<16x64xf32>
    %c3_25 = arith.constant 3 : index
    %c0_26 = arith.constant 0 : index
    %c0_27 = arith.constant 0 : index
    %22 = vector.load %arg2[%c3_25, %c0_26, %c0_27] : memref<9x64x64xf32, #tpu.memory_space<vmem>>, vector<1x64x64xf32>
    %23 = vector.shape_cast %22 : vector<1x64x64xf32> to vector<64x64xf32>
    %cst_28 = arith.constant dense<0.000000e+00> : vector<16x64xf32>
    %24 = tpu.matmul %21, %23, %cst_28 {dimension_numbers = #tpu.dot_dimension_numbers<[1], [0], [0], [1], [0, 0, 1, 1], [], []>} : vector<16x64xf32>, vector<64x64xf32>, vector<16x64xf32> -> vector<16x64xf32>
    %25 = arith.addf %20, %24 : vector<16x64xf32>
    %c4_29 = arith.constant 4 : index
    %c0_30 = arith.constant 0 : index
    %26 = vector.load %arg13[%c4_29, %c0_30] : memref<24x64xf32, #tpu.memory_space<vmem>>, vector<16x64xf32>
    %c4_31 = arith.constant 4 : index
    %c0_32 = arith.constant 0 : index
    %c0_33 = arith.constant 0 : index
    %27 = vector.load %arg2[%c4_31, %c0_32, %c0_33] : memref<9x64x64xf32, #tpu.memory_space<vmem>>, vector<1x64x64xf32>
    %28 = vector.shape_cast %27 : vector<1x64x64xf32> to vector<64x64xf32>
    %cst_34 = arith.constant dense<0.000000e+00> : vector<16x64xf32>
    %29 = tpu.matmul %26, %28, %cst_34 {dimension_numbers = #tpu.dot_dimension_numbers<[1], [0], [0], [1], [0, 0, 1, 1], [], []>} : vector<16x64xf32>, vector<64x64xf32>, vector<16x64xf32> -> vector<16x64xf32>
    %30 = arith.addf %25, %29 : vector<16x64xf32>
    %c5 = arith.constant 5 : index
    %c0_35 = arith.constant 0 : index
    %31 = vector.load %arg13[%c5, %c0_35] : memref<24x64xf32, #tpu.memory_space<vmem>>, vector<16x64xf32>
    %c5_36 = arith.constant 5 : index
    %c0_37 = arith.constant 0 : index
    %c0_38 = arith.constant 0 : index
    %32 = vector.load %arg2[%c5_36, %c0_37, %c0_38] : memref<9x64x64xf32, #tpu.memory_space<vmem>>, vector<1x64x64xf32>
    %33 = vector.shape_cast %32 : vector<1x64x64xf32> to vector<64x64xf32>
    %cst_39 = arith.constant dense<0.000000e+00> : vector<16x64xf32>
    %34 = tpu.matmul %31, %33, %cst_39 {dimension_numbers = #tpu.dot_dimension_numbers<[1], [0], [0], [1], [0, 0, 1, 1], [], []>} : vector<16x64xf32>, vector<64x64xf32>, vector<16x64xf32> -> vector<16x64xf32>
    %35 = arith.addf %30, %34 : vector<16x64xf32>
    %c6 = arith.constant 6 : index
    %c0_40 = arith.constant 0 : index
    %36 = vector.load %arg13[%c6, %c0_40] : memref<24x64xf32, #tpu.memory_space<vmem>>, vector<16x64xf32>
    %c6_41 = arith.constant 6 : index
    %c0_42 = arith.constant 0 : index
    %c0_43 = arith.constant 0 : index
    %37 = vector.load %arg2[%c6_41, %c0_42, %c0_43] : memref<9x64x64xf32, #tpu.memory_space<vmem>>, vector<1x64x64xf32>
    %38 = vector.shape_cast %37 : vector<1x64x64xf32> to vector<64x64xf32>
    %cst_44 = arith.constant dense<0.000000e+00> : vector<16x64xf32>
    %39 = tpu.matmul %36, %38, %cst_44 {dimension_numbers = #tpu.dot_dimension_numbers<[1], [0], [0], [1], [0, 0, 1, 1], [], []>} : vector<16x64xf32>, vector<64x64xf32>, vector<16x64xf32> -> vector<16x64xf32>
    %40 = arith.addf %35, %39 : vector<16x64xf32>
    %c7 = arith.constant 7 : index
    %c0_45 = arith.constant 0 : index
    %41 = vector.load %arg13[%c7, %c0_45] : memref<24x64xf32, #tpu.memory_space<vmem>>, vector<16x64xf32>
    %c7_46 = arith.constant 7 : index
    %c0_47 = arith.constant 0 : index
    %c0_48 = arith.constant 0 : index
    %42 = vector.load %arg2[%c7_46, %c0_47, %c0_48] : memref<9x64x64xf32, #tpu.memory_space<vmem>>, vector<1x64x64xf32>
    %43 = vector.shape_cast %42 : vector<1x64x64xf32> to vector<64x64xf32>
    %cst_49 = arith.constant dense<0.000000e+00> : vector<16x64xf32>
    %44 = tpu.matmul %41, %43, %cst_49 {dimension_numbers = #tpu.dot_dimension_numbers<[1], [0], [0], [1], [0, 0, 1, 1], [], []>} : vector<16x64xf32>, vector<64x64xf32>, vector<16x64xf32> -> vector<16x64xf32>
    %45 = arith.addf %40, %44 : vector<16x64xf32>
    %c8 = arith.constant 8 : index
    %c0_50 = arith.constant 0 : index
    %46 = vector.load %arg13[%c8, %c0_50] : memref<24x64xf32, #tpu.memory_space<vmem>>, vector<16x64xf32>
    %c8_51 = arith.constant 8 : index
    %c0_52 = arith.constant 0 : index
    %c0_53 = arith.constant 0 : index
    %47 = vector.load %arg2[%c8_51, %c0_52, %c0_53] : memref<9x64x64xf32, #tpu.memory_space<vmem>>, vector<1x64x64xf32>
    %48 = vector.shape_cast %47 : vector<1x64x64xf32> to vector<64x64xf32>
    %cst_54 = arith.constant dense<0.000000e+00> : vector<16x64xf32>
    %49 = tpu.matmul %46, %48, %cst_54 {dimension_numbers = #tpu.dot_dimension_numbers<[1], [0], [0], [1], [0, 0, 1, 1], [], []>} : vector<16x64xf32>, vector<64x64xf32>, vector<16x64xf32> -> vector<16x64xf32>
    %50 = arith.addf %45, %49 : vector<16x64xf32>
    %51 = vector.broadcast %2 : vector<1x64xf32> to vector<16x64xf32>
    %52 = arith.addf %50, %51 : vector<16x64xf32>
    %cst_55 = arith.constant 0.000000e+00 : f32
    %53 = vector.broadcast %cst_55 : f32 to vector<16x64xf32>
    %54 = arith.maximumf %52, %53 : vector<16x64xf32>
    %c0_56 = arith.constant 0 : index
    %c0_57 = arith.constant 0 : index
    %55 = vector.load %arg4[%c0_56, %c0_57] : memref<64x16xf32, #tpu.memory_space<vmem>>, vector<64x16xf32>
    %cst_58 = arith.constant dense<0.000000e+00> : vector<16x16xf32>
    %56 = tpu.matmul %54, %55, %cst_58 {dimension_numbers = #tpu.dot_dimension_numbers<[1], [0], [0], [1], [0, 0, 1, 1], [], []>} : vector<16x64xf32>, vector<64x16xf32>, vector<16x16xf32> -> vector<16x16xf32>
    %c0_59 = arith.constant 0 : index
    %c0_60 = arith.constant 0 : index
    %57 = vector.load %arg5[%c0_59, %c0_60] : memref<64x16xf32, #tpu.memory_space<vmem>>, vector<64x16xf32>
    %cst_61 = arith.constant dense<0.000000e+00> : vector<16x16xf32>
    %58 = tpu.matmul %1, %57, %cst_61 {dimension_numbers = #tpu.dot_dimension_numbers<[1], [0], [0], [1], [0, 0, 1, 1], [], []>} : vector<16x64xf32>, vector<64x16xf32>, vector<16x16xf32> -> vector<16x16xf32>
    %59 = arith.addf %56, %58 : vector<16x16xf32>
    %c0_62 = arith.constant 0 : index
    %c0_63 = arith.constant 0 : index
    %60 = vector.load %arg6[%c0_62, %c0_63] : memref<1x16xf32, #tpu.memory_space<vmem>>, vector<1x16xf32>
    %61 = vector.broadcast %60 : vector<1x16xf32> to vector<16x16xf32>
    %62 = arith.addf %59, %61 : vector<16x16xf32>
    %cst_64 = arith.constant 0.000000e+00 : f32
    %63 = vector.broadcast %cst_64 : f32 to vector<16x16xf32>
    %64 = arith.maximumf %62, %63 : vector<16x16xf32>
    %c0_65 = arith.constant 0 : index
    %c0_66 = arith.constant 0 : index
    %65 = vector.load %arg13[%c0_65, %c0_66] : memref<24x64xf32, #tpu.memory_space<vmem>>, vector<16x16xf32>
    tpu.vector_store %arg13[%c0_65, %c0_66], %64 {strides = array<i32>} : memref<24x64xf32, #tpu.memory_space<vmem>>, vector<16x16xf32>,
    %c0_67 = arith.constant 0 : index
    %c0_68 = arith.constant 0 : index
    %66 = tpu.strided_load %arg13[%c0_67, %c0_68] {strides = array<i32: 2, 1>} : memref<24x64xf32, #tpu.memory_space<vmem>>, vector<8x16xf32>
    %c1_69 = arith.constant 1 : index
    %c0_70 = arith.constant 0 : index
    %67 = tpu.strided_load %arg13[%c1_69, %c0_70] {strides = array<i32: 2, 1>} : memref<24x64xf32, #tpu.memory_space<vmem>>, vector<8x16xf32>
    %68 = arith.addf %66, %67 : vector<8x16xf32>
    %cst_71 = arith.constant 5.000000e-01 : f32
    %69 = vector.broadcast %cst_71 : f32 to vector<8x16xf32>
    %70 = arith.mulf %69, %68 : vector<8x16xf32>
    %c0_72 = arith.constant 0 : index
    %c0_73 = arith.constant 0 : index
    %71 = vector.load %arg9[%c0_72, %c0_73] : memref<12x16xf32, #tpu.memory_space<vmem>>, vector<1x16xf32>
    %cst_74 = arith.constant 0.000000e+00 : f32
    %72 = vector.broadcast %cst_74 : f32 to vector<1x16xf32>
    %c0_75 = arith.constant 0 : index
    %c0_76 = arith.constant 0 : index
    %73 = vector.load %arg13[%c0_75, %c0_76] : memref<24x64xf32, #tpu.memory_space<vmem>>, vector<1x16xf32>
    tpu.vector_store %arg13[%c0_75, %c0_76], %72 {strides = array<i32>} : memref<24x64xf32, #tpu.memory_space<vmem>>, vector<1x16xf32>,
    %c17 = arith.constant 17 : index
    %c0_77 = arith.constant 0 : index
    %74 = vector.load %arg13[%c17, %c0_77] : memref<24x64xf32, #tpu.memory_space<vmem>>, vector<1x16xf32>
    tpu.vector_store %arg13[%c17, %c0_77], %72 {strides = array<i32>} : memref<24x64xf32, #tpu.memory_space<vmem>>, vector<1x16xf32>,
    %c1_78 = arith.constant 1 : index
    %c0_79 = arith.constant 0 : index
    %75 = vector.load %arg13[%c1_78, %c0_79] : memref<24x64xf32, #tpu.memory_space<vmem>>, vector<16x16xf32>
    tpu.vector_store %arg13[%c1_78, %c0_79], %64 {strides = array<i32>} : memref<24x64xf32, #tpu.memory_space<vmem>>, vector<16x16xf32>,
    %c0_80 = arith.constant 0 : index
    %c0_81 = arith.constant 0 : index
    %76 = vector.load %arg13[%c0_80, %c0_81] : memref<24x64xf32, #tpu.memory_space<vmem>>, vector<16x16xf32>
    %c0_82 = arith.constant 0 : index
    %c0_83 = arith.constant 0 : index
    %c0_84 = arith.constant 0 : index
    %c0_85 = arith.constant 0 : index
    %77 = vector.load %arg7[%c0_82, %c0_83, %c0_84, %c0_85] : memref<9x3x16x16xf32, #tpu.memory_space<vmem>>, vector<1x1x16x16xf32>
    %78 = vector.shape_cast %77 : vector<1x1x16x16xf32> to vector<16x16xf32>
    %cst_86 = arith.constant dense<0.000000e+00> : vector<16x16xf32>
    %79 = tpu.matmul %76, %78, %cst_86 {dimension_numbers = #tpu.dot_dimension_numbers<[1], [0], [0], [1], [0, 0, 1, 1], [], []>} : vector<16x16xf32>, vector<16x16xf32>, vector<16x16xf32> -> vector<16x16xf32>
    %c1_87 = arith.constant 1 : index
    %c0_88 = arith.constant 0 : index
    %80 = vector.load %arg13[%c1_87, %c0_88] : memref<24x64xf32, #tpu.memory_space<vmem>>, vector<16x16xf32>
    %c0_89 = arith.constant 0 : index
    %c1_90 = arith.constant 1 : index
    %c0_91 = arith.constant 0 : index
    %c0_92 = arith.constant 0 : index
    %81 = vector.load %arg7[%c0_89, %c1_90, %c0_91, %c0_92] : memref<9x3x16x16xf32, #tpu.memory_space<vmem>>, vector<1x1x16x16xf32>
    %82 = vector.shape_cast %81 : vector<1x1x16x16xf32> to vector<16x16xf32>
    %cst_93 = arith.constant dense<0.000000e+00> : vector<16x16xf32>
    %83 = tpu.matmul %80, %82, %cst_93 {dimension_numbers = #tpu.dot_dimension_numbers<[1], [0], [0], [1], [0, 0, 1, 1], [], []>} : vector<16x16xf32>, vector<16x16xf32>, vector<16x16xf32> -> vector<16x16xf32>
    %84 = arith.addf %79, %83 : vector<16x16xf32>
    %c2_94 = arith.constant 2 : index
    %c0_95 = arith.constant 0 : index
    %85 = vector.load %arg13[%c2_94, %c0_95] : memref<24x64xf32, #tpu.memory_space<vmem>>, vector<16x16xf32>
    %c0_96 = arith.constant 0 : index
    %c2_97 = arith.constant 2 : index
    %c0_98 = arith.constant 0 : index
    %c0_99 = arith.constant 0 : index
    %86 = vector.load %arg7[%c0_96, %c2_97, %c0_98, %c0_99] : memref<9x3x16x16xf32, #tpu.memory_space<vmem>>, vector<1x1x16x16xf32>
    %87 = vector.shape_cast %86 : vector<1x1x16x16xf32> to vector<16x16xf32>
    %cst_100 = arith.constant dense<0.000000e+00> : vector<16x16xf32>
    %88 = tpu.matmul %85, %87, %cst_100 {dimension_numbers = #tpu.dot_dimension_numbers<[1], [0], [0], [1], [0, 0, 1, 1], [], []>} : vector<16x16xf32>, vector<16x16xf32>, vector<16x16xf32> -> vector<16x16xf32>
    %89 = arith.addf %84, %88 : vector<16x16xf32>
    %90 = vector.broadcast %71 : vector<1x16xf32> to vector<16x16xf32>
    %91 = arith.addf %89, %90 : vector<16x16xf32>
    %cst_101 = arith.constant 0.000000e+00 : f32
    %92 = vector.broadcast %cst_101 : f32 to vector<16x16xf32>
    %93 = arith.maximumf %91, %92 : vector<16x16xf32>
    %c1_102 = arith.constant 1 : index
    %c0_103 = arith.constant 0 : index
    %94 = vector.load %arg9[%c1_102, %c0_103] : memref<12x16xf32, #tpu.memory_space<vmem>>, vector<1x16xf32>
    %cst_104 = arith.constant 0.000000e+00 : f32
    %95 = vector.broadcast %cst_104 : f32 to vector<1x16xf32>
    %c0_105 = arith.constant 0 : index
    %c0_106 = arith.constant 0 : index
    %96 = vector.load %arg13[%c0_105, %c0_106] : memref<24x64xf32, #tpu.memory_space<vmem>>, vector<1x16xf32>
    tpu.vector_store %arg13[%c0_105, %c0_106], %95 {strides = array<i32>} : memref<24x64xf32, #tpu.memory_space<vmem>>, vector<1x16xf32>,
    %c17_107 = arith.constant 17 : index
    %c0_108 = arith.constant 0 : index
    %97 = vector.load %arg13[%c17_107, %c0_108] : memref<24x64xf32, #tpu.memory_space<vmem>>, vector<1x16xf32>
    tpu.vector_store %arg13[%c17_107, %c0_108], %95 {strides = array<i32>} : memref<24x64xf32, #tpu.memory_space<vmem>>, vector<1x16xf32>,
    %c1_109 = arith.constant 1 : index
    %c0_110 = arith.constant 0 : index
    %98 = vector.load %arg13[%c1_109, %c0_110] : memref<24x64xf32, #tpu.memory_space<vmem>>, vector<16x16xf32>
    tpu.vector_store %arg13[%c1_109, %c0_110], %93 {strides = array<i32>} : memref<24x64xf32, #tpu.memory_space<vmem>>, vector<16x16xf32>,
    %c0_111 = arith.constant 0 : index
    %c0_112 = arith.constant 0 : index
    %99 = vector.load %arg13[%c0_111, %c0_112] : memref<24x64xf32, #tpu.memory_space<vmem>>, vector<16x16xf32>
    %c1_113 = arith.constant 1 : index
    %c0_114 = arith.constant 0 : index
    %c0_115 = arith.constant 0 : index
    %c0_116 = arith.constant 0 : index
    %100 = vector.load %arg7[%c1_113, %c0_114, %c0_115, %c0_116] : memref<9x3x16x16xf32, #tpu.memory_space<vmem>>, vector<1x1x16x16xf32>
    %101 = vector.shape_cast %100 : vector<1x1x16x16xf32> to vector<16x16xf32>
    %cst_117 = arith.constant dense<0.000000e+00> : vector<16x16xf32>
    %102 = tpu.matmul %99, %101, %cst_117 {dimension_numbers = #tpu.dot_dimension_numbers<[1], [0], [0], [1], [0, 0, 1, 1], [], []>} : vector<16x16xf32>, vector<16x16xf32>, vector<16x16xf32> -> vector<16x16xf32>
    %c1_118 = arith.constant 1 : index
    %c0_119 = arith.constant 0 : index
    %103 = vector.load %arg13[%c1_118, %c0_119] : memref<24x64xf32, #tpu.memory_space<vmem>>, vector<16x16xf32>
    %c1_120 = arith.constant 1 : index
    %c1_121 = arith.constant 1 : index
    %c0_122 = arith.constant 0 : index
    %c0_123 = arith.constant 0 : index
    %104 = vector.load %arg7[%c1_120, %c1_121, %c0_122, %c0_123] : memref<9x3x16x16xf32, #tpu.memory_space<vmem>>, vector<1x1x16x16xf32>
    %105 = vector.shape_cast %104 : vector<1x1x16x16xf32> to vector<16x16xf32>
    %cst_124 = arith.constant dense<0.000000e+00> : vector<16x16xf32>
    %106 = tpu.matmul %103, %105, %cst_124 {dimension_numbers = #tpu.dot_dimension_numbers<[1], [0], [0], [1], [0, 0, 1, 1], [], []>} : vector<16x16xf32>, vector<16x16xf32>, vector<16x16xf32> -> vector<16x16xf32>
    %107 = arith.addf %102, %106 : vector<16x16xf32>
    %c2_125 = arith.constant 2 : index
    %c0_126 = arith.constant 0 : index
    %108 = vector.load %arg13[%c2_125, %c0_126] : memref<24x64xf32, #tpu.memory_space<vmem>>, vector<16x16xf32>
    %c1_127 = arith.constant 1 : index
    %c2_128 = arith.constant 2 : index
    %c0_129 = arith.constant 0 : index
    %c0_130 = arith.constant 0 : index
    %109 = vector.load %arg7[%c1_127, %c2_128, %c0_129, %c0_130] : memref<9x3x16x16xf32, #tpu.memory_space<vmem>>, vector<1x1x16x16xf32>
    %110 = vector.shape_cast %109 : vector<1x1x16x16xf32> to vector<16x16xf32>
    %cst_131 = arith.constant dense<0.000000e+00> : vector<16x16xf32>
    %111 = tpu.matmul %108, %110, %cst_131 {dimension_numbers = #tpu.dot_dimension_numbers<[1], [0], [0], [1], [0, 0, 1, 1], [], []>} : vector<16x16xf32>, vector<16x16xf32>, vector<16x16xf32> -> vector<16x16xf32>
    %112 = arith.addf %107, %111 : vector<16x16xf32>
    %113 = vector.broadcast %94 : vector<1x16xf32> to vector<16x16xf32>
    %114 = arith.addf %112, %113 : vector<16x16xf32>
    %cst_132 = arith.constant 0.000000e+00 : f32
    %115 = vector.broadcast %cst_132 : f32 to vector<16x16xf32>
    %116 = arith.maximumf %114, %115 : vector<16x16xf32>
    %117 = arith.addf %116, %64 : vector<16x16xf32>
    %c2_133 = arith.constant 2 : index
    %c0_134 = arith.constant 0 : index
    %118 = vector.load %arg9[%c2_133, %c0_134] : memref<12x16xf32, #tpu.memory_space<vmem>>, vector<1x16xf32>
    %cst_135 = arith.constant 0.000000e+00 : f32
    %119 = vector.broadcast %cst_135 : f32 to vector<1x16xf32>
    %c0_136 = arith.constant 0 : index
    %c0_137 = arith.constant 0 : index
    %120 = vector.load %arg13[%c0_136, %c0_137] : memref<24x64xf32, #tpu.memory_space<vmem>>, vector<1x16xf32>
    tpu.vector_store %arg13[%c0_136, %c0_137], %119 {strides = array<i32>} : memref<24x64xf32, #tpu.memory_space<vmem>>, vector<1x16xf32>,
    %c17_138 = arith.constant 17 : index
    %c0_139 = arith.constant 0 : index
    %121 = vector.load %arg13[%c17_138, %c0_139] : memref<24x64xf32, #tpu.memory_space<vmem>>, vector<1x16xf32>
    tpu.vector_store %arg13[%c17_138, %c0_139], %119 {strides = array<i32>} : memref<24x64xf32, #tpu.memory_space<vmem>>, vector<1x16xf32>,
    %c1_140 = arith.constant 1 : index
    %c0_141 = arith.constant 0 : index
    %122 = vector.load %arg13[%c1_140, %c0_141] : memref<24x64xf32, #tpu.memory_space<vmem>>, vector<16x16xf32>
    tpu.vector_store %arg13[%c1_140, %c0_141], %117 {strides = array<i32>} : memref<24x64xf32, #tpu.memory_space<vmem>>, vector<16x16xf32>,
    %c0_142 = arith.constant 0 : index
    %c0_143 = arith.constant 0 : index
    %123 = vector.load %arg13[%c0_142, %c0_143] : memref<24x64xf32, #tpu.memory_space<vmem>>, vector<16x16xf32>
    %c2_144 = arith.constant 2 : index
    %c0_145 = arith.constant 0 : index
    %c0_146 = arith.constant 0 : index
    %c0_147 = arith.constant 0 : index
    %124 = vector.load %arg7[%c2_144, %c0_145, %c0_146, %c0_147] : memref<9x3x16x16xf32, #tpu.memory_space<vmem>>, vector<1x1x16x16xf32>
    %125 = vector.shape_cast %124 : vector<1x1x16x16xf32> to vector<16x16xf32>
    %cst_148 = arith.constant dense<0.000000e+00> : vector<16x16xf32>
    %126 = tpu.matmul %123, %125, %cst_148 {dimension_numbers = #tpu.dot_dimension_numbers<[1], [0], [0], [1], [0, 0, 1, 1], [], []>} : vector<16x16xf32>, vector<16x16xf32>, vector<16x16xf32> -> vector<16x16xf32>
    %c1_149 = arith.constant 1 : index
    %c0_150 = arith.constant 0 : index
    %127 = vector.load %arg13[%c1_149, %c0_150] : memref<24x64xf32, #tpu.memory_space<vmem>>, vector<16x16xf32>
    %c2_151 = arith.constant 2 : index
    %c1_152 = arith.constant 1 : index
    %c0_153 = arith.constant 0 : index
    %c0_154 = arith.constant 0 : index
    %128 = vector.load %arg7[%c2_151, %c1_152, %c0_153, %c0_154] : memref<9x3x16x16xf32, #tpu.memory_space<vmem>>, vector<1x1x16x16xf32>
    %129 = vector.shape_cast %128 : vector<1x1x16x16xf32> to vector<16x16xf32>
    %cst_155 = arith.constant dense<0.000000e+00> : vector<16x16xf32>
    %130 = tpu.matmul %127, %129, %cst_155 {dimension_numbers = #tpu.dot_dimension_numbers<[1], [0], [0], [1], [0, 0, 1, 1], [], []>} : vector<16x16xf32>, vector<16x16xf32>, vector<16x16xf32> -> vector<16x16xf32>
    %131 = arith.addf %126, %130 : vector<16x16xf32>
    %c2_156 = arith.constant 2 : index
    %c0_157 = arith.constant 0 : index
    %132 = vector.load %arg13[%c2_156, %c0_157] : memref<24x64xf32, #tpu.memory_space<vmem>>, vector<16x16xf32>
    %c2_158 = arith.constant 2 : index
    %c2_159 = arith.constant 2 : index
    %c0_160 = arith.constant 0 : index
    %c0_161 = arith.constant 0 : index
    %133 = vector.load %arg7[%c2_158, %c2_159, %c0_160, %c0_161] : memref<9x3x16x16xf32, #tpu.memory_space<vmem>>, vector<1x1x16x16xf32>
    %134 = vector.shape_cast %133 : vector<1x1x16x16xf32> to vector<16x16xf32>
    %cst_162 = arith.constant dense<0.000000e+00> : vector<16x16xf32>
    %135 = tpu.matmul %132, %134, %cst_162 {dimension_numbers = #tpu.dot_dimension_numbers<[1], [0], [0], [1], [0, 0, 1, 1], [], []>} : vector<16x16xf32>, vector<16x16xf32>, vector<16x16xf32> -> vector<16x16xf32>
    %136 = arith.addf %131, %135 : vector<16x16xf32>
    %137 = vector.broadcast %118 : vector<1x16xf32> to vector<16x16xf32>
    %138 = arith.addf %136, %137 : vector<16x16xf32>
    %cst_163 = arith.constant 0.000000e+00 : f32
    %139 = vector.broadcast %cst_163 : f32 to vector<16x16xf32>
    %140 = arith.maximumf %138, %139 : vector<16x16xf32>
    %c3_164 = arith.constant 3 : index
    %c0_165 = arith.constant 0 : index
    %141 = vector.load %arg9[%c3_164, %c0_165] : memref<12x16xf32, #tpu.memory_space<vmem>>, vector<1x16xf32>
    %cst_166 = arith.constant 0.000000e+00 : f32
    %142 = vector.broadcast %cst_166 : f32 to vector<1x16xf32>
    %c0_167 = arith.constant 0 : index
    %c0_168 = arith.constant 0 : index
    %143 = vector.load %arg13[%c0_167, %c0_168] : memref<24x64xf32, #tpu.memory_space<vmem>>, vector<1x16xf32>
    tpu.vector_store %arg13[%c0_167, %c0_168], %142 {strides = array<i32>} : memref<24x64xf32, #tpu.memory_space<vmem>>, vector<1x16xf32>,
    %c17_169 = arith.constant 17 : index
    %c0_170 = arith.constant 0 : index
    %144 = vector.load %arg13[%c17_169, %c0_170] : memref<24x64xf32, #tpu.memory_space<vmem>>, vector<1x16xf32>
    tpu.vector_store %arg13[%c17_169, %c0_170], %142 {strides = array<i32>} : memref<24x64xf32, #tpu.memory_space<vmem>>, vector<1x16xf32>,
    %c1_171 = arith.constant 1 : index
    %c0_172 = arith.constant 0 : index
    %145 = vector.load %arg13[%c1_171, %c0_172] : memref<24x64xf32, #tpu.memory_space<vmem>>, vector<16x16xf32>
    tpu.vector_store %arg13[%c1_171, %c0_172], %140 {strides = array<i32>} : memref<24x64xf32, #tpu.memory_space<vmem>>, vector<16x16xf32>,
    %c0_173 = arith.constant 0 : index
    %c0_174 = arith.constant 0 : index
    %146 = tpu.strided_load %arg13[%c0_173, %c0_174] {strides = array<i32: 2, 1>} : memref<24x64xf32, #tpu.memory_space<vmem>>, vector<8x16xf32>
    %c0_175 = arith.constant 0 : index
    %c0_176 = arith.constant 0 : index
    %c0_177 = arith.constant 0 : index
    %c0_178 = arith.constant 0 : index
    %147 = vector.load %arg8[%c0_175, %c0_176, %c0_177, %c0_178] : memref<3x4x16x16xf32, #tpu.memory_space<vmem>>, vector<1x1x16x16xf32>
    %148 = vector.shape_cast %147 : vector<1x1x16x16xf32> to vector<16x16xf32>
    %cst_179 = arith.constant dense<0.000000e+00> : vector<8x16xf32>
    %149 = tpu.matmul %146, %148, %cst_179 {dimension_numbers = #tpu.dot_dimension_numbers<[1], [0], [0], [1], [0, 0, 1, 1], [], []>} : vector<8x16xf32>, vector<16x16xf32>, vector<8x16xf32> -> vector<8x16xf32>
    %c1_180 = arith.constant 1 : index
    %c0_181 = arith.constant 0 : index
    %150 = tpu.strided_load %arg13[%c1_180, %c0_181] {strides = array<i32: 2, 1>} : memref<24x64xf32, #tpu.memory_space<vmem>>, vector<8x16xf32>
    %c0_182 = arith.constant 0 : index
    %c1_183 = arith.constant 1 : index
    %c0_184 = arith.constant 0 : index
    %c0_185 = arith.constant 0 : index
    %151 = vector.load %arg8[%c0_182, %c1_183, %c0_184, %c0_185] : memref<3x4x16x16xf32, #tpu.memory_space<vmem>>, vector<1x1x16x16xf32>
    %152 = vector.shape_cast %151 : vector<1x1x16x16xf32> to vector<16x16xf32>
    %cst_186 = arith.constant dense<0.000000e+00> : vector<8x16xf32>
    %153 = tpu.matmul %150, %152, %cst_186 {dimension_numbers = #tpu.dot_dimension_numbers<[1], [0], [0], [1], [0, 0, 1, 1], [], []>} : vector<8x16xf32>, vector<16x16xf32>, vector<8x16xf32> -> vector<8x16xf32>
    %154 = arith.addf %149, %153 : vector<8x16xf32>
    %c2_187 = arith.constant 2 : index
    %c0_188 = arith.constant 0 : index
    %155 = tpu.strided_load %arg13[%c2_187, %c0_188] {strides = array<i32: 2, 1>} : memref<24x64xf32, #tpu.memory_space<vmem>>, vector<8x16xf32>
    %c0_189 = arith.constant 0 : index
    %c2_190 = arith.constant 2 : index
    %c0_191 = arith.constant 0 : index
    %c0_192 = arith.constant 0 : index
    %156 = vector.load %arg8[%c0_189, %c2_190, %c0_191, %c0_192] : memref<3x4x16x16xf32, #tpu.memory_space<vmem>>, vector<1x1x16x16xf32>
    %157 = vector.shape_cast %156 : vector<1x1x16x16xf32> to vector<16x16xf32>
    %cst_193 = arith.constant dense<0.000000e+00> : vector<8x16xf32>
    %158 = tpu.matmul %155, %157, %cst_193 {dimension_numbers = #tpu.dot_dimension_numbers<[1], [0], [0], [1], [0, 0, 1, 1], [], []>} : vector<8x16xf32>, vector<16x16xf32>, vector<8x16xf32> -> vector<8x16xf32>
    %159 = arith.addf %154, %158 : vector<8x16xf32>
    %c3_194 = arith.constant 3 : index
    %c0_195 = arith.constant 0 : index
    %160 = tpu.strided_load %arg13[%c3_194, %c0_195] {strides = array<i32: 2, 1>} : memref<24x64xf32, #tpu.memory_space<vmem>>, vector<8x16xf32>
    %c0_196 = arith.constant 0 : index
    %c3_197 = arith.constant 3 : index
    %c0_198 = arith.constant 0 : index
    %c0_199 = arith.constant 0 : index
    %161 = vector.load %arg8[%c0_196, %c3_197, %c0_198, %c0_199] : memref<3x4x16x16xf32, #tpu.memory_space<vmem>>, vector<1x1x16x16xf32>
    %162 = vector.shape_cast %161 : vector<1x1x16x16xf32> to vector<16x16xf32>
    %cst_200 = arith.constant dense<0.000000e+00> : vector<8x16xf32>
    %163 = tpu.matmul %160, %162, %cst_200 {dimension_numbers = #tpu.dot_dimension_numbers<[1], [0], [0], [1], [0, 0, 1, 1], [], []>} : vector<8x16xf32>, vector<16x16xf32>, vector<8x16xf32> -> vector<8x16xf32>
    %164 = arith.addf %159, %163 : vector<8x16xf32>
    %165 = vector.broadcast %141 : vector<1x16xf32> to vector<8x16xf32>
    %166 = arith.addf %164, %165 : vector<8x16xf32>
    %cst_201 = arith.constant 0.000000e+00 : f32
    %167 = vector.broadcast %cst_201 : f32 to vector<8x16xf32>
    %168 = arith.maximumf %166, %167 : vector<8x16xf32>
    %169 = arith.addf %168, %70 : vector<8x16xf32>
    %c0_202 = arith.constant 0 : index
    %c0_203 = arith.constant 0 : index
    %170 = vector.load %arg13[%c0_202, %c0_203] : memref<24x64xf32, #tpu.memory_space<vmem>>, vector<8x16xf32>
    tpu.vector_store %arg13[%c0_202, %c0_203], %169 {strides = array<i32>} : memref<24x64xf32, #tpu.memory_space<vmem>>, vector<8x16xf32>,
    %c0_204 = arith.constant 0 : index
    %c0_205 = arith.constant 0 : index
    %171 = tpu.strided_load %arg13[%c0_204, %c0_205] {strides = array<i32: 2, 1>} : memref<24x64xf32, #tpu.memory_space<vmem>>, vector<4x16xf32>
    %c1_206 = arith.constant 1 : index
    %c0_207 = arith.constant 0 : index
    %172 = tpu.strided_load %arg13[%c1_206, %c0_207] {strides = array<i32: 2, 1>} : memref<24x64xf32, #tpu.memory_space<vmem>>, vector<4x16xf32>
    %173 = arith.addf %171, %172 : vector<4x16xf32>
    %cst_208 = arith.constant 5.000000e-01 : f32
    %174 = vector.broadcast %cst_208 : f32 to vector<4x16xf32>
    %175 = arith.mulf %174, %173 : vector<4x16xf32>
    %c4_209 = arith.constant 4 : index
    %c0_210 = arith.constant 0 : index
    %176 = vector.load %arg9[%c4_209, %c0_210] : memref<12x16xf32, #tpu.memory_space<vmem>>, vector<1x16xf32>
    %cst_211 = arith.constant 0.000000e+00 : f32
    %177 = vector.broadcast %cst_211 : f32 to vector<1x16xf32>
    %c0_212 = arith.constant 0 : index
    %c0_213 = arith.constant 0 : index
    %178 = vector.load %arg13[%c0_212, %c0_213] : memref<24x64xf32, #tpu.memory_space<vmem>>, vector<1x16xf32>
    tpu.vector_store %arg13[%c0_212, %c0_213], %177 {strides = array<i32>} : memref<24x64xf32, #tpu.memory_space<vmem>>, vector<1x16xf32>,
    %c9 = arith.constant 9 : index
    %c0_214 = arith.constant 0 : index
    %179 = vector.load %arg13[%c9, %c0_214] : memref<24x64xf32, #tpu.memory_space<vmem>>, vector<1x16xf32>
    tpu.vector_store %arg13[%c9, %c0_214], %177 {strides = array<i32>} : memref<24x64xf32, #tpu.memory_space<vmem>>, vector<1x16xf32>,
    %c1_215 = arith.constant 1 : index
    %c0_216 = arith.constant 0 : index
    %180 = vector.load %arg13[%c1_215, %c0_216] : memref<24x64xf32, #tpu.memory_space<vmem>>, vector<8x16xf32>
    tpu.vector_store %arg13[%c1_215, %c0_216], %169 {strides = array<i32>} : memref<24x64xf32, #tpu.memory_space<vmem>>, vector<8x16xf32>,
    %c0_217 = arith.constant 0 : index
    %c0_218 = arith.constant 0 : index
    %181 = vector.load %arg13[%c0_217, %c0_218] : memref<24x64xf32, #tpu.memory_space<vmem>>, vector<8x16xf32>
    %c3_219 = arith.constant 3 : index
    %c0_220 = arith.constant 0 : index
    %c0_221 = arith.constant 0 : index
    %c0_222 = arith.constant 0 : index
    %182 = vector.load %arg7[%c3_219, %c0_220, %c0_221, %c0_222] : memref<9x3x16x16xf32, #tpu.memory_space<vmem>>, vector<1x1x16x16xf32>
    %183 = vector.shape_cast %182 : vector<1x1x16x16xf32> to vector<16x16xf32>
    %cst_223 = arith.constant dense<0.000000e+00> : vector<8x16xf32>
    %184 = tpu.matmul %181, %183, %cst_223 {dimension_numbers = #tpu.dot_dimension_numbers<[1], [0], [0], [1], [0, 0, 1, 1], [], []>} : vector<8x16xf32>, vector<16x16xf32>, vector<8x16xf32> -> vector<8x16xf32>
    %c1_224 = arith.constant 1 : index
    %c0_225 = arith.constant 0 : index
    %185 = vector.load %arg13[%c1_224, %c0_225] : memref<24x64xf32, #tpu.memory_space<vmem>>, vector<8x16xf32>
    %c3_226 = arith.constant 3 : index
    %c1_227 = arith.constant 1 : index
    %c0_228 = arith.constant 0 : index
    %c0_229 = arith.constant 0 : index
    %186 = vector.load %arg7[%c3_226, %c1_227, %c0_228, %c0_229] : memref<9x3x16x16xf32, #tpu.memory_space<vmem>>, vector<1x1x16x16xf32>
    %187 = vector.shape_cast %186 : vector<1x1x16x16xf32> to vector<16x16xf32>
    %cst_230 = arith.constant dense<0.000000e+00> : vector<8x16xf32>
    %188 = tpu.matmul %185, %187, %cst_230 {dimension_numbers = #tpu.dot_dimension_numbers<[1], [0], [0], [1], [0, 0, 1, 1], [], []>} : vector<8x16xf32>, vector<16x16xf32>, vector<8x16xf32> -> vector<8x16xf32>
    %189 = arith.addf %184, %188 : vector<8x16xf32>
    %c2_231 = arith.constant 2 : index
    %c0_232 = arith.constant 0 : index
    %190 = vector.load %arg13[%c2_231, %c0_232] : memref<24x64xf32, #tpu.memory_space<vmem>>, vector<8x16xf32>
    %c3_233 = arith.constant 3 : index
    %c2_234 = arith.constant 2 : index
    %c0_235 = arith.constant 0 : index
    %c0_236 = arith.constant 0 : index
    %191 = vector.load %arg7[%c3_233, %c2_234, %c0_235, %c0_236] : memref<9x3x16x16xf32, #tpu.memory_space<vmem>>, vector<1x1x16x16xf32>
    %192 = vector.shape_cast %191 : vector<1x1x16x16xf32> to vector<16x16xf32>
    %cst_237 = arith.constant dense<0.000000e+00> : vector<8x16xf32>
    %193 = tpu.matmul %190, %192, %cst_237 {dimension_numbers = #tpu.dot_dimension_numbers<[1], [0], [0], [1], [0, 0, 1, 1], [], []>} : vector<8x16xf32>, vector<16x16xf32>, vector<8x16xf32> -> vector<8x16xf32>
    %194 = arith.addf %189, %193 : vector<8x16xf32>
    %195 = vector.broadcast %176 : vector<1x16xf32> to vector<8x16xf32>
    %196 = arith.addf %194, %195 : vector<8x16xf32>
    %cst_238 = arith.constant 0.000000e+00 : f32
    %197 = vector.broadcast %cst_238 : f32 to vector<8x16xf32>
    %198 = arith.maximumf %196, %197 : vector<8x16xf32>
    %c5_239 = arith.constant 5 : index
    %c0_240 = arith.constant 0 : index
    %199 = vector.load %arg9[%c5_239, %c0_240] : memref<12x16xf32, #tpu.memory_space<vmem>>, vector<1x16xf32>
    %cst_241 = arith.constant 0.000000e+00 : f32
    %200 = vector.broadcast %cst_241 : f32 to vector<1x16xf32>
    %c0_242 = arith.constant 0 : index
    %c0_243 = arith.constant 0 : index
    %201 = vector.load %arg13[%c0_242, %c0_243] : memref<24x64xf32, #tpu.memory_space<vmem>>, vector<1x16xf32>
    tpu.vector_store %arg13[%c0_242, %c0_243], %200 {strides = array<i32>} : memref<24x64xf32, #tpu.memory_space<vmem>>, vector<1x16xf32>,
    %c9_244 = arith.constant 9 : index
    %c0_245 = arith.constant 0 : index
    %202 = vector.load %arg13[%c9_244, %c0_245] : memref<24x64xf32, #tpu.memory_space<vmem>>, vector<1x16xf32>
    tpu.vector_store %arg13[%c9_244, %c0_245], %200 {strides = array<i32>} : memref<24x64xf32, #tpu.memory_space<vmem>>, vector<1x16xf32>,
    %c1_246 = arith.constant 1 : index
    %c0_247 = arith.constant 0 : index
    %203 = vector.load %arg13[%c1_246, %c0_247] : memref<24x64xf32, #tpu.memory_space<vmem>>, vector<8x16xf32>
    tpu.vector_store %arg13[%c1_246, %c0_247], %198 {strides = array<i32>} : memref<24x64xf32, #tpu.memory_space<vmem>>, vector<8x16xf32>,
    %c0_248 = arith.constant 0 : index
    %c0_249 = arith.constant 0 : index
    %204 = vector.load %arg13[%c0_248, %c0_249] : memref<24x64xf32, #tpu.memory_space<vmem>>, vector<8x16xf32>
    %c4_250 = arith.constant 4 : index
    %c0_251 = arith.constant 0 : index
    %c0_252 = arith.constant 0 : index
    %c0_253 = arith.constant 0 : index
    %205 = vector.load %arg7[%c4_250, %c0_251, %c0_252, %c0_253] : memref<9x3x16x16xf32, #tpu.memory_space<vmem>>, vector<1x1x16x16xf32>
    %206 = vector.shape_cast %205 : vector<1x1x16x16xf32> to vector<16x16xf32>
    %cst_254 = arith.constant dense<0.000000e+00> : vector<8x16xf32>
    %207 = tpu.matmul %204, %206, %cst_254 {dimension_numbers = #tpu.dot_dimension_numbers<[1], [0], [0], [1], [0, 0, 1, 1], [], []>} : vector<8x16xf32>, vector<16x16xf32>, vector<8x16xf32> -> vector<8x16xf32>
    %c1_255 = arith.constant 1 : index
    %c0_256 = arith.constant 0 : index
    %208 = vector.load %arg13[%c1_255, %c0_256] : memref<24x64xf32, #tpu.memory_space<vmem>>, vector<8x16xf32>
    %c4_257 = arith.constant 4 : index
    %c1_258 = arith.constant 1 : index
    %c0_259 = arith.constant 0 : index
    %c0_260 = arith.constant 0 : index
    %209 = vector.load %arg7[%c4_257, %c1_258, %c0_259, %c0_260] : memref<9x3x16x16xf32, #tpu.memory_space<vmem>>, vector<1x1x16x16xf32>
    %210 = vector.shape_cast %209 : vector<1x1x16x16xf32> to vector<16x16xf32>
    %cst_261 = arith.constant dense<0.000000e+00> : vector<8x16xf32>
    %211 = tpu.matmul %208, %210, %cst_261 {dimension_numbers = #tpu.dot_dimension_numbers<[1], [0], [0], [1], [0, 0, 1, 1], [], []>} : vector<8x16xf32>, vector<16x16xf32>, vector<8x16xf32> -> vector<8x16xf32>
    %212 = arith.addf %207, %211 : vector<8x16xf32>
    %c2_262 = arith.constant 2 : index
    %c0_263 = arith.constant 0 : index
    %213 = vector.load %arg13[%c2_262, %c0_263] : memref<24x64xf32, #tpu.memory_space<vmem>>, vector<8x16xf32>
    %c4_264 = arith.constant 4 : index
    %c2_265 = arith.constant 2 : index
    %c0_266 = arith.constant 0 : index
    %c0_267 = arith.constant 0 : index
    %214 = vector.load %arg7[%c4_264, %c2_265, %c0_266, %c0_267] : memref<9x3x16x16xf32, #tpu.memory_space<vmem>>, vector<1x1x16x16xf32>
    %215 = vector.shape_cast %214 : vector<1x1x16x16xf32> to vector<16x16xf32>
    %cst_268 = arith.constant dense<0.000000e+00> : vector<8x16xf32>
    %216 = tpu.matmul %213, %215, %cst_268 {dimension_numbers = #tpu.dot_dimension_numbers<[1], [0], [0], [1], [0, 0, 1, 1], [], []>} : vector<8x16xf32>, vector<16x16xf32>, vector<8x16xf32> -> vector<8x16xf32>
    %217 = arith.addf %212, %216 : vector<8x16xf32>
    %218 = vector.broadcast %199 : vector<1x16xf32> to vector<8x16xf32>
    %219 = arith.addf %217, %218 : vector<8x16xf32>
    %cst_269 = arith.constant 0.000000e+00 : f32
    %220 = vector.broadcast %cst_269 : f32 to vector<8x16xf32>
    %221 = arith.maximumf %219, %220 : vector<8x16xf32>
    %222 = arith.addf %221, %169 : vector<8x16xf32>
    %c6_270 = arith.constant 6 : index
    %c0_271 = arith.constant 0 : index
    %223 = vector.load %arg9[%c6_270, %c0_271] : memref<12x16xf32, #tpu.memory_space<vmem>>, vector<1x16xf32>
    %cst_272 = arith.constant 0.000000e+00 : f32
    %224 = vector.broadcast %cst_272 : f32 to vector<1x16xf32>
    %c0_273 = arith.constant 0 : index
    %c0_274 = arith.constant 0 : index
    %225 = vector.load %arg13[%c0_273, %c0_274] : memref<24x64xf32, #tpu.memory_space<vmem>>, vector<1x16xf32>
    tpu.vector_store %arg13[%c0_273, %c0_274], %224 {strides = array<i32>} : memref<24x64xf32, #tpu.memory_space<vmem>>, vector<1x16xf32>,
    %c9_275 = arith.constant 9 : index
    %c0_276 = arith.constant 0 : index
    %226 = vector.load %arg13[%c9_275, %c0_276] : memref<24x64xf32, #tpu.memory_space<vmem>>, vector<1x16xf32>
    tpu.vector_store %arg13[%c9_275, %c0_276], %224 {strides = array<i32>} : memref<24x64xf32, #tpu.memory_space<vmem>>, vector<1x16xf32>,
    %c1_277 = arith.constant 1 : index
    %c0_278 = arith.constant 0 : index
    %227 = vector.load %arg13[%c1_277, %c0_278] : memref<24x64xf32, #tpu.memory_space<vmem>>, vector<8x16xf32>
    tpu.vector_store %arg13[%c1_277, %c0_278], %222 {strides = array<i32>} : memref<24x64xf32, #tpu.memory_space<vmem>>, vector<8x16xf32>,
    %c0_279 = arith.constant 0 : index
    %c0_280 = arith.constant 0 : index
    %228 = vector.load %arg13[%c0_279, %c0_280] : memref<24x64xf32, #tpu.memory_space<vmem>>, vector<8x16xf32>
    %c5_281 = arith.constant 5 : index
    %c0_282 = arith.constant 0 : index
    %c0_283 = arith.constant 0 : index
    %c0_284 = arith.constant 0 : index
    %229 = vector.load %arg7[%c5_281, %c0_282, %c0_283, %c0_284] : memref<9x3x16x16xf32, #tpu.memory_space<vmem>>, vector<1x1x16x16xf32>
    %230 = vector.shape_cast %229 : vector<1x1x16x16xf32> to vector<16x16xf32>
    %cst_285 = arith.constant dense<0.000000e+00> : vector<8x16xf32>
    %231 = tpu.matmul %228, %230, %cst_285 {dimension_numbers = #tpu.dot_dimension_numbers<[1], [0], [0], [1], [0, 0, 1, 1], [], []>} : vector<8x16xf32>, vector<16x16xf32>, vector<8x16xf32> -> vector<8x16xf32>
    %c1_286 = arith.constant 1 : index
    %c0_287 = arith.constant 0 : index
    %232 = vector.load %arg13[%c1_286, %c0_287] : memref<24x64xf32, #tpu.memory_space<vmem>>, vector<8x16xf32>
    %c5_288 = arith.constant 5 : index
    %c1_289 = arith.constant 1 : index
    %c0_290 = arith.constant 0 : index
    %c0_291 = arith.constant 0 : index
    %233 = vector.load %arg7[%c5_288, %c1_289, %c0_290, %c0_291] : memref<9x3x16x16xf32, #tpu.memory_space<vmem>>, vector<1x1x16x16xf32>
    %234 = vector.shape_cast %233 : vector<1x1x16x16xf32> to vector<16x16xf32>
    %cst_292 = arith.constant dense<0.000000e+00> : vector<8x16xf32>
    %235 = tpu.matmul %232, %234, %cst_292 {dimension_numbers = #tpu.dot_dimension_numbers<[1], [0], [0], [1], [0, 0, 1, 1], [], []>} : vector<8x16xf32>, vector<16x16xf32>, vector<8x16xf32> -> vector<8x16xf32>
    %236 = arith.addf %231, %235 : vector<8x16xf32>
    %c2_293 = arith.constant 2 : index
    %c0_294 = arith.constant 0 : index
    %237 = vector.load %arg13[%c2_293, %c0_294] : memref<24x64xf32, #tpu.memory_space<vmem>>, vector<8x16xf32>
    %c5_295 = arith.constant 5 : index
    %c2_296 = arith.constant 2 : index
    %c0_297 = arith.constant 0 : index
    %c0_298 = arith.constant 0 : index
    %238 = vector.load %arg7[%c5_295, %c2_296, %c0_297, %c0_298] : memref<9x3x16x16xf32, #tpu.memory_space<vmem>>, vector<1x1x16x16xf32>
    %239 = vector.shape_cast %238 : vector<1x1x16x16xf32> to vector<16x16xf32>
    %cst_299 = arith.constant dense<0.000000e+00> : vector<8x16xf32>
    %240 = tpu.matmul %237, %239, %cst_299 {dimension_numbers = #tpu.dot_dimension_numbers<[1], [0], [0], [1], [0, 0, 1, 1], [], []>} : vector<8x16xf32>, vector<16x16xf32>, vector<8x16xf32> -> vector<8x16xf32>
    %241 = arith.addf %236, %240 : vector<8x16xf32>
    %242 = vector.broadcast %223 : vector<1x16xf32> to vector<8x16xf32>
    %243 = arith.addf %241, %242 : vector<8x16xf32>
    %cst_300 = arith.constant 0.000000e+00 : f32
    %244 = vector.broadcast %cst_300 : f32 to vector<8x16xf32>
    %245 = arith.maximumf %243, %244 : vector<8x16xf32>
    %c7_301 = arith.constant 7 : index
    %c0_302 = arith.constant 0 : index
    %246 = vector.load %arg9[%c7_301, %c0_302] : memref<12x16xf32, #tpu.memory_space<vmem>>, vector<1x16xf32>
    %cst_303 = arith.constant 0.000000e+00 : f32
    %247 = vector.broadcast %cst_303 : f32 to vector<1x16xf32>
    %c0_304 = arith.constant 0 : index
    %c0_305 = arith.constant 0 : index
    %248 = vector.load %arg13[%c0_304, %c0_305] : memref<24x64xf32, #tpu.memory_space<vmem>>, vector<1x16xf32>
    tpu.vector_store %arg13[%c0_304, %c0_305], %247 {strides = array<i32>} : memref<24x64xf32, #tpu.memory_space<vmem>>, vector<1x16xf32>,
    %c9_306 = arith.constant 9 : index
    %c0_307 = arith.constant 0 : index
    %249 = vector.load %arg13[%c9_306, %c0_307] : memref<24x64xf32, #tpu.memory_space<vmem>>, vector<1x16xf32>
    tpu.vector_store %arg13[%c9_306, %c0_307], %247 {strides = array<i32>} : memref<24x64xf32, #tpu.memory_space<vmem>>, vector<1x16xf32>,
    %c1_308 = arith.constant 1 : index
    %c0_309 = arith.constant 0 : index
    %250 = vector.load %arg13[%c1_308, %c0_309] : memref<24x64xf32, #tpu.memory_space<vmem>>, vector<8x16xf32>
    tpu.vector_store %arg13[%c1_308, %c0_309], %245 {strides = array<i32>} : memref<24x64xf32, #tpu.memory_space<vmem>>, vector<8x16xf32>,
    %c0_310 = arith.constant 0 : index
    %c0_311 = arith.constant 0 : index
    %251 = tpu.strided_load %arg13[%c0_310, %c0_311] {strides = array<i32: 2, 1>} : memref<24x64xf32, #tpu.memory_space<vmem>>, vector<4x16xf32>
    %c1_312 = arith.constant 1 : index
    %c0_313 = arith.constant 0 : index
    %c0_314 = arith.constant 0 : index
    %c0_315 = arith.constant 0 : index
    %252 = vector.load %arg8[%c1_312, %c0_313, %c0_314, %c0_315] : memref<3x4x16x16xf32, #tpu.memory_space<vmem>>, vector<1x1x16x16xf32>
    %253 = vector.shape_cast %252 : vector<1x1x16x16xf32> to vector<16x16xf32>
    %cst_316 = arith.constant dense<0.000000e+00> : vector<4x16xf32>
    %254 = tpu.matmul %251, %253, %cst_316 {dimension_numbers = #tpu.dot_dimension_numbers<[1], [0], [0], [1], [0, 0, 1, 1], [], []>} : vector<4x16xf32>, vector<16x16xf32>, vector<4x16xf32> -> vector<4x16xf32>
    %c1_317 = arith.constant 1 : index
    %c0_318 = arith.constant 0 : index
    %255 = tpu.strided_load %arg13[%c1_317, %c0_318] {strides = array<i32: 2, 1>} : memref<24x64xf32, #tpu.memory_space<vmem>>, vector<4x16xf32>
    %c1_319 = arith.constant 1 : index
    %c1_320 = arith.constant 1 : index
    %c0_321 = arith.constant 0 : index
    %c0_322 = arith.constant 0 : index
    %256 = vector.load %arg8[%c1_319, %c1_320, %c0_321, %c0_322] : memref<3x4x16x16xf32, #tpu.memory_space<vmem>>, vector<1x1x16x16xf32>
    %257 = vector.shape_cast %256 : vector<1x1x16x16xf32> to vector<16x16xf32>
    %cst_323 = arith.constant dense<0.000000e+00> : vector<4x16xf32>
    %258 = tpu.matmul %255, %257, %cst_323 {dimension_numbers = #tpu.dot_dimension_numbers<[1], [0], [0], [1], [0, 0, 1, 1], [], []>} : vector<4x16xf32>, vector<16x16xf32>, vector<4x16xf32> -> vector<4x16xf32>
    %259 = arith.addf %254, %258 : vector<4x16xf32>
    %c2_324 = arith.constant 2 : index
    %c0_325 = arith.constant 0 : index
    %260 = tpu.strided_load %arg13[%c2_324, %c0_325] {strides = array<i32: 2, 1>} : memref<24x64xf32, #tpu.memory_space<vmem>>, vector<4x16xf32>
    %c1_326 = arith.constant 1 : index
    %c2_327 = arith.constant 2 : index
    %c0_328 = arith.constant 0 : index
    %c0_329 = arith.constant 0 : index
    %261 = vector.load %arg8[%c1_326, %c2_327, %c0_328, %c0_329] : memref<3x4x16x16xf32, #tpu.memory_space<vmem>>, vector<1x1x16x16xf32>
    %262 = vector.shape_cast %261 : vector<1x1x16x16xf32> to vector<16x16xf32>
    %cst_330 = arith.constant dense<0.000000e+00> : vector<4x16xf32>
    %263 = tpu.matmul %260, %262, %cst_330 {dimension_numbers = #tpu.dot_dimension_numbers<[1], [0], [0], [1], [0, 0, 1, 1], [], []>} : vector<4x16xf32>, vector<16x16xf32>, vector<4x16xf32> -> vector<4x16xf32>
    %264 = arith.addf %259, %263 : vector<4x16xf32>
    %c3_331 = arith.constant 3 : index
    %c0_332 = arith.constant 0 : index
    %265 = tpu.strided_load %arg13[%c3_331, %c0_332] {strides = array<i32: 2, 1>} : memref<24x64xf32, #tpu.memory_space<vmem>>, vector<4x16xf32>
    %c1_333 = arith.constant 1 : index
    %c3_334 = arith.constant 3 : index
    %c0_335 = arith.constant 0 : index
    %c0_336 = arith.constant 0 : index
    %266 = vector.load %arg8[%c1_333, %c3_334, %c0_335, %c0_336] : memref<3x4x16x16xf32, #tpu.memory_space<vmem>>, vector<1x1x16x16xf32>
    %267 = vector.shape_cast %266 : vector<1x1x16x16xf32> to vector<16x16xf32>
    %cst_337 = arith.constant dense<0.000000e+00> : vector<4x16xf32>
    %268 = tpu.matmul %265, %267, %cst_337 {dimension_numbers = #tpu.dot_dimension_numbers<[1], [0], [0], [1], [0, 0, 1, 1], [], []>} : vector<4x16xf32>, vector<16x16xf32>, vector<4x16xf32> -> vector<4x16xf32>
    %269 = arith.addf %264, %268 : vector<4x16xf32>
    %270 = vector.broadcast %246 : vector<1x16xf32> to vector<4x16xf32>
    %271 = arith.addf %269, %270 : vector<4x16xf32>
    %cst_338 = arith.constant 0.000000e+00 : f32
    %272 = vector.broadcast %cst_338 : f32 to vector<4x16xf32>
    %273 = arith.maximumf %271, %272 : vector<4x16xf32>
    %274 = arith.addf %273, %175 : vector<4x16xf32>
    %c0_339 = arith.constant 0 : index
    %c0_340 = arith.constant 0 : index
    %275 = vector.load %arg13[%c0_339, %c0_340] : memref<24x64xf32, #tpu.memory_space<vmem>>, vector<4x16xf32>
    tpu.vector_store %arg13[%c0_339, %c0_340], %274 {strides = array<i32>} : memref<24x64xf32, #tpu.memory_space<vmem>>, vector<4x16xf32>,
    %c0_341 = arith.constant 0 : index
    %c0_342 = arith.constant 0 : index
    %276 = tpu.strided_load %arg13[%c0_341, %c0_342] {strides = array<i32: 2, 1>} : memref<24x64xf32, #tpu.memory_space<vmem>>, vector<2x16xf32>
    %c1_343 = arith.constant 1 : index
    %c0_344 = arith.constant 0 : index
    %277 = tpu.strided_load %arg13[%c1_343, %c0_344] {strides = array<i32: 2, 1>} : memref<24x64xf32, #tpu.memory_space<vmem>>, vector<2x16xf32>
    %278 = arith.addf %276, %277 : vector<2x16xf32>
    %cst_345 = arith.constant 5.000000e-01 : f32
    %279 = vector.broadcast %cst_345 : f32 to vector<2x16xf32>
    %280 = arith.mulf %279, %278 : vector<2x16xf32>
    %c8_346 = arith.constant 8 : index
    %c0_347 = arith.constant 0 : index
    %281 = vector.load %arg9[%c8_346, %c0_347] : memref<12x16xf32, #tpu.memory_space<vmem>>, vector<1x16xf32>
    %cst_348 = arith.constant 0.000000e+00 : f32
    %282 = vector.broadcast %cst_348 : f32 to vector<1x16xf32>
    %c0_349 = arith.constant 0 : index
    %c0_350 = arith.constant 0 : index
    %283 = vector.load %arg13[%c0_349, %c0_350] : memref<24x64xf32, #tpu.memory_space<vmem>>, vector<1x16xf32>
    tpu.vector_store %arg13[%c0_349, %c0_350], %282 {strides = array<i32>} : memref<24x64xf32, #tpu.memory_space<vmem>>, vector<1x16xf32>,
    %c5_351 = arith.constant 5 : index
    %c0_352 = arith.constant 0 : index
    %284 = vector.load %arg13[%c5_351, %c0_352] : memref<24x64xf32, #tpu.memory_space<vmem>>, vector<1x16xf32>
    tpu.vector_store %arg13[%c5_351, %c0_352], %282 {strides = array<i32>} : memref<24x64xf32, #tpu.memory_space<vmem>>, vector<1x16xf32>,
    %c1_353 = arith.constant 1 : index
    %c0_354 = arith.constant 0 : index
    %285 = vector.load %arg13[%c1_353, %c0_354] : memref<24x64xf32, #tpu.memory_space<vmem>>, vector<4x16xf32>
    tpu.vector_store %arg13[%c1_353, %c0_354], %274 {strides = array<i32>} : memref<24x64xf32, #tpu.memory_space<vmem>>, vector<4x16xf32>,
    %c0_355 = arith.constant 0 : index
    %c0_356 = arith.constant 0 : index
    %286 = vector.load %arg13[%c0_355, %c0_356] : memref<24x64xf32, #tpu.memory_space<vmem>>, vector<4x16xf32>
    %c6_357 = arith.constant 6 : index
    %c0_358 = arith.constant 0 : index
    %c0_359 = arith.constant 0 : index
    %c0_360 = arith.constant 0 : index
    %287 = vector.load %arg7[%c6_357, %c0_358, %c0_359, %c0_360] : memref<9x3x16x16xf32, #tpu.memory_space<vmem>>, vector<1x1x16x16xf32>
    %288 = vector.shape_cast %287 : vector<1x1x16x16xf32> to vector<16x16xf32>
    %cst_361 = arith.constant dense<0.000000e+00> : vector<4x16xf32>
    %289 = tpu.matmul %286, %288, %cst_361 {dimension_numbers = #tpu.dot_dimension_numbers<[1], [0], [0], [1], [0, 0, 1, 1], [], []>} : vector<4x16xf32>, vector<16x16xf32>, vector<4x16xf32> -> vector<4x16xf32>
    %c1_362 = arith.constant 1 : index
    %c0_363 = arith.constant 0 : index
    %290 = vector.load %arg13[%c1_362, %c0_363] : memref<24x64xf32, #tpu.memory_space<vmem>>, vector<4x16xf32>
    %c6_364 = arith.constant 6 : index
    %c1_365 = arith.constant 1 : index
    %c0_366 = arith.constant 0 : index
    %c0_367 = arith.constant 0 : index
    %291 = vector.load %arg7[%c6_364, %c1_365, %c0_366, %c0_367] : memref<9x3x16x16xf32, #tpu.memory_space<vmem>>, vector<1x1x16x16xf32>
    %292 = vector.shape_cast %291 : vector<1x1x16x16xf32> to vector<16x16xf32>
    %cst_368 = arith.constant dense<0.000000e+00> : vector<4x16xf32>
    %293 = tpu.matmul %290, %292, %cst_368 {dimension_numbers = #tpu.dot_dimension_numbers<[1], [0], [0], [1], [0, 0, 1, 1], [], []>} : vector<4x16xf32>, vector<16x16xf32>, vector<4x16xf32> -> vector<4x16xf32>
    %294 = arith.addf %289, %293 : vector<4x16xf32>
    %c2_369 = arith.constant 2 : index
    %c0_370 = arith.constant 0 : index
    %295 = vector.load %arg13[%c2_369, %c0_370] : memref<24x64xf32, #tpu.memory_space<vmem>>, vector<4x16xf32>
    %c6_371 = arith.constant 6 : index
    %c2_372 = arith.constant 2 : index
    %c0_373 = arith.constant 0 : index
    %c0_374 = arith.constant 0 : index
    %296 = vector.load %arg7[%c6_371, %c2_372, %c0_373, %c0_374] : memref<9x3x16x16xf32, #tpu.memory_space<vmem>>, vector<1x1x16x16xf32>
    %297 = vector.shape_cast %296 : vector<1x1x16x16xf32> to vector<16x16xf32>
    %cst_375 = arith.constant dense<0.000000e+00> : vector<4x16xf32>
    %298 = tpu.matmul %295, %297, %cst_375 {dimension_numbers = #tpu.dot_dimension_numbers<[1], [0], [0], [1], [0, 0, 1, 1], [], []>} : vector<4x16xf32>, vector<16x16xf32>, vector<4x16xf32> -> vector<4x16xf32>
    %299 = arith.addf %294, %298 : vector<4x16xf32>
    %300 = vector.broadcast %281 : vector<1x16xf32> to vector<4x16xf32>
    %301 = arith.addf %299, %300 : vector<4x16xf32>
    %cst_376 = arith.constant 0.000000e+00 : f32
    %302 = vector.broadcast %cst_376 : f32 to vector<4x16xf32>
    %303 = arith.maximumf %301, %302 : vector<4x16xf32>
    %c9_377 = arith.constant 9 : index
    %c0_378 = arith.constant 0 : index
    %304 = vector.load %arg9[%c9_377, %c0_378] : memref<12x16xf32, #tpu.memory_space<vmem>>, vector<1x16xf32>
    %cst_379 = arith.constant 0.000000e+00 : f32
    %305 = vector.broadcast %cst_379 : f32 to vector<1x16xf32>
    %c0_380 = arith.constant 0 : index
    %c0_381 = arith.constant 0 : index
    %306 = vector.load %arg13[%c0_380, %c0_381] : memref<24x64xf32, #tpu.memory_space<vmem>>, vector<1x16xf32>
    tpu.vector_store %arg13[%c0_380, %c0_381], %305 {strides = array<i32>} : memref<24x64xf32, #tpu.memory_space<vmem>>, vector<1x16xf32>,
    %c5_382 = arith.constant 5 : index
    %c0_383 = arith.constant 0 : index
    %307 = vector.load %arg13[%c5_382, %c0_383] : memref<24x64xf32, #tpu.memory_space<vmem>>, vector<1x16xf32>
    tpu.vector_store %arg13[%c5_382, %c0_383], %305 {strides = array<i32>} : memref<24x64xf32, #tpu.memory_space<vmem>>, vector<1x16xf32>,
    %c1_384 = arith.constant 1 : index
    %c0_385 = arith.constant 0 : index
    %308 = vector.load %arg13[%c1_384, %c0_385] : memref<24x64xf32, #tpu.memory_space<vmem>>, vector<4x16xf32>
    tpu.vector_store %arg13[%c1_384, %c0_385], %303 {strides = array<i32>} : memref<24x64xf32, #tpu.memory_space<vmem>>, vector<4x16xf32>,
    %c0_386 = arith.constant 0 : index
    %c0_387 = arith.constant 0 : index
    %309 = vector.load %arg13[%c0_386, %c0_387] : memref<24x64xf32, #tpu.memory_space<vmem>>, vector<4x16xf32>
    %c7_388 = arith.constant 7 : index
    %c0_389 = arith.constant 0 : index
    %c0_390 = arith.constant 0 : index
    %c0_391 = arith.constant 0 : index
    %310 = vector.load %arg7[%c7_388, %c0_389, %c0_390, %c0_391] : memref<9x3x16x16xf32, #tpu.memory_space<vmem>>, vector<1x1x16x16xf32>
    %311 = vector.shape_cast %310 : vector<1x1x16x16xf32> to vector<16x16xf32>
    %cst_392 = arith.constant dense<0.000000e+00> : vector<4x16xf32>
    %312 = tpu.matmul %309, %311, %cst_392 {dimension_numbers = #tpu.dot_dimension_numbers<[1], [0], [0], [1], [0, 0, 1, 1], [], []>} : vector<4x16xf32>, vector<16x16xf32>, vector<4x16xf32> -> vector<4x16xf32>
    %c1_393 = arith.constant 1 : index
    %c0_394 = arith.constant 0 : index
    %313 = vector.load %arg13[%c1_393, %c0_394] : memref<24x64xf32, #tpu.memory_space<vmem>>, vector<4x16xf32>
    %c7_395 = arith.constant 7 : index
    %c1_396 = arith.constant 1 : index
    %c0_397 = arith.constant 0 : index
    %c0_398 = arith.constant 0 : index
    %314 = vector.load %arg7[%c7_395, %c1_396, %c0_397, %c0_398] : memref<9x3x16x16xf32, #tpu.memory_space<vmem>>, vector<1x1x16x16xf32>
    %315 = vector.shape_cast %314 : vector<1x1x16x16xf32> to vector<16x16xf32>
    %cst_399 = arith.constant dense<0.000000e+00> : vector<4x16xf32>
    %316 = tpu.matmul %313, %315, %cst_399 {dimension_numbers = #tpu.dot_dimension_numbers<[1], [0], [0], [1], [0, 0, 1, 1], [], []>} : vector<4x16xf32>, vector<16x16xf32>, vector<4x16xf32> -> vector<4x16xf32>
    %317 = arith.addf %312, %316 : vector<4x16xf32>
    %c2_400 = arith.constant 2 : index
    %c0_401 = arith.constant 0 : index
    %318 = vector.load %arg13[%c2_400, %c0_401] : memref<24x64xf32, #tpu.memory_space<vmem>>, vector<4x16xf32>
    %c7_402 = arith.constant 7 : index
    %c2_403 = arith.constant 2 : index
    %c0_404 = arith.constant 0 : index
    %c0_405 = arith.constant 0 : index
    %319 = vector.load %arg7[%c7_402, %c2_403, %c0_404, %c0_405] : memref<9x3x16x16xf32, #tpu.memory_space<vmem>>, vector<1x1x16x16xf32>
    %320 = vector.shape_cast %319 : vector<1x1x16x16xf32> to vector<16x16xf32>
    %cst_406 = arith.constant dense<0.000000e+00> : vector<4x16xf32>
    %321 = tpu.matmul %318, %320, %cst_406 {dimension_numbers = #tpu.dot_dimension_numbers<[1], [0], [0], [1], [0, 0, 1, 1], [], []>} : vector<4x16xf32>, vector<16x16xf32>, vector<4x16xf32> -> vector<4x16xf32>
    %322 = arith.addf %317, %321 : vector<4x16xf32>
    %323 = vector.broadcast %304 : vector<1x16xf32> to vector<4x16xf32>
    %324 = arith.addf %322, %323 : vector<4x16xf32>
    %cst_407 = arith.constant 0.000000e+00 : f32
    %325 = vector.broadcast %cst_407 : f32 to vector<4x16xf32>
    %326 = arith.maximumf %324, %325 : vector<4x16xf32>
    %327 = arith.addf %326, %274 : vector<4x16xf32>
    %c10 = arith.constant 10 : index
    %c0_408 = arith.constant 0 : index
    %328 = vector.load %arg9[%c10, %c0_408] : memref<12x16xf32, #tpu.memory_space<vmem>>, vector<1x16xf32>
    %cst_409 = arith.constant 0.000000e+00 : f32
    %329 = vector.broadcast %cst_409 : f32 to vector<1x16xf32>
    %c0_410 = arith.constant 0 : index
    %c0_411 = arith.constant 0 : index
    %330 = vector.load %arg13[%c0_410, %c0_411] : memref<24x64xf32, #tpu.memory_space<vmem>>, vector<1x16xf32>
    tpu.vector_store %arg13[%c0_410, %c0_411], %329 {strides = array<i32>} : memref<24x64xf32, #tpu.memory_space<vmem>>, vector<1x16xf32>,
    %c5_412 = arith.constant 5 : index
    %c0_413 = arith.constant 0 : index
    %331 = vector.load %arg13[%c5_412, %c0_413] : memref<24x64xf32, #tpu.memory_space<vmem>>, vector<1x16xf32>
    tpu.vector_store %arg13[%c5_412, %c0_413], %329 {strides = array<i32>} : memref<24x64xf32, #tpu.memory_space<vmem>>, vector<1x16xf32>,
    %c1_414 = arith.constant 1 : index
    %c0_415 = arith.constant 0 : index
    %332 = vector.load %arg13[%c1_414, %c0_415] : memref<24x64xf32, #tpu.memory_space<vmem>>, vector<4x16xf32>
    tpu.vector_store %arg13[%c1_414, %c0_415], %327 {strides = array<i32>} : memref<24x64xf32, #tpu.memory_space<vmem>>, vector<4x16xf32>,
    %c0_416 = arith.constant 0 : index
    %c0_417 = arith.constant 0 : index
    %333 = vector.load %arg13[%c0_416, %c0_417] : memref<24x64xf32, #tpu.memory_space<vmem>>, vector<4x16xf32>
    %c8_418 = arith.constant 8 : index
    %c0_419 = arith.constant 0 : index
    %c0_420 = arith.constant 0 : index
    %c0_421 = arith.constant 0 : index
    %334 = vector.load %arg7[%c8_418, %c0_419, %c0_420, %c0_421] : memref<9x3x16x16xf32, #tpu.memory_space<vmem>>, vector<1x1x16x16xf32>
    %335 = vector.shape_cast %334 : vector<1x1x16x16xf32> to vector<16x16xf32>
    %cst_422 = arith.constant dense<0.000000e+00> : vector<4x16xf32>
    %336 = tpu.matmul %333, %335, %cst_422 {dimension_numbers = #tpu.dot_dimension_numbers<[1], [0], [0], [1], [0, 0, 1, 1], [], []>} : vector<4x16xf32>, vector<16x16xf32>, vector<4x16xf32> -> vector<4x16xf32>
    %c1_423 = arith.constant 1 : index
    %c0_424 = arith.constant 0 : index
    %337 = vector.load %arg13[%c1_423, %c0_424] : memref<24x64xf32, #tpu.memory_space<vmem>>, vector<4x16xf32>
    %c8_425 = arith.constant 8 : index
    %c1_426 = arith.constant 1 : index
    %c0_427 = arith.constant 0 : index
    %c0_428 = arith.constant 0 : index
    %338 = vector.load %arg7[%c8_425, %c1_426, %c0_427, %c0_428] : memref<9x3x16x16xf32, #tpu.memory_space<vmem>>, vector<1x1x16x16xf32>
    %339 = vector.shape_cast %338 : vector<1x1x16x16xf32> to vector<16x16xf32>
    %cst_429 = arith.constant dense<0.000000e+00> : vector<4x16xf32>
    %340 = tpu.matmul %337, %339, %cst_429 {dimension_numbers = #tpu.dot_dimension_numbers<[1], [0], [0], [1], [0, 0, 1, 1], [], []>} : vector<4x16xf32>, vector<16x16xf32>, vector<4x16xf32> -> vector<4x16xf32>
    %341 = arith.addf %336, %340 : vector<4x16xf32>
    %c2_430 = arith.constant 2 : index
    %c0_431 = arith.constant 0 : index
    %342 = vector.load %arg13[%c2_430, %c0_431] : memref<24x64xf32, #tpu.memory_space<vmem>>, vector<4x16xf32>
    %c8_432 = arith.constant 8 : index
    %c2_433 = arith.constant 2 : index
    %c0_434 = arith.constant 0 : index
    %c0_435 = arith.constant 0 : index
    %343 = vector.load %arg7[%c8_432, %c2_433, %c0_434, %c0_435] : memref<9x3x16x16xf32, #tpu.memory_space<vmem>>, vector<1x1x16x16xf32>
    %344 = vector.shape_cast %343 : vector<1x1x16x16xf32> to vector<16x16xf32>
    %cst_436 = arith.constant dense<0.000000e+00> : vector<4x16xf32>
    %345 = tpu.matmul %342, %344, %cst_436 {dimension_numbers = #tpu.dot_dimension_numbers<[1], [0], [0], [1], [0, 0, 1, 1], [], []>} : vector<4x16xf32>, vector<16x16xf32>, vector<4x16xf32> -> vector<4x16xf32>
    %346 = arith.addf %341, %345 : vector<4x16xf32>
    %347 = vector.broadcast %328 : vector<1x16xf32> to vector<4x16xf32>
    %348 = arith.addf %346, %347 : vector<4x16xf32>
    %cst_437 = arith.constant 0.000000e+00 : f32
    %349 = vector.broadcast %cst_437 : f32 to vector<4x16xf32>
    %350 = arith.maximumf %348, %349 : vector<4x16xf32>
    %c11 = arith.constant 11 : index
    %c0_438 = arith.constant 0 : index
    %351 = vector.load %arg9[%c11, %c0_438] : memref<12x16xf32, #tpu.memory_space<vmem>>, vector<1x16xf32>
    %cst_439 = arith.constant 0.000000e+00 : f32
    %352 = vector.broadcast %cst_439 : f32 to vector<1x16xf32>
    %c0_440 = arith.constant 0 : index
    %c0_441 = arith.constant 0 : index
    %353 = vector.load %arg13[%c0_440, %c0_441] : memref<24x64xf32, #tpu.memory_space<vmem>>, vector<1x16xf32>
    tpu.vector_store %arg13[%c0_440, %c0_441], %352 {strides = array<i32>} : memref<24x64xf32, #tpu.memory_space<vmem>>, vector<1x16xf32>,
    %c5_442 = arith.constant 5 : index
    %c0_443 = arith.constant 0 : index
    %354 = vector.load %arg13[%c5_442, %c0_443] : memref<24x64xf32, #tpu.memory_space<vmem>>, vector<1x16xf32>
    tpu.vector_store %arg13[%c5_442, %c0_443], %352 {strides = array<i32>} : memref<24x64xf32, #tpu.memory_space<vmem>>, vector<1x16xf32>,
    %c1_444 = arith.constant 1 : index
    %c0_445 = arith.constant 0 : index
    %355 = vector.load %arg13[%c1_444, %c0_445] : memref<24x64xf32, #tpu.memory_space<vmem>>, vector<4x16xf32>
    tpu.vector_store %arg13[%c1_444, %c0_445], %350 {strides = array<i32>} : memref<24x64xf32, #tpu.memory_space<vmem>>, vector<4x16xf32>,
    %c0_446 = arith.constant 0 : index
    %c0_447 = arith.constant 0 : index
    %356 = tpu.strided_load %arg13[%c0_446, %c0_447] {strides = array<i32: 2, 1>} : memref<24x64xf32, #tpu.memory_space<vmem>>, vector<2x16xf32>
    %c2_448 = arith.constant 2 : index
    %c0_449 = arith.constant 0 : index
    %c0_450 = arith.constant 0 : index
    %c0_451 = arith.constant 0 : index
    %357 = vector.load %arg8[%c2_448, %c0_449, %c0_450, %c0_451] : memref<3x4x16x16xf32, #tpu.memory_space<vmem>>, vector<1x1x16x16xf32>
    %358 = vector.shape_cast %357 : vector<1x1x16x16xf32> to vector<16x16xf32>
    %cst_452 = arith.constant dense<0.000000e+00> : vector<2x16xf32>
    %359 = tpu.matmul %356, %358, %cst_452 {dimension_numbers = #tpu.dot_dimension_numbers<[1], [0], [0], [1], [0, 0, 1, 1], [], []>} : vector<2x16xf32>, vector<16x16xf32>, vector<2x16xf32> -> vector<2x16xf32>
    %c1_453 = arith.constant 1 : index
    %c0_454 = arith.constant 0 : index
    %360 = tpu.strided_load %arg13[%c1_453, %c0_454] {strides = array<i32: 2, 1>} : memref<24x64xf32, #tpu.memory_space<vmem>>, vector<2x16xf32>
    %c2_455 = arith.constant 2 : index
    %c1_456 = arith.constant 1 : index
    %c0_457 = arith.constant 0 : index
    %c0_458 = arith.constant 0 : index
    %361 = vector.load %arg8[%c2_455, %c1_456, %c0_457, %c0_458] : memref<3x4x16x16xf32, #tpu.memory_space<vmem>>, vector<1x1x16x16xf32>
    %362 = vector.shape_cast %361 : vector<1x1x16x16xf32> to vector<16x16xf32>
    %cst_459 = arith.constant dense<0.000000e+00> : vector<2x16xf32>
    %363 = tpu.matmul %360, %362, %cst_459 {dimension_numbers = #tpu.dot_dimension_numbers<[1], [0], [0], [1], [0, 0, 1, 1], [], []>} : vector<2x16xf32>, vector<16x16xf32>, vector<2x16xf32> -> vector<2x16xf32>
    %364 = arith.addf %359, %363 : vector<2x16xf32>
    %c2_460 = arith.constant 2 : index
    %c0_461 = arith.constant 0 : index
    %365 = tpu.strided_load %arg13[%c2_460, %c0_461] {strides = array<i32: 2, 1>} : memref<24x64xf32, #tpu.memory_space<vmem>>, vector<2x16xf32>
    %c2_462 = arith.constant 2 : index
    %c2_463 = arith.constant 2 : index
    %c0_464 = arith.constant 0 : index
    %c0_465 = arith.constant 0 : index
    %366 = vector.load %arg8[%c2_462, %c2_463, %c0_464, %c0_465] : memref<3x4x16x16xf32, #tpu.memory_space<vmem>>, vector<1x1x16x16xf32>
    %367 = vector.shape_cast %366 : vector<1x1x16x16xf32> to vector<16x16xf32>
    %cst_466 = arith.constant dense<0.000000e+00> : vector<2x16xf32>
    %368 = tpu.matmul %365, %367, %cst_466 {dimension_numbers = #tpu.dot_dimension_numbers<[1], [0], [0], [1], [0, 0, 1, 1], [], []>} : vector<2x16xf32>, vector<16x16xf32>, vector<2x16xf32> -> vector<2x16xf32>
    %369 = arith.addf %364, %368 : vector<2x16xf32>
    %c3_467 = arith.constant 3 : index
    %c0_468 = arith.constant 0 : index
    %370 = tpu.strided_load %arg13[%c3_467, %c0_468] {strides = array<i32: 2, 1>} : memref<24x64xf32, #tpu.memory_space<vmem>>, vector<2x16xf32>
    %c2_469 = arith.constant 2 : index
    %c3_470 = arith.constant 3 : index
    %c0_471 = arith.constant 0 : index
    %c0_472 = arith.constant 0 : index
    %371 = vector.load %arg8[%c2_469, %c3_470, %c0_471, %c0_472] : memref<3x4x16x16xf32, #tpu.memory_space<vmem>>, vector<1x1x16x16xf32>
    %372 = vector.shape_cast %371 : vector<1x1x16x16xf32> to vector<16x16xf32>
    %cst_473 = arith.constant dense<0.000000e+00> : vector<2x16xf32>
    %373 = tpu.matmul %370, %372, %cst_473 {dimension_numbers = #tpu.dot_dimension_numbers<[1], [0], [0], [1], [0, 0, 1, 1], [], []>} : vector<2x16xf32>, vector<16x16xf32>, vector<2x16xf32> -> vector<2x16xf32>
    %374 = arith.addf %369, %373 : vector<2x16xf32>
    %375 = vector.broadcast %351 : vector<1x16xf32> to vector<2x16xf32>
    %376 = arith.addf %374, %375 : vector<2x16xf32>
    %cst_474 = arith.constant 0.000000e+00 : f32
    %377 = vector.broadcast %cst_474 : f32 to vector<2x16xf32>
    %378 = arith.maximumf %376, %377 : vector<2x16xf32>
    %379 = arith.addf %378, %280 : vector<2x16xf32>
    %cst_475 = arith.constant dense<0.000000e+00> : vector<16xf32>
    %380 = vector.multi_reduction <add>, %379, %cst_475 [0] : vector<2x16xf32> to vector<16xf32>
    %381 = vector.shape_cast %380 : vector<16xf32> to vector<1x16xf32>
    %cst_476 = arith.constant 2.000000e+00 : f32
    %382 = vector.broadcast %cst_476 : f32 to vector<1x16xf32>
    %383 = arith.divf %381, %382 : vector<1x16xf32>
    %c0_477 = arith.constant 0 : index
    %c0_478 = arith.constant 0 : index
    %c0_479 = arith.constant 0 : index
    %384 = vector.load %arg10[%c0_477, %c0_478, %c0_479] : memref<4x16x16xf32, #tpu.memory_space<vmem>>, vector<1x16x16xf32>
    %385 = vector.shape_cast %384 : vector<1x16x16xf32> to vector<16x16xf32>
    %c1_480 = arith.constant 1 : index
    %c0_481 = arith.constant 0 : index
    %c0_482 = arith.constant 0 : index
    %386 = vector.load %arg10[%c1_480, %c0_481, %c0_482] : memref<4x16x16xf32, #tpu.memory_space<vmem>>, vector<1x16x16xf32>
    %387 = vector.shape_cast %386 : vector<1x16x16xf32> to vector<16x16xf32>
    %c0_483 = arith.constant 0 : index
    %c0_484 = arith.constant 0 : index
    %388 = vector.load %arg11[%c0_483, %c0_484] : memref<4x16xf32, #tpu.memory_space<vmem>>, vector<1x16xf32>
    %c1_485 = arith.constant 1 : index
    %c0_486 = arith.constant 0 : index
    %389 = vector.load %arg11[%c1_485, %c0_486] : memref<4x16xf32, #tpu.memory_space<vmem>>, vector<1x16xf32>
    %cst_487 = arith.constant dense<0.000000e+00> : vector<1x16xf32>
    %390 = tpu.matmul %383, %385, %cst_487 {dimension_numbers = #tpu.dot_dimension_numbers<[1], [0], [0], [1], [0, 0, 1, 1], [], []>} : vector<1x16xf32>, vector<16x16xf32>, vector<1x16xf32> -> vector<1x16xf32>
    %391 = arith.addf %390, %388 : vector<1x16xf32>
    %cst_488 = arith.constant 0.000000e+00 : f32
    %392 = vector.broadcast %cst_488 : f32 to vector<1x16xf32>
    %393 = arith.maximumf %391, %392 : vector<1x16xf32>
    %cst_489 = arith.constant dense<0.000000e+00> : vector<1x16xf32>
    %394 = tpu.matmul %393, %387, %cst_489 {dimension_numbers = #tpu.dot_dimension_numbers<[1], [0], [0], [1], [0, 0, 1, 1], [], []>} : vector<1x16xf32>, vector<16x16xf32>, vector<1x16xf32> -> vector<1x16xf32>
    %395 = arith.addf %394, %389 : vector<1x16xf32>
    %cst_490 = arith.constant 0.000000e+00 : f32
    %396 = vector.broadcast %cst_490 : f32 to vector<1x16xf32>
    %397 = arith.maximumf %395, %396 : vector<1x16xf32>
    %398 = arith.addf %397, %383 : vector<1x16xf32>
    %c2_491 = arith.constant 2 : index
    %c0_492 = arith.constant 0 : index
    %c0_493 = arith.constant 0 : index
    %399 = vector.load %arg10[%c2_491, %c0_492, %c0_493] : memref<4x16x16xf32, #tpu.memory_space<vmem>>, vector<1x16x16xf32>
    %400 = vector.shape_cast %399 : vector<1x16x16xf32> to vector<16x16xf32>
    %c3_494 = arith.constant 3 : index
    %c0_495 = arith.constant 0 : index
    %c0_496 = arith.constant 0 : index
    %401 = vector.load %arg10[%c3_494, %c0_495, %c0_496] : memref<4x16x16xf32, #tpu.memory_space<vmem>>, vector<1x16x16xf32>
    %402 = vector.shape_cast %401 : vector<1x16x16xf32> to vector<16x16xf32>
    %c2_497 = arith.constant 2 : index
    %c0_498 = arith.constant 0 : index
    %403 = vector.load %arg11[%c2_497, %c0_498] : memref<4x16xf32, #tpu.memory_space<vmem>>, vector<1x16xf32>
    %c3_499 = arith.constant 3 : index
    %c0_500 = arith.constant 0 : index
    %404 = vector.load %arg11[%c3_499, %c0_500] : memref<4x16xf32, #tpu.memory_space<vmem>>, vector<1x16xf32>
    %cst_501 = arith.constant dense<0.000000e+00> : vector<1x16xf32>
    %405 = tpu.matmul %398, %400, %cst_501 {dimension_numbers = #tpu.dot_dimension_numbers<[1], [0], [0], [1], [0, 0, 1, 1], [], []>} : vector<1x16xf32>, vector<16x16xf32>, vector<1x16xf32> -> vector<1x16xf32>
    %406 = arith.addf %405, %403 : vector<1x16xf32>
    %cst_502 = arith.constant 0.000000e+00 : f32
    %407 = vector.broadcast %cst_502 : f32 to vector<1x16xf32>
    %408 = arith.maximumf %406, %407 : vector<1x16xf32>
    %cst_503 = arith.constant dense<0.000000e+00> : vector<1x16xf32>
    %409 = tpu.matmul %408, %402, %cst_503 {dimension_numbers = #tpu.dot_dimension_numbers<[1], [0], [0], [1], [0, 0, 1, 1], [], []>} : vector<1x16xf32>, vector<16x16xf32>, vector<1x16xf32> -> vector<1x16xf32>
    %410 = arith.addf %409, %404 : vector<1x16xf32>
    %cst_504 = arith.constant 0.000000e+00 : f32
    %411 = vector.broadcast %cst_504 : f32 to vector<1x16xf32>
    %412 = arith.maximumf %410, %411 : vector<1x16xf32>
    %413 = arith.addf %412, %398 : vector<1x16xf32>
    %c0_505 = arith.constant 0 : index
    %c0_506 = arith.constant 0 : index
    %c0_507 = arith.constant 0 : index
    %414 = vector.load %arg12[%c0_505, %c0_506, %c0_507] : memref<1x1x16xf32, #tpu.memory_space<vmem>>, vector<1x1x16xf32>
    %415 = vector.shape_cast %414 : vector<1x1x16xf32> to vector<1x16xf32>
    %416 = vector.shape_cast %413 : vector<1x16xf32> to vector<1x1x16xf32>
    tpu.vector_store %arg12[%c0_505, %c0_506, %c0_507], %416 {strides = array<i32>} : memref<1x1x16xf32, #tpu.memory_space<vmem>>, vector<1x1x16xf32>,
    return
  }
  func.func @transform_0(%arg0: i32) -> (i32, i32, i32) {
    %c0_i32 = arith.constant 0 : i32
    %c0_i32_0 = arith.constant 0 : i32
    %c0_i32_1 = arith.constant 0 : i32
    return %arg0, %c0_i32, %c0_i32_0 : i32, i32, i32
  }
  func.func @transform_1(%arg0: i32) -> (i32, i32, i32) {
    %c0_i32 = arith.constant 0 : i32
    %c0_i32_0 = arith.constant 0 : i32
    %c0_i32_1 = arith.constant 0 : i32
    %c0_i32_2 = arith.constant 0 : i32
    return %c0_i32, %c0_i32_0, %c0_i32_1 : i32, i32, i32
  }
  func.func @transform_2(%arg0: i32) -> (i32, i32) {
    %c0_i32 = arith.constant 0 : i32
    %c0_i32_0 = arith.constant 0 : i32
    %c0_i32_1 = arith.constant 0 : i32
    return %c0_i32, %c0_i32_0 : i32, i32
  }
  func.func @transform_3(%arg0: i32) -> (i32, i32) {
    %c0_i32 = arith.constant 0 : i32
    %c0_i32_0 = arith.constant 0 : i32
    %c0_i32_1 = arith.constant 0 : i32
    return %c0_i32, %c0_i32_0 : i32, i32
  }
  func.func @transform_4(%arg0: i32) -> (i32, i32) {
    %c0_i32 = arith.constant 0 : i32
    %c0_i32_0 = arith.constant 0 : i32
    %c0_i32_1 = arith.constant 0 : i32
    return %c0_i32, %c0_i32_0 : i32, i32
  }
  func.func @transform_5(%arg0: i32) -> (i32, i32) {
    %c0_i32 = arith.constant 0 : i32
    %c0_i32_0 = arith.constant 0 : i32
    %c0_i32_1 = arith.constant 0 : i32
    return %c0_i32, %c0_i32_0 : i32, i32
  }
  func.func @transform_6(%arg0: i32) -> (i32, i32, i32, i32) {
    %c0_i32 = arith.constant 0 : i32
    %c0_i32_0 = arith.constant 0 : i32
    %c0_i32_1 = arith.constant 0 : i32
    %c0_i32_2 = arith.constant 0 : i32
    %c0_i32_3 = arith.constant 0 : i32
    return %c0_i32, %c0_i32_0, %c0_i32_1, %c0_i32_2 : i32, i32, i32, i32
  }
  func.func @transform_7(%arg0: i32) -> (i32, i32, i32, i32) {
    %c0_i32 = arith.constant 0 : i32
    %c0_i32_0 = arith.constant 0 : i32
    %c0_i32_1 = arith.constant 0 : i32
    %c0_i32_2 = arith.constant 0 : i32
    %c0_i32_3 = arith.constant 0 : i32
    return %c0_i32, %c0_i32_0, %c0_i32_1, %c0_i32_2 : i32, i32, i32, i32
  }
  func.func @transform_8(%arg0: i32) -> (i32, i32) {
    %c0_i32 = arith.constant 0 : i32
    %c0_i32_0 = arith.constant 0 : i32
    %c0_i32_1 = arith.constant 0 : i32
    return %c0_i32, %c0_i32_0 : i32, i32
  }
  func.func @transform_9(%arg0: i32) -> (i32, i32, i32) {
    %c0_i32 = arith.constant 0 : i32
    %c0_i32_0 = arith.constant 0 : i32
    %c0_i32_1 = arith.constant 0 : i32
    %c0_i32_2 = arith.constant 0 : i32
    return %c0_i32, %c0_i32_0, %c0_i32_1 : i32, i32, i32
  }
  func.func @transform_10(%arg0: i32) -> (i32, i32) {
    %c0_i32 = arith.constant 0 : i32
    %c0_i32_0 = arith.constant 0 : i32
    %c0_i32_1 = arith.constant 0 : i32
    return %c0_i32, %c0_i32_0 : i32, i32
  }
  func.func @transform_11(%arg0: i32) -> (i32, i32, i32) {
    %c0_i32 = arith.constant 0 : i32
    %c0_i32_0 = arith.constant 0 : i32
    %c0_i32_1 = arith.constant 0 : i32
    return %arg0, %c0_i32, %c0_i32_0 : i32, i32, i32
  }
}

</mosaic_0001>

<llo_original>
// kernel: speaker_encoder_forward.1
$region0: #{speaker_encoder_forward.1}
  #allocation0 [shape = 'u32[]', space=smem, size = 0x4, offset = 0x4, fixed_abs, tag = 'smem constant byte address 0x4 - core index']
  #allocation1 [shape = 'u32[144,128]{1,0:T(1,128)}', space=vmem, size = 0x12000, scoped, tag = 'internal scratch']
  #allocation2 [shape = 'f32[24,64]{1,0:T(8,128)}', space=vmem, size = 0x3000, scoped, tag = 'scratch operand']
  %s0 = inlined_call_operand.vmem [shape: f32[2,16,64], index: 0, kind: input, shape index: {}]
  %s1 = inlined_call_operand.hbm [shape: f32[9,64,64], index: 1, kind: input, shape index: {}]
  %s2 = inlined_call_operand.vmem [shape: f32[1,64], index: 2, kind: input, shape index: {}]
  %s3 = inlined_call_operand.vmem [shape: f32[64,16], index: 3, kind: input, shape index: {}]
  %s4 = inlined_call_operand.vmem [shape: f32[64,16], index: 4, kind: input, shape index: {}]
  %s5 = inlined_call_operand.vmem [shape: f32[1,16], index: 5, kind: input, shape index: {}]
  %s6 = inlined_call_operand.hbm [shape: f32[9,3,16,16], index: 6, kind: input, shape index: {}]
  %s7 = inlined_call_operand.hbm [shape: f32[3,4,16,16], index: 7, kind: input, shape index: {}]
  %s8 = inlined_call_operand.vmem [shape: f32[12,16], index: 8, kind: input, shape index: {}]
  %s9 = inlined_call_operand.vmem [shape: f32[4,16,16], index: 9, kind: input, shape index: {}]
  %s10 = inlined_call_operand.vmem [shape: f32[4,16], index: 10, kind: input, shape index: {}]
  %s11 = inlined_call_operand.hbm [shape: f32[2,1,16], index: 11, kind: output, shape index: {}]
  %s12 = sld [smem:[#allocation0]]
  $region89: #{speaker_encoder_forward.1} parent=0
    _
  %s14 = ssub.s32 1, %s12
  %s15 = scalar_select 0, %s14, %s12
  $region1: #{speaker_encoder_forward.1} parent=0
    #allocation3 [shape = 'u8[294912]{0}', space=vmem, size = 0x48000, scoped, tag = 'input window, operand 1, single buffered']
    #allocation4 [shape = 's32[2]{0}', space=sflag, size = 0x8, scoped, tag = 'scoped memory for speaker_encoder_forward.1']
    #allocation5 [shape = 's32[2]{0}', space=sflag, size = 0x8, scoped, tag = 'scoped memory for speaker_encoder_forward.1']
    #allocation6 [shape = 'u8[221184]{0}', space=vmem, size = 0x36000, scoped, tag = 'input window, operand 6, single buffered']
    #allocation7 [shape = 's32[1]{0}', space=sflag, size = 0x4, scoped, tag = 'scoped memory for speaker_encoder_forward.1']
    #allocation8 [shape = 'u8[98304]{0}', space=vmem, size = 0x18000, scoped, tag = 'input window, operand 7, single buffered']
    #allocation9 [shape = 'u8[1024]{0}', space=vmem, size = 0x400, scoped, tag = 'output window, operand 0']
    %16 = vsyncpa [#allocation4], 0
    %17 = vsyncpa [#allocation7], 0
    %18 = vsyncpa [#allocation5], 0
    %s19 = scalar_lea.sflag [#allocation5], 1
    %20 = vsyncpa %s19, 0
    loop: start=0, step=1, limit=4
    $region2: #{speaker_encoder_forward.1} parent=1 // loop_pre_header
      _
    $region3: #{speaker_encoder_forward.1} parent=1 // loop_header
      %s22 = sphi 0, %s26
      %p23 = scmp.ge.s32.totalorder %s22, 4
      %s32 = sphi 0, %s34
      %s35 = sphi 0, %s32
      %s36 = sphi 0, %s35
      %s52 = sphi 0, %s36
      %s56 = sphi 0, %s56
      %s58 = sphi 0, %s56
      %s59 = sphi 0, %s58
      %s73 = sphi 0, %s59
      %s77 = sphi 0, %s77
      %s79 = sphi 0, %s77
      %s80 = sphi 0, %s79
      %s94 = sphi 0, %s80
      %s98 = sphi 0, %s98
      %s100 = sphi 0, %s98
      %s101 = sphi 0, %s100
      %s115 = sphi 0, %s101
      %s119 = sphi 0, %s119
      %s121 = sphi 0, %s119
      %s122 = sphi 0, %s121
      %s136 = sphi 0, %s122
      %s140 = sphi 0, %s140
      %s142 = sphi 0, %s140
      %s143 = sphi 0, %s142
      %s157 = sphi 0, %s143
      %s161 = sphi 0, %s161
      %s163 = sphi 0, %s161
      %s164 = sphi 0, %s163
      %s178 = sphi 0, %s164
      %s182 = sphi 0, %s182
      %s184 = sphi 0, %s182
      %s185 = sphi 0, %s184
      %s199 = sphi 0, %s185
      %s203 = sphi 0, %s203
      %s205 = sphi 0, %s203
      %s206 = sphi 0, %s205
      %s220 = sphi 0, %s206
      %s224 = sphi 0, %s224
      %s226 = sphi 0, %s224
      %s227 = sphi 0, %s226
      %s241 = sphi 0, %s227
      %s245 = sphi 0, %s245
      %s247 = sphi 0, %s245
      %s248 = sphi 0, %s247
      %s262 = sphi 0, %s248
      %s268 = sphi 0, %s270
      %s271 = sphi 0, %s268
      %s272 = sphi 0, %s271
      %s288 = sphi 0, %s272
    $region4: #{speaker_encoder_forward.1} parent=1 // loop_header_branch
      %25 = sbr.rel (%p23) target = $region8
    $region5: #{speaker_encoder_forward.1} parent=1 // loop_body
      %s27 = ssub.s32 %s22, 1
      %s28 = ssub.s32 %s22, 2
      %s29 = sadd.s32 %s22, 1
      %s30 = ssub.s32 %s22, %s29
      %p31 = scmp.eq.s32.totalorder %s30, 0
      %s33 = sadd.s32 %s32, 1
      %s34 = scalar_select %p31, %s32, %s33
      %p37 = pneg %p31
      %p38 = scmp.eq.s32.totalorder %s22, 1
      %p39 = por %p37, %p38
      %p40 = scmp.ne.s32.totalorder %s32, %s35
      %p41 = scmp.eq.s32.totalorder %s22, 0
      %p42 = por %p40, %p41
      %p43 = scmp.ne.s32.totalorder %s32, %s35
      %p44 = scmp.eq.s32.totalorder %s27, 1
      %p45 = por %p43, %p44
      %p46 = scmp.ne.s32.totalorder %s35, %s36
      %p47 = scmp.eq.s32.totalorder %s27, 0
      %p48 = por %p46, %p47
      %p49 = scmp.ne.s32.totalorder %s35, %s36
      %p50 = scmp.eq.s32.totalorder %s28, 1
      %p51 = por %p49, %p50
      %p53 = scmp.ne.s32.totalorder %s36, %s52
      %p54 = scmp.eq.s32.totalorder %s28, 0
      %p55 = por %p53, %p54
      %s57 = sadd.s32 %s56, 1
      %p60 = scmp.eq.s32.totalorder %s22, 1
      %p61 = scmp.ne.s32.totalorder %s56, %s58
      %p62 = scmp.eq.s32.totalorder %s22, 0
      %p63 = por %p61, %p62
      %p64 = scmp.ne.s32.totalorder %s56, %s58
      %p65 = scmp.eq.s32.totalorder %s27, 1
      %p66 = por %p64, %p65
      %p67 = scmp.ne.s32.totalorder %s58, %s59
      %p68 = scmp.eq.s32.totalorder %s27, 0
      %p69 = por %p67, %p68
      %p70 = scmp.ne.s32.totalorder %s58, %s59
      %p71 = scmp.eq.s32.totalorder %s28, 1
      %p72 = por %p70, %p71
      %p74 = scmp.ne.s32.totalorder %s59, %s73
      %p75 = scmp.eq.s32.totalorder %s28, 0
      %p76 = por %p74, %p75
      %s78 = sadd.s32 %s77, 1
      %p81 = scmp.eq.s32.totalorder %s22, 1
      %p82 = scmp.ne.s32.totalorder %s77, %s79
      %p83 = scmp.eq.s32.totalorder %s22, 0
      %p84 = por %p82, %p83
      %p85 = scmp.ne.s32.totalorder %s77, %s79
      %p86 = scmp.eq.s32.totalorder %s27, 1
      %p87 = por %p85, %p86
      %p88 = scmp.ne.s32.totalorder %s79, %s80
      %p89 = scmp.eq.s32.totalorder %s27, 0
      %p90 = por %p88, %p89
      %p91 = scmp.ne.s32.totalorder %s79, %s80
      %p92 = scmp.eq.s32.totalorder %s28, 1
      %p93 = por %p91, %p92
      %p95 = scmp.ne.s32.totalorder %s80, %s94
      %p96 = scmp.eq.s32.totalorder %s28, 0
      %p97 = por %p95, %p96
      %s99 = sadd.s32 %s98, 1
      %p102 = scmp.eq.s32.totalorder %s22, 1
      %p103 = scmp.ne.s32.totalorder %s98, %s100
      %p104 = scmp.eq.s32.totalorder %s22, 0
      %p105 = por %p103, %p104
      %p106 = scmp.ne.s32.totalorder %s98, %s100
      %p107 = scmp.eq.s32.totalorder %s27, 1
      %p108 = por %p106, %p107
      %p109 = scmp.ne.s32.totalorder %s100, %s101
      %p110 = scmp.eq.s32.totalorder %s27, 0
      %p111 = por %p109, %p110
      %p112 = scmp.ne.s32.totalorder %s100, %s101
      %p113 = scmp.eq.s32.totalorder %s28, 1
      %p114 = por %p112, %p113
      %p116 = scmp.ne.s32.totalorder %s101, %s115
      %p117 = scmp.eq.s32.totalorder %s28, 0
      %p118 = por %p116, %p117
      %s120 = sadd.s32 %s119, 1
      %p123 = scmp.eq.s32.totalorder %s22, 1
      %p124 = scmp.ne.s32.totalorder %s119, %s121
      %p125 = scmp.eq.s32.totalorder %s22, 0
      %p126 = por %p124, %p125
      %p127 = scmp.ne.s32.totalorder %s119, %s121
      %p128 = scmp.eq.s32.totalorder %s27, 1
      %p129 = por %p127, %p128
      %p130 = scmp.ne.s32.totalorder %s121, %s122
      %p131 = scmp.eq.s32.totalorder %s27, 0
      %p132 = por %p130, %p131
      %p133 = scmp.ne.s32.totalorder %s121, %s122
      %p134 = scmp.eq.s32.totalorder %s28, 1
      %p135 = por %p133, %p134
      %p137 = scmp.ne.s32.totalorder %s122, %s136
      %p138 = scmp.eq.s32.totalorder %s28, 0
      %p139 = por %p137, %p138
      %s141 = sadd.s32 %s140, 1
      %p144 = scmp.eq.s32.totalorder %s22, 1
      %p145 = scmp.ne.s32.totalorder %s140, %s142
      %p146 = scmp.eq.s32.totalorder %s22, 0
      %p147 = por %p145, %p146
      %p148 = scmp.ne.s32.totalorder %s140, %s142
      %p149 = scmp.eq.s32.totalorder %s27, 1
      %p150 = por %p148, %p149
      %p151 = scmp.ne.s32.totalorder %s142, %s143
      %p152 = scmp.eq.s32.totalorder %s27, 0
      %p153 = por %p151, %p152
      %p154 = scmp.ne.s32.totalorder %s142, %s143
      %p155 = scmp.eq.s32.totalorder %s28, 1
      %p156 = por %p154, %p155
      %p158 = scmp.ne.s32.totalorder %s143, %s157
      %p159 = scmp.eq.s32.totalorder %s28, 0
      %p160 = por %p158, %p159
      %s162 = sadd.s32 %s161, 1
      %p165 = scmp.eq.s32.totalorder %s22, 1
      %p166 = scmp.ne.s32.totalorder %s161, %s163
      %p167 = scmp.eq.s32.totalorder %s22, 0
      %p168 = por %p166, %p167
      %p169 = scmp.ne.s32.totalorder %s161, %s163
      %p170 = scmp.eq.s32.totalorder %s27, 1
      %p171 = por %p169, %p170
      %p172 = scmp.ne.s32.totalorder %s163, %s164
      %p173 = scmp.eq.s32.totalorder %s27, 0
      %p174 = por %p172, %p173
      %p175 = scmp.ne.s32.totalorder %s163, %s164
      %p176 = scmp.eq.s32.totalorder %s28, 1
      %p177 = por %p175, %p176
      %p179 = scmp.ne.s32.totalorder %s164, %s178
      %p180 = scmp.eq.s32.totalorder %s28, 0
      %p181 = por %p179, %p180
      %s183 = sadd.s32 %s182, 1
      %p186 = scmp.eq.s32.totalorder %s22, 1
      %p187 = scmp.ne.s32.totalorder %s182, %s184
      %p188 = scmp.eq.s32.totalorder %s22, 0
      %p189 = por %p187, %p188
      %p190 = scmp.ne.s32.totalorder %s182, %s184
      %p191 = scmp.eq.s32.totalorder %s27, 1
      %p192 = por %p190, %p191
      %p193 = scmp.ne.s32.totalorder %s184, %s185
      %p194 = scmp.eq.s32.totalorder %s27, 0
      %p195 = por %p193, %p194
      %p196 = scmp.ne.s32.totalorder %s184, %s185
      %p197 = scmp.eq.s32.totalorder %s28, 1
      %p198 = por %p196, %p197
      %p200 = scmp.ne.s32.totalorder %s185, %s199
      %p201 = scmp.eq.s32.totalorder %s28, 0
      %p202 = por %p200, %p201
      %s204 = sadd.s32 %s203, 1
      %p207 = scmp.eq.s32.totalorder %s22, 1
      %p208 = scmp.ne.s32.totalorder %s203, %s205
      %p209 = scmp.eq.s32.totalorder %s22, 0
      %p210 = por %p208, %p209
      %p211 = scmp.ne.s32.totalorder %s203, %s205
      %p212 = scmp.eq.s32.totalorder %s27, 1
      %p213 = por %p211, %p212
      %p214 = scmp.ne.s32.totalorder %s205, %s206
      %p215 = scmp.eq.s32.totalorder %s27, 0
      %p216 = por %p214, %p215
      %p217 = scmp.ne.s32.totalorder %s205, %s206
      %p218 = scmp.eq.s32.totalorder %s28, 1
      %p219 = por %p217, %p218
      %p221 = scmp.ne.s32.totalorder %s206, %s220
      %p222 = scmp.eq.s32.totalorder %s28, 0
      %p223 = por %p221, %p222
      %s225 = sadd.s32 %s224, 1
      %p228 = scmp.eq.s32.totalorder %s22, 1
      %p229 = scmp.ne.s32.totalorder %s224, %s226
      %p230 = scmp.eq.s32.totalorder %s22, 0
      %p231 = por %p229, %p230
      %p232 = scmp.ne.s32.totalorder %s224, %s226
      %p233 = scmp.eq.s32.totalorder %s27, 1
      %p234 = por %p232, %p233
      %p235 = scmp.ne.s32.totalorder %s226, %s227
      %p236 = scmp.eq.s32.totalorder %s27, 0
      %p237 = por %p235, %p236
      %p238 = scmp.ne.s32.totalorder %s226, %s227
      %p239 = scmp.eq.s32.totalorder %s28, 1
      %p240 = por %p238, %p239
      %p242 = scmp.ne.s32.totalorder %s227, %s241
      %p243 = scmp.eq.s32.totalorder %s28, 0
      %p244 = por %p242, %p243
      %s246 = sadd.s32 %s245, 1
      %p249 = scmp.eq.s32.totalorder %s22, 1
      %p250 = scmp.ne.s32.totalorder %s245, %s247
      %p251 = scmp.eq.s32.totalorder %s22, 0
      %p252 = por %p250, %p251
      %p253 = scmp.ne.s32.totalorder %s245, %s247
      %p254 = scmp.eq.s32.totalorder %s27, 1
      %p255 = por %p253, %p254
      %p256 = scmp.ne.s32.totalorder %s247, %s248
      %p257 = scmp.eq.s32.totalorder %s27, 0
      %p258 = por %p256, %p257
      %p259 = scmp.ne.s32.totalorder %s247, %s248
      %p260 = scmp.eq.s32.totalorder %s28, 1
      %p261 = por %p259, %p260
      %p263 = scmp.ne.s32.totalorder %s248, %s262
      %p264 = scmp.eq.s32.totalorder %s28, 0
      %p265 = por %p263, %p264
      %s266 = ssub.s32 %s22, %s29
      %p267 = scmp.eq.s32.totalorder %s266, 0
      %s269 = sadd.s32 %s268, 1
      %s270 = scalar_select %p267, %s268, %s269
      %p273 = pneg %p267
      %p274 = scmp.eq.s32.totalorder %s22, 1
      %p275 = por %p273, %p274
      %p276 = scmp.ne.s32.totalorder %s268, %s271
      %p277 = scmp.eq.s32.totalorder %s22, 0
      %p278 = por %p276, %p277
      %p279 = scmp.ne.s32.totalorder %s268, %s271
      %p280 = scmp.eq.s32.totalorder %s27, 1
      %p281 = por %p279, %p280
      %p282 = scmp.ne.s32.totalorder %s271, %s272
      %p283 = scmp.eq.s32.totalorder %s27, 0
      %p284 = por %p282, %p283
      %p285 = scmp.ne.s32.totalorder %s271, %s272
      %p286 = scmp.eq.s32.totalorder %s28, 1
      %p287 = por %p285, %p286
      %p289 = scmp.ne.s32.totalorder %s272, %s288
      %p290 = scmp.eq.s32.totalorder %s28, 0
      %p291 = por %p289, %p290
      %p292 = scmp.le.s32.totalorder 1, %s22
      %p293 = scmp.lt.s32.totalorder %s22, 3
      %p294 = pnand %p292, %p293
      %p295 = pneg %p294
      // Predicated region
      $region9: #{speaker_encoder_forward.1} parent=5 // pred_check
        _
      $region10: #{speaker_encoder_forward.1} parent=5 // pred_check_branch
        %297 = sbr.rel (%p294) target = $region12
      $region11: #{speaker_encoder_forward.1} parent=5 // pred_region
        %s298 = ssub.s32 %s22, 1
        // Predicated region
        $region13: #{speaker_encoder_forward.1} parent=11 // pred_check
          %p299 = pneg %p69
        $region14: #{speaker_encoder_forward.1} parent=11 // pred_check_branch
          %301 = sbr.rel (%p299) target = $region16
        $region15: #{speaker_encoder_forward.1} parent=11 // pred_region
          %s303 = ssub.s32 9216, 9216
          %304 = vsyncadd [#allocation4], %s303
          %s305 = sshll.u32 [#allocation3], 4
          %s306 = int_to_ptr.vmem [resolvable:$true] %s305
          %311 = dma.hbm_to_vmem [thread:$0]  %s1, 9216, %s306, [#allocation4], 128, 128, 8
        $region16: #{speaker_encoder_forward.1} parent=11 // pred_fallthru
          _
        // Predicated region
        $region17: #{speaker_encoder_forward.1} parent=11 // pred_check
          %p312 = pneg %p90
        $region18: #{speaker_encoder_forward.1} parent=11 // pred_check_branch
          %314 = sbr.rel (%p312) target = $region20
        $region19: #{speaker_encoder_forward.1} parent=11 // pred_region
          _
        $region20: #{speaker_encoder_forward.1} parent=11 // pred_fallthru
          _
        // Predicated region
        $region21: #{speaker_encoder_forward.1} parent=11 // pred_check
          %p315 = pneg %p111
        $region22: #{speaker_encoder_forward.1} parent=11 // pred_check_branch
          %317 = sbr.rel (%p315) target = $region24
        $region23: #{speaker_encoder_forward.1} parent=11 // pred_region
          _
        $region24: #{speaker_encoder_forward.1} parent=11 // pred_fallthru
          _
        // Predicated region
        $region25: #{speaker_encoder_forward.1} parent=11 // pred_check
          %p318 = pneg %p132
        $region26: #{speaker_encoder_forward.1} parent=11 // pred_check_branch
          %320 = sbr.rel (%p318) target = $region28
        $region27: #{speaker_encoder_forward.1} parent=11 // pred_region
          _
        $region28: #{speaker_encoder_forward.1} parent=11 // pred_fallthru
          _
        // Predicated region
        $region29: #{speaker_encoder_forward.1} parent=11 // pred_check
          %p321 = pneg %p153
        $region30: #{speaker_encoder_forward.1} parent=11 // pred_check_branch
          %323 = sbr.rel (%p321) target = $region32
        $region31: #{speaker_encoder_forward.1} parent=11 // pred_region
          _
        $region32: #{speaker_encoder_forward.1} parent=11 // pred_fallthru
          _
        // Predicated region
        $region33: #{speaker_encoder_forward.1} parent=11 // pred_check
          %p324 = pneg %p174
        $region34: #{speaker_encoder_forward.1} parent=11 // pred_check_branch
          %326 = sbr.rel (%p324) target = $region36
        $region35: #{speaker_encoder_forward.1} parent=11 // pred_region
          %s328 = ssub.s32 6912, 6912
          %329 = vsyncadd [#allocation7], %s328
          %s330 = sshll.u32 [#allocation6], 4
          %s331 = int_to_ptr.vmem [resolvable:$true] %s330
          %336 = dma.hbm_to_vmem [thread:$0]  %s6, 6912, %s331, [#allocation7], 128, 128, 8
        $region36: #{speaker_encoder_forward.1} parent=11 // pred_fallthru
          _
        // Predicated region
        $region37: #{speaker_encoder_forward.1} parent=11 // pred_check
          %p337 = pneg %p195
        $region38: #{speaker_encoder_forward.1} parent=11 // pred_check_branch
          %339 = sbr.rel (%p337) target = $region40
        $region39: #{speaker_encoder_forward.1} parent=11 // pred_region
          %s341 = ssub.s32 3072, 3072
          %342 = vsyncadd [#allocation7], %s341
          %s343 = sshll.u32 [#allocation8], 4
          %s344 = int_to_ptr.vmem [resolvable:$true] %s343
          %349 = dma.hbm_to_vmem [thread:$0]  %s7, 3072, %s344, [#allocation7], 128, 128, 8
        $region40: #{speaker_encoder_forward.1} parent=11 // pred_fallthru
          _
        // Predicated region
        $region41: #{speaker_encoder_forward.1} parent=11 // pred_check
          %p350 = pneg %p216
        $region42: #{speaker_encoder_forward.1} parent=11 // pred_check_branch
          %352 = sbr.rel (%p350) target = $region44
        $region43: #{speaker_encoder_forward.1} parent=11 // pred_region
          _
        $region44: #{speaker_encoder_forward.1} parent=11 // pred_fallthru
          _
        // Predicated region
        $region45: #{speaker_encoder_forward.1} parent=11 // pred_check
          %p353 = pneg %p237
        $region46: #{speaker_encoder_forward.1} parent=11 // pred_check_branch
          %355 = sbr.rel (%p353) target = $region48
        $region47: #{speaker_encoder_forward.1} parent=11 // pred_region
          _
        $region48: #{speaker_encoder_forward.1} parent=11 // pred_fallthru
          _
        // Predicated region
        $region49: #{speaker_encoder_forward.1} parent=11 // pred_check
          %p356 = pneg %p258
        $region50: #{speaker_encoder_forward.1} parent=11 // pred_check_branch
          %358 = sbr.rel (%p356) target = $region52
        $region51: #{speaker_encoder_forward.1} parent=11 // pred_region
          _
        $region52: #{speaker_encoder_forward.1} parent=11 // pred_fallthru
          _
      $region12: #{speaker_encoder_forward.1} parent=5 // pred_fallthru
        _
      %p359 = scmp.lt.s32.totalorder %s22, 2
      // Predicated region
      $region53: #{speaker_encoder_forward.1} parent=5 // pred_check
        %p360 = pneg %p359
      $region54: #{speaker_encoder_forward.1} parent=5 // pred_check_branch
        %362 = sbr.rel (%p360) target = $region56
      $region55: #{speaker_encoder_forward.1} parent=5 // pred_region
        // Predicated region
        $region57: #{speaker_encoder_forward.1} parent=55 // pred_check
          %p363 = pneg %p42
        $region58: #{speaker_encoder_forward.1} parent=55 // pred_check_branch
          %365 = sbr.rel (%p363) target = $region60
        $region59: #{speaker_encoder_forward.1} parent=55 // pred_region
          %p366 = scmp.lt.s32.totalorder %s22, 1
          %s367 = scalar_select %p366, %s22, 1
          %s368 = smul.addr %s367, 2
          %s369 = smul.addr %s368, 8
          %s370 = scalar_lea.vmem %s0, %s369
        $region60: #{speaker_encoder_forward.1} parent=55 // pred_fallthru
          _
      $region56: #{speaker_encoder_forward.1} parent=5 // pred_fallthru
        _
      %p371 = scmp.le.s32.totalorder 1, %s22
      %p372 = scmp.lt.s32.totalorder %s22, 3
      %p373 = pnand %p371, %p372
      %p374 = pneg %p373
      // Predicated region
      $region61: #{speaker_encoder_forward.1} parent=5 // pred_check
        _
      $region62: #{speaker_encoder_forward.1} parent=5 // pred_check_branch
        %376 = sbr.rel (%p373) target = $region64
      $region63: #{speaker_encoder_forward.1} parent=5 // pred_region
        %s377 = ssub.s32 %s22, 1
        // Predicated region
        $region65: #{speaker_encoder_forward.1} parent=63 // pred_check
          %p378 = pneg %p69
        $region66: #{speaker_encoder_forward.1} parent=63 // pred_check_branch
          %380 = sbr.rel (%p378) target = $region68
        $region67: #{speaker_encoder_forward.1} parent=63 // pred_region
          %381 = dma.done [#allocation4], 9216
        $region68: #{speaker_encoder_forward.1} parent=63 // pred_fallthru
          _
        // Predicated region
        $region69: #{speaker_encoder_forward.1} parent=63 // pred_check
          %p382 = pneg %p174
        $region70: #{speaker_encoder_forward.1} parent=63 // pred_check_branch
          %384 = sbr.rel (%p382) target = $region72
        $region71: #{speaker_encoder_forward.1} parent=63 // pred_region
          %385 = dma.done [#allocation7], 6912
        $region72: #{speaker_encoder_forward.1} parent=63 // pred_fallthru
          _
        // Predicated region
        $region73: #{speaker_encoder_forward.1} parent=63 // pred_check
          %p386 = pneg %p195
        $region74: #{speaker_encoder_forward.1} parent=63 // pred_check_branch
          %388 = sbr.rel (%p386) target = $region76
        $region75: #{speaker_encoder_forward.1} parent=63 // pred_region
          %389 = dma.done [#allocation7], 3072
        $region76: #{speaker_encoder_forward.1} parent=63 // pred_fallthru
          _
        %p390 = scmp.lt.s32.totalorder %s27, 1
        %s391 = scalar_select %p390, %s27, 1
        %s392 = smul.addr %s391, 2
        %s393 = smul.addr %s392, 8
        %s394 = scalar_lea.vmem %s0, %s393
        %p395 = pneg %p48
        %p396 = pneg %p45
        %p397 = pneg %p69
        %p398 = pneg %p66
        %p399 = pneg %p90
        %p400 = pneg %p87
        %p401 = pneg %p111
        %p402 = pneg %p108
        %p403 = pneg %p132
        %p404 = pneg %p129
        %p405 = pneg %p153
        %p406 = pneg %p150
        %p407 = pneg %p174
        %p408 = pneg %p171
        %p409 = pneg %p195
        %p410 = pneg %p192
        %p411 = pneg %p216
        %p412 = pneg %p213
        %p413 = pneg %p237
        %p414 = pneg %p234
        %p415 = pneg %p258
        %p416 = pneg %p255
        %p417 = pneg %p284
        %p418 = pneg %p281
        %s419 = sand.u32 %s271, 1
        %s420 = scalar_lea.sflag [#allocation5], %s419
        %s421 = sand.u32 %s271, 1
        %s422 = scalar_lea.vmem [#allocation9], %s421
        %p423 = scmp.lt.s32.totalorder %s27, 1
        %s424 = scalar_select %p423, %s27, 1
        %s425 = smul.addr %s424, 2
        %s426 = smul.addr %s425, 8
        %s427 = scalar_lea.vmem %s0, %s426
        %v428 = vld [vmem:[%s427] sm:$0xff]
        %v429 = vld [vmem:[%s427 + $0x8] sm:$0xff]
        %v430 = vld [vmem:[%s2] sm:$0x1]
        %vm431 = vcmask 519168
        %432 = vst.msk [vmem:[#allocation2] sm:$0xf] %vm431, 0.0
        %433 = vst.msk [vmem:[#allocation2 + $0x14] sm:$0xf] %vm431, 0.0
        %vm434 = vcmask 523264
        %435 = vst.msk [vmem:[#allocation2 + $0x4] sm:$0xff] %vm434, %v428
        %436 = vst.msk [vmem:[#allocation2 + $0xc] sm:$0xff] %vm434, %v429
        %v437 = vld [vmem:[#allocation2] sm:$0xff]
        %v438 = vld [vmem:[#allocation2 + $0x8] sm:$0xff]
        %v439 = vld [vmem:[#allocation3] sm:$0xff]
        %v440 = vld [vmem:[#allocation3 + $0x8] sm:$0xff]
        %v441 = vld [vmem:[#allocation3 + $0x10] sm:$0xff]
        %v442 = vld [vmem:[#allocation3 + $0x18] sm:$0xff]
        %v443 = vld [vmem:[#allocation3 + $0x20] sm:$0xff]
        %v444 = vld [vmem:[#allocation3 + $0x28] sm:$0xff]
        %v445 = vld [vmem:[#allocation3 + $0x30] sm:$0xff]
        %v446 = vld [vmem:[#allocation3 + $0x38] sm:$0xff]
        %v447 = vld [vmem:[#allocation2 + $0x1] sm:$0xff]
        %v448 = vld [vmem:[#allocation2 + $0x9] sm:$0xff]
        %s449 = scalar_lea.vmem [#allocation3], 64
        %v450 = vld [vmem:[%s449] sm:$0xff]
        %v451 = vld [vmem:[%s449 + $0x8] sm:$0xff]
        %v452 = vld [vmem:[%s449 + $0x10] sm:$0xff]
        %v453 = vld [vmem:[%s449 + $0x18] sm:$0xff]
        %v454 = vld [vmem:[%s449 + $0x20] sm:$0xff]
        %v455 = vld [vmem:[%s449 + $0x28] sm:$0xff]
        %v456 = vld [vmem:[%s449 + $0x30] sm:$0xff]
        %v457 = vld [vmem:[%s449 + $0x38] sm:$0xff]
        %v459 = vsel %vm434, %v447, 0
        %v462 = vsel %vm434, %v448, 0
        %464 = vmatprep.subr.mxu0 0.0
        %465 = vmatpush1.msra.mxu0 %v450
        %466 = vmatprep.subr.mxu0 0.0
        %467 = vmatpush1.msra.mxu0 %v451
        %468 = vmatprep.subr.mxu0 0.0
        %469 = vmatpush1.msra.mxu0 %v452
        %470 = vmatprep.subr.mxu0 0.0
        %471 = vmatpush1.msra.mxu0 %v453
        %472 = vmatprep.subr.mxu0 0.0
        %473 = vmatpush1.msra.mxu0 %v454
        %474 = vmatprep.subr.mxu0 0.0
        %475 = vmatpush1.msra.mxu0 %v455
        %476 = vmatprep.subr.mxu0 0.0
        %477 = vmatpush1.msra.mxu0 %v456
        %478 = vmatprep.subr.mxu0 0.0
        %479 = vmatpush1.msra.mxu0 %v457
        %480 = vmatprep.subr.mxu0 0.0
        %481 = vmatpush1.msra.mxu0 0.0
        %482 = vmatprep.subr.mxu0 0.0
        %483 = vmatpush1.msra.mxu0 0.0
        %484 = vmatprep.subr.mxu0 0.0
        %485 = vmatpush1.msra.mxu0 0.0
        %486 = vmatprep.subr.mxu0 0.0
        %487 = vmatpush1.msra.mxu0 0.0
        %488 = vmatprep.subr.mxu0 0.0
        %489 = vmatpush1.msra.mxu0 0.0
        %490 = vmatprep.subr.mxu0 0.0
        %491 = vmatpush1.msra.mxu0 0.0
        %492 = vmatprep.subr.mxu0 0.0
        %493 = vmatpush1.msra.mxu0 0.0
        %494 = vmatprep.subr.mxu0 0.0
        %495 = vmatpush1.msra.mxu0 0.0
        %496 = vmatprep.subr.mxu0 0.0
        %497 = vmatpush1.msra.mxu0 0.0
        %498 = vmatprep.subr.mxu0 0.0
        %499 = vmatpush1.msra.mxu0 0.0
        %500 = vmatprep.subr.mxu0 0.0
        %501 = vmatpush1.msra.mxu0 0.0
        %502 = vmatprep.subr.mxu0 0.0
        %503 = vmatpush1.msra.mxu0 0.0
        %504 = vmatprep.subr.mxu0 0.0
        %505 = vmatpush1.msra.mxu0 0.0
        %506 = vmatprep.subr.mxu0 0.0
        %507 = vmatpush1.msra.mxu0 0.0
        %508 = vmatprep.subr.mxu0 0.0
        %509 = vmatpush1.msra.mxu0 0.0
        %510 = vmatprep.subr.mxu0 0.0
        %511 = vmatpush1.msra.mxu0 0.0
        %512 = vmatprep.subr.mxu0 0.0
        %513 = vmatpush1.msra.mxu0 0.0
        %514 = vmatprep.subr.mxu0 0.0
        %515 = vmatpush1.msra.mxu0 0.0
        %516 = vmatprep.subr.mxu0 0.0
        %517 = vmatpush1.msra.mxu0 0.0
        %518 = vmatprep.subr.mxu0 0.0
        %519 = vmatpush1.msra.mxu0 0.0
        %520 = vmatprep.subr.mxu0 0.0
        %521 = vmatpush1.msra.mxu0 0.0
        %522 = vmatprep.subr.mxu0 0.0
        %523 = vmatpush1.msra.mxu0 0.0
        %524 = vmatprep.subr.mxu0 0.0
        %525 = vmatpush1.msra.mxu0 0.0
        %526 = vmatprep.subr.mxu0 0.0
        %527 = vmatpush1.msra.mxu0 0.0
        %528 = vmatprep.mubr.f32.mxu0 0.0
        %529 = vmatmul.mubr.f32.gmra.mrb[0].mxu0 %v459
        %v530 = vpop.f32.mrb[0].mxu0
        %v531 = vadd.f32 0.0, %v530
        %v532 = vpop.f32.mrb[0].mxu0
        %533 = vmatprep.mubr.f32.mxu0 0.0
        %534 = vmatmul.mubr.f32.gmra.mrb[0].mxu0 %v462
        %v535 = vpop.f32.mrb[0].mxu0
        %v536 = vadd.f32 0.0, %v535
        %v537 = vpop.f32.mrb[0].mxu0
        %538 = vdwg.mxu0
        %v540 = vsel %vm434, %v437, 0
        %v543 = vsel %vm434, %v438, 0
        %545 = vmatprep.subr.mxu0 0.0
        %546 = vmatpush1.msra.mxu0 %v439
        %547 = vmatprep.subr.mxu0 0.0
        %548 = vmatpush1.msra.mxu0 %v440
        %549 = vmatprep.subr.mxu0 0.0
        %550 = vmatpush1.msra.mxu0 %v441
        %551 = vmatprep.subr.mxu0 0.0
        %552 = vmatpush1.msra.mxu0 %v442
        %553 = vmatprep.subr.mxu0 0.0
        %554 = vmatpush1.msra.mxu0 %v443
        %555 = vmatprep.subr.mxu0 0.0
        %556 = vmatpush1.msra.mxu0 %v444
        %557 = vmatprep.subr.mxu0 0.0
        %558 = vmatpush1.msra.mxu0 %v445
        %559 = vmatprep.subr.mxu0 0.0
        %560 = vmatpush1.msra.mxu0 %v446
        %561 = vmatprep.subr.mxu0 0.0
        %562 = vmatpush1.msra.mxu0 0.0
        %563 = vmatprep.subr.mxu0 0.0
        %564 = vmatpush1.msra.mxu0 0.0
        %565 = vmatprep.subr.mxu0 0.0
        %566 = vmatpush1.msra.mxu0 0.0
        %567 = vmatprep.subr.mxu0 0.0
        %568 = vmatpush1.msra.mxu0 0.0
        %569 = vmatprep.subr.mxu0 0.0
        %570 = vmatpush1.msra.mxu0 0.0
        %571 = vmatprep.subr.mxu0 0.0
        %572 = vmatpush1.msra.mxu0 0.0
        %573 = vmatprep.subr.mxu0 0.0
        %574 = vmatpush1.msra.mxu0 0.0
        %575 = vmatprep.subr.mxu0 0.0
        %576 = vmatpush1.msra.mxu0 0.0
        %577 = vmatprep.subr.mxu0 0.0
        %578 = vmatpush1.msra.mxu0 0.0
        %579 = vmatprep.subr.mxu0 0.0
        %580 = vmatpush1.msra.mxu0 0.0
        %581 = vmatprep.subr.mxu0 0.0
        %582 = vmatpush1.msra.mxu0 0.0
        %583 = vmatprep.subr.mxu0 0.0
        %584 = vmatpush1.msra.mxu0 0.0
        %585 = vmatprep.subr.mxu0 0.0
        %586 = vmatpush1.msra.mxu0 0.0
        %587 = vmatprep.subr.mxu0 0.0
        %588 = vmatpush1.msra.mxu0 0.0
        %589 = vmatprep.subr.mxu0 0.0
        %590 = vmatpush1.msra.mxu0 0.0
        %591 = vmatprep.subr.mxu0 0.0
        %592 = vmatpush1.msra.mxu0 0.0
        %593 = vmatprep.subr.mxu0 0.0
        %594 = vmatpush1.msra.mxu0 0.0
        %595 = vmatprep.subr.mxu0 0.0
        %596 = vmatpush1.msra.mxu0 0.0
        %597 = vmatprep.subr.mxu0 0.0
        %598 = vmatpush1.msra.mxu0 0.0
        %599 = vmatprep.subr.mxu0 0.0
        %600 = vmatpush1.msra.mxu0 0.0
        %601 = vmatprep.subr.mxu0 0.0
        %602 = vmatpush1.msra.mxu0 0.0
        %603 = vmatprep.subr.mxu0 0.0
        %604 = vmatpush1.msra.mxu0 0.0
        %605 = vmatprep.subr.mxu0 0.0
        %606 = vmatpush1.msra.mxu0 0.0
        %607 = vmatprep.subr.mxu0 0.0
        %608 = vmatpush1.msra.mxu0 0.0
        %609 = vmatprep.mubr.f32.mxu0 0.0
        %610 = vmatmul.mubr.f32.gmra.mrb[0].mxu0 %v540
        %v611 = vpop.f32.mrb[0].mxu0
        %v612 = vadd.f32 %v531, %v611
        %v613 = vpop.f32.mrb[0].mxu0
        %614 = vmatprep.mubr.f32.mxu0 0.0
        %615 = vmatmul.mubr.f32.gmra.mrb[0].mxu0 %v543
        %v616 = vpop.f32.mrb[0].mxu0
        %v617 = vadd.f32 %v536, %v616
        %v618 = vpop.f32.mrb[0].mxu0
        %619 = vdwg.mxu0
        %v620 = vld [vmem:[#allocation2 + $0x2] sm:$0xff]
        %v621 = vld [vmem:[#allocation2 + $0xa] sm:$0xff]
        %s622 = scalar_lea.vmem [#allocation3], 128
        %v623 = vld [vmem:[%s622] sm:$0xff]
        %v624 = vld [vmem:[%s622 + $0x8] sm:$0xff]
        %v625 = vld [vmem:[%s622 + $0x10] sm:$0xff]
        %v626 = vld [vmem:[%s622 + $0x18] sm:$0xff]
        %v627 = vld [vmem:[%s622 + $0x20] sm:$0xff]
        %v628 = vld [vmem:[%s622 + $0x28] sm:$0xff]
        %v629 = vld [vmem:[%s622 + $0x30] sm:$0xff]
        %v630 = vld [vmem:[%s622 + $0x38] sm:$0xff]
        %v632 = vsel %vm434, %v620, 0
        %v635 = vsel %vm434, %v621, 0
        %637 = vmatprep.subr.mxu0 0.0
        %638 = vmatpush1.msra.mxu0 %v623
        %639 = vmatprep.subr.mxu0 0.0
        %640 = vmatpush1.msra.mxu0 %v624
        %641 = vmatprep.subr.mxu0 0.0
        %642 = vmatpush1.msra.mxu0 %v625
        %643 = vmatprep.subr.mxu0 0.0
        %644 = vmatpush1.msra.mxu0 %v626
        %645 = vmatprep.subr.mxu0 0.0
        %646 = vmatpush1.msra.mxu0 %v627
        %647 = vmatprep.subr.mxu0 0.0
        %648 = vmatpush1.msra.mxu0 %v628
        %649 = vmatprep.subr.mxu0 0.0
        %650 = vmatpush1.msra.mxu0 %v629
        %651 = vmatprep.subr.mxu0 0.0
        %652 = vmatpush1.msra.mxu0 %v630
        %653 = vmatprep.subr.mxu0 0.0
        %654 = vmatpush1.msra.mxu0 0.0
        %655 = vmatprep.subr.mxu0 0.0
        %656 = vmatpush1.msra.mxu0 0.0
        %657 = vmatprep.subr.mxu0 0.0
        %658 = vmatpush1.msra.mxu0 0.0
        %659 = vmatprep.subr.mxu0 0.0
        %660 = vmatpush1.msra.mxu0 0.0
        %661 = vmatprep.subr.mxu0 0.0
        %662 = vmatpush1.msra.mxu0 0.0
        %663 = vmatprep.subr.mxu0 0.0
        %664 = vmatpush1.msra.mxu0 0.0
        %665 = vmatprep.subr.mxu0 0.0
        %666 = vmatpush1.msra.mxu0 0.0
        %667 = vmatprep.subr.mxu0 0.0
        %668 = vmatpush1.msra.mxu0 0.0
        %669 = vmatprep.subr.mxu0 0.0
        %670 = vmatpush1.msra.mxu0 0.0
        %671 = vmatprep.subr.mxu0 0.0
        %672 = vmatpush1.msra.mxu0 0.0
        %673 = vmatprep.subr.mxu0 0.0
        %674 = vmatpush1.msra.mxu0 0.0
        %675 = vmatprep.subr.mxu0 0.0
        %676 = vmatpush1.msra.mxu0 0.0
        %677 = vmatprep.subr.mxu0 0.0
        %678 = vmatpush1.msra.mxu0 0.0
        %679 = vmatprep.subr.mxu0 0.0
        %680 = vmatpush1.msra.mxu0 0.0
        %681 = vmatprep.subr.mxu0 0.0
        %682 = vmatpush1.msra.mxu0 0.0
        %683 = vmatprep.subr.mxu0 0.0
        %684 = vmatpush1.msra.mxu0 0.0
        %685 = vmatprep.subr.mxu0 0.0
        %686 = vmatpush1.msra.mxu0 0.0
        %687 = vmatprep.subr.mxu0 0.0
        %688 = vmatpush1.msra.mxu0 0.0
        %689 = vmatprep.subr.mxu0 0.0
        %690 = vmatpush1.msra.mxu0 0.0
        %691 = vmatprep.subr.mxu0 0.0
        %692 = vmatpush1.msra.mxu0 0.0
        %693 = vmatprep.subr.mxu0 0.0
        %694 = vmatpush1.msra.mxu0 0.0
        %695 = vmatprep.subr.mxu0 0.0
        %696 = vmatpush1.msra.mxu0 0.0
        %697 = vmatprep.subr.mxu0 0.0
        %698 = vmatpush1.msra.mxu0 0.0
        %699 = vmatprep.subr.mxu0 0.0
        %700 = vmatpush1.msra.mxu0 0.0
        %701 = vmatprep.mubr.f32.mxu0 0.0
        %702 = vmatmul.mubr.f32.gmra.mrb[0].mxu0 %v632
        %v703 = vpop.f32.mrb[0].mxu0
        %v704 = vadd.f32 0.0, %v703
        %v705 = vpop.f32.mrb[0].mxu0
        %706 = vmatprep.mubr.f32.mxu0 0.0
        %707 = vmatmul.mubr.f32.gmra.mrb[0].mxu0 %v635
        %v708 = vpop.f32.mrb[0].mxu0
        %v709 = vadd.f32 0.0, %v708
        %v710 = vpop.f32.mrb[0].mxu0
        %711 = vdwg.mxu0
        %v712 = vadd.f32 %v612, %v704
        %v713 = vadd.f32 %v617, %v709
        %v714 = vld [vmem:[#allocation2 + $0x3] sm:$0xff]
        %v715 = vld [vmem:[#allocation2 + $0xb] sm:$0xff]
        %s716 = scalar_lea.vmem [#allocation3], 192
        %v717 = vld [vmem:[%s716] sm:$0xff]
        %v718 = vld [vmem:[%s716 + $0x8] sm:$0xff]
        %v719 = vld [vmem:[%s716 + $0x10] sm:$0xff]
        %v720 = vld [vmem:[%s716 + $0x18] sm:$0xff]
        %v721 = vld [vmem:[%s716 + $0x20] sm:$0xff]
        %v722 = vld [vmem:[%s716 + $0x28] sm:$0xff]
        %v723 = vld [vmem:[%s716 + $0x30] sm:$0xff]
        %v724 = vld [vmem:[%s716 + $0x38] sm:$0xff]
        %v726 = vsel %vm434, %v714, 0
        %v729 = vsel %vm434, %v715, 0
        %731 = vmatprep.subr.mxu0 0.0
        %732 = vmatpush1.msra.mxu0 %v717
        %733 = vmatprep.subr.mxu0 0.0
        %734 = vmatpush1.msra.mxu0 %v718
        %735 = vmatprep.subr.mxu0 0.0
        %736 = vmatpush1.msra.mxu0 %v719
        %737 = vmatprep.subr.mxu0 0.0
        %738 = vmatpush1.msra.mxu0 %v720
        %739 = vmatprep.subr.mxu0 0.0
        %740 = vmatpush1.msra.mxu0 %v721
        %741 = vmatprep.subr.mxu0 0.0
        %742 = vmatpush1.msra.mxu0 %v722
        %743 = vmatprep.subr.mxu0 0.0
        %744 = vmatpush1.msra.mxu0 %v723
        %745 = vmatprep.subr.mxu0 0.0
        %746 = vmatpush1.msra.mxu0 %v724
        %747 = vmatprep.subr.mxu0 0.0
        %748 = vmatpush1.msra.mxu0 0.0
        %749 = vmatprep.subr.mxu0 0.0
        %750 = vmatpush1.msra.mxu0 0.0
        %751 = vmatprep.subr.mxu0 0.0
        %752 = vmatpush1.msra.mxu0 0.0
        %753 = vmatprep.subr.mxu0 0.0
        %754 = vmatpush1.msra.mxu0 0.0
        %755 = vmatprep.subr.mxu0 0.0
        %756 = vmatpush1.msra.mxu0 0.0
        %757 = vmatprep.subr.mxu0 0.0
        %758 = vmatpush1.msra.mxu0 0.0
        %759 = vmatprep.subr.mxu0 0.0
        %760 = vmatpush1.msra.mxu0 0.0
        %761 = vmatprep.subr.mxu0 0.0
        %762 = vmatpush1.msra.mxu0 0.0
        %763 = vmatprep.subr.mxu0 0.0
        %764 = vmatpush1.msra.mxu0 0.0
        %765 = vmatprep.subr.mxu0 0.0
        %766 = vmatpush1.msra.mxu0 0.0
        %767 = vmatprep.subr.mxu0 0.0
        %768 = vmatpush1.msra.mxu0 0.0
        %769 = vmatprep.subr.mxu0 0.0
        %770 = vmatpush1.msra.mxu0 0.0
        %771 = vmatprep.subr.mxu0 0.0
        %772 = vmatpush1.msra.mxu0 0.0
        %773 = vmatprep.subr.mxu0 0.0
        %774 = vmatpush1.msra.mxu0 0.0
        %775 = vmatprep.subr.mxu0 0.0
        %776 = vmatpush1.msra.mxu0 0.0
        %777 = vmatprep.subr.mxu0 0.0
        %778 = vmatpush1.msra.mxu0 0.0
        %779 = vmatprep.subr.mxu0 0.0
        %780 = vmatpush1.msra.mxu0 0.0
        %781 = vmatprep.subr.mxu0 0.0
        %782 = vmatpush1.msra.mxu0 0.0
        %783 = vmatprep.subr.mxu0 0.0
        %784 = vmatpush1.msra.mxu0 0.0
        %785 = vmatprep.subr.mxu0 0.0
        %786 = vmatpush1.msra.mxu0 0.0
        %787 = vmatprep.subr.mxu0 0.0
        %788 = vmatpush1.msra.mxu0 0.0
        %789 = vmatprep.subr.mxu0 0.0
        %790 = vmatpush1.msra.mxu0 0.0
        %791 = vmatprep.subr.mxu0 0.0
        %792 = vmatpush1.msra.mxu0 0.0
        %793 = vmatprep.subr.mxu0 0.0
        %794 = vmatpush1.msra.mxu0 0.0
        %795 = vmatprep.mubr.f32.mxu0 0.0
        %796 = vmatmul.mubr.f32.gmra.mrb[0].mxu0 %v726
        %v797 = vpop.f32.mrb[0].mxu0
        %v798 = vadd.f32 0.0, %v797
        %v799 = vpop.f32.mrb[0].mxu0
        %800 = vmatprep.mubr.f32.mxu0 0.0
        %801 = vmatmul.mubr.f32.gmra.mrb[0].mxu0 %v729
        %v802 = vpop.f32.mrb[0].mxu0
        %v803 = vadd.f32 0.0, %v802
        %v804 = vpop.f32.mrb[0].mxu0
        %805 = vdwg.mxu0
        %v806 = vadd.f32 %v712, %v798
        %v807 = vadd.f32 %v713, %v803
        %v808 = vld [vmem:[#allocation2 + $0x4] sm:$0xff]
        %v809 = vld [vmem:[#allocation2 + $0xc] sm:$0xff]
        %s810 = scalar_lea.vmem [#allocation3], 256
        %v811 = vld [vmem:[%s810] sm:$0xff]
        %v812 = vld [vmem:[%s810 + $0x8] sm:$0xff]
        %v813 = vld [vmem:[%s810 + $0x10] sm:$0xff]
        %v814 = vld [vmem:[%s810 + $0x18] sm:$0xff]
        %v815 = vld [vmem:[%s810 + $0x20] sm:$0xff]
        %v816 = vld [vmem:[%s810 + $0x28] sm:$0xff]
        %v817 = vld [vmem:[%s810 + $0x30] sm:$0xff]
        %v818 = vld [vmem:[%s810 + $0x38] sm:$0xff]
        %v820 = vsel %vm434, %v808, 0
        %v823 = vsel %vm434, %v809, 0
        %825 = vmatprep.subr.mxu0 0.0
        %826 = vmatpush1.msra.mxu0 %v811
        %827 = vmatprep.subr.mxu0 0.0
        %828 = vmatpush1.msra.mxu0 %v812
        %829 = vmatprep.subr.mxu0 0.0
        %830 = vmatpush1.msra.mxu0 %v813
        %831 = vmatprep.subr.mxu0 0.0
        %832 = vmatpush1.msra.mxu0 %v814
        %833 = vmatprep.subr.mxu0 0.0
        %834 = vmatpush1.msra.mxu0 %v815
        %835 = vmatprep.subr.mxu0 0.0
        %836 = vmatpush1.msra.mxu0 %v816
        %837 = vmatprep.subr.mxu0 0.0
        %838 = vmatpush1.msra.mxu0 %v817
        %839 = vmatprep.subr.mxu0 0.0
        %840 = vmatpush1.msra.mxu0 %v818
        %841 = vmatprep.subr.mxu0 0.0
        %842 = vmatpush1.msra.mxu0 0.0
        %843 = vmatprep.subr.mxu0 0.0
        %844 = vmatpush1.msra.mxu0 0.0
        %845 = vmatprep.subr.mxu0 0.0
        %846 = vmatpush1.msra.mxu0 0.0
        %847 = vmatprep.subr.mxu0 0.0
        %848 = vmatpush1.msra.mxu0 0.0
        %849 = vmatprep.subr.mxu0 0.0
        %850 = vmatpush1.msra.mxu0 0.0
        %851 = vmatprep.subr.mxu0 0.0
        %852 = vmatpush1.msra.mxu0 0.0
        %853 = vmatprep.subr.mxu0 0.0
        %854 = vmatpush1.msra.mxu0 0.0
        %855 = vmatprep.subr.mxu0 0.0
        %856 = vmatpush1.msra.mxu0 0.0
        %857 = vmatprep.subr.mxu0 0.0
        %858 = vmatpush1.msra.mxu0 0.0
        %859 = vmatprep.subr.mxu0 0.0
        %860 = vmatpush1.msra.mxu0 0.0
        %861 = vmatprep.subr.mxu0 0.0
        %862 = vmatpush1.msra.mxu0 0.0
        %863 = vmatprep.subr.mxu0 0.0
        %864 = vmatpush1.msra.mxu0 0.0
        %865 = vmatprep.subr.mxu0 0.0
        %866 = vmatpush1.msra.mxu0 0.0
        %867 = vmatprep.subr.mxu0 0.0
        %868 = vmatpush1.msra.mxu0 0.0
        %869 = vmatprep.subr.mxu0 0.0
        %870 = vmatpush1.msra.mxu0 0.0
        %871 = vmatprep.subr.mxu0 0.0
        %872 = vmatpush1.msra.mxu0 0.0
        %873 = vmatprep.subr.mxu0 0.0
        %874 = vmatpush1.msra.mxu0 0.0
        %875 = vmatprep.subr.mxu0 0.0
        %876 = vmatpush1.msra.mxu0 0.0
        %877 = vmatprep.subr.mxu0 0.0
        %878 = vmatpush1.msra.mxu0 0.0
        %879 = vmatprep.subr.mxu0 0.0
        %880 = vmatpush1.msra.mxu0 0.0
        %881 = vmatprep.subr.mxu0 0.0
        %882 = vmatpush1.msra.mxu0 0.0
        %883 = vmatprep.subr.mxu0 0.0
        %884 = vmatpush1.msra.mxu0 0.0
        %885 = vmatprep.subr.mxu0 0.0
        %886 = vmatpush1.msra.mxu0 0.0
        %887 = vmatprep.subr.mxu0 0.0
        %888 = vmatpush1.msra.mxu0 0.0
        %889 = vmatprep.mubr.f32.mxu0 0.0
        %890 = vmatmul.mubr.f32.gmra.mrb[0].mxu0 %v820
        %v891 = vpop.f32.mrb[0].mxu0
        %v892 = vadd.f32 0.0, %v891
        %v893 = vpop.f32.mrb[0].mxu0
        %894 = vmatprep.mubr.f32.mxu0 0.0
        %895 = vmatmul.mubr.f32.gmra.mrb[0].mxu0 %v823
        %v896 = vpop.f32.mrb[0].mxu0
        %v897 = vadd.f32 0.0, %v896
        %v898 = vpop.f32.mrb[0].mxu0
        %899 = vdwg.mxu0
        %v900 = vadd.f32 %v806, %v892
        %v901 = vadd.f32 %v807, %v897
        %v902 = vld [vmem:[#allocation2 + $0x5] sm:$0xff]
        %v903 = vld [vmem:[#allocation2 + $0xd] sm:$0xff]
        %s904 = scalar_lea.vmem [#allocation3], 320
        %v905 = vld [vmem:[%s904] sm:$0xff]
        %v906 = vld [vmem:[%s904 + $0x8] sm:$0xff]
        %v907 = vld [vmem:[%s904 + $0x10] sm:$0xff]
        %v908 = vld [vmem:[%s904 + $0x18] sm:$0xff]
        %v909 = vld [vmem:[%s904 + $0x20] sm:$0xff]
        %v910 = vld [vmem:[%s904 + $0x28] sm:$0xff]
        %v911 = vld [vmem:[%s904 + $0x30] sm:$0xff]
        %v912 = vld [vmem:[%s904 + $0x38] sm:$0xff]
        %v914 = vsel %vm434, %v902, 0
        %v917 = vsel %vm434, %v903, 0
        %919 = vmatprep.subr.mxu0 0.0
        %920 = vmatpush1.msra.mxu0 %v905
        %921 = vmatprep.subr.mxu0 0.0
        %922 = vmatpush1.msra.mxu0 %v906
        %923 = vmatprep.subr.mxu0 0.0
        %924 = vmatpush1.msra.mxu0 %v907
        %925 = vmatprep.subr.mxu0 0.0
        %926 = vmatpush1.msra.mxu0 %v908
        %927 = vmatprep.subr.mxu0 0.0
        %928 = vmatpush1.msra.mxu0 %v909
        %929 = vmatprep.subr.mxu0 0.0
        %930 = vmatpush1.msra.mxu0 %v910
        %931 = vmatprep.subr.mxu0 0.0
        %932 = vmatpush1.msra.mxu0 %v911
        %933 = vmatprep.subr.mxu0 0.0
        %934 = vmatpush1.msra.mxu0 %v912
        %935 = vmatprep.subr.mxu0 0.0
        %936 = vmatpush1.msra.mxu0 0.0
        %937 = vmatprep.subr.mxu0 0.0
        %938 = vmatpush1.msra.mxu0 0.0
        %939 = vmatprep.subr.mxu0 0.0
        %940 = vmatpush1.msra.mxu0 0.0
        %941 = vmatprep.subr.mxu0 0.0
        %942 = vmatpush1.msra.mxu0 0.0
        %943 = vmatprep.subr.mxu0 0.0
        %944 = vmatpush1.msra.mxu0 0.0
        %945 = vmatprep.subr.mxu0 0.0
        %946 = vmatpush1.msra.mxu0 0.0
        %947 = vmatprep.subr.mxu0 0.0
        %948 = vmatpush1.msra.mxu0 0.0
        %949 = vmatprep.subr.mxu0 0.0
        %950 = vmatpush1.msra.mxu0 0.0
        %951 = vmatprep.subr.mxu0 0.0
        %952 = vmatpush1.msra.mxu0 0.0
        %953 = vmatprep.subr.mxu0 0.0
        %954 = vmatpush1.msra.mxu0 0.0
        %955 = vmatprep.subr.mxu0 0.0
        %956 = vmatpush1.msra.mxu0 0.0
        %957 = vmatprep.subr.mxu0 0.0
        %958 = vmatpush1.msra.mxu0 0.0
        %959 = vmatprep.subr.mxu0 0.0
        %960 = vmatpush1.msra.mxu0 0.0
        %961 = vmatprep.subr.mxu0 0.0
        %962 = vmatpush1.msra.mxu0 0.0
        %963 = vmatprep.subr.mxu0 0.0
        %964 = vmatpush1.msra.mxu0 0.0
        %965 = vmatprep.subr.mxu0 0.0
        %966 = vmatpush1.msra.mxu0 0.0
        %967 = vmatprep.subr.mxu0 0.0
        %968 = vmatpush1.msra.mxu0 0.0
        %969 = vmatprep.subr.mxu0 0.0
        %970 = vmatpush1.msra.mxu0 0.0
        %971 = vmatprep.subr.mxu0 0.0
        %972 = vmatpush1.msra.mxu0 0.0
        %973 = vmatprep.subr.mxu0 0.0
        %974 = vmatpush1.msra.mxu0 0.0
        %975 = vmatprep.subr.mxu0 0.0
        %976 = vmatpush1.msra.mxu0 0.0
        %977 = vmatprep.subr.mxu0 0.0
        %978 = vmatpush1.msra.mxu0 0.0
        %979 = vmatprep.subr.mxu0 0.0
        %980 = vmatpush1.msra.mxu0 0.0
        %981 = vmatprep.subr.mxu0 0.0
        %982 = vmatpush1.msra.mxu0 0.0
        %983 = vmatprep.mubr.f32.mxu0 0.0
        %984 = vmatmul.mubr.f32.gmra.mrb[0].mxu0 %v914
        %v985 = vpop.f32.mrb[0].mxu0
        %v986 = vadd.f32 0.0, %v985
        %v987 = vpop.f32.mrb[0].mxu0
        %988 = vmatprep.mubr.f32.mxu0 0.0
        %989 = vmatmul.mubr.f32.gmra.mrb[0].mxu0 %v917
        %v990 = vpop.f32.mrb[0].mxu0
        %v991 = vadd.f32 0.0, %v990
        %v992 = vpop.f32.mrb[0].mxu0
        %993 = vdwg.mxu0
        %v994 = vadd.f32 %v900, %v986
        %v995 = vadd.f32 %v901, %v991
        %v996 = vld [vmem:[#allocation2 + $0x6] sm:$0xff]
        %v997 = vld [vmem:[#allocation2 + $0xe] sm:$0xff]
        %s998 = scalar_lea.vmem [#allocation3], 384
        %v999 = vld [vmem:[%s998] sm:$0xff]
        %v1000 = vld [vmem:[%s998 + $0x8] sm:$0xff]
        %v1001 = vld [vmem:[%s998 + $0x10] sm:$0xff]
        %v1002 = vld [vmem:[%s998 + $0x18] sm:$0xff]
        %v1003 = vld [vmem:[%s998 + $0x20] sm:$0xff]
        %v1004 = vld [vmem:[%s998 + $0x28] sm:$0xff]
        %v1005 = vld [vmem:[%s998 + $0x30] sm:$0xff]
        %v1006 = vld [vmem:[%s998 + $0x38] sm:$0xff]
        %v1008 = vsel %vm434, %v996, 0
        %v1011 = vsel %vm434, %v997, 0
        %1013 = vmatprep.subr.mxu0 0.0
        %1014 = vmatpush1.msra.mxu0 %v999
        %1015 = vmatprep.subr.mxu0 0.0
        %1016 = vmatpush1.msra.mxu0 %v1000
        %1017 = vmatprep.subr.mxu0 0.0
        %1018 = vmatpush1.msra.mxu0 %v1001
        %1019 = vmatprep.subr.mxu0 0.0
        %1020 = vmatpush1.msra.mxu0 %v1002
        %1021 = vmatprep.subr.mxu0 0.0
        %1022 = vmatpush1.msra.mxu0 %v1003
        %1023 = vmatprep.subr.mxu0 0.0
        %1024 = vmatpush1.msra.mxu0 %v1004
        %1025 = vmatprep.subr.mxu0 0.0
        %1026 = vmatpush1.msra.mxu0 %v1005
        %1027 = vmatprep.subr.mxu0 0.0
        %1028 = vmatpush1.msra.mxu0 %v1006
        %1029 = vmatprep.subr.mxu0 0.0
        %1030 = vmatpush1.msra.mxu0 0.0
        %1031 = vmatprep.subr.mxu0 0.0
        %1032 = vmatpush1.msra.mxu0 0.0
        %1033 = vmatprep.subr.mxu0 0.0
        %1034 = vmatpush1.msra.mxu0 0.0
        %1035 = vmatprep.subr.mxu0 0.0
        %1036 = vmatpush1.msra.mxu0 0.0
        %1037 = vmatprep.subr.mxu0 0.0
        %1038 = vmatpush1.msra.mxu0 0.0
        %1039 = vmatprep.subr.mxu0 0.0
        %1040 = vmatpush1.msra.mxu0 0.0
        %1041 = vmatprep.subr.mxu0 0.0
        %1042 = vmatpush1.msra.mxu0 0.0
        %1043 = vmatprep.subr.mxu0 0.0
        %1044 = vmatpush1.msra.mxu0 0.0
        %1045 = vmatprep.subr.mxu0 0.0
        %1046 = vmatpush1.msra.mxu0 0.0
        %1047 = vmatprep.subr.mxu0 0.0
        %1048 = vmatpush1.msra.mxu0 0.0
        %1049 = vmatprep.subr.mxu0 0.0
        %1050 = vmatpush1.msra.mxu0 0.0
        %1051 = vmatprep.subr.mxu0 0.0
        %1052 = vmatpush1.msra.mxu0 0.0
        %1053 = vmatprep.subr.mxu0 0.0
        %1054 = vmatpush1.msra.mxu0 0.0
        %1055 = vmatprep.subr.mxu0 0.0
        %1056 = vmatpush1.msra.mxu0 0.0
        %1057 = vmatprep.subr.mxu0 0.0
        %1058 = vmatpush1.msra.mxu0 0.0
        %1059 = vmatprep.subr.mxu0 0.0
        %1060 = vmatpush1.msra.mxu0 0.0
        %1061 = vmatprep.subr.mxu0 0.0
        %1062 = vmatpush1.msra.mxu0 0.0
        %1063 = vmatprep.subr.mxu0 0.0
        %1064 = vmatpush1.msra.mxu0 0.0
        %1065 = vmatprep.subr.mxu0 0.0
        %1066 = vmatpush1.msra.mxu0 0.0
        %1067 = vmatprep.subr.mxu0 0.0
        %1068 = vmatpush1.msra.mxu0 0.0
        %1069 = vmatprep.subr.mxu0 0.0
        %1070 = vmatpush1.msra.mxu0 0.0
        %1071 = vmatprep.subr.mxu0 0.0
        %1072 = vmatpush1.msra.mxu0 0.0
        %1073 = vmatprep.subr.mxu0 0.0
        %1074 = vmatpush1.msra.mxu0 0.0
        %1075 = vmatprep.subr.mxu0 0.0
        %1076 = vmatpush1.msra.mxu0 0.0
        %1077 = vmatprep.mubr.f32.mxu0 0.0
        %1078 = vmatmul.mubr.f32.gmra.mrb[0].mxu0 %v1008
        %v1079 = vpop.f32.mrb[0].mxu0
        %v1080 = vadd.f32 0.0, %v1079
        %v1081 = vpop.f32.mrb[0].mxu0
        %1082 = vmatprep.mubr.f32.mxu0 0.0
        %1083 = vmatmul.mubr.f32.gmra.mrb[0].mxu0 %v1011
        %v1084 = vpop.f32.mrb[0].mxu0
        %v1085 = vadd.f32 0.0, %v1084
        %v1086 = vpop.f32.mrb[0].mxu0
        %1087 = vdwg.mxu0
        %v1088 = vadd.f32 %v994, %v1080
        %v1089 = vadd.f32 %v995, %v1085
        %v1090 = vld [vmem:[#allocation2 + $0x7] sm:$0xff]
        %v1091 = vld [vmem:[#allocation2 + $0xf] sm:$0xff]
        %s1092 = scalar_lea.vmem [#allocation3], 448
        %v1093 = vld [vmem:[%s1092] sm:$0xff]
        %v1094 = vld [vmem:[%s1092 + $0x8] sm:$0xff]
        %v1095 = vld [vmem:[%s1092 + $0x10] sm:$0xff]
        %v1096 = vld [vmem:[%s1092 + $0x18] sm:$0xff]
        %v1097 = vld [vmem:[%s1092 + $0x20] sm:$0xff]
        %v1098 = vld [vmem:[%s1092 + $0x28] sm:$0xff]
        %v1099 = vld [vmem:[%s1092 + $0x30] sm:$0xff]
        %v1100 = vld [vmem:[%s1092 + $0x38] sm:$0xff]
        %v1102 = vsel %vm434, %v1090, 0
        %v1105 = vsel %vm434, %v1091, 0
        %1107 = vmatprep.subr.mxu0 0.0
        %1108 = vmatpush1.msra.mxu0 %v1093
        %1109 = vmatprep.subr.mxu0 0.0
        %1110 = vmatpush1.msra.mxu0 %v1094
        %1111 = vmatprep.subr.mxu0 0.0
        %1112 = vmatpush1.msra.mxu0 %v1095
        %1113 = vmatprep.subr.mxu0 0.0
        %1114 = vmatpush1.msra.mxu0 %v1096
        %1115 = vmatprep.subr.mxu0 0.0
        %1116 = vmatpush1.msra.mxu0 %v1097
        %1117 = vmatprep.subr.mxu0 0.0
        %1118 = vmatpush1.msra.mxu0 %v1098
        %1119 = vmatprep.subr.mxu0 0.0
        %1120 = vmatpush1.msra.mxu0 %v1099
        %1121 = vmatprep.subr.mxu0 0.0
        %1122 = vmatpush1.msra.mxu0 %v1100
        %1123 = vmatprep.subr.mxu0 0.0
        %1124 = vmatpush1.msra.mxu0 0.0
        %1125 = vmatprep.subr.mxu0 0.0
        %1126 = vmatpush1.msra.mxu0 0.0
        %1127 = vmatprep.subr.mxu0 0.0
        %1128 = vmatpush1.msra.mxu0 0.0
        %1129 = vmatprep.subr.mxu0 0.0
        %1130 = vmatpush1.msra.mxu0 0.0
        %1131 = vmatprep.subr.mxu0 0.0
        %1132 = vmatpush1.msra.mxu0 0.0
        %1133 = vmatprep.subr.mxu0 0.0
        %1134 = vmatpush1.msra.mxu0 0.0
        %1135 = vmatprep.subr.mxu0 0.0
        %1136 = vmatpush1.msra.mxu0 0.0
        %1137 = vmatprep.subr.mxu0 0.0
        %1138 = vmatpush1.msra.mxu0 0.0
        %1139 = vmatprep.subr.mxu0 0.0
        %1140 = vmatpush1.msra.mxu0 0.0
        %1141 = vmatprep.subr.mxu0 0.0
        %1142 = vmatpush1.msra.mxu0 0.0
        %1143 = vmatprep.subr.mxu0 0.0
        %1144 = vmatpush1.msra.mxu0 0.0
        %1145 = vmatprep.subr.mxu0 0.0
        %1146 = vmatpush1.msra.mxu0 0.0
        %1147 = vmatprep.subr.mxu0 0.0
        %1148 = vmatpush1.msra.mxu0 0.0
        %1149 = vmatprep.subr.mxu0 0.0
        %1150 = vmatpush1.msra.mxu0 0.0
        %1151 = vmatprep.subr.mxu0 0.0
        %1152 = vmatpush1.msra.mxu0 0.0
        %1153 = vmatprep.subr.mxu0 0.0
        %1154 = vmatpush1.msra.mxu0 0.0
        %1155 = vmatprep.subr.mxu0 0.0
        %1156 = vmatpush1.msra.mxu0 0.0
        %1157 = vmatprep.subr.mxu0 0.0
        %1158 = vmatpush1.msra.mxu0 0.0
        %1159 = vmatprep.subr.mxu0 0.0
        %1160 = vmatpush1.msra.mxu0 0.0
        %1161 = vmatprep.subr.mxu0 0.0
        %1162 = vmatpush1.msra.mxu0 0.0
        %1163 = vmatprep.subr.mxu0 0.0
        %1164 = vmatpush1.msra.mxu0 0.0
        %1165 = vmatprep.subr.mxu0 0.0
        %1166 = vmatpush1.msra.mxu0 0.0
        %1167 = vmatprep.subr.mxu0 0.0
        %1168 = vmatpush1.msra.mxu0 0.0
        %1169 = vmatprep.subr.mxu0 0.0
        %1170 = vmatpush1.msra.mxu0 0.0
        %1171 = vmatprep.mubr.f32.mxu0 0.0
        %1172 = vmatmul.mubr.f32.gmra.mrb[0].mxu0 %v1102
        %v1173 = vpop.f32.mrb[0].mxu0
        %v1174 = vadd.f32 0.0, %v1173
        %v1175 = vpop.f32.mrb[0].mxu0
        %1176 = vmatprep.mubr.f32.mxu0 0.0
        %1177 = vmatmul.mubr.f32.gmra.mrb[0].mxu0 %v1105
        %v1178 = vpop.f32.mrb[0].mxu0
        %v1179 = vadd.f32 0.0, %v1178
        %v1180 = vpop.f32.mrb[0].mxu0
        %1181 = vdwg.mxu0
        %v1182 = vadd.f32 %v1088, %v1174
        %v1183 = vadd.f32 %v1089, %v1179
        %v1184 = vld [vmem:[#allocation2 + $0x8] sm:$0xff]
        %v1185 = vld [vmem:[#allocation2 + $0x10] sm:$0xff]
        %s1186 = scalar_lea.vmem [#allocation3], 512
        %v1187 = vld [vmem:[%s1186] sm:$0xff]
        %v1188 = vld [vmem:[%s1186 + $0x8] sm:$0xff]
        %v1189 = vld [vmem:[%s1186 + $0x10] sm:$0xff]
        %v1190 = vld [vmem:[%s1186 + $0x18] sm:$0xff]
        %v1191 = vld [vmem:[%s1186 + $0x20] sm:$0xff]
        %v1192 = vld [vmem:[%s1186 + $0x28] sm:$0xff]
        %v1193 = vld [vmem:[%s1186 + $0x30] sm:$0xff]
        %v1194 = vld [vmem:[%s1186 + $0x38] sm:$0xff]
        %v1196 = vsel %vm434, %v1184, 0
        %v1199 = vsel %vm434, %v1185, 0
        %1201 = vmatprep.subr.mxu0 0.0
        %1202 = vmatpush1.msra.mxu0 %v1187
        %1203 = vmatprep.subr.mxu0 0.0
        %1204 = vmatpush1.msra.mxu0 %v1188
        %1205 = vmatprep.subr.mxu0 0.0
        %1206 = vmatpush1.msra.mxu0 %v1189
        %1207 = vmatprep.subr.mxu0 0.0
        %1208 = vmatpush1.msra.mxu0 %v1190
        %1209 = vmatprep.subr.mxu0 0.0
        %1210 = vmatpush1.msra.mxu0 %v1191
        %1211 = vmatprep.subr.mxu0 0.0
        %1212 = vmatpush1.msra.mxu0 %v1192
        %1213 = vmatprep.subr.mxu0 0.0
        %1214 = vmatpush1.msra.mxu0 %v1193
        %1215 = vmatprep.subr.mxu0 0.0
        %1216 = vmatpush1.msra.mxu0 %v1194
        %1217 = vmatprep.subr.mxu0 0.0
        %1218 = vmatpush1.msra.mxu0 0.0
        %1219 = vmatprep.subr.mxu0 0.0
        %1220 = vmatpush1.msra.mxu0 0.0
        %1221 = vmatprep.subr.mxu0 0.0
        %1222 = vmatpush1.msra.mxu0 0.0
        %1223 = vmatprep.subr.mxu0 0.0
        %1224 = vmatpush1.msra.mxu0 0.0
        %1225 = vmatprep.subr.mxu0 0.0
        %1226 = vmatpush1.msra.mxu0 0.0
        %1227 = vmatprep.subr.mxu0 0.0
        %1228 = vmatpush1.msra.mxu0 0.0
        %1229 = vmatprep.subr.mxu0 0.0
        %1230 = vmatpush1.msra.mxu0 0.0
        %1231 = vmatprep.subr.mxu0 0.0
        %1232 = vmatpush1.msra.mxu0 0.0
        %1233 = vmatprep.subr.mxu0 0.0
        %1234 = vmatpush1.msra.mxu0 0.0
        %1235 = vmatprep.subr.mxu0 0.0
        %1236 = vmatpush1.msra.mxu0 0.0
        %1237 = vmatprep.subr.mxu0 0.0
        %1238 = vmatpush1.msra.mxu0 0.0
        %1239 = vmatprep.subr.mxu0 0.0
        %1240 = vmatpush1.msra.mxu0 0.0
        %1241 = vmatprep.subr.mxu0 0.0
        %1242 = vmatpush1.msra.mxu0 0.0
        %1243 = vmatprep.subr.mxu0 0.0
        %1244 = vmatpush1.msra.mxu0 0.0
        %1245 = vmatprep.subr.mxu0 0.0
        %1246 = vmatpush1.msra.mxu0 0.0
        %1247 = vmatprep.subr.mxu0 0.0
        %1248 = vmatpush1.msra.mxu0 0.0
        %1249 = vmatprep.subr.mxu0 0.0
        %1250 = vmatpush1.msra.mxu0 0.0
        %1251 = vmatprep.subr.mxu0 0.0
        %1252 = vmatpush1.msra.mxu0 0.0
        %1253 = vmatprep.subr.mxu0 0.0
        %1254 = vmatpush1.msra.mxu0 0.0
        %1255 = vmatprep.subr.mxu0 0.0
        %1256 = vmatpush1.msra.mxu0 0.0
        %1257 = vmatprep.subr.mxu0 0.0
        %1258 = vmatpush1.msra.mxu0 0.0
        %1259 = vmatprep.subr.mxu0 0.0
        %1260 = vmatpush1.msra.mxu0 0.0
        %1261 = vmatprep.subr.mxu0 0.0
        %1262 = vmatpush1.msra.mxu0 0.0
        %1263 = vmatprep.subr.mxu0 0.0
        %1264 = vmatpush1.msra.mxu0 0.0
        %1265 = vmatprep.mubr.f32.mxu0 0.0
        %1266 = vmatmul.mubr.f32.gmra.mrb[0].mxu0 %v1196
        %v1267 = vpop.f32.mrb[0].mxu0
        %v1268 = vadd.f32 0.0, %v1267
        %v1269 = vpop.f32.mrb[0].mxu0
        %1270 = vmatprep.mubr.f32.mxu0 0.0
        %1271 = vmatmul.mubr.f32.gmra.mrb[0].mxu0 %v1199
        %v1272 = vpop.f32.mrb[0].mxu0
        %v1273 = vadd.f32 0.0, %v1272
        %v1274 = vpop.f32.mrb[0].mxu0
        %1275 = vdwg.mxu0
        %v1276 = vadd.f32 %v1182, %v1268
        %v1277 = vadd.f32 %v1183, %v1273
        %v1279 = vlaneseq
        %v1280 = vshrl.u32 %v1279, 7
        %v1281 = vsub.s32 0, %v1280
        %v1282 = vrot.slane %v430, %v1281
        %v1284 = vadd.f32 %v1276, %v1282
        %v1285 = vadd.f32 %v1277, %v1282
        %v1286 = vmax.f32 %v1284, 0.0
        %v1287 = vmax.f32 %v1285, 0.0
        %v1288 = vld [vmem:[%s3] sm:$0xff]
        %v1289 = vld [vmem:[%s3 + $0x8] sm:$0xff]
        %v1290 = vld [vmem:[%s3 + $0x10] sm:$0xff]
        %v1291 = vld [vmem:[%s3 + $0x18] sm:$0xff]
        %v1292 = vld [vmem:[%s3 + $0x20] sm:$0xff]
        %v1293 = vld [vmem:[%s3 + $0x28] sm:$0xff]
        %v1294 = vld [vmem:[%s3 + $0x30] sm:$0xff]
        %v1295 = vld [vmem:[%s3 + $0x38] sm:$0xff]
        %v1296 = vld [vmem:[%s4] sm:$0xff]
        %v1297 = vld [vmem:[%s4 + $0x8] sm:$0xff]
        %v1298 = vld [vmem:[%s4 + $0x10] sm:$0xff]
        %v1299 = vld [vmem:[%s4 + $0x18] sm:$0xff]
        %v1300 = vld [vmem:[%s4 + $0x20] sm:$0xff]
        %v1301 = vld [vmem:[%s4 + $0x28] sm:$0xff]
        %v1302 = vld [vmem:[%s4 + $0x30] sm:$0xff]
        %v1303 = vld [vmem:[%s4 + $0x38] sm:$0xff]
        %v1305 = vsel %vm434, %v428, 0
        %v1308 = vsel %vm434, %v429, 0
        %1310 = vmatprep.subr.mxu0 0.0
        %1311 = vmatpush1.msra.mxu0 %v1296
        %1312 = vmatprep.subr.mxu0 0.0
        %1313 = vmatpush1.msra.mxu0 %v1297
        %1314 = vmatprep.subr.mxu0 0.0
        %1315 = vmatpush1.msra.mxu0 %v1298
        %1316 = vmatprep.subr.mxu0 0.0
        %1317 = vmatpush1.msra.mxu0 %v1299
        %1318 = vmatprep.subr.mxu0 0.0
        %1319 = vmatpush1.msra.mxu0 %v1300
        %1320 = vmatprep.subr.mxu0 0.0
        %1321 = vmatpush1.msra.mxu0 %v1301
        %1322 = vmatprep.subr.mxu0 0.0
        %1323 = vmatpush1.msra.mxu0 %v1302
        %1324 = vmatprep.subr.mxu0 0.0
        %1325 = vmatpush1.msra.mxu0 %v1303
        %1326 = vmatprep.subr.mxu0 0.0
        %1327 = vmatpush1.msra.mxu0 0.0
        %1328 = vmatprep.subr.mxu0 0.0
        %1329 = vmatpush1.msra.mxu0 0.0
        %1330 = vmatprep.subr.mxu0 0.0
        %1331 = vmatpush1.msra.mxu0 0.0
        %1332 = vmatprep.subr.mxu0 0.0
        %1333 = vmatpush1.msra.mxu0 0.0
        %1334 = vmatprep.subr.mxu0 0.0
        %1335 = vmatpush1.msra.mxu0 0.0
        %1336 = vmatprep.subr.mxu0 0.0
        %1337 = vmatpush1.msra.mxu0 0.0
        %1338 = vmatprep.subr.mxu0 0.0
        %1339 = vmatpush1.msra.mxu0 0.0
        %1340 = vmatprep.subr.mxu0 0.0
        %1341 = vmatpush1.msra.mxu0 0.0
        %1342 = vmatprep.subr.mxu0 0.0
        %1343 = vmatpush1.msra.mxu0 0.0
        %1344 = vmatprep.subr.mxu0 0.0
        %1345 = vmatpush1.msra.mxu0 0.0
        %1346 = vmatprep.subr.mxu0 0.0
        %1347 = vmatpush1.msra.mxu0 0.0
        %1348 = vmatprep.subr.mxu0 0.0
        %1349 = vmatpush1.msra.mxu0 0.0
        %1350 = vmatprep.subr.mxu0 0.0
        %1351 = vmatpush1.msra.mxu0 0.0
        %1352 = vmatprep.subr.mxu0 0.0
        %1353 = vmatpush1.msra.mxu0 0.0
        %1354 = vmatprep.subr.mxu0 0.0
        %1355 = vmatpush1.msra.mxu0 0.0
        %1356 = vmatprep.subr.mxu0 0.0
        %1357 = vmatpush1.msra.mxu0 0.0
        %1358 = vmatprep.subr.mxu0 0.0
        %1359 = vmatpush1.msra.mxu0 0.0
        %1360 = vmatprep.subr.mxu0 0.0
        %1361 = vmatpush1.msra.mxu0 0.0
        %1362 = vmatprep.subr.mxu0 0.0
        %1363 = vmatpush1.msra.mxu0 0.0
        %1364 = vmatprep.subr.mxu0 0.0
        %1365 = vmatpush1.msra.mxu0 0.0
        %1366 = vmatprep.subr.mxu0 0.0
        %1367 = vmatpush1.msra.mxu0 0.0
        %1368 = vmatprep.subr.mxu0 0.0
        %1369 = vmatpush1.msra.mxu0 0.0
        %1370 = vmatprep.subr.mxu0 0.0
        %1371 = vmatpush1.msra.mxu0 0.0
        %1372 = vmatprep.subr.mxu0 0.0
        %1373 = vmatpush1.msra.mxu0 0.0
        %1374 = vmatprep.mubr.f32.mxu0 0.0
        %1375 = vmatmul.mubr.f32.gmra.mrb[0].mxu0 %v1305
        %v1376 = vpop.f32.mrb[0].mxu0
        %v1377 = vadd.f32 0.0, %v1376
        %v1378 = vpop.f32.mrb[0].mxu0
        %1379 = vmatprep.mubr.f32.mxu0 0.0
        %1380 = vmatmul.mubr.f32.gmra.mrb[0].mxu0 %v1308
        %v1381 = vpop.f32.mrb[0].mxu0
        %v1382 = vadd.f32 0.0, %v1381
        %v1383 = vpop.f32.mrb[0].mxu0
        %1384 = vdwg.mxu0
        %v1386 = vsel %vm434, %v1286, 0
        %v1389 = vsel %vm434, %v1287, 0
        %1391 = vmatprep.subr.mxu0 0.0
        %1392 = vmatpush1.msra.mxu0 %v1288
        %1393 = vmatprep.subr.mxu0 0.0
        %1394 = vmatpush1.msra.mxu0 %v1289
        %1395 = vmatprep.subr.mxu0 0.0
        %1396 = vmatpush1.msra.mxu0 %v1290
        %1397 = vmatprep.subr.mxu0 0.0
        %1398 = vmatpush1.msra.mxu0 %v1291
        %1399 = vmatprep.subr.mxu0 0.0
        %1400 = vmatpush1.msra.mxu0 %v1292
        %1401 = vmatprep.subr.mxu0 0.0
        %1402 = vmatpush1.msra.mxu0 %v1293
        %1403 = vmatprep.subr.mxu0 0.0
        %1404 = vmatpush1.msra.mxu0 %v1294
        %1405 = vmatprep.subr.mxu0 0.0
        %1406 = vmatpush1.msra.mxu0 %v1295
        %1407 = vmatprep.subr.mxu0 0.0
        %1408 = vmatpush1.msra.mxu0 0.0
        %1409 = vmatprep.subr.mxu0 0.0
        %1410 = vmatpush1.msra.mxu0 0.0
        %1411 = vmatprep.subr.mxu0 0.0
        %1412 = vmatpush1.msra.mxu0 0.0
        %1413 = vmatprep.subr.mxu0 0.0
        %1414 = vmatpush1.msra.mxu0 0.0
        %1415 = vmatprep.subr.mxu0 0.0
        %1416 = vmatpush1.msra.mxu0 0.0
        %1417 = vmatprep.subr.mxu0 0.0
        %1418 = vmatpush1.msra.mxu0 0.0
        %1419 = vmatprep.subr.mxu0 0.0
        %1420 = vmatpush1.msra.mxu0 0.0
        %1421 = vmatprep.subr.mxu0 0.0
        %1422 = vmatpush1.msra.mxu0 0.0
        %1423 = vmatprep.subr.mxu0 0.0
        %1424 = vmatpush1.msra.mxu0 0.0
        %1425 = vmatprep.subr.mxu0 0.0
        %1426 = vmatpush1.msra.mxu0 0.0
        %1427 = vmatprep.subr.mxu0 0.0
        %1428 = vmatpush1.msra.mxu0 0.0
        %1429 = vmatprep.subr.mxu0 0.0
        %1430 = vmatpush1.msra.mxu0 0.0
        %1431 = vmatprep.subr.mxu0 0.0
        %1432 = vmatpush1.msra.mxu0 0.0
        %1433 = vmatprep.subr.mxu0 0.0
        %1434 = vmatpush1.msra.mxu0 0.0
        %1435 = vmatprep.subr.mxu0 0.0
        %1436 = vmatpush1.msra.mxu0 0.0
        %1437 = vmatprep.subr.mxu0 0.0
        %1438 = vmatpush1.msra.mxu0 0.0
        %1439 = vmatprep.subr.mxu0 0.0
        %1440 = vmatpush1.msra.mxu0 0.0
        %1441 = vmatprep.subr.mxu0 0.0
        %1442 = vmatpush1.msra.mxu0 0.0
        %1443 = vmatprep.subr.mxu0 0.0
        %1444 = vmatpush1.msra.mxu0 0.0
        %1445 = vmatprep.subr.mxu0 0.0
        %1446 = vmatpush1.msra.mxu0 0.0
        %1447 = vmatprep.subr.mxu0 0.0
        %1448 = vmatpush1.msra.mxu0 0.0
        %1449 = vmatprep.subr.mxu0 0.0
        %1450 = vmatpush1.msra.mxu0 0.0
        %1451 = vmatprep.subr.mxu0 0.0
        %1452 = vmatpush1.msra.mxu0 0.0
        %1453 = vmatprep.subr.mxu0 0.0
        %1454 = vmatpush1.msra.mxu0 0.0
        %1455 = vmatprep.mubr.f32.mxu0 0.0
        %1456 = vmatmul.mubr.f32.gmra.mrb[0].mxu0 %v1386
        %v1457 = vpop.f32.mrb[0].mxu0
        %v1458 = vadd.f32 %v1377, %v1457
        %v1459 = vpop.f32.mrb[0].mxu0
        %1460 = vmatprep.mubr.f32.mxu0 0.0
        %1461 = vmatmul.mubr.f32.gmra.mrb[0].mxu0 %v1389
        %v1462 = vpop.f32.mrb[0].mxu0
        %v1463 = vadd.f32 %v1382, %v1462
        %v1464 = vpop.f32.mrb[0].mxu0
        %1465 = vdwg.mxu0
        %v1466 = vld [vmem:[%s5] sm:$0x1]
        %v1468 = vlaneseq
        %v1469 = vshrl.u32 %v1468, 7
        %v1470 = vsub.s32 0, %v1469
        %v1471 = vrot.slane %v1466, %v1470
        %v1473 = vadd.f32 %v1458, %v1471
        %v1474 = vadd.f32 %v1463, %v1471
        %v1475 = vmax.f32 %v1473, 0.0
        %v1476 = vmax.f32 %v1474, 0.0
        %vm1477 = vcmask 130048
        %1478 = vst.msk [vmem:[#allocation2] sm:$0xff] %vm1477, %v1475
        %1479 = vst.msk [vmem:[#allocation2 + $0x8] sm:$0xff] %vm1477, %v1476
        %v1480 = vld [vmem:[#allocation2] ss:$2 sm:$0xff]
        %s1481 = scalar_lea.vmem [#allocation2], 1
        %v1482 = vld [vmem:[%s1481] ss:$2 sm:$0xff]
        %v1483 = vadd.f32 %v1480, %v1482
        %v1484 = vmul.f32 %v1483, 0.5
        %v1485 = vld [vmem:[%s8] sm:$0x1]
        %vm1486 = vcmask 122880
        %1487 = vst.msk [vmem:[#allocation2] sm:$0x1] %vm1486, 0.0
        %1488 = vst.msk [vmem:[#allocation2 + $0x11] sm:$0x1] %vm1486, 0.0
        %1489 = vst.msk [vmem:[#allocation2 + $0x1] sm:$0xff] %vm1477, %v1475
        %1490 = vst.msk [vmem:[#allocation2 + $0x9] sm:$0xff] %vm1477, %v1476
        %v1491 = vld [vmem:[#allocation2] sm:$0xff]
        %v1492 = vld [vmem:[#allocation2 + $0x8] sm:$0xff]
        %v1493 = vld [vmem:[#allocation6] sm:$0xff]
        %v1494 = vld [vmem:[#allocation6 + $0x8] sm:$0xff]
        %v1495 = vld [vmem:[#allocation2 + $0x1] sm:$0xff]
        %v1496 = vld [vmem:[#allocation2 + $0x9] sm:$0xff]
        %s1497 = scalar_lea.vmem [#allocation6], 16
        %v1498 = vld [vmem:[%s1497] sm:$0xff]
        %v1499 = vld [vmem:[%s1497 + $0x8] sm:$0xff]
        %v1501 = vsel %vm1477, %v1495, 0
        %v1504 = vsel %vm1477, %v1496, 0
        %1506 = vmatprep.subr.mxu0 0.0
        %1507 = vmatpush1.msra.mxu0 %v1498
        %1508 = vmatprep.subr.mxu0 0.0
        %1509 = vmatpush1.msra.mxu0 %v1499
        %1510 = vmatprep.subr.mxu0 0.0
        %1511 = vmatpush1.msra.mxu0 0.0
        %1512 = vmatprep.subr.mxu0 0.0
        %1513 = vmatpush1.msra.mxu0 0.0
        %1514 = vmatprep.subr.mxu0 0.0
        %1515 = vmatpush1.msra.mxu0 0.0
        %1516 = vmatprep.subr.mxu0 0.0
        %1517 = vmatpush1.msra.mxu0 0.0
        %1518 = vmatprep.subr.mxu0 0.0
        %1519 = vmatpush1.msra.mxu0 0.0
        %1520 = vmatprep.subr.mxu0 0.0
        %1521 = vmatpush1.msra.mxu0 0.0
        %1522 = vmatprep.subr.mxu0 0.0
        %1523 = vmatpush1.msra.mxu0 0.0
        %1524 = vmatprep.subr.mxu0 0.0
        %1525 = vmatpush1.msra.mxu0 0.0
        %1526 = vmatprep.subr.mxu0 0.0
        %1527 = vmatpush1.msra.mxu0 0.0
        %1528 = vmatprep.subr.mxu0 0.0
        %1529 = vmatpush1.msra.mxu0 0.0
        %1530 = vmatprep.subr.mxu0 0.0
        %1531 = vmatpush1.msra.mxu0 0.0
        %1532 = vmatprep.subr.mxu0 0.0
        %1533 = vmatpush1.msra.mxu0 0.0
        %1534 = vmatprep.subr.mxu0 0.0
        %1535 = vmatpush1.msra.mxu0 0.0
        %1536 = vmatprep.subr.mxu0 0.0
        %1537 = vmatpush1.msra.mxu0 0.0
        %1538 = vmatprep.subr.mxu0 0.0
        %1539 = vmatpush1.msra.mxu0 0.0
        %1540 = vmatprep.subr.mxu0 0.0
        %1541 = vmatpush1.msra.mxu0 0.0
        %1542 = vmatprep.subr.mxu0 0.0
        %1543 = vmatpush1.msra.mxu0 0.0
        %1544 = vmatprep.subr.mxu0 0.0
        %1545 = vmatpush1.msra.mxu0 0.0
        %1546 = vmatprep.subr.mxu0 0.0
        %1547 = vmatpush1.msra.mxu0 0.0
        %1548 = vmatprep.subr.mxu0 0.0
        %1549 = vmatpush1.msra.mxu0 0.0
        %1550 = vmatprep.subr.mxu0 0.0
        %1551 = vmatpush1.msra.mxu0 0.0
        %1552 = vmatprep.subr.mxu0 0.0
        %1553 = vmatpush1.msra.mxu0 0.0
        %1554 = vmatprep.subr.mxu0 0.0
        %1555 = vmatpush1.msra.mxu0 0.0
        %1556 = vmatprep.subr.mxu0 0.0
        %1557 = vmatpush1.msra.mxu0 0.0
        %1558 = vmatprep.subr.mxu0 0.0
        %1559 = vmatpush1.msra.mxu0 0.0
        %1560 = vmatprep.subr.mxu0 0.0
        %1561 = vmatpush1.msra.mxu0 0.0
        %1562 = vmatprep.subr.mxu0 0.0
        %1563 = vmatpush1.msra.mxu0 0.0
        %1564 = vmatprep.subr.mxu0 0.0
        %1565 = vmatpush1.msra.mxu0 0.0
        %1566 = vmatprep.subr.mxu0 0.0
        %1567 = vmatpush1.msra.mxu0 0.0
        %1568 = vmatprep.subr.mxu0 0.0
        %1569 = vmatpush1.msra.mxu0 0.0
        %1570 = vmatprep.mubr.f32.mxu0 0.0
        %1571 = vmatmul.mubr.f32.gmra.mrb[0].mxu0 %v1501
        %v1572 = vpop.f32.mrb[0].mxu0
        %v1573 = vadd.f32 0.0, %v1572
        %v1574 = vpop.f32.mrb[0].mxu0
        %1575 = vmatprep.mubr.f32.mxu0 0.0
        %1576 = vmatmul.mubr.f32.gmra.mrb[0].mxu0 %v1504
        %v1577 = vpop.f32.mrb[0].mxu0
        %v1578 = vadd.f32 0.0, %v1577
        %v1579 = vpop.f32.mrb[0].mxu0
        %1580 = vdwg.mxu0
        %v1582 = vsel %vm1477, %v1491, 0
        %v1585 = vsel %vm1477, %v1492, 0
        %1587 = vmatprep.subr.mxu0 0.0
        %1588 = vmatpush1.msra.mxu0 %v1493
        %1589 = vmatprep.subr.mxu0 0.0
        %1590 = vmatpush1.msra.mxu0 %v1494
        %1591 = vmatprep.subr.mxu0 0.0
        %1592 = vmatpush1.msra.mxu0 0.0
        %1593 = vmatprep.subr.mxu0 0.0
        %1594 = vmatpush1.msra.mxu0 0.0
        %1595 = vmatprep.subr.mxu0 0.0
        %1596 = vmatpush1.msra.mxu0 0.0
        %1597 = vmatprep.subr.mxu0 0.0
        %1598 = vmatpush1.msra.mxu0 0.0
        %1599 = vmatprep.subr.mxu0 0.0
        %1600 = vmatpush1.msra.mxu0 0.0
        %1601 = vmatprep.subr.mxu0 0.0
        %1602 = vmatpush1.msra.mxu0 0.0
        %1603 = vmatprep.subr.mxu0 0.0
        %1604 = vmatpush1.msra.mxu0 0.0
        %1605 = vmatprep.subr.mxu0 0.0
        %1606 = vmatpush1.msra.mxu0 0.0
        %1607 = vmatprep.subr.mxu0 0.0
        %1608 = vmatpush1.msra.mxu0 0.0
        %1609 = vmatprep.subr.mxu0 0.0
        %1610 = vmatpush1.msra.mxu0 0.0
        %1611 = vmatprep.subr.mxu0 0.0
        %1612 = vmatpush1.msra.mxu0 0.0
        %1613 = vmatprep.subr.mxu0 0.0
        %1614 = vmatpush1.msra.mxu0 0.0
        %1615 = vmatprep.subr.mxu0 0.0
        %1616 = vmatpush1.msra.mxu0 0.0
        %1617 = vmatprep.subr.mxu0 0.0
        %1618 = vmatpush1.msra.mxu0 0.0
        %1619 = vmatprep.subr.mxu0 0.0
        %1620 = vmatpush1.msra.mxu0 0.0
        %1621 = vmatprep.subr.mxu0 0.0
        %1622 = vmatpush1.msra.mxu0 0.0
        %1623 = vmatprep.subr.mxu0 0.0
        %1624 = vmatpush1.msra.mxu0 0.0
        %1625 = vmatprep.subr.mxu0 0.0
        %1626 = vmatpush1.msra.mxu0 0.0
        %1627 = vmatprep.subr.mxu0 0.0
        %1628 = vmatpush1.msra.mxu0 0.0
        %1629 = vmatprep.subr.mxu0 0.0
        %1630 = vmatpush1.msra.mxu0 0.0
        %1631 = vmatprep.subr.mxu0 0.0
        %1632 = vmatpush1.msra.mxu0 0.0
        %1633 = vmatprep.subr.mxu0 0.0
        %1634 = vmatpush1.msra.mxu0 0.0
        %1635 = vmatprep.subr.mxu0 0.0
        %1636 = vmatpush1.msra.mxu0 0.0
        %1637 = vmatprep.subr.mxu0 0.0
        %1638 = vmatpush1.msra.mxu0 0.0
        %1639 = vmatprep.subr.mxu0 0.0
        %1640 = vmatpush1.msra.mxu0 0.0
        %1641 = vmatprep.subr.mxu0 0.0
        %1642 = vmatpush1.msra.mxu0 0.0
        %1643 = vmatprep.subr.mxu0 0.0
        %1644 = vmatpush1.msra.mxu0 0.0
        %1645 = vmatprep.subr.mxu0 0.0
        %1646 = vmatpush1.msra.mxu0 0.0
        %1647 = vmatprep.subr.mxu0 0.0
        %1648 = vmatpush1.msra.mxu0 0.0
        %1649 = vmatprep.subr.mxu0 0.0
        %1650 = vmatpush1.msra.mxu0 0.0
        %1651 = vmatprep.mubr.f32.mxu0 0.0
        %1652 = vmatmul.mubr.f32.gmra.mrb[0].mxu0 %v1582
        %v1653 = vpop.f32.mrb[0].mxu0
        %v1654 = vadd.f32 %v1573, %v1653
        %v1655 = vpop.f32.mrb[0].mxu0
        %1656 = vmatprep.mubr.f32.mxu0 0.0
        %1657 = vmatmul.mubr.f32.gmra.mrb[0].mxu0 %v1585
        %v1658 = vpop.f32.mrb[0].mxu0
        %v1659 = vadd.f32 %v1578, %v1658
        %v1660 = vpop.f32.mrb[0].mxu0
        %1661 = vdwg.mxu0
        %v1662 = vld [vmem:[#allocation2 + $0x2] sm:$0xff]
        %v1663 = vld [vmem:[#allocation2 + $0xa] sm:$0xff]
        %s1664 = scalar_lea.vmem [#allocation6], 32
        %v1665 = vld [vmem:[%s1664] sm:$0xff]
        %v1666 = vld [vmem:[%s1664 + $0x8] sm:$0xff]
        %v1668 = vsel %vm1477, %v1662, 0
        %v1671 = vsel %vm1477, %v1663, 0
        %1673 = vmatprep.subr.mxu0 0.0
        %1674 = vmatpush1.msra.mxu0 %v1665
        %1675 = vmatprep.subr.mxu0 0.0
        %1676 = vmatpush1.msra.mxu0 %v1666
        %1677 = vmatprep.subr.mxu0 0.0
        %1678 = vmatpush1.msra.mxu0 0.0
        %1679 = vmatprep.subr.mxu0 0.0
        %1680 = vmatpush1.msra.mxu0 0.0
        %1681 = vmatprep.subr.mxu0 0.0
        %1682 = vmatpush1.msra.mxu0 0.0
        %1683 = vmatprep.subr.mxu0 0.0
        %1684 = vmatpush1.msra.mxu0 0.0
        %1685 = vmatprep.subr.mxu0 0.0
        %1686 = vmatpush1.msra.mxu0 0.0
        %1687 = vmatprep.subr.mxu0 0.0
        %1688 = vmatpush1.msra.mxu0 0.0
        %1689 = vmatprep.subr.mxu0 0.0
        %1690 = vmatpush1.msra.mxu0 0.0
        %1691 = vmatprep.subr.mxu0 0.0
        %1692 = vmatpush1.msra.mxu0 0.0
        %1693 = vmatprep.subr.mxu0 0.0
        %1694 = vmatpush1.msra.mxu0 0.0
        %1695 = vmatprep.subr.mxu0 0.0
        %1696 = vmatpush1.msra.mxu0 0.0
        %1697 = vmatprep.subr.mxu0 0.0
        %1698 = vmatpush1.msra.mxu0 0.0
        %1699 = vmatprep.subr.mxu0 0.0
        %1700 = vmatpush1.msra.mxu0 0.0
        %1701 = vmatprep.subr.mxu0 0.0
        %1702 = vmatpush1.msra.mxu0 0.0
        %1703 = vmatprep.subr.mxu0 0.0
        %1704 = vmatpush1.msra.mxu0 0.0
        %1705 = vmatprep.subr.mxu0 0.0
        %1706 = vmatpush1.msra.mxu0 0.0
        %1707 = vmatprep.subr.mxu0 0.0
        %1708 = vmatpush1.msra.mxu0 0.0
        %1709 = vmatprep.subr.mxu0 0.0
        %1710 = vmatpush1.msra.mxu0 0.0
        %1711 = vmatprep.subr.mxu0 0.0
        %1712 = vmatpush1.msra.mxu0 0.0
        %1713 = vmatprep.subr.mxu0 0.0
        %1714 = vmatpush1.msra.mxu0 0.0
        %1715 = vmatprep.subr.mxu0 0.0
        %1716 = vmatpush1.msra.mxu0 0.0
        %1717 = vmatprep.subr.mxu0 0.0
        %1718 = vmatpush1.msra.mxu0 0.0
        %1719 = vmatprep.subr.mxu0 0.0
        %1720 = vmatpush1.msra.mxu0 0.0
        %1721 = vmatprep.subr.mxu0 0.0
        %1722 = vmatpush1.msra.mxu0 0.0
        %1723 = vmatprep.subr.mxu0 0.0
        %1724 = vmatpush1.msra.mxu0 0.0
        %1725 = vmatprep.subr.mxu0 0.0
        %1726 = vmatpush1.msra.mxu0 0.0
        %1727 = vmatprep.subr.mxu0 0.0
        %1728 = vmatpush1.msra.mxu0 0.0
        %1729 = vmatprep.subr.mxu0 0.0
        %1730 = vmatpush1.msra.mxu0 0.0
        %1731 = vmatprep.subr.mxu0 0.0
        %1732 = vmatpush1.msra.mxu0 0.0
        %1733 = vmatprep.subr.mxu0 0.0
        %1734 = vmatpush1.msra.mxu0 0.0
        %1735 = vmatprep.subr.mxu0 0.0
        %1736 = vmatpush1.msra.mxu0 0.0
        %1737 = vmatprep.mubr.f32.mxu0 0.0
        %1738 = vmatmul.mubr.f32.gmra.mrb[0].mxu0 %v1668
        %v1739 = vpop.f32.mrb[0].mxu0
        %v1740 = vadd.f32 0.0, %v1739
        %v1741 = vpop.f32.mrb[0].mxu0
        %1742 = vmatprep.mubr.f32.mxu0 0.0
        %1743 = vmatmul.mubr.f32.gmra.mrb[0].mxu0 %v1671
        %v1744 = vpop.f32.mrb[0].mxu0
        %v1745 = vadd.f32 0.0, %v1744
        %v1746 = vpop.f32.mrb[0].mxu0
        %1747 = vdwg.mxu0
        %v1748 = vadd.f32 %v1654, %v1740
        %v1749 = vadd.f32 %v1659, %v1745
        %v1750 = vlaneseq
        %v1751 = vshrl.u32 %v1750, 7
        %v1752 = vsub.s32 0, %v1751
        %v1753 = vrot.slane %v1485, %v1752
        %v1754 = vadd.f32 %v1748, %v1753
        %v1755 = vadd.f32 %v1749, %v1753
        %v1756 = vmax.f32 %v1754, 0.0
        %v1757 = vmax.f32 %v1755, 0.0
        %v1758 = vld [vmem:[%s8 + $0x1] sm:$0x1]
        %1759 = vst.msk [vmem:[#allocation2] sm:$0x1] %vm1486, 0.0
        %1760 = vst.msk [vmem:[#allocation2 + $0x11] sm:$0x1] %vm1486, 0.0
        %1761 = vst.msk [vmem:[#allocation2 + $0x1] sm:$0xff] %vm1477, %v1756
        %1762 = vst.msk [vmem:[#allocation2 + $0x9] sm:$0xff] %vm1477, %v1757
        %v1763 = vld [vmem:[#allocation2] sm:$0xff]
        %v1764 = vld [vmem:[#allocation2 + $0x8] sm:$0xff]
        %s1765 = scalar_lea.vmem [#allocation6], 48
        %v1766 = vld [vmem:[%s1765] sm:$0xff]
        %v1767 = vld [vmem:[%s1765 + $0x8] sm:$0xff]
        %v1768 = vld [vmem:[#allocation2 + $0x1] sm:$0xff]
        %v1769 = vld [vmem:[#allocation2 + $0x9] sm:$0xff]
        %s1770 = scalar_lea.vmem [#allocation6], 64
        %v1771 = vld [vmem:[%s1770] sm:$0xff]
        %v1772 = vld [vmem:[%s1770 + $0x8] sm:$0xff]
        %v1774 = vsel %vm1477, %v1768, 0
        %v1777 = vsel %vm1477, %v1769, 0
        %1779 = vmatprep.subr.mxu0 0.0
        %1780 = vmatpush1.msra.mxu0 %v1771
        %1781 = vmatprep.subr.mxu0 0.0
        %1782 = vmatpush1.msra.mxu0 %v1772
        %1783 = vmatprep.subr.mxu0 0.0
        %1784 = vmatpush1.msra.mxu0 0.0
        %1785 = vmatprep.subr.mxu0 0.0
        %1786 = vmatpush1.msra.mxu0 0.0
        %1787 = vmatprep.subr.mxu0 0.0
        %1788 = vmatpush1.msra.mxu0 0.0
        %1789 = vmatprep.subr.mxu0 0.0
        %1790 = vmatpush1.msra.mxu0 0.0
        %1791 = vmatprep.subr.mxu0 0.0
        %1792 = vmatpush1.msra.mxu0 0.0
        %1793 = vmatprep.subr.mxu0 0.0
        %1794 = vmatpush1.msra.mxu0 0.0
        %1795 = vmatprep.subr.mxu0 0.0
        %1796 = vmatpush1.msra.mxu0 0.0
        %1797 = vmatprep.subr.mxu0 0.0
        %1798 = vmatpush1.msra.mxu0 0.0
        %1799 = vmatprep.subr.mxu0 0.0
        %1800 = vmatpush1.msra.mxu0 0.0
        %1801 = vmatprep.subr.mxu0 0.0
        %1802 = vmatpush1.msra.mxu0 0.0
        %1803 = vmatprep.subr.mxu0 0.0
        %1804 = vmatpush1.msra.mxu0 0.0
        %1805 = vmatprep.subr.mxu0 0.0
        %1806 = vmatpush1.msra.mxu0 0.0
        %1807 = vmatprep.subr.mxu0 0.0
        %1808 = vmatpush1.msra.mxu0 0.0
        %1809 = vmatprep.subr.mxu0 0.0
        %1810 = vmatpush1.msra.mxu0 0.0
        %1811 = vmatprep.subr.mxu0 0.0
        %1812 = vmatpush1.msra.mxu0 0.0
        %1813 = vmatprep.subr.mxu0 0.0
        %1814 = vmatpush1.msra.mxu0 0.0
        %1815 = vmatprep.subr.mxu0 0.0
        %1816 = vmatpush1.msra.mxu0 0.0
        %1817 = vmatprep.subr.mxu0 0.0
        %1818 = vmatpush1.msra.mxu0 0.0
        %1819 = vmatprep.subr.mxu0 0.0
        %1820 = vmatpush1.msra.mxu0 0.0
        %1821 = vmatprep.subr.mxu0 0.0
        %1822 = vmatpush1.msra.mxu0 0.0
        %1823 = vmatprep.subr.mxu0 0.0
        %1824 = vmatpush1.msra.mxu0 0.0
        %1825 = vmatprep.subr.mxu0 0.0
        %1826 = vmatpush1.msra.mxu0 0.0
        %1827 = vmatprep.subr.mxu0 0.0
        %1828 = vmatpush1.msra.mxu0 0.0
        %1829 = vmatprep.subr.mxu0 0.0
        %1830 = vmatpush1.msra.mxu0 0.0
        %1831 = vmatprep.subr.mxu0 0.0
        %1832 = vmatpush1.msra.mxu0 0.0
        %1833 = vmatprep.subr.mxu0 0.0
        %1834 = vmatpush1.msra.mxu0 0.0
        %1835 = vmatprep.subr.mxu0 0.0
        %1836 = vmatpush1.msra.mxu0 0.0
        %1837 = vmatprep.subr.mxu0 0.0
        %1838 = vmatpush1.msra.mxu0 0.0
        %1839 = vmatprep.subr.mxu0 0.0
        %1840 = vmatpush1.msra.mxu0 0.0
        %1841 = vmatprep.subr.mxu0 0.0
        %1842 = vmatpush1.msra.mxu0 0.0
        %1843 = vmatprep.mubr.f32.mxu0 0.0
        %1844 = vmatmul.mubr.f32.gmra.mrb[0].mxu0 %v1774
        %v1845 = vpop.f32.mrb[0].mxu0
        %v1846 = vadd.f32 0.0, %v1845
        %v1847 = vpop.f32.mrb[0].mxu0
        %1848 = vmatprep.mubr.f32.mxu0 0.0
        %1849 = vmatmul.mubr.f32.gmra.mrb[0].mxu0 %v1777
        %v1850 = vpop.f32.mrb[0].mxu0
        %v1851 = vadd.f32 0.0, %v1850
        %v1852 = vpop.f32.mrb[0].mxu0
        %1853 = vdwg.mxu0
        %v1855 = vsel %vm1477, %v1763, 0
        %v1858 = vsel %vm1477, %v1764, 0
        %1860 = vmatprep.subr.mxu0 0.0
        %1861 = vmatpush1.msra.mxu0 %v1766
        %1862 = vmatprep.subr.mxu0 0.0
        %1863 = vmatpush1.msra.mxu0 %v1767
        %1864 = vmatprep.subr.mxu0 0.0
        %1865 = vmatpush1.msra.mxu0 0.0
        %1866 = vmatprep.subr.mxu0 0.0
        %1867 = vmatpush1.msra.mxu0 0.0
        %1868 = vmatprep.subr.mxu0 0.0
        %1869 = vmatpush1.msra.mxu0 0.0
        %1870 = vmatprep.subr.mxu0 0.0
        %1871 = vmatpush1.msra.mxu0 0.0
        %1872 = vmatprep.subr.mxu0 0.0
        %1873 = vmatpush1.msra.mxu0 0.0
        %1874 = vmatprep.subr.mxu0 0.0
        %1875 = vmatpush1.msra.mxu0 0.0
        %1876 = vmatprep.subr.mxu0 0.0
        %1877 = vmatpush1.msra.mxu0 0.0
        %1878 = vmatprep.subr.mxu0 0.0
        %1879 = vmatpush1.msra.mxu0 0.0
        %1880 = vmatprep.subr.mxu0 0.0
        %1881 = vmatpush1.msra.mxu0 0.0
        %1882 = vmatprep.subr.mxu0 0.0
        %1883 = vmatpush1.msra.mxu0 0.0
        %1884 = vmatprep.subr.mxu0 0.0
        %1885 = vmatpush1.msra.mxu0 0.0
        %1886 = vmatprep.subr.mxu0 0.0
        %1887 = vmatpush1.msra.mxu0 0.0
        %1888 = vmatprep.subr.mxu0 0.0
        %1889 = vmatpush1.msra.mxu0 0.0
        %1890 = vmatprep.subr.mxu0 0.0
        %1891 = vmatpush1.msra.mxu0 0.0
        %1892 = vmatprep.subr.mxu0 0.0
        %1893 = vmatpush1.msra.mxu0 0.0
        %1894 = vmatprep.subr.mxu0 0.0
        %1895 = vmatpush1.msra.mxu0 0.0
        %1896 = vmatprep.subr.mxu0 0.0
        %1897 = vmatpush1.msra.mxu0 0.0
        %1898 = vmatprep.subr.mxu0 0.0
        %1899 = vmatpush1.msra.mxu0 0.0
        %1900 = vmatprep.subr.mxu0 0.0
        %1901 = vmatpush1.msra.mxu0 0.0
        %1902 = vmatprep.subr.mxu0 0.0
        %1903 = vmatpush1.msra.mxu0 0.0
        %1904 = vmatprep.subr.mxu0 0.0
        %1905 = vmatpush1.msra.mxu0 0.0
        %1906 = vmatprep.subr.mxu0 0.0
        %1907 = vmatpush1.msra.mxu0 0.0
        %1908 = vmatprep.subr.mxu0 0.0
        %1909 = vmatpush1.msra.mxu0 0.0
        %1910 = vmatprep.subr.mxu0 0.0
        %1911 = vmatpush1.msra.mxu0 0.0
        %1912 = vmatprep.subr.mxu0 0.0
        %1913 = vmatpush1.msra.mxu0 0.0
        %1914 = vmatprep.subr.mxu0 0.0
        %1915 = vmatpush1.msra.mxu0 0.0
        %1916 = vmatprep.subr.mxu0 0.0
        %1917 = vmatpush1.msra.mxu0 0.0
        %1918 = vmatprep.subr.mxu0 0.0
        %1919 = vmatpush1.msra.mxu0 0.0
        %1920 = vmatprep.subr.mxu0 0.0
        %1921 = vmatpush1.msra.mxu0 0.0
        %1922 = vmatprep.subr.mxu0 0.0
        %1923 = vmatpush1.msra.mxu0 0.0
        %1924 = vmatprep.mubr.f32.mxu0 0.0
        %1925 = vmatmul.mubr.f32.gmra.mrb[0].mxu0 %v1855
        %v1926 = vpop.f32.mrb[0].mxu0
        %v1927 = vadd.f32 %v1846, %v1926
        %v1928 = vpop.f32.mrb[0].mxu0
        %1929 = vmatprep.mubr.f32.mxu0 0.0
        %1930 = vmatmul.mubr.f32.gmra.mrb[0].mxu0 %v1858
        %v1931 = vpop.f32.mrb[0].mxu0
        %v1932 = vadd.f32 %v1851, %v1931
        %v1933 = vpop.f32.mrb[0].mxu0
        %1934 = vdwg.mxu0
        %v1935 = vld [vmem:[#allocation2 + $0x2] sm:$0xff]
        %v1936 = vld [vmem:[#allocation2 + $0xa] sm:$0xff]
        %s1937 = scalar_lea.vmem [#allocation6], 80
        %v1938 = vld [vmem:[%s1937] sm:$0xff]
        %v1939 = vld [vmem:[%s1937 + $0x8] sm:$0xff]
        %v1941 = vsel %vm1477, %v1935, 0
        %v1944 = vsel %vm1477, %v1936, 0
        %1946 = vmatprep.subr.mxu0 0.0
        %1947 = vmatpush1.msra.mxu0 %v1938
        %1948 = vmatprep.subr.mxu0 0.0
        %1949 = vmatpush1.msra.mxu0 %v1939
        %1950 = vmatprep.subr.mxu0 0.0
        %1951 = vmatpush1.msra.mxu0 0.0
        %1952 = vmatprep.subr.mxu0 0.0
        %1953 = vmatpush1.msra.mxu0 0.0
        %1954 = vmatprep.subr.mxu0 0.0
        %1955 = vmatpush1.msra.mxu0 0.0
        %1956 = vmatprep.subr.mxu0 0.0
        %1957 = vmatpush1.msra.mxu0 0.0
        %1958 = vmatprep.subr.mxu0 0.0
        %1959 = vmatpush1.msra.mxu0 0.0
        %1960 = vmatprep.subr.mxu0 0.0
        %1961 = vmatpush1.msra.mxu0 0.0
        %1962 = vmatprep.subr.mxu0 0.0
        %1963 = vmatpush1.msra.mxu0 0.0
        %1964 = vmatprep.subr.mxu0 0.0
        %1965 = vmatpush1.msra.mxu0 0.0
        %1966 = vmatprep.subr.mxu0 0.0
        %1967 = vmatpush1.msra.mxu0 0.0
        %1968 = vmatprep.subr.mxu0 0.0
        %1969 = vmatpush1.msra.mxu0 0.0
        %1970 = vmatprep.subr.mxu0 0.0
        %1971 = vmatpush1.msra.mxu0 0.0
        %1972 = vmatprep.subr.mxu0 0.0
        %1973 = vmatpush1.msra.mxu0 0.0
        %1974 = vmatprep.subr.mxu0 0.0
        %1975 = vmatpush1.msra.mxu0 0.0
        %1976 = vmatprep.subr.mxu0 0.0
        %1977 = vmatpush1.msra.mxu0 0.0
        %1978 = vmatprep.subr.mxu0 0.0
        %1979 = vmatpush1.msra.mxu0 0.0
        %1980 = vmatprep.subr.mxu0 0.0
        %1981 = vmatpush1.msra.mxu0 0.0
        %1982 = vmatprep.subr.mxu0 0.0
        %1983 = vmatpush1.msra.mxu0 0.0
        %1984 = vmatprep.subr.mxu0 0.0
        %1985 = vmatpush1.msra.mxu0 0.0
        %1986 = vmatprep.subr.mxu0 0.0
        %1987 = vmatpush1.msra.mxu0 0.0
        %1988 = vmatprep.subr.mxu0 0.0
        %1989 = vmatpush1.msra.mxu0 0.0
        %1990 = vmatprep.subr.mxu0 0.0
        %1991 = vmatpush1.msra.mxu0 0.0
        %1992 = vmatprep.subr.mxu0 0.0
        %1993 = vmatpush1.msra.mxu0 0.0
        %1994 = vmatprep.subr.mxu0 0.0
        %1995 = vmatpush1.msra.mxu0 0.0
        %1996 = vmatprep.subr.mxu0 0.0
        %1997 = vmatpush1.msra.mxu0 0.0
        %1998 = vmatprep.subr.mxu0 0.0
        %1999 = vmatpush1.msra.mxu0 0.0
        %2000 = vmatprep.subr.mxu0 0.0
        %2001 = vmatpush1.msra.mxu0 0.0
        %2002 = vmatprep.subr.mxu0 0.0
        %2003 = vmatpush1.msra.mxu0 0.0
        %2004 = vmatprep.subr.mxu0 0.0
        %2005 = vmatpush1.msra.mxu0 0.0
        %2006 = vmatprep.subr.mxu0 0.0
        %2007 = vmatpush1.msra.mxu0 0.0
        %2008 = vmatprep.subr.mxu0 0.0
        %2009 = vmatpush1.msra.mxu0 0.0
        %2010 = vmatprep.mubr.f32.mxu0 0.0
        %2011 = vmatmul.mubr.f32.gmra.mrb[0].mxu0 %v1941
        %v2012 = vpop.f32.mrb[0].mxu0
        %v2013 = vadd.f32 0.0, %v2012
        %v2014 = vpop.f32.mrb[0].mxu0
        %2015 = vmatprep.mubr.f32.mxu0 0.0
        %2016 = vmatmul.mubr.f32.gmra.mrb[0].mxu0 %v1944
        %v2017 = vpop.f32.mrb[0].mxu0
        %v2018 = vadd.f32 0.0, %v2017
        %v2019 = vpop.f32.mrb[0].mxu0
        %2020 = vdwg.mxu0
        %v2021 = vadd.f32 %v1927, %v2013
        %v2022 = vadd.f32 %v1932, %v2018
        %v2023 = vlaneseq
        %v2024 = vshrl.u32 %v2023, 7
        %v2025 = vsub.s32 0, %v2024
        %v2026 = vrot.slane %v1758, %v2025
        %v2027 = vadd.f32 %v2021, %v2026
        %v2028 = vadd.f32 %v2022, %v2026
        %v2029 = vmax.f32 %v2027, 0.0
        %v2030 = vmax.f32 %v2028, 0.0
        %v2031 = vadd.f32 %v2029, %v1475
        %v2032 = vadd.f32 %v2030, %v1476
        %v2033 = vld [vmem:[%s8 + $0x2] sm:$0x1]
        %2034 = vst.msk [vmem:[#allocation2] sm:$0x1] %vm1486, 0.0
        %2035 = vst.msk [vmem:[#allocation2 + $0x11] sm:$0x1] %vm1486, 0.0
        %2036 = vst.msk [vmem:[#allocation2 + $0x1] sm:$0xff] %vm1477, %v2031
        %2037 = vst.msk [vmem:[#allocation2 + $0x9] sm:$0xff] %vm1477, %v2032
        %v2038 = vld [vmem:[#allocation2] sm:$0xff]
        %v2039 = vld [vmem:[#allocation2 + $0x8] sm:$0xff]
        %s2040 = scalar_lea.vmem [#allocation6], 96
        %v2041 = vld [vmem:[%s2040] sm:$0xff]
        %v2042 = vld [vmem:[%s2040 + $0x8] sm:$0xff]
        %v2043 = vld [vmem:[#allocation2 + $0x1] sm:$0xff]
        %v2044 = vld [vmem:[#allocation2 + $0x9] sm:$0xff]
        %s2045 = scalar_lea.vmem [#allocation6], 112
        %v2046 = vld [vmem:[%s2045] sm:$0xff]
        %v2047 = vld [vmem:[%s2045 + $0x8] sm:$0xff]
        %v2049 = vsel %vm1477, %v2043, 0
        %v2052 = vsel %vm1477, %v2044, 0
        %2054 = vmatprep.subr.mxu0 0.0
        %2055 = vmatpush1.msra.mxu0 %v2046
        %2056 = vmatprep.subr.mxu0 0.0
        %2057 = vmatpush1.msra.mxu0 %v2047
        %2058 = vmatprep.subr.mxu0 0.0
        %2059 = vmatpush1.msra.mxu0 0.0
        %2060 = vmatprep.subr.mxu0 0.0
        %2061 = vmatpush1.msra.mxu0 0.0
        %2062 = vmatprep.subr.mxu0 0.0
        %2063 = vmatpush1.msra.mxu0 0.0
        %2064 = vmatprep.subr.mxu0 0.0
        %2065 = vmatpush1.msra.mxu0 0.0
        %2066 = vmatprep.subr.mxu0 0.0
        %2067 = vmatpush1.msra.mxu0 0.0
        %2068 = vmatprep.subr.mxu0 0.0
        %2069 = vmatpush1.msra.mxu0 0.0
        %2070 = vmatprep.subr.mxu0 0.0
        %2071 = vmatpush1.msra.mxu0 0.0
        %2072 = vmatprep.subr.mxu0 0.0
        %2073 = vmatpush1.msra.mxu0 0.0
        %2074 = vmatprep.subr.mxu0 0.0
        %2075 = vmatpush1.msra.mxu0 0.0
        %2076 = vmatprep.subr.mxu0 0.0
        %2077 = vmatpush1.msra.mxu0 0.0
        %2078 = vmatprep.subr.mxu0 0.0
        %2079 = vmatpush1.msra.mxu0 0.0
        %2080 = vmatprep.subr.mxu0 0.0
        %2081 = vmatpush1.msra.mxu0 0.0
        %2082 = vmatprep.subr.mxu0 0.0
        %2083 = vmatpush1.msra.mxu0 0.0
        %2084 = vmatprep.subr.mxu0 0.0
        %2085 = vmatpush1.msra.mxu0 0.0
        %2086 = vmatprep.subr.mxu0 0.0
        %2087 = vmatpush1.msra.mxu0 0.0
        %2088 = vmatprep.subr.mxu0 0.0
        %2089 = vmatpush1.msra.mxu0 0.0
        %2090 = vmatprep.subr.mxu0 0.0
        %2091 = vmatpush1.msra.mxu0 0.0
        %2092 = vmatprep.subr.mxu0 0.0
        %2093 = vmatpush1.msra.mxu0 0.0
        %2094 = vmatprep.subr.mxu0 0.0
        %2095 = vmatpush1.msra.mxu0 0.0
        %2096 = vmatprep.subr.mxu0 0.0
        %2097 = vmatpush1.msra.mxu0 0.0
        %2098 = vmatprep.subr.mxu0 0.0
        %2099 = vmatpush1.msra.mxu0 0.0
        %2100 = vmatprep.subr.mxu0 0.0
        %2101 = vmatpush1.msra.mxu0 0.0
        %2102 = vmatprep.subr.mxu0 0.0
        %2103 = vmatpush1.msra.mxu0 0.0
        %2104 = vmatprep.subr.mxu0 0.0
        %2105 = vmatpush1.msra.mxu0 0.0
        %2106 = vmatprep.subr.mxu0 0.0
        %2107 = vmatpush1.msra.mxu0 0.0
        %2108 = vmatprep.subr.mxu0 0.0
        %2109 = vmatpush1.msra.mxu0 0.0
        %2110 = vmatprep.subr.mxu0 0.0
        %2111 = vmatpush1.msra.mxu0 0.0
        %2112 = vmatprep.subr.mxu0 0.0
        %2113 = vmatpush1.msra.mxu0 0.0
        %2114 = vmatprep.subr.mxu0 0.0
        %2115 = vmatpush1.msra.mxu0 0.0
        %2116 = vmatprep.subr.mxu0 0.0
        %2117 = vmatpush1.msra.mxu0 0.0
        %2118 = vmatprep.mubr.f32.mxu0 0.0
        %2119 = vmatmul.mubr.f32.gmra.mrb[0].mxu0 %v2049
        %v2120 = vpop.f32.mrb[0].mxu0
        %v2121 = vadd.f32 0.0, %v2120
        %v2122 = vpop.f32.mrb[0].mxu0
        %2123 = vmatprep.mubr.f32.mxu0 0.0
        %2124 = vmatmul.mubr.f32.gmra.mrb[0].mxu0 %v2052
        %v2125 = vpop.f32.mrb[0].mxu0
        %v2126 = vadd.f32 0.0, %v2125
        %v2127 = vpop.f32.mrb[0].mxu0
        %2128 = vdwg.mxu0
        %v2130 = vsel %vm1477, %v2038, 0
        %v2133 = vsel %vm1477, %v2039, 0
        %2135 = vmatprep.subr.mxu0 0.0
        %2136 = vmatpush1.msra.mxu0 %v2041
        %2137 = vmatprep.subr.mxu0 0.0
        %2138 = vmatpush1.msra.mxu0 %v2042
        %2139 = vmatprep.subr.mxu0 0.0
        %2140 = vmatpush1.msra.mxu0 0.0
        %2141 = vmatprep.subr.mxu0 0.0
        %2142 = vmatpush1.msra.mxu0 0.0
        %2143 = vmatprep.subr.mxu0 0.0
        %2144 = vmatpush1.msra.mxu0 0.0
        %2145 = vmatprep.subr.mxu0 0.0
        %2146 = vmatpush1.msra.mxu0 0.0
        %2147 = vmatprep.subr.mxu0 0.0
        %2148 = vmatpush1.msra.mxu0 0.0
        %2149 = vmatprep.subr.mxu0 0.0
        %2150 = vmatpush1.msra.mxu0 0.0
        %2151 = vmatprep.subr.mxu0 0.0
        %2152 = vmatpush1.msra.mxu0 0.0
        %2153 = vmatprep.subr.mxu0 0.0
        %2154 = vmatpush1.msra.mxu0 0.0
        %2155 = vmatprep.subr.mxu0 0.0
        %2156 = vmatpush1.msra.mxu0 0.0
        %2157 = vmatprep.subr.mxu0 0.0
        %2158 = vmatpush1.msra.mxu0 0.0
        %2159 = vmatprep.subr.mxu0 0.0
        %2160 = vmatpush1.msra.mxu0 0.0
        %2161 = vmatprep.subr.mxu0 0.0
        %2162 = vmatpush1.msra.mxu0 0.0
        %2163 = vmatprep.subr.mxu0 0.0
        %2164 = vmatpush1.msra.mxu0 0.0
        %2165 = vmatprep.subr.mxu0 0.0
        %2166 = vmatpush1.msra.mxu0 0.0
        %2167 = vmatprep.subr.mxu0 0.0
        %2168 = vmatpush1.msra.mxu0 0.0
        %2169 = vmatprep.subr.mxu0 0.0
        %2170 = vmatpush1.msra.mxu0 0.0
        %2171 = vmatprep.subr.mxu0 0.0
        %2172 = vmatpush1.msra.mxu0 0.0
        %2173 = vmatprep.subr.mxu0 0.0
        %2174 = vmatpush1.msra.mxu0 0.0
        %2175 = vmatprep.subr.mxu0 0.0
        %2176 = vmatpush1.msra.mxu0 0.0
        %2177 = vmatprep.subr.mxu0 0.0
        %2178 = vmatpush1.msra.mxu0 0.0
        %2179 = vmatprep.subr.mxu0 0.0
        %2180 = vmatpush1.msra.mxu0 0.0
        %2181 = vmatprep.subr.mxu0 0.0
        %2182 = vmatpush1.msra.mxu0 0.0
        %2183 = vmatprep.subr.mxu0 0.0
        %2184 = vmatpush1.msra.mxu0 0.0
        %2185 = vmatprep.subr.mxu0 0.0
        %2186 = vmatpush1.msra.mxu0 0.0
        %2187 = vmatprep.subr.mxu0 0.0
        %2188 = vmatpush1.msra.mxu0 0.0
        %2189 = vmatprep.subr.mxu0 0.0
        %2190 = vmatpush1.msra.mxu0 0.0
        %2191 = vmatprep.subr.mxu0 0.0
        %2192 = vmatpush1.msra.mxu0 0.0
        %2193 = vmatprep.subr.mxu0 0.0
        %2194 = vmatpush1.msra.mxu0 0.0
        %2195 = vmatprep.subr.mxu0 0.0
        %2196 = vmatpush1.msra.mxu0 0.0
        %2197 = vmatprep.subr.mxu0 0.0
        %2198 = vmatpush1.msra.mxu0 0.0
        %2199 = vmatprep.mubr.f32.mxu0 0.0
        %2200 = vmatmul.mubr.f32.gmra.mrb[0].mxu0 %v2130
        %v2201 = vpop.f32.mrb[0].mxu0
        %v2202 = vadd.f32 %v2121, %v2201
        %v2203 = vpop.f32.mrb[0].mxu0
        %2204 = vmatprep.mubr.f32.mxu0 0.0
        %2205 = vmatmul.mubr.f32.gmra.mrb[0].mxu0 %v2133
        %v2206 = vpop.f32.mrb[0].mxu0
        %v2207 = vadd.f32 %v2126, %v2206
        %v2208 = vpop.f32.mrb[0].mxu0
        %2209 = vdwg.mxu0
        %v2210 = vld [vmem:[#allocation2 + $0x2] sm:$0xff]
        %v2211 = vld [vmem:[#allocation2 + $0xa] sm:$0xff]
        %s2212 = scalar_lea.vmem [#allocation6], 128
        %v2213 = vld [vmem:[%s2212] sm:$0xff]
        %v2214 = vld [vmem:[%s2212 + $0x8] sm:$0xff]
        %v2216 = vsel %vm1477, %v2210, 0
        %v2219 = vsel %vm1477, %v2211, 0
        %2221 = vmatprep.subr.mxu0 0.0
        %2222 = vmatpush1.msra.mxu0 %v2213
        %2223 = vmatprep.subr.mxu0 0.0
        %2224 = vmatpush1.msra.mxu0 %v2214
        %2225 = vmatprep.subr.mxu0 0.0
        %2226 = vmatpush1.msra.mxu0 0.0
        %2227 = vmatprep.subr.mxu0 0.0
        %2228 = vmatpush1.msra.mxu0 0.0
        %2229 = vmatprep.subr.mxu0 0.0
        %2230 = vmatpush1.msra.mxu0 0.0
        %2231 = vmatprep.subr.mxu0 0.0
        %2232 = vmatpush1.msra.mxu0 0.0
        %2233 = vmatprep.subr.mxu0 0.0
        %2234 = vmatpush1.msra.mxu0 0.0
        %2235 = vmatprep.subr.mxu0 0.0
        %2236 = vmatpush1.msra.mxu0 0.0
        %2237 = vmatprep.subr.mxu0 0.0
        %2238 = vmatpush1.msra.mxu0 0.0
        %2239 = vmatprep.subr.mxu0 0.0
        %2240 = vmatpush1.msra.mxu0 0.0
        %2241 = vmatprep.subr.mxu0 0.0
        %2242 = vmatpush1.msra.mxu0 0.0
        %2243 = vmatprep.subr.mxu0 0.0
        %2244 = vmatpush1.msra.mxu0 0.0
        %2245 = vmatprep.subr.mxu0 0.0
        %2246 = vmatpush1.msra.mxu0 0.0
        %2247 = vmatprep.subr.mxu0 0.0
        %2248 = vmatpush1.msra.mxu0 0.0
        %2249 = vmatprep.subr.mxu0 0.0
        %2250 = vmatpush1.msra.mxu0 0.0
        %2251 = vmatprep.subr.mxu0 0.0
        %2252 = vmatpush1.msra.mxu0 0.0
        %2253 = vmatprep.subr.mxu0 0.0
        %2254 = vmatpush1.msra.mxu0 0.0
        %2255 = vmatprep.subr.mxu0 0.0
        %2256 = vmatpush1.msra.mxu0 0.0
        %2257 = vmatprep.subr.mxu0 0.0
        %2258 = vmatpush1.msra.mxu0 0.0
        %2259 = vmatprep.subr.mxu0 0.0
        %2260 = vmatpush1.msra.mxu0 0.0
        %2261 = vmatprep.subr.mxu0 0.0
        %2262 = vmatpush1.msra.mxu0 0.0
        %2263 = vmatprep.subr.mxu0 0.0
        %2264 = vmatpush1.msra.mxu0 0.0
        %2265 = vmatprep.subr.mxu0 0.0
        %2266 = vmatpush1.msra.mxu0 0.0
        %2267 = vmatprep.subr.mxu0 0.0
        %2268 = vmatpush1.msra.mxu0 0.0
        %2269 = vmatprep.subr.mxu0 0.0
        %2270 = vmatpush1.msra.mxu0 0.0
        %2271 = vmatprep.subr.mxu0 0.0
        %2272 = vmatpush1.msra.mxu0 0.0
        %2273 = vmatprep.subr.mxu0 0.0
        %2274 = vmatpush1.msra.mxu0 0.0
        %2275 = vmatprep.subr.mxu0 0.0
        %2276 = vmatpush1.msra.mxu0 0.0
        %2277 = vmatprep.subr.mxu0 0.0
        %2278 = vmatpush1.msra.mxu0 0.0
        %2279 = vmatprep.subr.mxu0 0.0
        %2280 = vmatpush1.msra.mxu0 0.0
        %2281 = vmatprep.subr.mxu0 0.0
        %2282 = vmatpush1.msra.mxu0 0.0
        %2283 = vmatprep.subr.mxu0 0.0
        %2284 = vmatpush1.msra.mxu0 0.0
        %2285 = vmatprep.mubr.f32.mxu0 0.0
        %2286 = vmatmul.mubr.f32.gmra.mrb[0].mxu0 %v2216
        %v2287 = vpop.f32.mrb[0].mxu0
        %v2288 = vadd.f32 0.0, %v2287
        %v2289 = vpop.f32.mrb[0].mxu0
        %2290 = vmatprep.mubr.f32.mxu0 0.0
        %2291 = vmatmul.mubr.f32.gmra.mrb[0].mxu0 %v2219
        %v2292 = vpop.f32.mrb[0].mxu0
        %v2293 = vadd.f32 0.0, %v2292
        %v2294 = vpop.f32.mrb[0].mxu0
        %2295 = vdwg.mxu0
        %v2296 = vadd.f32 %v2202, %v2288
        %v2297 = vadd.f32 %v2207, %v2293
        %v2298 = vlaneseq
        %v2299 = vshrl.u32 %v2298, 7
        %v2300 = vsub.s32 0, %v2299
        %v2301 = vrot.slane %v2033, %v2300
        %v2302 = vadd.f32 %v2296, %v2301
        %v2303 = vadd.f32 %v2297, %v2301
        %v2304 = vmax.f32 %v2302, 0.0
        %v2305 = vmax.f32 %v2303, 0.0
        %v2306 = vld [vmem:[%s8 + $0x3] sm:$0x1]
        %2307 = vst.msk [vmem:[#allocation2] sm:$0x1] %vm1486, 0.0
        %2308 = vst.msk [vmem:[#allocation2 + $0x11] sm:$0x1] %vm1486, 0.0
        %2309 = vst.msk [vmem:[#allocation2 + $0x1] sm:$0xff] %vm1477, %v2304
        %2310 = vst.msk [vmem:[#allocation2 + $0x9] sm:$0xff] %vm1477, %v2305
        %v2311 = vld [vmem:[#allocation2] ss:$2 sm:$0xff]
        %v2312 = vld [vmem:[#allocation8] sm:$0xff]
        %v2313 = vld [vmem:[#allocation8 + $0x8] sm:$0xff]
        %v2314 = vld [vmem:[%s1481] ss:$2 sm:$0xff]
        %s2315 = scalar_lea.vmem [#allocation8], 16
        %v2316 = vld [vmem:[%s2315] sm:$0xff]
        %v2317 = vld [vmem:[%s2315 + $0x8] sm:$0xff]
        %v2319 = vsel %vm1477, %v2314, 0
        %2321 = vmatprep.subr.mxu0 0.0
        %2322 = vmatpush1.msra.mxu0 %v2316
        %2323 = vmatprep.subr.mxu0 0.0
        %2324 = vmatpush1.msra.mxu0 %v2317
        %2325 = vmatprep.subr.mxu0 0.0
        %2326 = vmatpush1.msra.mxu0 0.0
        %2327 = vmatprep.subr.mxu0 0.0
        %2328 = vmatpush1.msra.mxu0 0.0
        %2329 = vmatprep.subr.mxu0 0.0
        %2330 = vmatpush1.msra.mxu0 0.0
        %2331 = vmatprep.subr.mxu0 0.0
        %2332 = vmatpush1.msra.mxu0 0.0
        %2333 = vmatprep.subr.mxu0 0.0
        %2334 = vmatpush1.msra.mxu0 0.0
        %2335 = vmatprep.subr.mxu0 0.0
        %2336 = vmatpush1.msra.mxu0 0.0
        %2337 = vmatprep.subr.mxu0 0.0
        %2338 = vmatpush1.msra.mxu0 0.0
        %2339 = vmatprep.subr.mxu0 0.0
        %2340 = vmatpush1.msra.mxu0 0.0
        %2341 = vmatprep.subr.mxu0 0.0
        %2342 = vmatpush1.msra.mxu0 0.0
        %2343 = vmatprep.subr.mxu0 0.0
        %2344 = vmatpush1.msra.mxu0 0.0
        %2345 = vmatprep.subr.mxu0 0.0
        %2346 = vmatpush1.msra.mxu0 0.0
        %2347 = vmatprep.subr.mxu0 0.0
        %2348 = vmatpush1.msra.mxu0 0.0
        %2349 = vmatprep.subr.mxu0 0.0
        %2350 = vmatpush1.msra.mxu0 0.0
        %2351 = vmatprep.subr.mxu0 0.0
        %2352 = vmatpush1.msra.mxu0 0.0
        %2353 = vmatprep.subr.mxu0 0.0
        %2354 = vmatpush1.msra.mxu0 0.0
        %2355 = vmatprep.subr.mxu0 0.0
        %2356 = vmatpush1.msra.mxu0 0.0
        %2357 = vmatprep.subr.mxu0 0.0
        %2358 = vmatpush1.msra.mxu0 0.0
        %2359 = vmatprep.subr.mxu0 0.0
        %2360 = vmatpush1.msra.mxu0 0.0
        %2361 = vmatprep.subr.mxu0 0.0
        %2362 = vmatpush1.msra.mxu0 0.0
        %2363 = vmatprep.subr.mxu0 0.0
        %2364 = vmatpush1.msra.mxu0 0.0
        %2365 = vmatprep.subr.mxu0 0.0
        %2366 = vmatpush1.msra.mxu0 0.0
        %2367 = vmatprep.subr.mxu0 0.0
        %2368 = vmatpush1.msra.mxu0 0.0
        %2369 = vmatprep.subr.mxu0 0.0
        %2370 = vmatpush1.msra.mxu0 0.0
        %2371 = vmatprep.subr.mxu0 0.0
        %2372 = vmatpush1.msra.mxu0 0.0
        %2373 = vmatprep.subr.mxu0 0.0
        %2374 = vmatpush1.msra.mxu0 0.0
        %2375 = vmatprep.subr.mxu0 0.0
        %2376 = vmatpush1.msra.mxu0 0.0
        %2377 = vmatprep.subr.mxu0 0.0
        %2378 = vmatpush1.msra.mxu0 0.0
        %2379 = vmatprep.subr.mxu0 0.0
        %2380 = vmatpush1.msra.mxu0 0.0
        %2381 = vmatprep.subr.mxu0 0.0
        %2382 = vmatpush1.msra.mxu0 0.0
        %2383 = vmatprep.subr.mxu0 0.0
        %2384 = vmatpush1.msra.mxu0 0.0
        %2385 = vmatprep.mubr.f32.mxu0 0.0
        %2386 = vmatmul.mubr.f32.gmra.mrb[0].mxu0 %v2319
        %v2387 = vpop.f32.mrb[0].mxu0
        %v2388 = vadd.f32 0.0, %v2387
        %v2389 = vpop.f32.mrb[0].mxu0
        %2390 = vdwg.mxu0
        %v2392 = vsel %vm1477, %v2311, 0
        %2394 = vmatprep.subr.mxu0 0.0
        %2395 = vmatpush1.msra.mxu0 %v2312
        %2396 = vmatprep.subr.mxu0 0.0
        %2397 = vmatpush1.msra.mxu0 %v2313
        %2398 = vmatprep.subr.mxu0 0.0
        %2399 = vmatpush1.msra.mxu0 0.0
        %2400 = vmatprep.subr.mxu0 0.0
        %2401 = vmatpush1.msra.mxu0 0.0
        %2402 = vmatprep.subr.mxu0 0.0
        %2403 = vmatpush1.msra.mxu0 0.0
        %2404 = vmatprep.subr.mxu0 0.0
        %2405 = vmatpush1.msra.mxu0 0.0
        %2406 = vmatprep.subr.mxu0 0.0
        %2407 = vmatpush1.msra.mxu0 0.0
        %2408 = vmatprep.subr.mxu0 0.0
        %2409 = vmatpush1.msra.mxu0 0.0
        %2410 = vmatprep.subr.mxu0 0.0
        %2411 = vmatpush1.msra.mxu0 0.0
        %2412 = vmatprep.subr.mxu0 0.0
        %2413 = vmatpush1.msra.mxu0 0.0
        %2414 = vmatprep.subr.mxu0 0.0
        %2415 = vmatpush1.msra.mxu0 0.0
        %2416 = vmatprep.subr.mxu0 0.0
        %2417 = vmatpush1.msra.mxu0 0.0
        %2418 = vmatprep.subr.mxu0 0.0
        %2419 = vmatpush1.msra.mxu0 0.0
        %2420 = vmatprep.subr.mxu0 0.0
        %2421 = vmatpush1.msra.mxu0 0.0
        %2422 = vmatprep.subr.mxu0 0.0
        %2423 = vmatpush1.msra.mxu0 0.0
        %2424 = vmatprep.subr.mxu0 0.0
        %2425 = vmatpush1.msra.mxu0 0.0
        %2426 = vmatprep.subr.mxu0 0.0
        %2427 = vmatpush1.msra.mxu0 0.0
        %2428 = vmatprep.subr.mxu0 0.0
        %2429 = vmatpush1.msra.mxu0 0.0
        %2430 = vmatprep.subr.mxu0 0.0
        %2431 = vmatpush1.msra.mxu0 0.0
        %2432 = vmatprep.subr.mxu0 0.0
        %2433 = vmatpush1.msra.mxu0 0.0
        %2434 = vmatprep.subr.mxu0 0.0
        %2435 = vmatpush1.msra.mxu0 0.0
        %2436 = vmatprep.subr.mxu0 0.0
        %2437 = vmatpush1.msra.mxu0 0.0
        %2438 = vmatprep.subr.mxu0 0.0
        %2439 = vmatpush1.msra.mxu0 0.0
        %2440 = vmatprep.subr.mxu0 0.0
        %2441 = vmatpush1.msra.mxu0 0.0
        %2442 = vmatprep.subr.mxu0 0.0
        %2443 = vmatpush1.msra.mxu0 0.0
        %2444 = vmatprep.subr.mxu0 0.0
        %2445 = vmatpush1.msra.mxu0 0.0
        %2446 = vmatprep.subr.mxu0 0.0
        %2447 = vmatpush1.msra.mxu0 0.0
        %2448 = vmatprep.subr.mxu0 0.0
        %2449 = vmatpush1.msra.mxu0 0.0
        %2450 = vmatprep.subr.mxu0 0.0
        %2451 = vmatpush1.msra.mxu0 0.0
        %2452 = vmatprep.subr.mxu0 0.0
        %2453 = vmatpush1.msra.mxu0 0.0
        %2454 = vmatprep.subr.mxu0 0.0
        %2455 = vmatpush1.msra.mxu0 0.0
        %2456 = vmatprep.subr.mxu0 0.0
        %2457 = vmatpush1.msra.mxu0 0.0
        %2458 = vmatprep.mubr.f32.mxu0 0.0
        %2459 = vmatmul.mubr.f32.gmra.mrb[0].mxu0 %v2392
        %v2460 = vpop.f32.mrb[0].mxu0
        %v2461 = vadd.f32 %v2388, %v2460
        %v2462 = vpop.f32.mrb[0].mxu0
        %2463 = vdwg.mxu0
        %s2464 = scalar_lea.vmem [#allocation2], 2
        %v2465 = vld [vmem:[%s2464] ss:$2 sm:$0xff]
        %s2466 = scalar_lea.vmem [#allocation8], 32
        %v2467 = vld [vmem:[%s2466] sm:$0xff]
        %v2468 = vld [vmem:[%s2466 + $0x8] sm:$0xff]
        %v2470 = vsel %vm1477, %v2465, 0
        %2472 = vmatprep.subr.mxu0 0.0
        %2473 = vmatpush1.msra.mxu0 %v2467
        %2474 = vmatprep.subr.mxu0 0.0
        %2475 = vmatpush1.msra.mxu0 %v2468
        %2476 = vmatprep.subr.mxu0 0.0
        %2477 = vmatpush1.msra.mxu0 0.0
        %2478 = vmatprep.subr.mxu0 0.0
        %2479 = vmatpush1.msra.mxu0 0.0
        %2480 = vmatprep.subr.mxu0 0.0
        %2481 = vmatpush1.msra.mxu0 0.0
        %2482 = vmatprep.subr.mxu0 0.0
        %2483 = vmatpush1.msra.mxu0 0.0
        %2484 = vmatprep.subr.mxu0 0.0
        %2485 = vmatpush1.msra.mxu0 0.0
        %2486 = vmatprep.subr.mxu0 0.0
        %2487 = vmatpush1.msra.mxu0 0.0
        %2488 = vmatprep.subr.mxu0 0.0
        %2489 = vmatpush1.msra.mxu0 0.0
        %2490 = vmatprep.subr.mxu0 0.0
        %2491 = vmatpush1.msra.mxu0 0.0
        %2492 = vmatprep.subr.mxu0 0.0
        %2493 = vmatpush1.msra.mxu0 0.0
        %2494 = vmatprep.subr.mxu0 0.0
        %2495 = vmatpush1.msra.mxu0 0.0
        %2496 = vmatprep.subr.mxu0 0.0
        %2497 = vmatpush1.msra.mxu0 0.0
        %2498 = vmatprep.subr.mxu0 0.0
        %2499 = vmatpush1.msra.mxu0 0.0
        %2500 = vmatprep.subr.mxu0 0.0
        %2501 = vmatpush1.msra.mxu0 0.0
        %2502 = vmatprep.subr.mxu0 0.0
        %2503 = vmatpush1.msra.mxu0 0.0
        %2504 = vmatprep.subr.mxu0 0.0
        %2505 = vmatpush1.msra.mxu0 0.0
        %2506 = vmatprep.subr.mxu0 0.0
        %2507 = vmatpush1.msra.mxu0 0.0
        %2508 = vmatprep.subr.mxu0 0.0
        %2509 = vmatpush1.msra.mxu0 0.0
        %2510 = vmatprep.subr.mxu0 0.0
        %2511 = vmatpush1.msra.mxu0 0.0
        %2512 = vmatprep.subr.mxu0 0.0
        %2513 = vmatpush1.msra.mxu0 0.0
        %2514 = vmatprep.subr.mxu0 0.0
        %2515 = vmatpush1.msra.mxu0 0.0
        %2516 = vmatprep.subr.mxu0 0.0
        %2517 = vmatpush1.msra.mxu0 0.0
        %2518 = vmatprep.subr.mxu0 0.0
        %2519 = vmatpush1.msra.mxu0 0.0
        %2520 = vmatprep.subr.mxu0 0.0
        %2521 = vmatpush1.msra.mxu0 0.0
        %2522 = vmatprep.subr.mxu0 0.0
        %2523 = vmatpush1.msra.mxu0 0.0
        %2524 = vmatprep.subr.mxu0 0.0
        %2525 = vmatpush1.msra.mxu0 0.0
        %2526 = vmatprep.subr.mxu0 0.0
        %2527 = vmatpush1.msra.mxu0 0.0
        %2528 = vmatprep.subr.mxu0 0.0
        %2529 = vmatpush1.msra.mxu0 0.0
        %2530 = vmatprep.subr.mxu0 0.0
        %2531 = vmatpush1.msra.mxu0 0.0
        %2532 = vmatprep.subr.mxu0 0.0
        %2533 = vmatpush1.msra.mxu0 0.0
        %2534 = vmatprep.subr.mxu0 0.0
        %2535 = vmatpush1.msra.mxu0 0.0
        %2536 = vmatprep.mubr.f32.mxu0 0.0
        %2537 = vmatmul.mubr.f32.gmra.mrb[0].mxu0 %v2470
        %v2538 = vpop.f32.mrb[0].mxu0
        %v2539 = vadd.f32 0.0, %v2538
        %v2540 = vpop.f32.mrb[0].mxu0
        %2541 = vdwg.mxu0
        %v2542 = vadd.f32 %v2461, %v2539
        %s2543 = scalar_lea.vmem [#allocation2], 3
        %v2544 = vld [vmem:[%s2543] ss:$2 sm:$0xff]
        %s2545 = scalar_lea.vmem [#allocation8], 48
        %v2546 = vld [vmem:[%s2545] sm:$0xff]
        %v2547 = vld [vmem:[%s2545 + $0x8] sm:$0xff]
        %v2549 = vsel %vm1477, %v2544, 0
        %2551 = vmatprep.subr.mxu0 0.0
        %2552 = vmatpush1.msra.mxu0 %v2546
        %2553 = vmatprep.subr.mxu0 0.0
        %2554 = vmatpush1.msra.mxu0 %v2547
        %2555 = vmatprep.subr.mxu0 0.0
        %2556 = vmatpush1.msra.mxu0 0.0
        %2557 = vmatprep.subr.mxu0 0.0
        %2558 = vmatpush1.msra.mxu0 0.0
        %2559 = vmatprep.subr.mxu0 0.0
        %2560 = vmatpush1.msra.mxu0 0.0
        %2561 = vmatprep.subr.mxu0 0.0
        %2562 = vmatpush1.msra.mxu0 0.0
        %2563 = vmatprep.subr.mxu0 0.0
        %2564 = vmatpush1.msra.mxu0 0.0
        %2565 = vmatprep.subr.mxu0 0.0
        %2566 = vmatpush1.msra.mxu0 0.0
        %2567 = vmatprep.subr.mxu0 0.0
        %2568 = vmatpush1.msra.mxu0 0.0
        %2569 = vmatprep.subr.mxu0 0.0
        %2570 = vmatpush1.msra.mxu0 0.0
        %2571 = vmatprep.subr.mxu0 0.0
        %2572 = vmatpush1.msra.mxu0 0.0
        %2573 = vmatprep.subr.mxu0 0.0
        %2574 = vmatpush1.msra.mxu0 0.0
        %2575 = vmatprep.subr.mxu0 0.0
        %2576 = vmatpush1.msra.mxu0 0.0
        %2577 = vmatprep.subr.mxu0 0.0
        %2578 = vmatpush1.msra.mxu0 0.0
        %2579 = vmatprep.subr.mxu0 0.0
        %2580 = vmatpush1.msra.mxu0 0.0
        %2581 = vmatprep.subr.mxu0 0.0
        %2582 = vmatpush1.msra.mxu0 0.0
        %2583 = vmatprep.subr.mxu0 0.0
        %2584 = vmatpush1.msra.mxu0 0.0
        %2585 = vmatprep.subr.mxu0 0.0
        %2586 = vmatpush1.msra.mxu0 0.0
        %2587 = vmatprep.subr.mxu0 0.0
        %2588 = vmatpush1.msra.mxu0 0.0
        %2589 = vmatprep.subr.mxu0 0.0
        %2590 = vmatpush1.msra.mxu0 0.0
        %2591 = vmatprep.subr.mxu0 0.0
        %2592 = vmatpush1.msra.mxu0 0.0
        %2593 = vmatprep.subr.mxu0 0.0
        %2594 = vmatpush1.msra.mxu0 0.0
        %2595 = vmatprep.subr.mxu0 0.0
        %2596 = vmatpush1.msra.mxu0 0.0
        %2597 = vmatprep.subr.mxu0 0.0
        %2598 = vmatpush1.msra.mxu0 0.0
        %2599 = vmatprep.subr.mxu0 0.0
        %2600 = vmatpush1.msra.mxu0 0.0
        %2601 = vmatprep.subr.mxu0 0.0
        %2602 = vmatpush1.msra.mxu0 0.0
        %2603 = vmatprep.subr.mxu0 0.0
        %2604 = vmatpush1.msra.mxu0 0.0
        %2605 = vmatprep.subr.mxu0 0.0
        %2606 = vmatpush1.msra.mxu0 0.0
        %2607 = vmatprep.subr.mxu0 0.0
        %2608 = vmatpush1.msra.mxu0 0.0
        %2609 = vmatprep.subr.mxu0 0.0
        %2610 = vmatpush1.msra.mxu0 0.0
        %2611 = vmatprep.subr.mxu0 0.0
        %2612 = vmatpush1.msra.mxu0 0.0
        %2613 = vmatprep.subr.mxu0 0.0
        %2614 = vmatpush1.msra.mxu0 0.0
        %2615 = vmatprep.mubr.f32.mxu0 0.0
        %2616 = vmatmul.mubr.f32.gmra.mrb[0].mxu0 %v2549
        %v2617 = vpop.f32.mrb[0].mxu0
        %v2618 = vadd.f32 0.0, %v2617
        %v2619 = vpop.f32.mrb[0].mxu0
        %2620 = vdwg.mxu0
        %v2621 = vadd.f32 %v2542, %v2618
        %v2622 = vlaneseq
        %v2623 = vshrl.u32 %v2622, 7
        %v2624 = vsub.s32 0, %v2623
        %v2625 = vrot.slane %v2306, %v2624
        %v2626 = vadd.f32 %v2621, %v2625
        %v2627 = vmax.f32 %v2626, 0.0
        %v2628 = vadd.f32 %v2627, %v1484
        %2629 = vst.msk [vmem:[#allocation2] sm:$0xff] %vm1477, %v2628
        %v2630 = vld [vmem:[#allocation2] ss:$2 sm:$0xf]
        %v2631 = vld [vmem:[%s1481] ss:$2 sm:$0xf]
        %v2632 = vadd.f32 %v2630, %v2631
        %v2633 = vmul.f32 %v2632, 0.5
        %v2634 = vld [vmem:[%s8 + $0x4] sm:$0x1]
        %2635 = vst.msk [vmem:[#allocation2] sm:$0x1] %vm1486, 0.0
        %2636 = vst.msk [vmem:[#allocation2 + $0x9] sm:$0x1] %vm1486, 0.0
        %2637 = vst.msk [vmem:[#allocation2 + $0x1] sm:$0xff] %vm1477, %v2628
        %v2638 = vld [vmem:[#allocation2] sm:$0xff]
        %s2639 = scalar_lea.vmem [#allocation6], 144
        %v2640 = vld [vmem:[%s2639] sm:$0xff]
        %v2641 = vld [vmem:[%s2639 + $0x8] sm:$0xff]
        %v2642 = vld [vmem:[#allocation2 + $0x1] sm:$0xff]
        %s2643 = scalar_lea.vmem [#allocation6], 160
        %v2644 = vld [vmem:[%s2643] sm:$0xff]
        %v2645 = vld [vmem:[%s2643 + $0x8] sm:$0xff]
        %v2647 = vsel %vm1477, %v2642, 0
        %2649 = vmatprep.subr.mxu0 0.0
        %2650 = vmatpush1.msra.mxu0 %v2644
        %2651 = vmatprep.subr.mxu0 0.0
        %2652 = vmatpush1.msra.mxu0 %v2645
        %2653 = vmatprep.subr.mxu0 0.0
        %2654 = vmatpush1.msra.mxu0 0.0
        %2655 = vmatprep.subr.mxu0 0.0
        %2656 = vmatpush1.msra.mxu0 0.0
        %2657 = vmatprep.subr.mxu0 0.0
        %2658 = vmatpush1.msra.mxu0 0.0
        %2659 = vmatprep.subr.mxu0 0.0
        %2660 = vmatpush1.msra.mxu0 0.0
        %2661 = vmatprep.subr.mxu0 0.0
        %2662 = vmatpush1.msra.mxu0 0.0
        %2663 = vmatprep.subr.mxu0 0.0
        %2664 = vmatpush1.msra.mxu0 0.0
        %2665 = vmatprep.subr.mxu0 0.0
        %2666 = vmatpush1.msra.mxu0 0.0
        %2667 = vmatprep.subr.mxu0 0.0
        %2668 = vmatpush1.msra.mxu0 0.0
        %2669 = vmatprep.subr.mxu0 0.0
        %2670 = vmatpush1.msra.mxu0 0.0
        %2671 = vmatprep.subr.mxu0 0.0
        %2672 = vmatpush1.msra.mxu0 0.0
        %2673 = vmatprep.subr.mxu0 0.0
        %2674 = vmatpush1.msra.mxu0 0.0
        %2675 = vmatprep.subr.mxu0 0.0
        %2676 = vmatpush1.msra.mxu0 0.0
        %2677 = vmatprep.subr.mxu0 0.0
        %2678 = vmatpush1.msra.mxu0 0.0
        %2679 = vmatprep.subr.mxu0 0.0
        %2680 = vmatpush1.msra.mxu0 0.0
        %2681 = vmatprep.subr.mxu0 0.0
        %2682 = vmatpush1.msra.mxu0 0.0
        %2683 = vmatprep.subr.mxu0 0.0
        %2684 = vmatpush1.msra.mxu0 0.0
        %2685 = vmatprep.subr.mxu0 0.0
        %2686 = vmatpush1.msra.mxu0 0.0
        %2687 = vmatprep.subr.mxu0 0.0
        %2688 = vmatpush1.msra.mxu0 0.0
        %2689 = vmatprep.subr.mxu0 0.0
        %2690 = vmatpush1.msra.mxu0 0.0
        %2691 = vmatprep.subr.mxu0 0.0
        %2692 = vmatpush1.msra.mxu0 0.0
        %2693 = vmatprep.subr.mxu0 0.0
        %2694 = vmatpush1.msra.mxu0 0.0
        %2695 = vmatprep.subr.mxu0 0.0
        %2696 = vmatpush1.msra.mxu0 0.0
        %2697 = vmatprep.subr.mxu0 0.0
        %2698 = vmatpush1.msra.mxu0 0.0
        %2699 = vmatprep.subr.mxu0 0.0
        %2700 = vmatpush1.msra.mxu0 0.0
        %2701 = vmatprep.subr.mxu0 0.0
        %2702 = vmatpush1.msra.mxu0 0.0
        %2703 = vmatprep.subr.mxu0 0.0
        %2704 = vmatpush1.msra.mxu0 0.0
        %2705 = vmatprep.subr.mxu0 0.0
        %2706 = vmatpush1.msra.mxu0 0.0
        %2707 = vmatprep.subr.mxu0 0.0
        %2708 = vmatpush1.msra.mxu0 0.0
        %2709 = vmatprep.subr.mxu0 0.0
        %2710 = vmatpush1.msra.mxu0 0.0
        %2711 = vmatprep.subr.mxu0 0.0
        %2712 = vmatpush1.msra.mxu0 0.0
        %2713 = vmatprep.mubr.f32.mxu0 0.0
        %2714 = vmatmul.mubr.f32.gmra.mrb[0].mxu0 %v2647
        %v2715 = vpop.f32.mrb[0].mxu0
        %v2716 = vadd.f32 0.0, %v2715
        %v2717 = vpop.f32.mrb[0].mxu0
        %2718 = vdwg.mxu0
        %v2720 = vsel %vm1477, %v2638, 0
        %2722 = vmatprep.subr.mxu0 0.0
        %2723 = vmatpush1.msra.mxu0 %v2640
        %2724 = vmatprep.subr.mxu0 0.0
        %2725 = vmatpush1.msra.mxu0 %v2641
        %2726 = vmatprep.subr.mxu0 0.0
        %2727 = vmatpush1.msra.mxu0 0.0
        %2728 = vmatprep.subr.mxu0 0.0
        %2729 = vmatpush1.msra.mxu0 0.0
        %2730 = vmatprep.subr.mxu0 0.0
        %2731 = vmatpush1.msra.mxu0 0.0
        %2732 = vmatprep.subr.mxu0 0.0
        %2733 = vmatpush1.msra.mxu0 0.0
        %2734 = vmatprep.subr.mxu0 0.0
        %2735 = vmatpush1.msra.mxu0 0.0
        %2736 = vmatprep.subr.mxu0 0.0
        %2737 = vmatpush1.msra.mxu0 0.0
        %2738 = vmatprep.subr.mxu0 0.0
        %2739 = vmatpush1.msra.mxu0 0.0
        %2740 = vmatprep.subr.mxu0 0.0
        %2741 = vmatpush1.msra.mxu0 0.0
        %2742 = vmatprep.subr.mxu0 0.0
        %2743 = vmatpush1.msra.mxu0 0.0
        %2744 = vmatprep.subr.mxu0 0.0
        %2745 = vmatpush1.msra.mxu0 0.0
        %2746 = vmatprep.subr.mxu0 0.0
        %2747 = vmatpush1.msra.mxu0 0.0
        %2748 = vmatprep.subr.mxu0 0.0
        %2749 = vmatpush1.msra.mxu0 0.0
        %2750 = vmatprep.subr.mxu0 0.0
        %2751 = vmatpush1.msra.mxu0 0.0
        %2752 = vmatprep.subr.mxu0 0.0
        %2753 = vmatpush1.msra.mxu0 0.0
        %2754 = vmatprep.subr.mxu0 0.0
        %2755 = vmatpush1.msra.mxu0 0.0
        %2756 = vmatprep.subr.mxu0 0.0
        %2757 = vmatpush1.msra.mxu0 0.0
        %2758 = vmatprep.subr.mxu0 0.0
        %2759 = vmatpush1.msra.mxu0 0.0
        %2760 = vmatprep.subr.mxu0 0.0
        %2761 = vmatpush1.msra.mxu0 0.0
        %2762 = vmatprep.subr.mxu0 0.0
        %2763 = vmatpush1.msra.mxu0 0.0
        %2764 = vmatprep.subr.mxu0 0.0
        %2765 = vmatpush1.msra.mxu0 0.0
        %2766 = vmatprep.subr.mxu0 0.0
        %2767 = vmatpush1.msra.mxu0 0.0
        %2768 = vmatprep.subr.mxu0 0.0
        %2769 = vmatpush1.msra.mxu0 0.0
        %2770 = vmatprep.subr.mxu0 0.0
        %2771 = vmatpush1.msra.mxu0 0.0
        %2772 = vmatprep.subr.mxu0 0.0
        %2773 = vmatpush1.msra.mxu0 0.0
        %2774 = vmatprep.subr.mxu0 0.0
        %2775 = vmatpush1.msra.mxu0 0.0
        %2776 = vmatprep.subr.mxu0 0.0
        %2777 = vmatpush1.msra.mxu0 0.0
        %2778 = vmatprep.subr.mxu0 0.0
        %2779 = vmatpush1.msra.mxu0 0.0
        %2780 = vmatprep.subr.mxu0 0.0
        %2781 = vmatpush1.msra.mxu0 0.0
        %2782 = vmatprep.subr.mxu0 0.0
        %2783 = vmatpush1.msra.mxu0 0.0
        %2784 = vmatprep.subr.mxu0 0.0
        %2785 = vmatpush1.msra.mxu0 0.0
        %2786 = vmatprep.mubr.f32.mxu0 0.0
        %2787 = vmatmul.mubr.f32.gmra.mrb[0].mxu0 %v2720
        %v2788 = vpop.f32.mrb[0].mxu0
        %v2789 = vadd.f32 %v2716, %v2788
        %v2790 = vpop.f32.mrb[0].mxu0
        %2791 = vdwg.mxu0
        %v2792 = vld [vmem:[#allocation2 + $0x2] sm:$0xff]
        %s2793 = scalar_lea.vmem [#allocation6], 176
        %v2794 = vld [vmem:[%s2793] sm:$0xff]
        %v2795 = vld [vmem:[%s2793 + $0x8] sm:$0xff]
        %v2797 = vsel %vm1477, %v2792, 0
        %2799 = vmatprep.subr.mxu0 0.0
        %2800 = vmatpush1.msra.mxu0 %v2794
        %2801 = vmatprep.subr.mxu0 0.0
        %2802 = vmatpush1.msra.mxu0 %v2795
        %2803 = vmatprep.subr.mxu0 0.0
        %2804 = vmatpush1.msra.mxu0 0.0
        %2805 = vmatprep.subr.mxu0 0.0
        %2806 = vmatpush1.msra.mxu0 0.0
        %2807 = vmatprep.subr.mxu0 0.0
        %2808 = vmatpush1.msra.mxu0 0.0
        %2809 = vmatprep.subr.mxu0 0.0
        %2810 = vmatpush1.msra.mxu0 0.0
        %2811 = vmatprep.subr.mxu0 0.0
        %2812 = vmatpush1.msra.mxu0 0.0
        %2813 = vmatprep.subr.mxu0 0.0
        %2814 = vmatpush1.msra.mxu0 0.0
        %2815 = vmatprep.subr.mxu0 0.0
        %2816 = vmatpush1.msra.mxu0 0.0
        %2817 = vmatprep.subr.mxu0 0.0
        %2818 = vmatpush1.msra.mxu0 0.0
        %2819 = vmatprep.subr.mxu0 0.0
        %2820 = vmatpush1.msra.mxu0 0.0
        %2821 = vmatprep.subr.mxu0 0.0
        %2822 = vmatpush1.msra.mxu0 0.0
        %2823 = vmatprep.subr.mxu0 0.0
        %2824 = vmatpush1.msra.mxu0 0.0
        %2825 = vmatprep.subr.mxu0 0.0
        %2826 = vmatpush1.msra.mxu0 0.0
        %2827 = vmatprep.subr.mxu0 0.0
        %2828 = vmatpush1.msra.mxu0 0.0
        %2829 = vmatprep.subr.mxu0 0.0
        %2830 = vmatpush1.msra.mxu0 0.0
        %2831 = vmatprep.subr.mxu0 0.0
        %2832 = vmatpush1.msra.mxu0 0.0
        %2833 = vmatprep.subr.mxu0 0.0
        %2834 = vmatpush1.msra.mxu0 0.0
        %2835 = vmatprep.subr.mxu0 0.0
        %2836 = vmatpush1.msra.mxu0 0.0
        %2837 = vmatprep.subr.mxu0 0.0
        %2838 = vmatpush1.msra.mxu0 0.0
        %2839 = vmatprep.subr.mxu0 0.0
        %2840 = vmatpush1.msra.mxu0 0.0
        %2841 = vmatprep.subr.mxu0 0.0
        %2842 = vmatpush1.msra.mxu0 0.0
        %2843 = vmatprep.subr.mxu0 0.0
        %2844 = vmatpush1.msra.mxu0 0.0
        %2845 = vmatprep.subr.mxu0 0.0
        %2846 = vmatpush1.msra.mxu0 0.0
        %2847 = vmatprep.subr.mxu0 0.0
        %2848 = vmatpush1.msra.mxu0 0.0
        %2849 = vmatprep.subr.mxu0 0.0
        %2850 = vmatpush1.msra.mxu0 0.0
        %2851 = vmatprep.subr.mxu0 0.0
        %2852 = vmatpush1.msra.mxu0 0.0
        %2853 = vmatprep.subr.mxu0 0.0
        %2854 = vmatpush1.msra.mxu0 0.0
        %2855 = vmatprep.subr.mxu0 0.0
        %2856 = vmatpush1.msra.mxu0 0.0
        %2857 = vmatprep.subr.mxu0 0.0
        %2858 = vmatpush1.msra.mxu0 0.0
        %2859 = vmatprep.subr.mxu0 0.0
        %2860 = vmatpush1.msra.mxu0 0.0
        %2861 = vmatprep.subr.mxu0 0.0
        %2862 = vmatpush1.msra.mxu0 0.0
        %2863 = vmatprep.mubr.f32.mxu0 0.0
        %2864 = vmatmul.mubr.f32.gmra.mrb[0].mxu0 %v2797
        %v2865 = vpop.f32.mrb[0].mxu0
        %v2866 = vadd.f32 0.0, %v2865
        %v2867 = vpop.f32.mrb[0].mxu0
        %2868 = vdwg.mxu0
        %v2869 = vadd.f32 %v2789, %v2866
        %v2870 = vlaneseq
        %v2871 = vshrl.u32 %v2870, 7
        %v2872 = vsub.s32 0, %v2871
        %v2873 = vrot.slane %v2634, %v2872
        %v2874 = vadd.f32 %v2869, %v2873
        %v2875 = vmax.f32 %v2874, 0.0
        %v2876 = vld [vmem:[%s8 + $0x5] sm:$0x1]
        %2877 = vst.msk [vmem:[#allocation2] sm:$0x1] %vm1486, 0.0
        %2878 = vst.msk [vmem:[#allocation2 + $0x9] sm:$0x1] %vm1486, 0.0
        %2879 = vst.msk [vmem:[#allocation2 + $0x1] sm:$0xff] %vm1477, %v2875
        %v2880 = vld [vmem:[#allocation2] sm:$0xff]
        %s2881 = scalar_lea.vmem [#allocation6], 192
        %v2882 = vld [vmem:[%s2881] sm:$0xff]
        %v2883 = vld [vmem:[%s2881 + $0x8] sm:$0xff]
        %v2884 = vld [vmem:[#allocation2 + $0x1] sm:$0xff]
        %s2885 = scalar_lea.vmem [#allocation6], 208
        %v2886 = vld [vmem:[%s2885] sm:$0xff]
        %v2887 = vld [vmem:[%s2885 + $0x8] sm:$0xff]
        %v2889 = vsel %vm1477, %v2884, 0
        %2891 = vmatprep.subr.mxu0 0.0
        %2892 = vmatpush1.msra.mxu0 %v2886
        %2893 = vmatprep.subr.mxu0 0.0
        %2894 = vmatpush1.msra.mxu0 %v2887
        %2895 = vmatprep.subr.mxu0 0.0
        %2896 = vmatpush1.msra.mxu0 0.0
        %2897 = vmatprep.subr.mxu0 0.0
        %2898 = vmatpush1.msra.mxu0 0.0
        %2899 = vmatprep.subr.mxu0 0.0
        %2900 = vmatpush1.msra.mxu0 0.0
        %2901 = vmatprep.subr.mxu0 0.0
        %2902 = vmatpush1.msra.mxu0 0.0
        %2903 = vmatprep.subr.mxu0 0.0
        %2904 = vmatpush1.msra.mxu0 0.0
        %2905 = vmatprep.subr.mxu0 0.0
        %2906 = vmatpush1.msra.mxu0 0.0
        %2907 = vmatprep.subr.mxu0 0.0
        %2908 = vmatpush1.msra.mxu0 0.0
        %2909 = vmatprep.subr.mxu0 0.0
        %2910 = vmatpush1.msra.mxu0 0.0
        %2911 = vmatprep.subr.mxu0 0.0
        %2912 = vmatpush1.msra.mxu0 0.0
        %2913 = vmatprep.subr.mxu0 0.0
        %2914 = vmatpush1.msra.mxu0 0.0
        %2915 = vmatprep.subr.mxu0 0.0
        %2916 = vmatpush1.msra.mxu0 0.0
        %2917 = vmatprep.subr.mxu0 0.0
        %2918 = vmatpush1.msra.mxu0 0.0
        %2919 = vmatprep.subr.mxu0 0.0
        %2920 = vmatpush1.msra.mxu0 0.0
        %2921 = vmatprep.subr.mxu0 0.0
        %2922 = vmatpush1.msra.mxu0 0.0
        %2923 = vmatprep.subr.mxu0 0.0
        %2924 = vmatpush1.msra.mxu0 0.0
        %2925 = vmatprep.subr.mxu0 0.0
        %2926 = vmatpush1.msra.mxu0 0.0
        %2927 = vmatprep.subr.mxu0 0.0
        %2928 = vmatpush1.msra.mxu0 0.0
        %2929 = vmatprep.subr.mxu0 0.0
        %2930 = vmatpush1.msra.mxu0 0.0
        %2931 = vmatprep.subr.mxu0 0.0
        %2932 = vmatpush1.msra.mxu0 0.0
        %2933 = vmatprep.subr.mxu0 0.0
        %2934 = vmatpush1.msra.mxu0 0.0
        %2935 = vmatprep.subr.mxu0 0.0
        %2936 = vmatpush1.msra.mxu0 0.0
        %2937 = vmatprep.subr.mxu0 0.0
        %2938 = vmatpush1.msra.mxu0 0.0
        %2939 = vmatprep.subr.mxu0 0.0
        %2940 = vmatpush1.msra.mxu0 0.0
        %2941 = vmatprep.subr.mxu0 0.0
        %2942 = vmatpush1.msra.mxu0 0.0
        %2943 = vmatprep.subr.mxu0 0.0
        %2944 = vmatpush1.msra.mxu0 0.0
        %2945 = vmatprep.subr.mxu0 0.0
        %2946 = vmatpush1.msra.mxu0 0.0
        %2947 = vmatprep.subr.mxu0 0.0
        %2948 = vmatpush1.msra.mxu0 0.0
        %2949 = vmatprep.subr.mxu0 0.0
        %2950 = vmatpush1.msra.mxu0 0.0
        %2951 = vmatprep.subr.mxu0 0.0
        %2952 = vmatpush1.msra.mxu0 0.0
        %2953 = vmatprep.subr.mxu0 0.0
        %2954 = vmatpush1.msra.mxu0 0.0
        %2955 = vmatprep.mubr.f32.mxu0 0.0
        %2956 = vmatmul.mubr.f32.gmra.mrb[0].mxu0 %v2889
        %v2957 = vpop.f32.mrb[0].mxu0
        %v2958 = vadd.f32 0.0, %v2957
        %v2959 = vpop.f32.mrb[0].mxu0
        %2960 = vdwg.mxu0
        %v2962 = vsel %vm1477, %v2880, 0
        %2964 = vmatprep.subr.mxu0 0.0
        %2965 = vmatpush1.msra.mxu0 %v2882
        %2966 = vmatprep.subr.mxu0 0.0
        %2967 = vmatpush1.msra.mxu0 %v2883
        %2968 = vmatprep.subr.mxu0 0.0
        %2969 = vmatpush1.msra.mxu0 0.0
        %2970 = vmatprep.subr.mxu0 0.0
        %2971 = vmatpush1.msra.mxu0 0.0
        %2972 = vmatprep.subr.mxu0 0.0
        %2973 = vmatpush1.msra.mxu0 0.0
        %2974 = vmatprep.subr.mxu0 0.0
        %2975 = vmatpush1.msra.mxu0 0.0
        %2976 = vmatprep.subr.mxu0 0.0
        %2977 = vmatpush1.msra.mxu0 0.0
        %2978 = vmatprep.subr.mxu0 0.0
        %2979 = vmatpush1.msra.mxu0 0.0
        %2980 = vmatprep.subr.mxu0 0.0
        %2981 = vmatpush1.msra.mxu0 0.0
        %2982 = vmatprep.subr.mxu0 0.0
        %2983 = vmatpush1.msra.mxu0 0.0
        %2984 = vmatprep.subr.mxu0 0.0
        %2985 = vmatpush1.msra.mxu0 0.0
        %2986 = vmatprep.subr.mxu0 0.0
        %2987 = vmatpush1.msra.mxu0 0.0
        %2988 = vmatprep.subr.mxu0 0.0
        %2989 = vmatpush1.msra.mxu0 0.0
        %2990 = vmatprep.subr.mxu0 0.0
        %2991 = vmatpush1.msra.mxu0 0.0
        %2992 = vmatprep.subr.mxu0 0.0
        %2993 = vmatpush1.msra.mxu0 0.0
        %2994 = vmatprep.subr.mxu0 0.0
        %2995 = vmatpush1.msra.mxu0 0.0
        %2996 = vmatprep.subr.mxu0 0.0
        %2997 = vmatpush1.msra.mxu0 0.0
        %2998 = vmatprep.subr.mxu0 0.0
        %2999 = vmatpush1.msra.mxu0 0.0
        %3000 = vmatprep.subr.mxu0 0.0
        %3001 = vmatpush1.msra.mxu0 0.0
        %3002 = vmatprep.subr.mxu0 0.0
        %3003 = vmatpush1.msra.mxu0 0.0
        %3004 = vmatprep.subr.mxu0 0.0
        %3005 = vmatpush1.msra.mxu0 0.0
        %3006 = vmatprep.subr.mxu0 0.0
        %3007 = vmatpush1.msra.mxu0 0.0
        %3008 = vmatprep.subr.mxu0 0.0
        %3009 = vmatpush1.msra.mxu0 0.0
        %3010 = vmatprep.subr.mxu0 0.0
        %3011 = vmatpush1.msra.mxu0 0.0
        %3012 = vmatprep.subr.mxu0 0.0
        %3013 = vmatpush1.msra.mxu0 0.0
        %3014 = vmatprep.subr.mxu0 0.0
        %3015 = vmatpush1.msra.mxu0 0.0
        %3016 = vmatprep.subr.mxu0 0.0
        %3017 = vmatpush1.msra.mxu0 0.0
        %3018 = vmatprep.subr.mxu0 0.0
        %3019 = vmatpush1.msra.mxu0 0.0
        %3020 = vmatprep.subr.mxu0 0.0
        %3021 = vmatpush1.msra.mxu0 0.0
        %3022 = vmatprep.subr.mxu0 0.0
        %3023 = vmatpush1.msra.mxu0 0.0
        %3024 = vmatprep.subr.mxu0 0.0
        %3025 = vmatpush1.msra.mxu0 0.0
        %3026 = vmatprep.subr.mxu0 0.0
        %3027 = vmatpush1.msra.mxu0 0.0
        %3028 = vmatprep.mubr.f32.mxu0 0.0
        %3029 = vmatmul.mubr.f32.gmra.mrb[0].mxu0 %v2962
        %v3030 = vpop.f32.mrb[0].mxu0
        %v3031 = vadd.f32 %v2958, %v3030
        %v3032 = vpop.f32.mrb[0].mxu0
        %3033 = vdwg.mxu0
        %v3034 = vld [vmem:[#allocation2 + $0x2] sm:$0xff]
        %s3035 = scalar_lea.vmem [#allocation6], 224
        %v3036 = vld [vmem:[%s3035] sm:$0xff]
        %v3037 = vld [vmem:[%s3035 + $0x8] sm:$0xff]
        %v3039 = vsel %vm1477, %v3034, 0
        %3041 = vmatprep.subr.mxu0 0.0
        %3042 = vmatpush1.msra.mxu0 %v3036
        %3043 = vmatprep.subr.mxu0 0.0
        %3044 = vmatpush1.msra.mxu0 %v3037
        %3045 = vmatprep.subr.mxu0 0.0
        %3046 = vmatpush1.msra.mxu0 0.0
        %3047 = vmatprep.subr.mxu0 0.0
        %3048 = vmatpush1.msra.mxu0 0.0
        %3049 = vmatprep.subr.mxu0 0.0
        %3050 = vmatpush1.msra.mxu0 0.0
        %3051 = vmatprep.subr.mxu0 0.0
        %3052 = vmatpush1.msra.mxu0 0.0
        %3053 = vmatprep.subr.mxu0 0.0
        %3054 = vmatpush1.msra.mxu0 0.0
        %3055 = vmatprep.subr.mxu0 0.0
        %3056 = vmatpush1.msra.mxu0 0.0
        %3057 = vmatprep.subr.mxu0 0.0
        %3058 = vmatpush1.msra.mxu0 0.0
        %3059 = vmatprep.subr.mxu0 0.0
        %3060 = vmatpush1.msra.mxu0 0.0
        %3061 = vmatprep.subr.mxu0 0.0
        %3062 = vmatpush1.msra.mxu0 0.0
        %3063 = vmatprep.subr.mxu0 0.0
        %3064 = vmatpush1.msra.mxu0 0.0
        %3065 = vmatprep.subr.mxu0 0.0
        %3066 = vmatpush1.msra.mxu0 0.0
        %3067 = vmatprep.subr.mxu0 0.0
        %3068 = vmatpush1.msra.mxu0 0.0
        %3069 = vmatprep.subr.mxu0 0.0
        %3070 = vmatpush1.msra.mxu0 0.0
        %3071 = vmatprep.subr.mxu0 0.0
        %3072 = vmatpush1.msra.mxu0 0.0
        %3073 = vmatprep.subr.mxu0 0.0
        %3074 = vmatpush1.msra.mxu0 0.0
        %3075 = vmatprep.subr.mxu0 0.0
        %3076 = vmatpush1.msra.mxu0 0.0
        %3077 = vmatprep.subr.mxu0 0.0
        %3078 = vmatpush1.msra.mxu0 0.0
        %3079 = vmatprep.subr.mxu0 0.0
        %3080 = vmatpush1.msra.mxu0 0.0
        %3081 = vmatprep.subr.mxu0 0.0
        %3082 = vmatpush1.msra.mxu0 0.0
        %3083 = vmatprep.subr.mxu0 0.0
        %3084 = vmatpush1.msra.mxu0 0.0
        %3085 = vmatprep.subr.mxu0 0.0
        %3086 = vmatpush1.msra.mxu0 0.0
        %3087 = vmatprep.subr.mxu0 0.0
        %3088 = vmatpush1.msra.mxu0 0.0
        %3089 = vmatprep.subr.mxu0 0.0
        %3090 = vmatpush1.msra.mxu0 0.0
        %3091 = vmatprep.subr.mxu0 0.0
        %3092 = vmatpush1.msra.mxu0 0.0
        %3093 = vmatprep.subr.mxu0 0.0
        %3094 = vmatpush1.msra.mxu0 0.0
        %3095 = vmatprep.subr.mxu0 0.0
        %3096 = vmatpush1.msra.mxu0 0.0
        %3097 = vmatprep.subr.mxu0 0.0
        %3098 = vmatpush1.msra.mxu0 0.0
        %3099 = vmatprep.subr.mxu0 0.0
        %3100 = vmatpush1.msra.mxu0 0.0
        %3101 = vmatprep.subr.mxu0 0.0
        %3102 = vmatpush1.msra.mxu0 0.0
        %3103 = vmatprep.subr.mxu0 0.0
        %3104 = vmatpush1.msra.mxu0 0.0
        %3105 = vmatprep.mubr.f32.mxu0 0.0
        %3106 = vmatmul.mubr.f32.gmra.mrb[0].mxu0 %v3039
        %v3107 = vpop.f32.mrb[0].mxu0
        %v3108 = vadd.f32 0.0, %v3107
        %v3109 = vpop.f32.mrb[0].mxu0
        %3110 = vdwg.mxu0
        %v3111 = vadd.f32 %v3031, %v3108
        %v3112 = vlaneseq
        %v3113 = vshrl.u32 %v3112, 7
        %v3114 = vsub.s32 0, %v3113
        %v3115 = vrot.slane %v2876, %v3114
        %v3116 = vadd.f32 %v3111, %v3115
        %v3117 = vmax.f32 %v3116, 0.0
        %v3118 = vadd.f32 %v3117, %v2628
        %v3119 = vld [vmem:[%s8 + $0x6] sm:$0x1]
        %3120 = vst.msk [vmem:[#allocation2] sm:$0x1] %vm1486, 0.0
        %3121 = vst.msk [vmem:[#allocation2 + $0x9] sm:$0x1] %vm1486, 0.0
        %3122 = vst.msk [vmem:[#allocation2 + $0x1] sm:$0xff] %vm1477, %v3118
        %v3123 = vld [vmem:[#allocation2] sm:$0xff]
        %s3124 = scalar_lea.vmem [#allocation6], 240
        %v3125 = vld [vmem:[%s3124] sm:$0xff]
        %v3126 = vld [vmem:[%s3124 + $0x8] sm:$0xff]
        %v3127 = vld [vmem:[#allocation2 + $0x1] sm:$0xff]
        %s3128 = scalar_lea.vmem [#allocation6], 256
        %v3129 = vld [vmem:[%s3128] sm:$0xff]
        %v3130 = vld [vmem:[%s3128 + $0x8] sm:$0xff]
        %v3132 = vsel %vm1477, %v3127, 0
        %3134 = vmatprep.subr.mxu0 0.0
        %3135 = vmatpush1.msra.mxu0 %v3129
        %3136 = vmatprep.subr.mxu0 0.0
        %3137 = vmatpush1.msra.mxu0 %v3130
        %3138 = vmatprep.subr.mxu0 0.0
        %3139 = vmatpush1.msra.mxu0 0.0
        %3140 = vmatprep.subr.mxu0 0.0
        %3141 = vmatpush1.msra.mxu0 0.0
        %3142 = vmatprep.subr.mxu0 0.0
        %3143 = vmatpush1.msra.mxu0 0.0
        %3144 = vmatprep.subr.mxu0 0.0
        %3145 = vmatpush1.msra.mxu0 0.0
        %3146 = vmatprep.subr.mxu0 0.0
        %3147 = vmatpush1.msra.mxu0 0.0
        %3148 = vmatprep.subr.mxu0 0.0
        %3149 = vmatpush1.msra.mxu0 0.0
        %3150 = vmatprep.subr.mxu0 0.0
        %3151 = vmatpush1.msra.mxu0 0.0
        %3152 = vmatprep.subr.mxu0 0.0
        %3153 = vmatpush1.msra.mxu0 0.0
        %3154 = vmatprep.subr.mxu0 0.0
        %3155 = vmatpush1.msra.mxu0 0.0
        %3156 = vmatprep.subr.mxu0 0.0
        %3157 = vmatpush1.msra.mxu0 0.0
        %3158 = vmatprep.subr.mxu0 0.0
        %3159 = vmatpush1.msra.mxu0 0.0
        %3160 = vmatprep.subr.mxu0 0.0
        %3161 = vmatpush1.msra.mxu0 0.0
        %3162 = vmatprep.subr.mxu0 0.0
        %3163 = vmatpush1.msra.mxu0 0.0
        %3164 = vmatprep.subr.mxu0 0.0
        %3165 = vmatpush1.msra.mxu0 0.0
        %3166 = vmatprep.subr.mxu0 0.0
        %3167 = vmatpush1.msra.mxu0 0.0
        %3168 = vmatprep.subr.mxu0 0.0
        %3169 = vmatpush1.msra.mxu0 0.0
        %3170 = vmatprep.subr.mxu0 0.0
        %3171 = vmatpush1.msra.mxu0 0.0
        %3172 = vmatprep.subr.mxu0 0.0
        %3173 = vmatpush1.msra.mxu0 0.0
        %3174 = vmatprep.subr.mxu0 0.0
        %3175 = vmatpush1.msra.mxu0 0.0
        %3176 = vmatprep.subr.mxu0 0.0
        %3177 = vmatpush1.msra.mxu0 0.0
        %3178 = vmatprep.subr.mxu0 0.0
        %3179 = vmatpush1.msra.mxu0 0.0
        %3180 = vmatprep.subr.mxu0 0.0
        %3181 = vmatpush1.msra.mxu0 0.0
        %3182 = vmatprep.subr.mxu0 0.0
        %3183 = vmatpush1.msra.mxu0 0.0
        %3184 = vmatprep.subr.mxu0 0.0
        %3185 = vmatpush1.msra.mxu0 0.0
        %3186 = vmatprep.subr.mxu0 0.0
        %3187 = vmatpush1.msra.mxu0 0.0
        %3188 = vmatprep.subr.mxu0 0.0
        %3189 = vmatpush1.msra.mxu0 0.0
        %3190 = vmatprep.subr.mxu0 0.0
        %3191 = vmatpush1.msra.mxu0 0.0
        %3192 = vmatprep.subr.mxu0 0.0
        %3193 = vmatpush1.msra.mxu0 0.0
        %3194 = vmatprep.subr.mxu0 0.0
        %3195 = vmatpush1.msra.mxu0 0.0
        %3196 = vmatprep.subr.mxu0 0.0
        %3197 = vmatpush1.msra.mxu0 0.0
        %3198 = vmatprep.mubr.f32.mxu0 0.0
        %3199 = vmatmul.mubr.f32.gmra.mrb[0].mxu0 %v3132
        %v3200 = vpop.f32.mrb[0].mxu0
        %v3201 = vadd.f32 0.0, %v3200
        %v3202 = vpop.f32.mrb[0].mxu0
        %3203 = vdwg.mxu0
        %v3205 = vsel %vm1477, %v3123, 0
        %3207 = vmatprep.subr.mxu0 0.0
        %3208 = vmatpush1.msra.mxu0 %v3125
        %3209 = vmatprep.subr.mxu0 0.0
        %3210 = vmatpush1.msra.mxu0 %v3126
        %3211 = vmatprep.subr.mxu0 0.0
        %3212 = vmatpush1.msra.mxu0 0.0
        %3213 = vmatprep.subr.mxu0 0.0
        %3214 = vmatpush1.msra.mxu0 0.0
        %3215 = vmatprep.subr.mxu0 0.0
        %3216 = vmatpush1.msra.mxu0 0.0
        %3217 = vmatprep.subr.mxu0 0.0
        %3218 = vmatpush1.msra.mxu0 0.0
        %3219 = vmatprep.subr.mxu0 0.0
        %3220 = vmatpush1.msra.mxu0 0.0
        %3221 = vmatprep.subr.mxu0 0.0
        %3222 = vmatpush1.msra.mxu0 0.0
        %3223 = vmatprep.subr.mxu0 0.0
        %3224 = vmatpush1.msra.mxu0 0.0
        %3225 = vmatprep.subr.mxu0 0.0
        %3226 = vmatpush1.msra.mxu0 0.0
        %3227 = vmatprep.subr.mxu0 0.0
        %3228 = vmatpush1.msra.mxu0 0.0
        %3229 = vmatprep.subr.mxu0 0.0
        %3230 = vmatpush1.msra.mxu0 0.0
        %3231 = vmatprep.subr.mxu0 0.0
        %3232 = vmatpush1.msra.mxu0 0.0
        %3233 = vmatprep.subr.mxu0 0.0
        %3234 = vmatpush1.msra.mxu0 0.0
        %3235 = vmatprep.subr.mxu0 0.0
        %3236 = vmatpush1.msra.mxu0 0.0
        %3237 = vmatprep.subr.mxu0 0.0
        %3238 = vmatpush1.msra.mxu0 0.0
        %3239 = vmatprep.subr.mxu0 0.0
        %3240 = vmatpush1.msra.mxu0 0.0
        %3241 = vmatprep.subr.mxu0 0.0
        %3242 = vmatpush1.msra.mxu0 0.0
        %3243 = vmatprep.subr.mxu0 0.0
        %3244 = vmatpush1.msra.mxu0 0.0
        %3245 = vmatprep.subr.mxu0 0.0
        %3246 = vmatpush1.msra.mxu0 0.0
        %3247 = vmatprep.subr.mxu0 0.0
        %3248 = vmatpush1.msra.mxu0 0.0
        %3249 = vmatprep.subr.mxu0 0.0
        %3250 = vmatpush1.msra.mxu0 0.0
        %3251 = vmatprep.subr.mxu0 0.0
        %3252 = vmatpush1.msra.mxu0 0.0
        %3253 = vmatprep.subr.mxu0 0.0
        %3254 = vmatpush1.msra.mxu0 0.0
        %3255 = vmatprep.subr.mxu0 0.0
        %3256 = vmatpush1.msra.mxu0 0.0
        %3257 = vmatprep.subr.mxu0 0.0
        %3258 = vmatpush1.msra.mxu0 0.0
        %3259 = vmatprep.subr.mxu0 0.0
        %3260 = vmatpush1.msra.mxu0 0.0
        %3261 = vmatprep.subr.mxu0 0.0
        %3262 = vmatpush1.msra.mxu0 0.0
        %3263 = vmatprep.subr.mxu0 0.0
        %3264 = vmatpush1.msra.mxu0 0.0
        %3265 = vmatprep.subr.mxu0 0.0
        %3266 = vmatpush1.msra.mxu0 0.0
        %3267 = vmatprep.subr.mxu0 0.0
        %3268 = vmatpush1.msra.mxu0 0.0
        %3269 = vmatprep.subr.mxu0 0.0
        %3270 = vmatpush1.msra.mxu0 0.0
        %3271 = vmatprep.mubr.f32.mxu0 0.0
        %3272 = vmatmul.mubr.f32.gmra.mrb[0].mxu0 %v3205
        %v3273 = vpop.f32.mrb[0].mxu0
        %v3274 = vadd.f32 %v3201, %v3273
        %v3275 = vpop.f32.mrb[0].mxu0
        %3276 = vdwg.mxu0
        %v3277 = vld [vmem:[#allocation2 + $0x2] sm:$0xff]
        %s3278 = scalar_lea.vmem [#allocation6], 272
        %v3279 = vld [vmem:[%s3278] sm:$0xff]
        %v3280 = vld [vmem:[%s3278 + $0x8] sm:$0xff]
        %v3282 = vsel %vm1477, %v3277, 0
        %3284 = vmatprep.subr.mxu0 0.0
        %3285 = vmatpush1.msra.mxu0 %v3279
        %3286 = vmatprep.subr.mxu0 0.0
        %3287 = vmatpush1.msra.mxu0 %v3280
        %3288 = vmatprep.subr.mxu0 0.0
        %3289 = vmatpush1.msra.mxu0 0.0
        %3290 = vmatprep.subr.mxu0 0.0
        %3291 = vmatpush1.msra.mxu0 0.0
        %3292 = vmatprep.subr.mxu0 0.0
        %3293 = vmatpush1.msra.mxu0 0.0
        %3294 = vmatprep.subr.mxu0 0.0
        %3295 = vmatpush1.msra.mxu0 0.0
        %3296 = vmatprep.subr.mxu0 0.0
        %3297 = vmatpush1.msra.mxu0 0.0
        %3298 = vmatprep.subr.mxu0 0.0
        %3299 = vmatpush1.msra.mxu0 0.0
        %3300 = vmatprep.subr.mxu0 0.0
        %3301 = vmatpush1.msra.mxu0 0.0
        %3302 = vmatprep.subr.mxu0 0.0
        %3303 = vmatpush1.msra.mxu0 0.0
        %3304 = vmatprep.subr.mxu0 0.0
        %3305 = vmatpush1.msra.mxu0 0.0
        %3306 = vmatprep.subr.mxu0 0.0
        %3307 = vmatpush1.msra.mxu0 0.0
        %3308 = vmatprep.subr.mxu0 0.0
        %3309 = vmatpush1.msra.mxu0 0.0
        %3310 = vmatprep.subr.mxu0 0.0
        %3311 = vmatpush1.msra.mxu0 0.0
        %3312 = vmatprep.subr.mxu0 0.0
        %3313 = vmatpush1.msra.mxu0 0.0
        %3314 = vmatprep.subr.mxu0 0.0
        %3315 = vmatpush1.msra.mxu0 0.0
        %3316 = vmatprep.subr.mxu0 0.0
        %3317 = vmatpush1.msra.mxu0 0.0
        %3318 = vmatprep.subr.mxu0 0.0
        %3319 = vmatpush1.msra.mxu0 0.0
        %3320 = vmatprep.subr.mxu0 0.0
        %3321 = vmatpush1.msra.mxu0 0.0
        %3322 = vmatprep.subr.mxu0 0.0
        %3323 = vmatpush1.msra.mxu0 0.0
        %3324 = vmatprep.subr.mxu0 0.0
        %3325 = vmatpush1.msra.mxu0 0.0
        %3326 = vmatprep.subr.mxu0 0.0
        %3327 = vmatpush1.msra.mxu0 0.0
        %3328 = vmatprep.subr.mxu0 0.0
        %3329 = vmatpush1.msra.mxu0 0.0
        %3330 = vmatprep.subr.mxu0 0.0
        %3331 = vmatpush1.msra.mxu0 0.0
        %3332 = vmatprep.subr.mxu0 0.0
        %3333 = vmatpush1.msra.mxu0 0.0
        %3334 = vmatprep.subr.mxu0 0.0
        %3335 = vmatpush1.msra.mxu0 0.0
        %3336 = vmatprep.subr.mxu0 0.0
        %3337 = vmatpush1.msra.mxu0 0.0
        %3338 = vmatprep.subr.mxu0 0.0
        %3339 = vmatpush1.msra.mxu0 0.0
        %3340 = vmatprep.subr.mxu0 0.0
        %3341 = vmatpush1.msra.mxu0 0.0
        %3342 = vmatprep.subr.mxu0 0.0
        %3343 = vmatpush1.msra.mxu0 0.0
        %3344 = vmatprep.subr.mxu0 0.0
        %3345 = vmatpush1.msra.mxu0 0.0
        %3346 = vmatprep.subr.mxu0 0.0
        %3347 = vmatpush1.msra.mxu0 0.0
        %3348 = vmatprep.mubr.f32.mxu0 0.0
        %3349 = vmatmul.mubr.f32.gmra.mrb[0].mxu0 %v3282
        %v3350 = vpop.f32.mrb[0].mxu0
        %v3351 = vadd.f32 0.0, %v3350
        %v3352 = vpop.f32.mrb[0].mxu0
        %3353 = vdwg.mxu0
        %v3354 = vadd.f32 %v3274, %v3351
        %v3355 = vlaneseq
        %v3356 = vshrl.u32 %v3355, 7
        %v3357 = vsub.s32 0, %v3356
        %v3358 = vrot.slane %v3119, %v3357
        %v3359 = vadd.f32 %v3354, %v3358
        %v3360 = vmax.f32 %v3359, 0.0
        %v3361 = vld [vmem:[%s8 + $0x7] sm:$0x1]
        %3362 = vst.msk [vmem:[#allocation2] sm:$0x1] %vm1486, 0.0
        %3363 = vst.msk [vmem:[#allocation2 + $0x9] sm:$0x1] %vm1486, 0.0
        %3364 = vst.msk [vmem:[#allocation2 + $0x1] sm:$0xff] %vm1477, %v3360
        %v3365 = vld [vmem:[#allocation2] ss:$2 sm:$0xf]
        %s3366 = scalar_lea.vmem [#allocation8], 64
        %v3367 = vld [vmem:[%s3366] sm:$0xff]
        %v3368 = vld [vmem:[%s3366 + $0x8] sm:$0xff]
        %v3369 = vld [vmem:[%s1481] ss:$2 sm:$0xf]
        %s3370 = scalar_lea.vmem [#allocation8], 80
        %v3371 = vld [vmem:[%s3370] sm:$0xff]
        %v3372 = vld [vmem:[%s3370 + $0x8] sm:$0xff]
        %v3374 = vsel %vm1477, %v3369, 0
        %3376 = vmatprep.subr.mxu0 0.0
        %3377 = vmatpush1.msra.mxu0 %v3371
        %3378 = vmatprep.subr.mxu0 0.0
        %3379 = vmatpush1.msra.mxu0 %v3372
        %3380 = vmatprep.subr.mxu0 0.0
        %3381 = vmatpush1.msra.mxu0 0.0
        %3382 = vmatprep.subr.mxu0 0.0
        %3383 = vmatpush1.msra.mxu0 0.0
        %3384 = vmatprep.subr.mxu0 0.0
        %3385 = vmatpush1.msra.mxu0 0.0
        %3386 = vmatprep.subr.mxu0 0.0
        %3387 = vmatpush1.msra.mxu0 0.0
        %3388 = vmatprep.subr.mxu0 0.0
        %3389 = vmatpush1.msra.mxu0 0.0
        %3390 = vmatprep.subr.mxu0 0.0
        %3391 = vmatpush1.msra.mxu0 0.0
        %3392 = vmatprep.subr.mxu0 0.0
        %3393 = vmatpush1.msra.mxu0 0.0
        %3394 = vmatprep.subr.mxu0 0.0
        %3395 = vmatpush1.msra.mxu0 0.0
        %3396 = vmatprep.subr.mxu0 0.0
        %3397 = vmatpush1.msra.mxu0 0.0
        %3398 = vmatprep.subr.mxu0 0.0
        %3399 = vmatpush1.msra.mxu0 0.0
        %3400 = vmatprep.subr.mxu0 0.0
        %3401 = vmatpush1.msra.mxu0 0.0
        %3402 = vmatprep.subr.mxu0 0.0
        %3403 = vmatpush1.msra.mxu0 0.0
        %3404 = vmatprep.subr.mxu0 0.0
        %3405 = vmatpush1.msra.mxu0 0.0
        %3406 = vmatprep.subr.mxu0 0.0
        %3407 = vmatpush1.msra.mxu0 0.0
        %3408 = vmatprep.subr.mxu0 0.0
        %3409 = vmatpush1.msra.mxu0 0.0
        %3410 = vmatprep.subr.mxu0 0.0
        %3411 = vmatpush1.msra.mxu0 0.0
        %3412 = vmatprep.subr.mxu0 0.0
        %3413 = vmatpush1.msra.mxu0 0.0
        %3414 = vmatprep.subr.mxu0 0.0
        %3415 = vmatpush1.msra.mxu0 0.0
        %3416 = vmatprep.subr.mxu0 0.0
        %3417 = vmatpush1.msra.mxu0 0.0
        %3418 = vmatprep.subr.mxu0 0.0
        %3419 = vmatpush1.msra.mxu0 0.0
        %3420 = vmatprep.subr.mxu0 0.0
        %3421 = vmatpush1.msra.mxu0 0.0
        %3422 = vmatprep.subr.mxu0 0.0
        %3423 = vmatpush1.msra.mxu0 0.0
        %3424 = vmatprep.subr.mxu0 0.0
        %3425 = vmatpush1.msra.mxu0 0.0
        %3426 = vmatprep.subr.mxu0 0.0
        %3427 = vmatpush1.msra.mxu0 0.0
        %3428 = vmatprep.subr.mxu0 0.0
        %3429 = vmatpush1.msra.mxu0 0.0
        %3430 = vmatprep.subr.mxu0 0.0
        %3431 = vmatpush1.msra.mxu0 0.0
        %3432 = vmatprep.subr.mxu0 0.0
        %3433 = vmatpush1.msra.mxu0 0.0
        %3434 = vmatprep.subr.mxu0 0.0
        %3435 = vmatpush1.msra.mxu0 0.0
        %3436 = vmatprep.subr.mxu0 0.0
        %3437 = vmatpush1.msra.mxu0 0.0
        %3438 = vmatprep.subr.mxu0 0.0
        %3439 = vmatpush1.msra.mxu0 0.0
        %3440 = vmatprep.mubr.f32.mxu0 0.0
        %3441 = vmatmul.mubr.f32.gmra.mrb[0].mxu0 %v3374
        %v3442 = vpop.f32.mrb[0].mxu0
        %v3443 = vadd.f32 0.0, %v3442
        %v3444 = vpop.f32.mrb[0].mxu0
        %3445 = vdwg.mxu0
        %v3447 = vsel %vm1477, %v3365, 0
        %3449 = vmatprep.subr.mxu0 0.0
        %3450 = vmatpush1.msra.mxu0 %v3367
        %3451 = vmatprep.subr.mxu0 0.0
        %3452 = vmatpush1.msra.mxu0 %v3368
        %3453 = vmatprep.subr.mxu0 0.0
        %3454 = vmatpush1.msra.mxu0 0.0
        %3455 = vmatprep.subr.mxu0 0.0
        %3456 = vmatpush1.msra.mxu0 0.0
        %3457 = vmatprep.subr.mxu0 0.0
        %3458 = vmatpush1.msra.mxu0 0.0
        %3459 = vmatprep.subr.mxu0 0.0
        %3460 = vmatpush1.msra.mxu0 0.0
        %3461 = vmatprep.subr.mxu0 0.0
        %3462 = vmatpush1.msra.mxu0 0.0
        %3463 = vmatprep.subr.mxu0 0.0
        %3464 = vmatpush1.msra.mxu0 0.0
        %3465 = vmatprep.subr.mxu0 0.0
        %3466 = vmatpush1.msra.mxu0 0.0
        %3467 = vmatprep.subr.mxu0 0.0
        %3468 = vmatpush1.msra.mxu0 0.0
        %3469 = vmatprep.subr.mxu0 0.0
        %3470 = vmatpush1.msra.mxu0 0.0
        %3471 = vmatprep.subr.mxu0 0.0
        %3472 = vmatpush1.msra.mxu0 0.0
        %3473 = vmatprep.subr.mxu0 0.0
        %3474 = vmatpush1.msra.mxu0 0.0
        %3475 = vmatprep.subr.mxu0 0.0
        %3476 = vmatpush1.msra.mxu0 0.0
        %3477 = vmatprep.subr.mxu0 0.0
        %3478 = vmatpush1.msra.mxu0 0.0
        %3479 = vmatprep.subr.mxu0 0.0
        %3480 = vmatpush1.msra.mxu0 0.0
        %3481 = vmatprep.subr.mxu0 0.0
        %3482 = vmatpush1.msra.mxu0 0.0
        %3483 = vmatprep.subr.mxu0 0.0
        %3484 = vmatpush1.msra.mxu0 0.0
        %3485 = vmatprep.subr.mxu0 0.0
        %3486 = vmatpush1.msra.mxu0 0.0
        %3487 = vmatprep.subr.mxu0 0.0
        %3488 = vmatpush1.msra.mxu0 0.0
        %3489 = vmatprep.subr.mxu0 0.0
        %3490 = vmatpush1.msra.mxu0 0.0
        %3491 = vmatprep.subr.mxu0 0.0
        %3492 = vmatpush1.msra.mxu0 0.0
        %3493 = vmatprep.subr.mxu0 0.0
        %3494 = vmatpush1.msra.mxu0 0.0
        %3495 = vmatprep.subr.mxu0 0.0
        %3496 = vmatpush1.msra.mxu0 0.0
        %3497 = vmatprep.subr.mxu0 0.0
        %3498 = vmatpush1.msra.mxu0 0.0
        %3499 = vmatprep.subr.mxu0 0.0
        %3500 = vmatpush1.msra.mxu0 0.0
        %3501 = vmatprep.subr.mxu0 0.0
        %3502 = vmatpush1.msra.mxu0 0.0
        %3503 = vmatprep.subr.mxu0 0.0
        %3504 = vmatpush1.msra.mxu0 0.0
        %3505 = vmatprep.subr.mxu0 0.0
        %3506 = vmatpush1.msra.mxu0 0.0
        %3507 = vmatprep.subr.mxu0 0.0
        %3508 = vmatpush1.msra.mxu0 0.0
        %3509 = vmatprep.subr.mxu0 0.0
        %3510 = vmatpush1.msra.mxu0 0.0
        %3511 = vmatprep.subr.mxu0 0.0
        %3512 = vmatpush1.msra.mxu0 0.0
        %3513 = vmatprep.mubr.f32.mxu0 0.0
        %3514 = vmatmul.mubr.f32.gmra.mrb[0].mxu0 %v3447
        %v3515 = vpop.f32.mrb[0].mxu0
        %v3516 = vadd.f32 %v3443, %v3515
        %v3517 = vpop.f32.mrb[0].mxu0
        %3518 = vdwg.mxu0
        %v3519 = vld [vmem:[%s2464] ss:$2 sm:$0xf]
        %s3520 = scalar_lea.vmem [#allocation8], 96
        %v3521 = vld [vmem:[%s3520] sm:$0xff]
        %v3522 = vld [vmem:[%s3520 + $0x8] sm:$0xff]
        %v3524 = vsel %vm1477, %v3519, 0
        %3526 = vmatprep.subr.mxu0 0.0
        %3527 = vmatpush1.msra.mxu0 %v3521
        %3528 = vmatprep.subr.mxu0 0.0
        %3529 = vmatpush1.msra.mxu0 %v3522
        %3530 = vmatprep.subr.mxu0 0.0
        %3531 = vmatpush1.msra.mxu0 0.0
        %3532 = vmatprep.subr.mxu0 0.0
        %3533 = vmatpush1.msra.mxu0 0.0
        %3534 = vmatprep.subr.mxu0 0.0
        %3535 = vmatpush1.msra.mxu0 0.0
        %3536 = vmatprep.subr.mxu0 0.0
        %3537 = vmatpush1.msra.mxu0 0.0
        %3538 = vmatprep.subr.mxu0 0.0
        %3539 = vmatpush1.msra.mxu0 0.0
        %3540 = vmatprep.subr.mxu0 0.0
        %3541 = vmatpush1.msra.mxu0 0.0
        %3542 = vmatprep.subr.mxu0 0.0
        %3543 = vmatpush1.msra.mxu0 0.0
        %3544 = vmatprep.subr.mxu0 0.0
        %3545 = vmatpush1.msra.mxu0 0.0
        %3546 = vmatprep.subr.mxu0 0.0
        %3547 = vmatpush1.msra.mxu0 0.0
        %3548 = vmatprep.subr.mxu0 0.0
        %3549 = vmatpush1.msra.mxu0 0.0
        %3550 = vmatprep.subr.mxu0 0.0
        %3551 = vmatpush1.msra.mxu0 0.0
        %3552 = vmatprep.subr.mxu0 0.0
        %3553 = vmatpush1.msra.mxu0 0.0
        %3554 = vmatprep.subr.mxu0 0.0
        %3555 = vmatpush1.msra.mxu0 0.0
        %3556 = vmatprep.subr.mxu0 0.0
        %3557 = vmatpush1.msra.mxu0 0.0
        %3558 = vmatprep.subr.mxu0 0.0
        %3559 = vmatpush1.msra.mxu0 0.0
        %3560 = vmatprep.subr.mxu0 0.0
        %3561 = vmatpush1.msra.mxu0 0.0
        %3562 = vmatprep.subr.mxu0 0.0
        %3563 = vmatpush1.msra.mxu0 0.0
        %3564 = vmatprep.subr.mxu0 0.0
        %3565 = vmatpush1.msra.mxu0 0.0
        %3566 = vmatprep.subr.mxu0 0.0
        %3567 = vmatpush1.msra.mxu0 0.0
        %3568 = vmatprep.subr.mxu0 0.0
        %3569 = vmatpush1.msra.mxu0 0.0
        %3570 = vmatprep.subr.mxu0 0.0
        %3571 = vmatpush1.msra.mxu0 0.0
        %3572 = vmatprep.subr.mxu0 0.0
        %3573 = vmatpush1.msra.mxu0 0.0
        %3574 = vmatprep.subr.mxu0 0.0
        %3575 = vmatpush1.msra.mxu0 0.0
        %3576 = vmatprep.subr.mxu0 0.0
        %3577 = vmatpush1.msra.mxu0 0.0
        %3578 = vmatprep.subr.mxu0 0.0
        %3579 = vmatpush1.msra.mxu0 0.0
        %3580 = vmatprep.subr.mxu0 0.0
        %3581 = vmatpush1.msra.mxu0 0.0
        %3582 = vmatprep.subr.mxu0 0.0
        %3583 = vmatpush1.msra.mxu0 0.0
        %3584 = vmatprep.subr.mxu0 0.0
        %3585 = vmatpush1.msra.mxu0 0.0
        %3586 = vmatprep.subr.mxu0 0.0
        %3587 = vmatpush1.msra.mxu0 0.0
        %3588 = vmatprep.subr.mxu0 0.0
        %3589 = vmatpush1.msra.mxu0 0.0
        %3590 = vmatprep.mubr.f32.mxu0 0.0
        %3591 = vmatmul.mubr.f32.gmra.mrb[0].mxu0 %v3524
        %v3592 = vpop.f32.mrb[0].mxu0
        %v3593 = vadd.f32 0.0, %v3592
        %v3594 = vpop.f32.mrb[0].mxu0
        %3595 = vdwg.mxu0
        %v3596 = vadd.f32 %v3516, %v3593
        %v3597 = vld [vmem:[%s2543] ss:$2 sm:$0xf]
        %s3598 = scalar_lea.vmem [#allocation8], 112
        %v3599 = vld [vmem:[%s3598] sm:$0xff]
        %v3600 = vld [vmem:[%s3598 + $0x8] sm:$0xff]
        %v3602 = vsel %vm1477, %v3597, 0
        %3604 = vmatprep.subr.mxu0 0.0
        %3605 = vmatpush1.msra.mxu0 %v3599
        %3606 = vmatprep.subr.mxu0 0.0
        %3607 = vmatpush1.msra.mxu0 %v3600
        %3608 = vmatprep.subr.mxu0 0.0
        %3609 = vmatpush1.msra.mxu0 0.0
        %3610 = vmatprep.subr.mxu0 0.0
        %3611 = vmatpush1.msra.mxu0 0.0
        %3612 = vmatprep.subr.mxu0 0.0
        %3613 = vmatpush1.msra.mxu0 0.0
        %3614 = vmatprep.subr.mxu0 0.0
        %3615 = vmatpush1.msra.mxu0 0.0
        %3616 = vmatprep.subr.mxu0 0.0
        %3617 = vmatpush1.msra.mxu0 0.0
        %3618 = vmatprep.subr.mxu0 0.0
        %3619 = vmatpush1.msra.mxu0 0.0
        %3620 = vmatprep.subr.mxu0 0.0
        %3621 = vmatpush1.msra.mxu0 0.0
        %3622 = vmatprep.subr.mxu0 0.0
        %3623 = vmatpush1.msra.mxu0 0.0
        %3624 = vmatprep.subr.mxu0 0.0
        %3625 = vmatpush1.msra.mxu0 0.0
        %3626 = vmatprep.subr.mxu0 0.0
        %3627 = vmatpush1.msra.mxu0 0.0
        %3628 = vmatprep.subr.mxu0 0.0
        %3629 = vmatpush1.msra.mxu0 0.0
        %3630 = vmatprep.subr.mxu0 0.0
        %3631 = vmatpush1.msra.mxu0 0.0
        %3632 = vmatprep.subr.mxu0 0.0
        %3633 = vmatpush1.msra.mxu0 0.0
        %3634 = vmatprep.subr.mxu0 0.0
        %3635 = vmatpush1.msra.mxu0 0.0
        %3636 = vmatprep.subr.mxu0 0.0
        %3637 = vmatpush1.msra.mxu0 0.0
        %3638 = vmatprep.subr.mxu0 0.0
        %3639 = vmatpush1.msra.mxu0 0.0
        %3640 = vmatprep.subr.mxu0 0.0
        %3641 = vmatpush1.msra.mxu0 0.0
        %3642 = vmatprep.subr.mxu0 0.0
        %3643 = vmatpush1.msra.mxu0 0.0
        %3644 = vmatprep.subr.mxu0 0.0
        %3645 = vmatpush1.msra.mxu0 0.0
        %3646 = vmatprep.subr.mxu0 0.0
        %3647 = vmatpush1.msra.mxu0 0.0
        %3648 = vmatprep.subr.mxu0 0.0
        %3649 = vmatpush1.msra.mxu0 0.0
        %3650 = vmatprep.subr.mxu0 0.0
        %3651 = vmatpush1.msra.mxu0 0.0
        %3652 = vmatprep.subr.mxu0 0.0
        %3653 = vmatpush1.msra.mxu0 0.0
        %3654 = vmatprep.subr.mxu0 0.0
        %3655 = vmatpush1.msra.mxu0 0.0
        %3656 = vmatprep.subr.mxu0 0.0
        %3657 = vmatpush1.msra.mxu0 0.0
        %3658 = vmatprep.subr.mxu0 0.0
        %3659 = vmatpush1.msra.mxu0 0.0
        %3660 = vmatprep.subr.mxu0 0.0
        %3661 = vmatpush1.msra.mxu0 0.0
        %3662 = vmatprep.subr.mxu0 0.0
        %3663 = vmatpush1.msra.mxu0 0.0
        %3664 = vmatprep.subr.mxu0 0.0
        %3665 = vmatpush1.msra.mxu0 0.0
        %3666 = vmatprep.subr.mxu0 0.0
        %3667 = vmatpush1.msra.mxu0 0.0
        %3668 = vmatprep.mubr.f32.mxu0 0.0
        %3669 = vmatmul.mubr.f32.gmra.mrb[0].mxu0 %v3602
        %v3670 = vpop.f32.mrb[0].mxu0
        %v3671 = vadd.f32 0.0, %v3670
        %v3672 = vpop.f32.mrb[0].mxu0
        %3673 = vdwg.mxu0
        %v3674 = vadd.f32 %v3596, %v3671
        %v3675 = vlaneseq
        %v3676 = vshrl.u32 %v3675, 7
        %v3677 = vsub.s32 0, %v3676
        %v3678 = vrot.slane %v3361, %v3677
        %v3679 = vadd.f32 %v3674, %v3678
        %v3680 = vmax.f32 %v3679, 0.0
        %v3681 = vadd.f32 %v3680, %v2633
        %vm3682 = vcmask 125952
        %3683 = vst.msk [vmem:[#allocation2] sm:$0xf] %vm3682, %v3681
        %v3684 = vld [vmem:[#allocation2] ss:$2 sm:$0x3]
        %v3685 = vld [vmem:[%s1481] ss:$2 sm:$0x3]
        %v3686 = vadd.f32 %v3684, %v3685
        %v3687 = vmul.f32 %v3686, 0.5
        %v3688 = vld [vmem:[%s8 + $0x8] sm:$0x1]
        %3689 = vst.msk [vmem:[#allocation2] sm:$0x1] %vm1486, 0.0
        %3690 = vst.msk [vmem:[#allocation2 + $0x5] sm:$0x1] %vm1486, 0.0
        %3691 = vst.msk [vmem:[#allocation2 + $0x1] sm:$0xf] %vm3682, %v3681
        %v3692 = vld [vmem:[#allocation2] sm:$0xf]
        %s3693 = scalar_lea.vmem [#allocation6], 288
        %v3694 = vld [vmem:[%s3693] sm:$0xff]
        %v3695 = vld [vmem:[%s3693 + $0x8] sm:$0xff]
        %v3696 = vld [vmem:[#allocation2 + $0x1] sm:$0xf]
        %s3697 = scalar_lea.vmem [#allocation6], 304
        %v3698 = vld [vmem:[%s3697] sm:$0xff]
        %v3699 = vld [vmem:[%s3697 + $0x8] sm:$0xff]
        %v3701 = vsel %vm1477, %v3696, 0
        %3703 = vmatprep.subr.mxu0 0.0
        %3704 = vmatpush1.msra.mxu0 %v3698
        %3705 = vmatprep.subr.mxu0 0.0
        %3706 = vmatpush1.msra.mxu0 %v3699
        %3707 = vmatprep.subr.mxu0 0.0
        %3708 = vmatpush1.msra.mxu0 0.0
        %3709 = vmatprep.subr.mxu0 0.0
        %3710 = vmatpush1.msra.mxu0 0.0
        %3711 = vmatprep.subr.mxu0 0.0
        %3712 = vmatpush1.msra.mxu0 0.0
        %3713 = vmatprep.subr.mxu0 0.0
        %3714 = vmatpush1.msra.mxu0 0.0
        %3715 = vmatprep.subr.mxu0 0.0
        %3716 = vmatpush1.msra.mxu0 0.0
        %3717 = vmatprep.subr.mxu0 0.0
        %3718 = vmatpush1.msra.mxu0 0.0
        %3719 = vmatprep.subr.mxu0 0.0
        %3720 = vmatpush1.msra.mxu0 0.0
        %3721 = vmatprep.subr.mxu0 0.0
        %3722 = vmatpush1.msra.mxu0 0.0
        %3723 = vmatprep.subr.mxu0 0.0
        %3724 = vmatpush1.msra.mxu0 0.0
        %3725 = vmatprep.subr.mxu0 0.0
        %3726 = vmatpush1.msra.mxu0 0.0
        %3727 = vmatprep.subr.mxu0 0.0
        %3728 = vmatpush1.msra.mxu0 0.0
        %3729 = vmatprep.subr.mxu0 0.0
        %3730 = vmatpush1.msra.mxu0 0.0
        %3731 = vmatprep.subr.mxu0 0.0
        %3732 = vmatpush1.msra.mxu0 0.0
        %3733 = vmatprep.subr.mxu0 0.0
        %3734 = vmatpush1.msra.mxu0 0.0
        %3735 = vmatprep.subr.mxu0 0.0
        %3736 = vmatpush1.msra.mxu0 0.0
        %3737 = vmatprep.subr.mxu0 0.0
        %3738 = vmatpush1.msra.mxu0 0.0
        %3739 = vmatprep.subr.mxu0 0.0
        %3740 = vmatpush1.msra.mxu0 0.0
        %3741 = vmatprep.subr.mxu0 0.0
        %3742 = vmatpush1.msra.mxu0 0.0
        %3743 = vmatprep.subr.mxu0 0.0
        %3744 = vmatpush1.msra.mxu0 0.0
        %3745 = vmatprep.subr.mxu0 0.0
        %3746 = vmatpush1.msra.mxu0 0.0
        %3747 = vmatprep.subr.mxu0 0.0
        %3748 = vmatpush1.msra.mxu0 0.0
        %3749 = vmatprep.subr.mxu0 0.0
        %3750 = vmatpush1.msra.mxu0 0.0
        %3751 = vmatprep.subr.mxu0 0.0
        %3752 = vmatpush1.msra.mxu0 0.0
        %3753 = vmatprep.subr.mxu0 0.0
        %3754 = vmatpush1.msra.mxu0 0.0
        %3755 = vmatprep.subr.mxu0 0.0
        %3756 = vmatpush1.msra.mxu0 0.0
        %3757 = vmatprep.subr.mxu0 0.0
        %3758 = vmatpush1.msra.mxu0 0.0
        %3759 = vmatprep.subr.mxu0 0.0
        %3760 = vmatpush1.msra.mxu0 0.0
        %3761 = vmatprep.subr.mxu0 0.0
        %3762 = vmatpush1.msra.mxu0 0.0
        %3763 = vmatprep.subr.mxu0 0.0
        %3764 = vmatpush1.msra.mxu0 0.0
        %3765 = vmatprep.subr.mxu0 0.0
        %3766 = vmatpush1.msra.mxu0 0.0
        %3767 = vmatprep.mubr.f32.mxu0 0.0
        %3768 = vmatmul.mubr.f32.gmra.mrb[0].mxu0 %v3701
        %v3769 = vpop.f32.mrb[0].mxu0
        %v3770 = vadd.f32 0.0, %v3769
        %v3771 = vpop.f32.mrb[0].mxu0
        %3772 = vdwg.mxu0
        %v3774 = vsel %vm1477, %v3692, 0
        %3776 = vmatprep.subr.mxu0 0.0
        %3777 = vmatpush1.msra.mxu0 %v3694
        %3778 = vmatprep.subr.mxu0 0.0
        %3779 = vmatpush1.msra.mxu0 %v3695
        %3780 = vmatprep.subr.mxu0 0.0
        %3781 = vmatpush1.msra.mxu0 0.0
        %3782 = vmatprep.subr.mxu0 0.0
        %3783 = vmatpush1.msra.mxu0 0.0
        %3784 = vmatprep.subr.mxu0 0.0
        %3785 = vmatpush1.msra.mxu0 0.0
        %3786 = vmatprep.subr.mxu0 0.0
        %3787 = vmatpush1.msra.mxu0 0.0
        %3788 = vmatprep.subr.mxu0 0.0
        %3789 = vmatpush1.msra.mxu0 0.0
        %3790 = vmatprep.subr.mxu0 0.0
        %3791 = vmatpush1.msra.mxu0 0.0
        %3792 = vmatprep.subr.mxu0 0.0
        %3793 = vmatpush1.msra.mxu0 0.0
        %3794 = vmatprep.subr.mxu0 0.0
        %3795 = vmatpush1.msra.mxu0 0.0
        %3796 = vmatprep.subr.mxu0 0.0
        %3797 = vmatpush1.msra.mxu0 0.0
        %3798 = vmatprep.subr.mxu0 0.0
        %3799 = vmatpush1.msra.mxu0 0.0
        %3800 = vmatprep.subr.mxu0 0.0
        %3801 = vmatpush1.msra.mxu0 0.0
        %3802 = vmatprep.subr.mxu0 0.0
        %3803 = vmatpush1.msra.mxu0 0.0
        %3804 = vmatprep.subr.mxu0 0.0
        %3805 = vmatpush1.msra.mxu0 0.0
        %3806 = vmatprep.subr.mxu0 0.0
        %3807 = vmatpush1.msra.mxu0 0.0
        %3808 = vmatprep.subr.mxu0 0.0
        %3809 = vmatpush1.msra.mxu0 0.0
        %3810 = vmatprep.subr.mxu0 0.0
        %3811 = vmatpush1.msra.mxu0 0.0
        %3812 = vmatprep.subr.mxu0 0.0
        %3813 = vmatpush1.msra.mxu0 0.0
        %3814 = vmatprep.subr.mxu0 0.0
        %3815 = vmatpush1.msra.mxu0 0.0
        %3816 = vmatprep.subr.mxu0 0.0
        %3817 = vmatpush1.msra.mxu0 0.0
        %3818 = vmatprep.subr.mxu0 0.0
        %3819 = vmatpush1.msra.mxu0 0.0
        %3820 = vmatprep.subr.mxu0 0.0
        %3821 = vmatpush1.msra.mxu0 0.0
        %3822 = vmatprep.subr.mxu0 0.0
        %3823 = vmatpush1.msra.mxu0 0.0
        %3824 = vmatprep.subr.mxu0 0.0
        %3825 = vmatpush1.msra.mxu0 0.0
        %3826 = vmatprep.subr.mxu0 0.0
        %3827 = vmatpush1.msra.mxu0 0.0
        %3828 = vmatprep.subr.mxu0 0.0
        %3829 = vmatpush1.msra.mxu0 0.0
        %3830 = vmatprep.subr.mxu0 0.0
        %3831 = vmatpush1.msra.mxu0 0.0
        %3832 = vmatprep.subr.mxu0 0.0
        %3833 = vmatpush1.msra.mxu0 0.0
        %3834 = vmatprep.subr.mxu0 0.0
        %3835 = vmatpush1.msra.mxu0 0.0
        %3836 = vmatprep.subr.mxu0 0.0
        %3837 = vmatpush1.msra.mxu0 0.0
        %3838 = vmatprep.subr.mxu0 0.0
        %3839 = vmatpush1.msra.mxu0 0.0
        %3840 = vmatprep.mubr.f32.mxu0 0.0
        %3841 = vmatmul.mubr.f32.gmra.mrb[0].mxu0 %v3774
        %v3842 = vpop.f32.mrb[0].mxu0
        %v3843 = vadd.f32 %v3770, %v3842
        %v3844 = vpop.f32.mrb[0].mxu0
        %3845 = vdwg.mxu0
        %v3846 = vld [vmem:[#allocation2 + $0x2] sm:$0xf]
        %s3847 = scalar_lea.vmem [#allocation6], 320
        %v3848 = vld [vmem:[%s3847] sm:$0xff]
        %v3849 = vld [vmem:[%s3847 + $0x8] sm:$0xff]
        %v3851 = vsel %vm1477, %v3846, 0
        %3853 = vmatprep.subr.mxu0 0.0
        %3854 = vmatpush1.msra.mxu0 %v3848
        %3855 = vmatprep.subr.mxu0 0.0
        %3856 = vmatpush1.msra.mxu0 %v3849
        %3857 = vmatprep.subr.mxu0 0.0
        %3858 = vmatpush1.msra.mxu0 0.0
        %3859 = vmatprep.subr.mxu0 0.0
        %3860 = vmatpush1.msra.mxu0 0.0
        %3861 = vmatprep.subr.mxu0 0.0
        %3862 = vmatpush1.msra.mxu0 0.0
        %3863 = vmatprep.subr.mxu0 0.0
        %3864 = vmatpush1.msra.mxu0 0.0
        %3865 = vmatprep.subr.mxu0 0.0
        %3866 = vmatpush1.msra.mxu0 0.0
        %3867 = vmatprep.subr.mxu0 0.0
        %3868 = vmatpush1.msra.mxu0 0.0
        %3869 = vmatprep.subr.mxu0 0.0
        %3870 = vmatpush1.msra.mxu0 0.0
        %3871 = vmatprep.subr.mxu0 0.0
        %3872 = vmatpush1.msra.mxu0 0.0
        %3873 = vmatprep.subr.mxu0 0.0
        %3874 = vmatpush1.msra.mxu0 0.0
        %3875 = vmatprep.subr.mxu0 0.0
        %3876 = vmatpush1.msra.mxu0 0.0
        %3877 = vmatprep.subr.mxu0 0.0
        %3878 = vmatpush1.msra.mxu0 0.0
        %3879 = vmatprep.subr.mxu0 0.0
        %3880 = vmatpush1.msra.mxu0 0.0
        %3881 = vmatprep.subr.mxu0 0.0
        %3882 = vmatpush1.msra.mxu0 0.0
        %3883 = vmatprep.subr.mxu0 0.0
        %3884 = vmatpush1.msra.mxu0 0.0
        %3885 = vmatprep.subr.mxu0 0.0
        %3886 = vmatpush1.msra.mxu0 0.0
        %3887 = vmatprep.subr.mxu0 0.0
        %3888 = vmatpush1.msra.mxu0 0.0
        %3889 = vmatprep.subr.mxu0 0.0
        %3890 = vmatpush1.msra.mxu0 0.0
        %3891 = vmatprep.subr.mxu0 0.0
        %3892 = vmatpush1.msra.mxu0 0.0
        %3893 = vmatprep.subr.mxu0 0.0
        %3894 = vmatpush1.msra.mxu0 0.0
        %3895 = vmatprep.subr.mxu0 0.0
        %3896 = vmatpush1.msra.mxu0 0.0
        %3897 = vmatprep.subr.mxu0 0.0
        %3898 = vmatpush1.msra.mxu0 0.0
        %3899 = vmatprep.subr.mxu0 0.0
        %3900 = vmatpush1.msra.mxu0 0.0
        %3901 = vmatprep.subr.mxu0 0.0
        %3902 = vmatpush1.msra.mxu0 0.0
        %3903 = vmatprep.subr.mxu0 0.0
        %3904 = vmatpush1.msra.mxu0 0.0
        %3905 = vmatprep.subr.mxu0 0.0
        %3906 = vmatpush1.msra.mxu0 0.0
        %3907 = vmatprep.subr.mxu0 0.0
        %3908 = vmatpush1.msra.mxu0 0.0
        %3909 = vmatprep.subr.mxu0 0.0
        %3910 = vmatpush1.msra.mxu0 0.0
        %3911 = vmatprep.subr.mxu0 0.0
        %3912 = vmatpush1.msra.mxu0 0.0
        %3913 = vmatprep.subr.mxu0 0.0
        %3914 = vmatpush1.msra.mxu0 0.0
        %3915 = vmatprep.subr.mxu0 0.0
        %3916 = vmatpush1.msra.mxu0 0.0
        %3917 = vmatprep.mubr.f32.mxu0 0.0
        %3918 = vmatmul.mubr.f32.gmra.mrb[0].mxu0 %v3851
        %v3919 = vpop.f32.mrb[0].mxu0
        %v3920 = vadd.f32 0.0, %v3919
        %v3921 = vpop.f32.mrb[0].mxu0
        %3922 = vdwg.mxu0
        %v3923 = vadd.f32 %v3843, %v3920
        %v3924 = vlaneseq
        %v3925 = vshrl.u32 %v3924, 7
        %v3926 = vsub.s32 0, %v3925
        %v3927 = vrot.slane %v3688, %v3926
        %v3928 = vadd.f32 %v3923, %v3927
        %v3929 = vmax.f32 %v3928, 0.0
        %v3930 = vld [vmem:[%s8 + $0x9] sm:$0x1]
        %3931 = vst.msk [vmem:[#allocation2] sm:$0x1] %vm1486, 0.0
        %3932 = vst.msk [vmem:[#allocation2 + $0x5] sm:$0x1] %vm1486, 0.0
        %3933 = vst.msk [vmem:[#allocation2 + $0x1] sm:$0xf] %vm3682, %v3929
        %v3934 = vld [vmem:[#allocation2] sm:$0xf]
        %s3935 = scalar_lea.vmem [#allocation6], 336
        %v3936 = vld [vmem:[%s3935] sm:$0xff]
        %v3937 = vld [vmem:[%s3935 + $0x8] sm:$0xff]
        %v3938 = vld [vmem:[#allocation2 + $0x1] sm:$0xf]
        %s3939 = scalar_lea.vmem [#allocation6], 352
        %v3940 = vld [vmem:[%s3939] sm:$0xff]
        %v3941 = vld [vmem:[%s3939 + $0x8] sm:$0xff]
        %v3943 = vsel %vm1477, %v3938, 0
        %3945 = vmatprep.subr.mxu0 0.0
        %3946 = vmatpush1.msra.mxu0 %v3940
        %3947 = vmatprep.subr.mxu0 0.0
        %3948 = vmatpush1.msra.mxu0 %v3941
        %3949 = vmatprep.subr.mxu0 0.0
        %3950 = vmatpush1.msra.mxu0 0.0
        %3951 = vmatprep.subr.mxu0 0.0
        %3952 = vmatpush1.msra.mxu0 0.0
        %3953 = vmatprep.subr.mxu0 0.0
        %3954 = vmatpush1.msra.mxu0 0.0
        %3955 = vmatprep.subr.mxu0 0.0
        %3956 = vmatpush1.msra.mxu0 0.0
        %3957 = vmatprep.subr.mxu0 0.0
        %3958 = vmatpush1.msra.mxu0 0.0
        %3959 = vmatprep.subr.mxu0 0.0
        %3960 = vmatpush1.msra.mxu0 0.0
        %3961 = vmatprep.subr.mxu0 0.0
        %3962 = vmatpush1.msra.mxu0 0.0
        %3963 = vmatprep.subr.mxu0 0.0
        %3964 = vmatpush1.msra.mxu0 0.0
        %3965 = vmatprep.subr.mxu0 0.0
        %3966 = vmatpush1.msra.mxu0 0.0
        %3967 = vmatprep.subr.mxu0 0.0
        %3968 = vmatpush1.msra.mxu0 0.0
        %3969 = vmatprep.subr.mxu0 0.0
        %3970 = vmatpush1.msra.mxu0 0.0
        %3971 = vmatprep.subr.mxu0 0.0
        %3972 = vmatpush1.msra.mxu0 0.0
        %3973 = vmatprep.subr.mxu0 0.0
        %3974 = vmatpush1.msra.mxu0 0.0
        %3975 = vmatprep.subr.mxu0 0.0
        %3976 = vmatpush1.msra.mxu0 0.0
        %3977 = vmatprep.subr.mxu0 0.0
        %3978 = vmatpush1.msra.mxu0 0.0
        %3979 = vmatprep.subr.mxu0 0.0
        %3980 = vmatpush1.msra.mxu0 0.0
        %3981 = vmatprep.subr.mxu0 0.0
        %3982 = vmatpush1.msra.mxu0 0.0
        %3983 = vmatprep.subr.mxu0 0.0
        %3984 = vmatpush1.msra.mxu0 0.0
        %3985 = vmatprep.subr.mxu0 0.0
        %3986 = vmatpush1.msra.mxu0 0.0
        %3987 = vmatprep.subr.mxu0 0.0
        %3988 = vmatpush1.msra.mxu0 0.0
        %3989 = vmatprep.subr.mxu0 0.0
        %3990 = vmatpush1.msra.mxu0 0.0
        %3991 = vmatprep.subr.mxu0 0.0
        %3992 = vmatpush1.msra.mxu0 0.0
        %3993 = vmatprep.subr.mxu0 0.0
        %3994 = vmatpush1.msra.mxu0 0.0
        %3995 = vmatprep.subr.mxu0 0.0
        %3996 = vmatpush1.msra.mxu0 0.0
        %3997 = vmatprep.subr.mxu0 0.0
        %3998 = vmatpush1.msra.mxu0 0.0
        %3999 = vmatprep.subr.mxu0 0.0
        %4000 = vmatpush1.msra.mxu0 0.0
        %4001 = vmatprep.subr.mxu0 0.0
        %4002 = vmatpush1.msra.mxu0 0.0
        %4003 = vmatprep.subr.mxu0 0.0
        %4004 = vmatpush1.msra.mxu0 0.0
        %4005 = vmatprep.subr.mxu0 0.0
        %4006 = vmatpush1.msra.mxu0 0.0
        %4007 = vmatprep.subr.mxu0 0.0
        %4008 = vmatpush1.msra.mxu0 0.0
        %4009 = vmatprep.mubr.f32.mxu0 0.0
        %4010 = vmatmul.mubr.f32.gmra.mrb[0].mxu0 %v3943
        %v4011 = vpop.f32.mrb[0].mxu0
        %v4012 = vadd.f32 0.0, %v4011
        %v4013 = vpop.f32.mrb[0].mxu0
        %4014 = vdwg.mxu0
        %v4016 = vsel %vm1477, %v3934, 0
        %4018 = vmatprep.subr.mxu0 0.0
        %4019 = vmatpush1.msra.mxu0 %v3936
        %4020 = vmatprep.subr.mxu0 0.0
        %4021 = vmatpush1.msra.mxu0 %v3937
        %4022 = vmatprep.subr.mxu0 0.0
        %4023 = vmatpush1.msra.mxu0 0.0
        %4024 = vmatprep.subr.mxu0 0.0
        %4025 = vmatpush1.msra.mxu0 0.0
        %4026 = vmatprep.subr.mxu0 0.0
        %4027 = vmatpush1.msra.mxu0 0.0
        %4028 = vmatprep.subr.mxu0 0.0
        %4029 = vmatpush1.msra.mxu0 0.0
        %4030 = vmatprep.subr.mxu0 0.0
        %4031 = vmatpush1.msra.mxu0 0.0
        %4032 = vmatprep.subr.mxu0 0.0
        %4033 = vmatpush1.msra.mxu0 0.0
        %4034 = vmatprep.subr.mxu0 0.0
        %4035 = vmatpush1.msra.mxu0 0.0
        %4036 = vmatprep.subr.mxu0 0.0
        %4037 = vmatpush1.msra.mxu0 0.0
        %4038 = vmatprep.subr.mxu0 0.0
        %4039 = vmatpush1.msra.mxu0 0.0
        %4040 = vmatprep.subr.mxu0 0.0
        %4041 = vmatpush1.msra.mxu0 0.0
        %4042 = vmatprep.subr.mxu0 0.0
        %4043 = vmatpush1.msra.mxu0 0.0
        %4044 = vmatprep.subr.mxu0 0.0
        %4045 = vmatpush1.msra.mxu0 0.0
        %4046 = vmatprep.subr.mxu0 0.0
        %4047 = vmatpush1.msra.mxu0 0.0
        %4048 = vmatprep.subr.mxu0 0.0
        %4049 = vmatpush1.msra.mxu0 0.0
        %4050 = vmatprep.subr.mxu0 0.0
        %4051 = vmatpush1.msra.mxu0 0.0
        %4052 = vmatprep.subr.mxu0 0.0
        %4053 = vmatpush1.msra.mxu0 0.0
        %4054 = vmatprep.subr.mxu0 0.0
        %4055 = vmatpush1.msra.mxu0 0.0
        %4056 = vmatprep.subr.mxu0 0.0
        %4057 = vmatpush1.msra.mxu0 0.0
        %4058 = vmatprep.subr.mxu0 0.0
        %4059 = vmatpush1.msra.mxu0 0.0
        %4060 = vmatprep.subr.mxu0 0.0
        %4061 = vmatpush1.msra.mxu0 0.0
        %4062 = vmatprep.subr.mxu0 0.0
        %4063 = vmatpush1.msra.mxu0 0.0
        %4064 = vmatprep.subr.mxu0 0.0
        %4065 = vmatpush1.msra.mxu0 0.0
        %4066 = vmatprep.subr.mxu0 0.0
        %4067 = vmatpush1.msra.mxu0 0.0
        %4068 = vmatprep.subr.mxu0 0.0
        %4069 = vmatpush1.msra.mxu0 0.0
        %4070 = vmatprep.subr.mxu0 0.0
        %4071 = vmatpush1.msra.mxu0 0.0
        %4072 = vmatprep.subr.mxu0 0.0
        %4073 = vmatpush1.msra.mxu0 0.0
        %4074 = vmatprep.subr.mxu0 0.0
        %4075 = vmatpush1.msra.mxu0 0.0
        %4076 = vmatprep.subr.mxu0 0.0
        %4077 = vmatpush1.msra.mxu0 0.0
        %4078 = vmatprep.subr.mxu0 0.0
        %4079 = vmatpush1.msra.mxu0 0.0
        %4080 = vmatprep.subr.mxu0 0.0
        %4081 = vmatpush1.msra.mxu0 0.0
        %4082 = vmatprep.mubr.f32.mxu0 0.0
        %4083 = vmatmul.mubr.f32.gmra.mrb[0].mxu0 %v4016
        %v4084 = vpop.f32.mrb[0].mxu0
        %v4085 = vadd.f32 %v4012, %v4084
        %v4086 = vpop.f32.mrb[0].mxu0
        %4087 = vdwg.mxu0
        %v4088 = vld [vmem:[#allocation2 + $0x2] sm:$0xf]
        %s4089 = scalar_lea.vmem [#allocation6], 368
        %v4090 = vld [vmem:[%s4089] sm:$0xff]
        %v4091 = vld [vmem:[%s4089 + $0x8] sm:$0xff]
        %v4093 = vsel %vm1477, %v4088, 0
        %4095 = vmatprep.subr.mxu0 0.0
        %4096 = vmatpush1.msra.mxu0 %v4090
        %4097 = vmatprep.subr.mxu0 0.0
        %4098 = vmatpush1.msra.mxu0 %v4091
        %4099 = vmatprep.subr.mxu0 0.0
        %4100 = vmatpush1.msra.mxu0 0.0
        %4101 = vmatprep.subr.mxu0 0.0
        %4102 = vmatpush1.msra.mxu0 0.0
        %4103 = vmatprep.subr.mxu0 0.0
        %4104 = vmatpush1.msra.mxu0 0.0
        %4105 = vmatprep.subr.mxu0 0.0
        %4106 = vmatpush1.msra.mxu0 0.0
        %4107 = vmatprep.subr.mxu0 0.0
        %4108 = vmatpush1.msra.mxu0 0.0
        %4109 = vmatprep.subr.mxu0 0.0
        %4110 = vmatpush1.msra.mxu0 0.0
        %4111 = vmatprep.subr.mxu0 0.0
        %4112 = vmatpush1.msra.mxu0 0.0
        %4113 = vmatprep.subr.mxu0 0.0
        %4114 = vmatpush1.msra.mxu0 0.0
        %4115 = vmatprep.subr.mxu0 0.0
        %4116 = vmatpush1.msra.mxu0 0.0
        %4117 = vmatprep.subr.mxu0 0.0
        %4118 = vmatpush1.msra.mxu0 0.0
        %4119 = vmatprep.subr.mxu0 0.0
        %4120 = vmatpush1.msra.mxu0 0.0
        %4121 = vmatprep.subr.mxu0 0.0
        %4122 = vmatpush1.msra.mxu0 0.0
        %4123 = vmatprep.subr.mxu0 0.0
        %4124 = vmatpush1.msra.mxu0 0.0
        %4125 = vmatprep.subr.mxu0 0.0
        %4126 = vmatpush1.msra.mxu0 0.0
        %4127 = vmatprep.subr.mxu0 0.0
        %4128 = vmatpush1.msra.mxu0 0.0
        %4129 = vmatprep.subr.mxu0 0.0
        %4130 = vmatpush1.msra.mxu0 0.0
        %4131 = vmatprep.subr.mxu0 0.0
        %4132 = vmatpush1.msra.mxu0 0.0
        %4133 = vmatprep.subr.mxu0 0.0
        %4134 = vmatpush1.msra.mxu0 0.0
        %4135 = vmatprep.subr.mxu0 0.0
        %4136 = vmatpush1.msra.mxu0 0.0
        %4137 = vmatprep.subr.mxu0 0.0
        %4138 = vmatpush1.msra.mxu0 0.0
        %4139 = vmatprep.subr.mxu0 0.0
        %4140 = vmatpush1.msra.mxu0 0.0
        %4141 = vmatprep.subr.mxu0 0.0
        %4142 = vmatpush1.msra.mxu0 0.0
        %4143 = vmatprep.subr.mxu0 0.0
        %4144 = vmatpush1.msra.mxu0 0.0
        %4145 = vmatprep.subr.mxu0 0.0
        %4146 = vmatpush1.msra.mxu0 0.0
        %4147 = vmatprep.subr.mxu0 0.0
        %4148 = vmatpush1.msra.mxu0 0.0
        %4149 = vmatprep.subr.mxu0 0.0
        %4150 = vmatpush1.msra.mxu0 0.0
        %4151 = vmatprep.subr.mxu0 0.0
        %4152 = vmatpush1.msra.mxu0 0.0
        %4153 = vmatprep.subr.mxu0 0.0
        %4154 = vmatpush1.msra.mxu0 0.0
        %4155 = vmatprep.subr.mxu0 0.0
        %4156 = vmatpush1.msra.mxu0 0.0
        %4157 = vmatprep.subr.mxu0 0.0
        %4158 = vmatpush1.msra.mxu0 0.0
        %4159 = vmatprep.mubr.f32.mxu0 0.0
        %4160 = vmatmul.mubr.f32.gmra.mrb[0].mxu0 %v4093
        %v4161 = vpop.f32.mrb[0].mxu0
        %v4162 = vadd.f32 0.0, %v4161
        %v4163 = vpop.f32.mrb[0].mxu0
        %4164 = vdwg.mxu0
        %v4165 = vadd.f32 %v4085, %v4162
        %v4166 = vlaneseq
        %v4167 = vshrl.u32 %v4166, 7
        %v4168 = vsub.s32 0, %v4167
        %v4169 = vrot.slane %v3930, %v4168
        %v4170 = vadd.f32 %v4165, %v4169
        %v4171 = vmax.f32 %v4170, 0.0
        %v4172 = vadd.f32 %v4171, %v3681
        %v4173 = vld [vmem:[%s8 + $0xa] sm:$0x1]
        %4174 = vst.msk [vmem:[#allocation2] sm:$0x1] %vm1486, 0.0
        %4175 = vst.msk [vmem:[#allocation2 + $0x5] sm:$0x1] %vm1486, 0.0
        %4176 = vst.msk [vmem:[#allocation2 + $0x1] sm:$0xf] %vm3682, %v4172
        %v4177 = vld [vmem:[#allocation2] sm:$0xf]
        %s4178 = scalar_lea.vmem [#allocation6], 384
        %v4179 = vld [vmem:[%s4178] sm:$0xff]
        %v4180 = vld [vmem:[%s4178 + $0x8] sm:$0xff]
        %v4181 = vld [vmem:[#allocation2 + $0x1] sm:$0xf]
        %s4182 = scalar_lea.vmem [#allocation6], 400
        %v4183 = vld [vmem:[%s4182] sm:$0xff]
        %v4184 = vld [vmem:[%s4182 + $0x8] sm:$0xff]
        %v4186 = vsel %vm1477, %v4181, 0
        %4188 = vmatprep.subr.mxu0 0.0
        %4189 = vmatpush1.msra.mxu0 %v4183
        %4190 = vmatprep.subr.mxu0 0.0
        %4191 = vmatpush1.msra.mxu0 %v4184
        %4192 = vmatprep.subr.mxu0 0.0
        %4193 = vmatpush1.msra.mxu0 0.0
        %4194 = vmatprep.subr.mxu0 0.0
        %4195 = vmatpush1.msra.mxu0 0.0
        %4196 = vmatprep.subr.mxu0 0.0
        %4197 = vmatpush1.msra.mxu0 0.0
        %4198 = vmatprep.subr.mxu0 0.0
        %4199 = vmatpush1.msra.mxu0 0.0
        %4200 = vmatprep.subr.mxu0 0.0
        %4201 = vmatpush1.msra.mxu0 0.0
        %4202 = vmatprep.subr.mxu0 0.0
        %4203 = vmatpush1.msra.mxu0 0.0
        %4204 = vmatprep.subr.mxu0 0.0
        %4205 = vmatpush1.msra.mxu0 0.0
        %4206 = vmatprep.subr.mxu0 0.0
        %4207 = vmatpush1.msra.mxu0 0.0
        %4208 = vmatprep.subr.mxu0 0.0
        %4209 = vmatpush1.msra.mxu0 0.0
        %4210 = vmatprep.subr.mxu0 0.0
        %4211 = vmatpush1.msra.mxu0 0.0
        %4212 = vmatprep.subr.mxu0 0.0
        %4213 = vmatpush1.msra.mxu0 0.0
        %4214 = vmatprep.subr.mxu0 0.0
        %4215 = vmatpush1.msra.mxu0 0.0
        %4216 = vmatprep.subr.mxu0 0.0
        %4217 = vmatpush1.msra.mxu0 0.0
        %4218 = vmatprep.subr.mxu0 0.0
        %4219 = vmatpush1.msra.mxu0 0.0
        %4220 = vmatprep.subr.mxu0 0.0
        %4221 = vmatpush1.msra.mxu0 0.0
        %4222 = vmatprep.subr.mxu0 0.0
        %4223 = vmatpush1.msra.mxu0 0.0
        %4224 = vmatprep.subr.mxu0 0.0
        %4225 = vmatpush1.msra.mxu0 0.0
        %4226 = vmatprep.subr.mxu0 0.0
        %4227 = vmatpush1.msra.mxu0 0.0
        %4228 = vmatprep.subr.mxu0 0.0
        %4229 = vmatpush1.msra.mxu0 0.0
        %4230 = vmatprep.subr.mxu0 0.0
        %4231 = vmatpush1.msra.mxu0 0.0
        %4232 = vmatprep.subr.mxu0 0.0
        %4233 = vmatpush1.msra.mxu0 0.0
        %4234 = vmatprep.subr.mxu0 0.0
        %4235 = vmatpush1.msra.mxu0 0.0
        %4236 = vmatprep.subr.mxu0 0.0
        %4237 = vmatpush1.msra.mxu0 0.0
        %4238 = vmatprep.subr.mxu0 0.0
        %4239 = vmatpush1.msra.mxu0 0.0
        %4240 = vmatprep.subr.mxu0 0.0
        %4241 = vmatpush1.msra.mxu0 0.0
        %4242 = vmatprep.subr.mxu0 0.0
        %4243 = vmatpush1.msra.mxu0 0.0
        %4244 = vmatprep.subr.mxu0 0.0
        %4245 = vmatpush1.msra.mxu0 0.0
        %4246 = vmatprep.subr.mxu0 0.0
        %4247 = vmatpush1.msra.mxu0 0.0
        %4248 = vmatprep.subr.mxu0 0.0
        %4249 = vmatpush1.msra.mxu0 0.0
        %4250 = vmatprep.subr.mxu0 0.0
        %4251 = vmatpush1.msra.mxu0 0.0
        %4252 = vmatprep.mubr.f32.mxu0 0.0
        %4253 = vmatmul.mubr.f32.gmra.mrb[0].mxu0 %v4186
        %v4254 = vpop.f32.mrb[0].mxu0
        %v4255 = vadd.f32 0.0, %v4254
        %v4256 = vpop.f32.mrb[0].mxu0
        %4257 = vdwg.mxu0
        %v4259 = vsel %vm1477, %v4177, 0
        %4261 = vmatprep.subr.mxu0 0.0
        %4262 = vmatpush1.msra.mxu0 %v4179
        %4263 = vmatprep.subr.mxu0 0.0
        %4264 = vmatpush1.msra.mxu0 %v4180
        %4265 = vmatprep.subr.mxu0 0.0
        %4266 = vmatpush1.msra.mxu0 0.0
        %4267 = vmatprep.subr.mxu0 0.0
        %4268 = vmatpush1.msra.mxu0 0.0
        %4269 = vmatprep.subr.mxu0 0.0
        %4270 = vmatpush1.msra.mxu0 0.0
        %4271 = vmatprep.subr.mxu0 0.0
        %4272 = vmatpush1.msra.mxu0 0.0
        %4273 = vmatprep.subr.mxu0 0.0
        %4274 = vmatpush1.msra.mxu0 0.0
        %4275 = vmatprep.subr.mxu0 0.0
        %4276 = vmatpush1.msra.mxu0 0.0
        %4277 = vmatprep.subr.mxu0 0.0
        %4278 = vmatpush1.msra.mxu0 0.0
        %4279 = vmatprep.subr.mxu0 0.0
        %4280 = vmatpush1.msra.mxu0 0.0
        %4281 = vmatprep.subr.mxu0 0.0
        %4282 = vmatpush1.msra.mxu0 0.0
        %4283 = vmatprep.subr.mxu0 0.0
        %4284 = vmatpush1.msra.mxu0 0.0
        %4285 = vmatprep.subr.mxu0 0.0
        %4286 = vmatpush1.msra.mxu0 0.0
        %4287 = vmatprep.subr.mxu0 0.0
        %4288 = vmatpush1.msra.mxu0 0.0
        %4289 = vmatprep.subr.mxu0 0.0
        %4290 = vmatpush1.msra.mxu0 0.0
        %4291 = vmatprep.subr.mxu0 0.0
        %4292 = vmatpush1.msra.mxu0 0.0
        %4293 = vmatprep.subr.mxu0 0.0
        %4294 = vmatpush1.msra.mxu0 0.0
        %4295 = vmatprep.subr.mxu0 0.0
        %4296 = vmatpush1.msra.mxu0 0.0
        %4297 = vmatprep.subr.mxu0 0.0
        %4298 = vmatpush1.msra.mxu0 0.0
        %4299 = vmatprep.subr.mxu0 0.0
        %4300 = vmatpush1.msra.mxu0 0.0
        %4301 = vmatprep.subr.mxu0 0.0
        %4302 = vmatpush1.msra.mxu0 0.0
        %4303 = vmatprep.subr.mxu0 0.0
        %4304 = vmatpush1.msra.mxu0 0.0
        %4305 = vmatprep.subr.mxu0 0.0
        %4306 = vmatpush1.msra.mxu0 0.0
        %4307 = vmatprep.subr.mxu0 0.0
        %4308 = vmatpush1.msra.mxu0 0.0
        %4309 = vmatprep.subr.mxu0 0.0
        %4310 = vmatpush1.msra.mxu0 0.0
        %4311 = vmatprep.subr.mxu0 0.0
        %4312 = vmatpush1.msra.mxu0 0.0
        %4313 = vmatprep.subr.mxu0 0.0
        %4314 = vmatpush1.msra.mxu0 0.0
        %4315 = vmatprep.subr.mxu0 0.0
        %4316 = vmatpush1.msra.mxu0 0.0
        %4317 = vmatprep.subr.mxu0 0.0
        %4318 = vmatpush1.msra.mxu0 0.0
        %4319 = vmatprep.subr.mxu0 0.0
        %4320 = vmatpush1.msra.mxu0 0.0
        %4321 = vmatprep.subr.mxu0 0.0
        %4322 = vmatpush1.msra.mxu0 0.0
        %4323 = vmatprep.subr.mxu0 0.0
        %4324 = vmatpush1.msra.mxu0 0.0
        %4325 = vmatprep.mubr.f32.mxu0 0.0
        %4326 = vmatmul.mubr.f32.gmra.mrb[0].mxu0 %v4259
        %v4327 = vpop.f32.mrb[0].mxu0
        %v4328 = vadd.f32 %v4255, %v4327
        %v4329 = vpop.f32.mrb[0].mxu0
        %4330 = vdwg.mxu0
        %v4331 = vld [vmem:[#allocation2 + $0x2] sm:$0xf]
        %s4332 = scalar_lea.vmem [#allocation6], 416
        %v4333 = vld [vmem:[%s4332] sm:$0xff]
        %v4334 = vld [vmem:[%s4332 + $0x8] sm:$0xff]
        %v4336 = vsel %vm1477, %v4331, 0
        %4338 = vmatprep.subr.mxu0 0.0
        %4339 = vmatpush1.msra.mxu0 %v4333
        %4340 = vmatprep.subr.mxu0 0.0
        %4341 = vmatpush1.msra.mxu0 %v4334
        %4342 = vmatprep.subr.mxu0 0.0
        %4343 = vmatpush1.msra.mxu0 0.0
        %4344 = vmatprep.subr.mxu0 0.0
        %4345 = vmatpush1.msra.mxu0 0.0
        %4346 = vmatprep.subr.mxu0 0.0
        %4347 = vmatpush1.msra.mxu0 0.0
        %4348 = vmatprep.subr.mxu0 0.0
        %4349 = vmatpush1.msra.mxu0 0.0
        %4350 = vmatprep.subr.mxu0 0.0
        %4351 = vmatpush1.msra.mxu0 0.0
        %4352 = vmatprep.subr.mxu0 0.0
        %4353 = vmatpush1.msra.mxu0 0.0
        %4354 = vmatprep.subr.mxu0 0.0
        %4355 = vmatpush1.msra.mxu0 0.0
        %4356 = vmatprep.subr.mxu0 0.0
        %4357 = vmatpush1.msra.mxu0 0.0
        %4358 = vmatprep.subr.mxu0 0.0
        %4359 = vmatpush1.msra.mxu0 0.0
        %4360 = vmatprep.subr.mxu0 0.0
        %4361 = vmatpush1.msra.mxu0 0.0
        %4362 = vmatprep.subr.mxu0 0.0
        %4363 = vmatpush1.msra.mxu0 0.0
        %4364 = vmatprep.subr.mxu0 0.0
        %4365 = vmatpush1.msra.mxu0 0.0
        %4366 = vmatprep.subr.mxu0 0.0
        %4367 = vmatpush1.msra.mxu0 0.0
        %4368 = vmatprep.subr.mxu0 0.0
        %4369 = vmatpush1.msra.mxu0 0.0
        %4370 = vmatprep.subr.mxu0 0.0
        %4371 = vmatpush1.msra.mxu0 0.0
        %4372 = vmatprep.subr.mxu0 0.0
        %4373 = vmatpush1.msra.mxu0 0.0
        %4374 = vmatprep.subr.mxu0 0.0
        %4375 = vmatpush1.msra.mxu0 0.0
        %4376 = vmatprep.subr.mxu0 0.0
        %4377 = vmatpush1.msra.mxu0 0.0
        %4378 = vmatprep.subr.mxu0 0.0
        %4379 = vmatpush1.msra.mxu0 0.0
        %4380 = vmatprep.subr.mxu0 0.0
        %4381 = vmatpush1.msra.mxu0 0.0
        %4382 = vmatprep.subr.mxu0 0.0
        %4383 = vmatpush1.msra.mxu0 0.0
        %4384 = vmatprep.subr.mxu0 0.0
        %4385 = vmatpush1.msra.mxu0 0.0
        %4386 = vmatprep.subr.mxu0 0.0
        %4387 = vmatpush1.msra.mxu0 0.0
        %4388 = vmatprep.subr.mxu0 0.0
        %4389 = vmatpush1.msra.mxu0 0.0
        %4390 = vmatprep.subr.mxu0 0.0
        %4391 = vmatpush1.msra.mxu0 0.0
        %4392 = vmatprep.subr.mxu0 0.0
        %4393 = vmatpush1.msra.mxu0 0.0
        %4394 = vmatprep.subr.mxu0 0.0
        %4395 = vmatpush1.msra.mxu0 0.0
        %4396 = vmatprep.subr.mxu0 0.0
        %4397 = vmatpush1.msra.mxu0 0.0
        %4398 = vmatprep.subr.mxu0 0.0
        %4399 = vmatpush1.msra.mxu0 0.0
        %4400 = vmatprep.subr.mxu0 0.0
        %4401 = vmatpush1.msra.mxu0 0.0
        %4402 = vmatprep.mubr.f32.mxu0 0.0
        %4403 = vmatmul.mubr.f32.gmra.mrb[0].mxu0 %v4336
        %v4404 = vpop.f32.mrb[0].mxu0
        %v4405 = vadd.f32 0.0, %v4404
        %v4406 = vpop.f32.mrb[0].mxu0
        %4407 = vdwg.mxu0
        %v4408 = vadd.f32 %v4328, %v4405
        %v4409 = vlaneseq
        %v4410 = vshrl.u32 %v4409, 7
        %v4411 = vsub.s32 0, %v4410
        %v4412 = vrot.slane %v4173, %v4411
        %v4413 = vadd.f32 %v4408, %v4412
        %v4414 = vmax.f32 %v4413, 0.0
        %v4415 = vld [vmem:[%s8 + $0xb] sm:$0x1]
        %4416 = vst.msk [vmem:[#allocation2] sm:$0x1] %vm1486, 0.0
        %4417 = vst.msk [vmem:[#allocation2 + $0x5] sm:$0x1] %vm1486, 0.0
        %4418 = vst.msk [vmem:[#allocation2 + $0x1] sm:$0xf] %vm3682, %v4414
        %v4419 = vld [vmem:[#allocation2] ss:$2 sm:$0x3]
        %s4420 = scalar_lea.vmem [#allocation8], 128
        %v4421 = vld [vmem:[%s4420] sm:$0xff]
        %v4422 = vld [vmem:[%s4420 + $0x8] sm:$0xff]
        %v4423 = vld [vmem:[%s1481] ss:$2 sm:$0x3]
        %s4424 = scalar_lea.vmem [#allocation8], 144
        %v4425 = vld [vmem:[%s4424] sm:$0xff]
        %v4426 = vld [vmem:[%s4424 + $0x8] sm:$0xff]
        %v4428 = vsel %vm1477, %v4423, 0
        %4430 = vmatprep.subr.mxu0 0.0
        %4431 = vmatpush1.msra.mxu0 %v4425
        %4432 = vmatprep.subr.mxu0 0.0
        %4433 = vmatpush1.msra.mxu0 %v4426
        %4434 = vmatprep.subr.mxu0 0.0
        %4435 = vmatpush1.msra.mxu0 0.0
        %4436 = vmatprep.subr.mxu0 0.0
        %4437 = vmatpush1.msra.mxu0 0.0
        %4438 = vmatprep.subr.mxu0 0.0
        %4439 = vmatpush1.msra.mxu0 0.0
        %4440 = vmatprep.subr.mxu0 0.0
        %4441 = vmatpush1.msra.mxu0 0.0
        %4442 = vmatprep.subr.mxu0 0.0
        %4443 = vmatpush1.msra.mxu0 0.0
        %4444 = vmatprep.subr.mxu0 0.0
        %4445 = vmatpush1.msra.mxu0 0.0
        %4446 = vmatprep.subr.mxu0 0.0
        %4447 = vmatpush1.msra.mxu0 0.0
        %4448 = vmatprep.subr.mxu0 0.0
        %4449 = vmatpush1.msra.mxu0 0.0
        %4450 = vmatprep.subr.mxu0 0.0
        %4451 = vmatpush1.msra.mxu0 0.0
        %4452 = vmatprep.subr.mxu0 0.0
        %4453 = vmatpush1.msra.mxu0 0.0
        %4454 = vmatprep.subr.mxu0 0.0
        %4455 = vmatpush1.msra.mxu0 0.0
        %4456 = vmatprep.subr.mxu0 0.0
        %4457 = vmatpush1.msra.mxu0 0.0
        %4458 = vmatprep.subr.mxu0 0.0
        %4459 = vmatpush1.msra.mxu0 0.0
        %4460 = vmatprep.subr.mxu0 0.0
        %4461 = vmatpush1.msra.mxu0 0.0
        %4462 = vmatprep.subr.mxu0 0.0
        %4463 = vmatpush1.msra.mxu0 0.0
        %4464 = vmatprep.subr.mxu0 0.0
        %4465 = vmatpush1.msra.mxu0 0.0
        %4466 = vmatprep.subr.mxu0 0.0
        %4467 = vmatpush1.msra.mxu0 0.0
        %4468 = vmatprep.subr.mxu0 0.0
        %4469 = vmatpush1.msra.mxu0 0.0
        %4470 = vmatprep.subr.mxu0 0.0
        %4471 = vmatpush1.msra.mxu0 0.0
        %4472 = vmatprep.subr.mxu0 0.0
        %4473 = vmatpush1.msra.mxu0 0.0
        %4474 = vmatprep.subr.mxu0 0.0
        %4475 = vmatpush1.msra.mxu0 0.0
        %4476 = vmatprep.subr.mxu0 0.0
        %4477 = vmatpush1.msra.mxu0 0.0
        %4478 = vmatprep.subr.mxu0 0.0
        %4479 = vmatpush1.msra.mxu0 0.0
        %4480 = vmatprep.subr.mxu0 0.0
        %4481 = vmatpush1.msra.mxu0 0.0
        %4482 = vmatprep.subr.mxu0 0.0
        %4483 = vmatpush1.msra.mxu0 0.0
        %4484 = vmatprep.subr.mxu0 0.0
        %4485 = vmatpush1.msra.mxu0 0.0
        %4486 = vmatprep.subr.mxu0 0.0
        %4487 = vmatpush1.msra.mxu0 0.0
        %4488 = vmatprep.subr.mxu0 0.0
        %4489 = vmatpush1.msra.mxu0 0.0
        %4490 = vmatprep.subr.mxu0 0.0
        %4491 = vmatpush1.msra.mxu0 0.0
        %4492 = vmatprep.subr.mxu0 0.0
        %4493 = vmatpush1.msra.mxu0 0.0
        %4494 = vmatprep.mubr.f32.mxu0 0.0
        %4495 = vmatmul.mubr.f32.gmra.mrb[0].mxu0 %v4428
        %v4496 = vpop.f32.mrb[0].mxu0
        %v4497 = vadd.f32 0.0, %v4496
        %v4498 = vpop.f32.mrb[0].mxu0
        %4499 = vdwg.mxu0
        %v4501 = vsel %vm1477, %v4419, 0
        %4503 = vmatprep.subr.mxu0 0.0
        %4504 = vmatpush1.msra.mxu0 %v4421
        %4505 = vmatprep.subr.mxu0 0.0
        %4506 = vmatpush1.msra.mxu0 %v4422
        %4507 = vmatprep.subr.mxu0 0.0
        %4508 = vmatpush1.msra.mxu0 0.0
        %4509 = vmatprep.subr.mxu0 0.0
        %4510 = vmatpush1.msra.mxu0 0.0
        %4511 = vmatprep.subr.mxu0 0.0
        %4512 = vmatpush1.msra.mxu0 0.0
        %4513 = vmatprep.subr.mxu0 0.0
        %4514 = vmatpush1.msra.mxu0 0.0
        %4515 = vmatprep.subr.mxu0 0.0
        %4516 = vmatpush1.msra.mxu0 0.0
        %4517 = vmatprep.subr.mxu0 0.0
        %4518 = vmatpush1.msra.mxu0 0.0
        %4519 = vmatprep.subr.mxu0 0.0
        %4520 = vmatpush1.msra.mxu0 0.0
        %4521 = vmatprep.subr.mxu0 0.0
        %4522 = vmatpush1.msra.mxu0 0.0
        %4523 = vmatprep.subr.mxu0 0.0
        %4524 = vmatpush1.msra.mxu0 0.0
        %4525 = vmatprep.subr.mxu0 0.0
        %4526 = vmatpush1.msra.mxu0 0.0
        %4527 = vmatprep.subr.mxu0 0.0
        %4528 = vmatpush1.msra.mxu0 0.0
        %4529 = vmatprep.subr.mxu0 0.0
        %4530 = vmatpush1.msra.mxu0 0.0
        %4531 = vmatprep.subr.mxu0 0.0
        %4532 = vmatpush1.msra.mxu0 0.0
        %4533 = vmatprep.subr.mxu0 0.0
        %4534 = vmatpush1.msra.mxu0 0.0
        %4535 = vmatprep.subr.mxu0 0.0
        %4536 = vmatpush1.msra.mxu0 0.0
        %4537 = vmatprep.subr.mxu0 0.0
        %4538 = vmatpush1.msra.mxu0 0.0
        %4539 = vmatprep.subr.mxu0 0.0
        %4540 = vmatpush1.msra.mxu0 0.0
        %4541 = vmatprep.subr.mxu0 0.0
        %4542 = vmatpush1.msra.mxu0 0.0
        %4543 = vmatprep.subr.mxu0 0.0
        %4544 = vmatpush1.msra.mxu0 0.0
        %4545 = vmatprep.subr.mxu0 0.0
        %4546 = vmatpush1.msra.mxu0 0.0
        %4547 = vmatprep.subr.mxu0 0.0
        %4548 = vmatpush1.msra.mxu0 0.0
        %4549 = vmatprep.subr.mxu0 0.0
        %4550 = vmatpush1.msra.mxu0 0.0
        %4551 = vmatprep.subr.mxu0 0.0
        %4552 = vmatpush1.msra.mxu0 0.0
        %4553 = vmatprep.subr.mxu0 0.0
        %4554 = vmatpush1.msra.mxu0 0.0
        %4555 = vmatprep.subr.mxu0 0.0
        %4556 = vmatpush1.msra.mxu0 0.0
        %4557 = vmatprep.subr.mxu0 0.0
        %4558 = vmatpush1.msra.mxu0 0.0
        %4559 = vmatprep.subr.mxu0 0.0
        %4560 = vmatpush1.msra.mxu0 0.0
        %4561 = vmatprep.subr.mxu0 0.0
        %4562 = vmatpush1.msra.mxu0 0.0
        %4563 = vmatprep.subr.mxu0 0.0
        %4564 = vmatpush1.msra.mxu0 0.0
        %4565 = vmatprep.subr.mxu0 0.0
        %4566 = vmatpush1.msra.mxu0 0.0
        %4567 = vmatprep.mubr.f32.mxu0 0.0
        %4568 = vmatmul.mubr.f32.gmra.mrb[0].mxu0 %v4501
        %v4569 = vpop.f32.mrb[0].mxu0
        %v4570 = vadd.f32 %v4497, %v4569
        %v4571 = vpop.f32.mrb[0].mxu0
        %4572 = vdwg.mxu0
        %v4573 = vld [vmem:[%s2464] ss:$2 sm:$0x3]
        %s4574 = scalar_lea.vmem [#allocation8], 160
        %v4575 = vld [vmem:[%s4574] sm:$0xff]
        %v4576 = vld [vmem:[%s4574 + $0x8] sm:$0xff]
        %v4578 = vsel %vm1477, %v4573, 0
        %4580 = vmatprep.subr.mxu0 0.0
        %4581 = vmatpush1.msra.mxu0 %v4575
        %4582 = vmatprep.subr.mxu0 0.0
        %4583 = vmatpush1.msra.mxu0 %v4576
        %4584 = vmatprep.subr.mxu0 0.0
        %4585 = vmatpush1.msra.mxu0 0.0
        %4586 = vmatprep.subr.mxu0 0.0
        %4587 = vmatpush1.msra.mxu0 0.0
        %4588 = vmatprep.subr.mxu0 0.0
        %4589 = vmatpush1.msra.mxu0 0.0
        %4590 = vmatprep.subr.mxu0 0.0
        %4591 = vmatpush1.msra.mxu0 0.0
        %4592 = vmatprep.subr.mxu0 0.0
        %4593 = vmatpush1.msra.mxu0 0.0
        %4594 = vmatprep.subr.mxu0 0.0
        %4595 = vmatpush1.msra.mxu0 0.0
        %4596 = vmatprep.subr.mxu0 0.0
        %4597 = vmatpush1.msra.mxu0 0.0
        %4598 = vmatprep.subr.mxu0 0.0
        %4599 = vmatpush1.msra.mxu0 0.0
        %4600 = vmatprep.subr.mxu0 0.0
        %4601 = vmatpush1.msra.mxu0 0.0
        %4602 = vmatprep.subr.mxu0 0.0
        %4603 = vmatpush1.msra.mxu0 0.0
        %4604 = vmatprep.subr.mxu0 0.0
        %4605 = vmatpush1.msra.mxu0 0.0
        %4606 = vmatprep.subr.mxu0 0.0
        %4607 = vmatpush1.msra.mxu0 0.0
        %4608 = vmatprep.subr.mxu0 0.0
        %4609 = vmatpush1.msra.mxu0 0.0
        %4610 = vmatprep.subr.mxu0 0.0
        %4611 = vmatpush1.msra.mxu0 0.0
        %4612 = vmatprep.subr.mxu0 0.0
        %4613 = vmatpush1.msra.mxu0 0.0
        %4614 = vmatprep.subr.mxu0 0.0
        %4615 = vmatpush1.msra.mxu0 0.0
        %4616 = vmatprep.subr.mxu0 0.0
        %4617 = vmatpush1.msra.mxu0 0.0
        %4618 = vmatprep.subr.mxu0 0.0
        %4619 = vmatpush1.msra.mxu0 0.0
        %4620 = vmatprep.subr.mxu0 0.0
        %4621 = vmatpush1.msra.mxu0 0.0
        %4622 = vmatprep.subr.mxu0 0.0
        %4623 = vmatpush1.msra.mxu0 0.0
        %4624 = vmatprep.subr.mxu0 0.0
        %4625 = vmatpush1.msra.mxu0 0.0
        %4626 = vmatprep.subr.mxu0 0.0
        %4627 = vmatpush1.msra.mxu0 0.0
        %4628 = vmatprep.subr.mxu0 0.0
        %4629 = vmatpush1.msra.mxu0 0.0
        %4630 = vmatprep.subr.mxu0 0.0
        %4631 = vmatpush1.msra.mxu0 0.0
        %4632 = vmatprep.subr.mxu0 0.0
        %4633 = vmatpush1.msra.mxu0 0.0
        %4634 = vmatprep.subr.mxu0 0.0
        %4635 = vmatpush1.msra.mxu0 0.0
        %4636 = vmatprep.subr.mxu0 0.0
        %4637 = vmatpush1.msra.mxu0 0.0
        %4638 = vmatprep.subr.mxu0 0.0
        %4639 = vmatpush1.msra.mxu0 0.0
        %4640 = vmatprep.subr.mxu0 0.0
        %4641 = vmatpush1.msra.mxu0 0.0
        %4642 = vmatprep.subr.mxu0 0.0
        %4643 = vmatpush1.msra.mxu0 0.0
        %4644 = vmatprep.mubr.f32.mxu0 0.0
        %4645 = vmatmul.mubr.f32.gmra.mrb[0].mxu0 %v4578
        %v4646 = vpop.f32.mrb[0].mxu0
        %v4647 = vadd.f32 0.0, %v4646
        %v4648 = vpop.f32.mrb[0].mxu0
        %4649 = vdwg.mxu0
        %v4650 = vadd.f32 %v4570, %v4647
        %v4651 = vld [vmem:[%s2543] ss:$2 sm:$0x3]
        %s4652 = scalar_lea.vmem [#allocation8], 176
        %v4653 = vld [vmem:[%s4652] sm:$0xff]
        %v4654 = vld [vmem:[%s4652 + $0x8] sm:$0xff]
        %v4656 = vsel %vm1477, %v4651, 0
        %4658 = vmatprep.subr.mxu0 0.0
        %4659 = vmatpush1.msra.mxu0 %v4653
        %4660 = vmatprep.subr.mxu0 0.0
        %4661 = vmatpush1.msra.mxu0 %v4654
        %4662 = vmatprep.subr.mxu0 0.0
        %4663 = vmatpush1.msra.mxu0 0.0
        %4664 = vmatprep.subr.mxu0 0.0
        %4665 = vmatpush1.msra.mxu0 0.0
        %4666 = vmatprep.subr.mxu0 0.0
        %4667 = vmatpush1.msra.mxu0 0.0
        %4668 = vmatprep.subr.mxu0 0.0
        %4669 = vmatpush1.msra.mxu0 0.0
        %4670 = vmatprep.subr.mxu0 0.0
        %4671 = vmatpush1.msra.mxu0 0.0
        %4672 = vmatprep.subr.mxu0 0.0
        %4673 = vmatpush1.msra.mxu0 0.0
        %4674 = vmatprep.subr.mxu0 0.0
        %4675 = vmatpush1.msra.mxu0 0.0
        %4676 = vmatprep.subr.mxu0 0.0
        %4677 = vmatpush1.msra.mxu0 0.0
        %4678 = vmatprep.subr.mxu0 0.0
        %4679 = vmatpush1.msra.mxu0 0.0
        %4680 = vmatprep.subr.mxu0 0.0
        %4681 = vmatpush1.msra.mxu0 0.0
        %4682 = vmatprep.subr.mxu0 0.0
        %4683 = vmatpush1.msra.mxu0 0.0
        %4684 = vmatprep.subr.mxu0 0.0
        %4685 = vmatpush1.msra.mxu0 0.0
        %4686 = vmatprep.subr.mxu0 0.0
        %4687 = vmatpush1.msra.mxu0 0.0
        %4688 = vmatprep.subr.mxu0 0.0
        %4689 = vmatpush1.msra.mxu0 0.0
        %4690 = vmatprep.subr.mxu0 0.0
        %4691 = vmatpush1.msra.mxu0 0.0
        %4692 = vmatprep.subr.mxu0 0.0
        %4693 = vmatpush1.msra.mxu0 0.0
        %4694 = vmatprep.subr.mxu0 0.0
        %4695 = vmatpush1.msra.mxu0 0.0
        %4696 = vmatprep.subr.mxu0 0.0
        %4697 = vmatpush1.msra.mxu0 0.0
        %4698 = vmatprep.subr.mxu0 0.0
        %4699 = vmatpush1.msra.mxu0 0.0
        %4700 = vmatprep.subr.mxu0 0.0
        %4701 = vmatpush1.msra.mxu0 0.0
        %4702 = vmatprep.subr.mxu0 0.0
        %4703 = vmatpush1.msra.mxu0 0.0
        %4704 = vmatprep.subr.mxu0 0.0
        %4705 = vmatpush1.msra.mxu0 0.0
        %4706 = vmatprep.subr.mxu0 0.0
        %4707 = vmatpush1.msra.mxu0 0.0
        %4708 = vmatprep.subr.mxu0 0.0
        %4709 = vmatpush1.msra.mxu0 0.0
        %4710 = vmatprep.subr.mxu0 0.0
        %4711 = vmatpush1.msra.mxu0 0.0
        %4712 = vmatprep.subr.mxu0 0.0
        %4713 = vmatpush1.msra.mxu0 0.0
        %4714 = vmatprep.subr.mxu0 0.0
        %4715 = vmatpush1.msra.mxu0 0.0
        %4716 = vmatprep.subr.mxu0 0.0
        %4717 = vmatpush1.msra.mxu0 0.0
        %4718 = vmatprep.subr.mxu0 0.0
        %4719 = vmatpush1.msra.mxu0 0.0
        %4720 = vmatprep.subr.mxu0 0.0
        %4721 = vmatpush1.msra.mxu0 0.0
        %4722 = vmatprep.mubr.f32.mxu0 0.0
        %4723 = vmatmul.mubr.f32.gmra.mrb[0].mxu0 %v4656
        %v4724 = vpop.f32.mrb[0].mxu0
        %v4725 = vadd.f32 0.0, %v4724
        %v4726 = vpop.f32.mrb[0].mxu0
        %4727 = vdwg.mxu0
        %v4728 = vadd.f32 %v4650, %v4725
        %v4729 = vlaneseq
        %v4730 = vshrl.u32 %v4729, 7
        %v4731 = vsub.s32 0, %v4730
        %v4732 = vrot.slane %v4415, %v4731
        %v4733 = vadd.f32 %v4728, %v4732
        %v4734 = vmax.f32 %v4733, 0.0
        %v4735 = vadd.f32 %v4734, %v3687
        %vm4736 = vcmask 123904
        %v4737 = vsel %vm4736, %v4735, 0.0
        %v4738 = vrot.slane %v4737, 4
        %v4739 = vadd.f32 %v4737, %v4738
        %v4740 = vrot.slane %v4739, 2
        %v4741 = vadd.f32 %v4739, %v4740
        %v4742 = vrot.slane %v4741, 1
        %v4743 = vadd.f32 %v4741, %v4742
        %v4744 = vrcp.pop 2.0
        %v4745 = vmul.f32 %v4743, %v4744
        %v4746 = vld [vmem:[%s9] sm:$0xff]
        %v4747 = vld [vmem:[%s9 + $0x8] sm:$0xff]
        %s4748 = scalar_lea.vmem %s9, 16
        %v4749 = vld [vmem:[%s4748] sm:$0xff]
        %v4750 = vld [vmem:[%s4748 + $0x8] sm:$0xff]
        %v4751 = vld [vmem:[%s10] sm:$0x1]
        %v4752 = vld [vmem:[%s10 + $0x1] sm:$0x1]
        %v4754 = vsel %vm1477, %v4745, 0
        %4756 = vmatprep.subr.mxu0 0.0
        %4757 = vmatpush1.msra.mxu0 %v4746
        %4758 = vmatprep.subr.mxu0 0.0
        %4759 = vmatpush1.msra.mxu0 %v4747
        %4760 = vmatprep.subr.mxu0 0.0
        %4761 = vmatpush1.msra.mxu0 0.0
        %4762 = vmatprep.subr.mxu0 0.0
        %4763 = vmatpush1.msra.mxu0 0.0
        %4764 = vmatprep.subr.mxu0 0.0
        %4765 = vmatpush1.msra.mxu0 0.0
        %4766 = vmatprep.subr.mxu0 0.0
        %4767 = vmatpush1.msra.mxu0 0.0
        %4768 = vmatprep.subr.mxu0 0.0
        %4769 = vmatpush1.msra.mxu0 0.0
        %4770 = vmatprep.subr.mxu0 0.0
        %4771 = vmatpush1.msra.mxu0 0.0
        %4772 = vmatprep.subr.mxu0 0.0
        %4773 = vmatpush1.msra.mxu0 0.0
        %4774 = vmatprep.subr.mxu0 0.0
        %4775 = vmatpush1.msra.mxu0 0.0
        %4776 = vmatprep.subr.mxu0 0.0
        %4777 = vmatpush1.msra.mxu0 0.0
        %4778 = vmatprep.subr.mxu0 0.0
        %4779 = vmatpush1.msra.mxu0 0.0
        %4780 = vmatprep.subr.mxu0 0.0
        %4781 = vmatpush1.msra.mxu0 0.0
        %4782 = vmatprep.subr.mxu0 0.0
        %4783 = vmatpush1.msra.mxu0 0.0
        %4784 = vmatprep.subr.mxu0 0.0
        %4785 = vmatpush1.msra.mxu0 0.0
        %4786 = vmatprep.subr.mxu0 0.0
        %4787 = vmatpush1.msra.mxu0 0.0
        %4788 = vmatprep.subr.mxu0 0.0
        %4789 = vmatpush1.msra.mxu0 0.0
        %4790 = vmatprep.subr.mxu0 0.0
        %4791 = vmatpush1.msra.mxu0 0.0
        %4792 = vmatprep.subr.mxu0 0.0
        %4793 = vmatpush1.msra.mxu0 0.0
        %4794 = vmatprep.subr.mxu0 0.0
        %4795 = vmatpush1.msra.mxu0 0.0
        %4796 = vmatprep.subr.mxu0 0.0
        %4797 = vmatpush1.msra.mxu0 0.0
        %4798 = vmatprep.subr.mxu0 0.0
        %4799 = vmatpush1.msra.mxu0 0.0
        %4800 = vmatprep.subr.mxu0 0.0
        %4801 = vmatpush1.msra.mxu0 0.0
        %4802 = vmatprep.subr.mxu0 0.0
        %4803 = vmatpush1.msra.mxu0 0.0
        %4804 = vmatprep.subr.mxu0 0.0
        %4805 = vmatpush1.msra.mxu0 0.0
        %4806 = vmatprep.subr.mxu0 0.0
        %4807 = vmatpush1.msra.mxu0 0.0
        %4808 = vmatprep.subr.mxu0 0.0
        %4809 = vmatpush1.msra.mxu0 0.0
        %4810 = vmatprep.subr.mxu0 0.0
        %4811 = vmatpush1.msra.mxu0 0.0
        %4812 = vmatprep.subr.mxu0 0.0
        %4813 = vmatpush1.msra.mxu0 0.0
        %4814 = vmatprep.subr.mxu0 0.0
        %4815 = vmatpush1.msra.mxu0 0.0
        %4816 = vmatprep.subr.mxu0 0.0
        %4817 = vmatpush1.msra.mxu0 0.0
        %4818 = vmatprep.subr.mxu0 0.0
        %4819 = vmatpush1.msra.mxu0 0.0
        %4820 = vmatprep.mubr.f32.mxu0 0.0
        %4821 = vmatmul.mubr.f32.gmra.mrb[0].mxu0 %v4754
        %v4822 = vpop.f32.mrb[0].mxu0
        %v4823 = vadd.f32 %v4751, %v4822
        %v4824 = vpop.f32.mrb[0].mxu0
        %4825 = vdwg.mxu0
        %v4826 = vmax.f32 %v4823, 0.0
        %v4828 = vsel %vm1477, %v4826, 0
        %4830 = vmatprep.subr.mxu0 0.0
        %4831 = vmatpush1.msra.mxu0 %v4749
        %4832 = vmatprep.subr.mxu0 0.0
        %4833 = vmatpush1.msra.mxu0 %v4750
        %4834 = vmatprep.subr.mxu0 0.0
        %4835 = vmatpush1.msra.mxu0 0.0
        %4836 = vmatprep.subr.mxu0 0.0
        %4837 = vmatpush1.msra.mxu0 0.0
        %4838 = vmatprep.subr.mxu0 0.0
        %4839 = vmatpush1.msra.mxu0 0.0
        %4840 = vmatprep.subr.mxu0 0.0
        %4841 = vmatpush1.msra.mxu0 0.0
        %4842 = vmatprep.subr.mxu0 0.0
        %4843 = vmatpush1.msra.mxu0 0.0
        %4844 = vmatprep.subr.mxu0 0.0
        %4845 = vmatpush1.msra.mxu0 0.0
        %4846 = vmatprep.subr.mxu0 0.0
        %4847 = vmatpush1.msra.mxu0 0.0
        %4848 = vmatprep.subr.mxu0 0.0
        %4849 = vmatpush1.msra.mxu0 0.0
        %4850 = vmatprep.subr.mxu0 0.0
        %4851 = vmatpush1.msra.mxu0 0.0
        %4852 = vmatprep.subr.mxu0 0.0
        %4853 = vmatpush1.msra.mxu0 0.0
        %4854 = vmatprep.subr.mxu0 0.0
        %4855 = vmatpush1.msra.mxu0 0.0
        %4856 = vmatprep.subr.mxu0 0.0
        %4857 = vmatpush1.msra.mxu0 0.0
        %4858 = vmatprep.subr.mxu0 0.0
        %4859 = vmatpush1.msra.mxu0 0.0
        %4860 = vmatprep.subr.mxu0 0.0
        %4861 = vmatpush1.msra.mxu0 0.0
        %4862 = vmatprep.subr.mxu0 0.0
        %4863 = vmatpush1.msra.mxu0 0.0
        %4864 = vmatprep.subr.mxu0 0.0
        %4865 = vmatpush1.msra.mxu0 0.0
        %4866 = vmatprep.subr.mxu0 0.0
        %4867 = vmatpush1.msra.mxu0 0.0
        %4868 = vmatprep.subr.mxu0 0.0
        %4869 = vmatpush1.msra.mxu0 0.0
        %4870 = vmatprep.subr.mxu0 0.0
        %4871 = vmatpush1.msra.mxu0 0.0
        %4872 = vmatprep.subr.mxu0 0.0
        %4873 = vmatpush1.msra.mxu0 0.0
        %4874 = vmatprep.subr.mxu0 0.0
        %4875 = vmatpush1.msra.mxu0 0.0
        %4876 = vmatprep.subr.mxu0 0.0
        %4877 = vmatpush1.msra.mxu0 0.0
        %4878 = vmatprep.subr.mxu0 0.0
        %4879 = vmatpush1.msra.mxu0 0.0
        %4880 = vmatprep.subr.mxu0 0.0
        %4881 = vmatpush1.msra.mxu0 0.0
        %4882 = vmatprep.subr.mxu0 0.0
        %4883 = vmatpush1.msra.mxu0 0.0
        %4884 = vmatprep.subr.mxu0 0.0
        %4885 = vmatpush1.msra.mxu0 0.0
        %4886 = vmatprep.subr.mxu0 0.0
        %4887 = vmatpush1.msra.mxu0 0.0
        %4888 = vmatprep.subr.mxu0 0.0
        %4889 = vmatpush1.msra.mxu0 0.0
        %4890 = vmatprep.subr.mxu0 0.0
        %4891 = vmatpush1.msra.mxu0 0.0
        %4892 = vmatprep.subr.mxu0 0.0
        %4893 = vmatpush1.msra.mxu0 0.0
        %4894 = vmatprep.mubr.f32.mxu0 0.0
        %4895 = vmatmul.mubr.f32.gmra.mrb[0].mxu0 %v4828
        %v4896 = vpop.f32.mrb[0].mxu0
        %v4897 = vadd.f32 %v4752, %v4896
        %v4898 = vpop.f32.mrb[0].mxu0
        %4899 = vdwg.mxu0
        %v4900 = vmax.f32 %v4897, 0.0
        %v4901 = vadd.f32 %v4900, %v4745
        %s4902 = scalar_lea.vmem %s9, 32
        %v4903 = vld [vmem:[%s4902] sm:$0xff]
        %v4904 = vld [vmem:[%s4902 + $0x8] sm:$0xff]
        %s4905 = scalar_lea.vmem %s9, 48
        %v4906 = vld [vmem:[%s4905] sm:$0xff]
        %v4907 = vld [vmem:[%s4905 + $0x8] sm:$0xff]
        %v4908 = vld [vmem:[%s10 + $0x2] sm:$0x1]
        %v4909 = vld [vmem:[%s10 + $0x3] sm:$0x1]
        %v4911 = vsel %vm1477, %v4901, 0
        %4913 = vmatprep.subr.mxu0 0.0
        %4914 = vmatpush1.msra.mxu0 %v4903
        %4915 = vmatprep.subr.mxu0 0.0
        %4916 = vmatpush1.msra.mxu0 %v4904
        %4917 = vmatprep.subr.mxu0 0.0
        %4918 = vmatpush1.msra.mxu0 0.0
        %4919 = vmatprep.subr.mxu0 0.0
        %4920 = vmatpush1.msra.mxu0 0.0
        %4921 = vmatprep.subr.mxu0 0.0
        %4922 = vmatpush1.msra.mxu0 0.0
        %4923 = vmatprep.subr.mxu0 0.0
        %4924 = vmatpush1.msra.mxu0 0.0
        %4925 = vmatprep.subr.mxu0 0.0
        %4926 = vmatpush1.msra.mxu0 0.0
        %4927 = vmatprep.subr.mxu0 0.0
        %4928 = vmatpush1.msra.mxu0 0.0
        %4929 = vmatprep.subr.mxu0 0.0
        %4930 = vmatpush1.msra.mxu0 0.0
        %4931 = vmatprep.subr.mxu0 0.0
        %4932 = vmatpush1.msra.mxu0 0.0
        %4933 = vmatprep.subr.mxu0 0.0
        %4934 = vmatpush1.msra.mxu0 0.0
        %4935 = vmatprep.subr.mxu0 0.0
        %4936 = vmatpush1.msra.mxu0 0.0
        %4937 = vmatprep.subr.mxu0 0.0
        %4938 = vmatpush1.msra.mxu0 0.0
        %4939 = vmatprep.subr.mxu0 0.0
        %4940 = vmatpush1.msra.mxu0 0.0
        %4941 = vmatprep.subr.mxu0 0.0
        %4942 = vmatpush1.msra.mxu0 0.0
        %4943 = vmatprep.subr.mxu0 0.0
        %4944 = vmatpush1.msra.mxu0 0.0
        %4945 = vmatprep.subr.mxu0 0.0
        %4946 = vmatpush1.msra.mxu0 0.0
        %4947 = vmatprep.subr.mxu0 0.0
        %4948 = vmatpush1.msra.mxu0 0.0
        %4949 = vmatprep.subr.mxu0 0.0
        %4950 = vmatpush1.msra.mxu0 0.0
        %4951 = vmatprep.subr.mxu0 0.0
        %4952 = vmatpush1.msra.mxu0 0.0
        %4953 = vmatprep.subr.mxu0 0.0
        %4954 = vmatpush1.msra.mxu0 0.0
        %4955 = vmatprep.subr.mxu0 0.0
        %4956 = vmatpush1.msra.mxu0 0.0
        %4957 = vmatprep.subr.mxu0 0.0
        %4958 = vmatpush1.msra.mxu0 0.0
        %4959 = vmatprep.subr.mxu0 0.0
        %4960 = vmatpush1.msra.mxu0 0.0
        %4961 = vmatprep.subr.mxu0 0.0
        %4962 = vmatpush1.msra.mxu0 0.0
        %4963 = vmatprep.subr.mxu0 0.0
        %4964 = vmatpush1.msra.mxu0 0.0
        %4965 = vmatprep.subr.mxu0 0.0
        %4966 = vmatpush1.msra.mxu0 0.0
        %4967 = vmatprep.subr.mxu0 0.0
        %4968 = vmatpush1.msra.mxu0 0.0
        %4969 = vmatprep.subr.mxu0 0.0
        %4970 = vmatpush1.msra.mxu0 0.0
        %4971 = vmatprep.subr.mxu0 0.0
        %4972 = vmatpush1.msra.mxu0 0.0
        %4973 = vmatprep.subr.mxu0 0.0
        %4974 = vmatpush1.msra.mxu0 0.0
        %4975 = vmatprep.subr.mxu0 0.0
        %4976 = vmatpush1.msra.mxu0 0.0
        %4977 = vmatprep.mubr.f32.mxu0 0.0
        %4978 = vmatmul.mubr.f32.gmra.mrb[0].mxu0 %v4911
        %v4979 = vpop.f32.mrb[0].mxu0
        %v4980 = vadd.f32 %v4908, %v4979
        %v4981 = vpop.f32.mrb[0].mxu0
        %4982 = vdwg.mxu0
        %v4983 = vmax.f32 %v4980, 0.0
        %v4985 = vsel %vm1477, %v4983, 0
        %4987 = vmatprep.subr.mxu0 0.0
        %4988 = vmatpush1.msra.mxu0 %v4906
        %4989 = vmatprep.subr.mxu0 0.0
        %4990 = vmatpush1.msra.mxu0 %v4907
        %4991 = vmatprep.subr.mxu0 0.0
        %4992 = vmatpush1.msra.mxu0 0.0
        %4993 = vmatprep.subr.mxu0 0.0
        %4994 = vmatpush1.msra.mxu0 0.0
        %4995 = vmatprep.subr.mxu0 0.0
        %4996 = vmatpush1.msra.mxu0 0.0
        %4997 = vmatprep.subr.mxu0 0.0
        %4998 = vmatpush1.msra.mxu0 0.0
        %4999 = vmatprep.subr.mxu0 0.0
        %5000 = vmatpush1.msra.mxu0 0.0
        %5001 = vmatprep.subr.mxu0 0.0
        %5002 = vmatpush1.msra.mxu0 0.0
        %5003 = vmatprep.subr.mxu0 0.0
        %5004 = vmatpush1.msra.mxu0 0.0
        %5005 = vmatprep.subr.mxu0 0.0
        %5006 = vmatpush1.msra.mxu0 0.0
        %5007 = vmatprep.subr.mxu0 0.0
        %5008 = vmatpush1.msra.mxu0 0.0
        %5009 = vmatprep.subr.mxu0 0.0
        %5010 = vmatpush1.msra.mxu0 0.0
        %5011 = vmatprep.subr.mxu0 0.0
        %5012 = vmatpush1.msra.mxu0 0.0
        %5013 = vmatprep.subr.mxu0 0.0
        %5014 = vmatpush1.msra.mxu0 0.0
        %5015 = vmatprep.subr.mxu0 0.0
        %5016 = vmatpush1.msra.mxu0 0.0
        %5017 = vmatprep.subr.mxu0 0.0
        %5018 = vmatpush1.msra.mxu0 0.0
        %5019 = vmatprep.subr.mxu0 0.0
        %5020 = vmatpush1.msra.mxu0 0.0
        %5021 = vmatprep.subr.mxu0 0.0
        %5022 = vmatpush1.msra.mxu0 0.0
        %5023 = vmatprep.subr.mxu0 0.0
        %5024 = vmatpush1.msra.mxu0 0.0
        %5025 = vmatprep.subr.mxu0 0.0
        %5026 = vmatpush1.msra.mxu0 0.0
        %5027 = vmatprep.subr.mxu0 0.0
        %5028 = vmatpush1.msra.mxu0 0.0
        %5029 = vmatprep.subr.mxu0 0.0
        %5030 = vmatpush1.msra.mxu0 0.0
        %5031 = vmatprep.subr.mxu0 0.0
        %5032 = vmatpush1.msra.mxu0 0.0
        %5033 = vmatprep.subr.mxu0 0.0
        %5034 = vmatpush1.msra.mxu0 0.0
        %5035 = vmatprep.subr.mxu0 0.0
        %5036 = vmatpush1.msra.mxu0 0.0
        %5037 = vmatprep.subr.mxu0 0.0
        %5038 = vmatpush1.msra.mxu0 0.0
        %5039 = vmatprep.subr.mxu0 0.0
        %5040 = vmatpush1.msra.mxu0 0.0
        %5041 = vmatprep.subr.mxu0 0.0
        %5042 = vmatpush1.msra.mxu0 0.0
        %5043 = vmatprep.subr.mxu0 0.0
        %5044 = vmatpush1.msra.mxu0 0.0
        %5045 = vmatprep.subr.mxu0 0.0
        %5046 = vmatpush1.msra.mxu0 0.0
        %5047 = vmatprep.subr.mxu0 0.0
        %5048 = vmatpush1.msra.mxu0 0.0
        %5049 = vmatprep.subr.mxu0 0.0
        %5050 = vmatpush1.msra.mxu0 0.0
        %5051 = vmatprep.mubr.f32.mxu0 0.0
        %5052 = vmatmul.mubr.f32.gmra.mrb[0].mxu0 %v4985
        %v5053 = vpop.f32.mrb[0].mxu0
        %v5054 = vadd.f32 %v4909, %v5053
        %v5055 = vpop.f32.mrb[0].mxu0
        %5056 = vdwg.mxu0
        %v5057 = vmax.f32 %v5054, 0.0
        %v5058 = vadd.f32 %v5057, %v4901
        %5059 = vst.msk [vmem:[%s422] sm:$0x1] %vm1486, %v5058
        %s5060 = sand.u32 %s271, 1
        %s5061 = scalar_lea.sflag [#allocation5], %s5060
        %s5062 = sand.u32 %s271, 1
        %s5063 = scalar_lea.vmem [#allocation9], %s5062
        // Predicated region
        $region77: #{speaker_encoder_forward.1} parent=63 // pred_check
          %p5064 = pneg %p281
        $region78: #{speaker_encoder_forward.1} parent=63 // pred_check_branch
          %5066 = sbr.rel (%p5064) target = $region80
        $region79: #{speaker_encoder_forward.1} parent=63 // pred_region
          %s5068 = ssub.s32 16, 16
          %5069 = vsyncadd %s5061, %s5068
          %s5070 = smul.addr %s27, 16
          %s5071 = scalar_lea.hbm %s11, %s5070
          %s5073 = sshll.u32 %s5063, 4
          %s5074 = int_to_ptr.vmem [resolvable:$true] %s5073
          %5076 = dma.vmem_to_hbm [thread:$0]  %s5074, 16, %s5071, %s5061
        $region80: #{speaker_encoder_forward.1} parent=63 // pred_fallthru
          _
      $region64: #{speaker_encoder_forward.1} parent=5 // pred_fallthru
        _
      %p5077 = scmp.le.s32.totalorder 2, %s22
      // Predicated region
      $region81: #{speaker_encoder_forward.1} parent=5 // pred_check
        %p5078 = pneg %p5077
      $region82: #{speaker_encoder_forward.1} parent=5 // pred_check_branch
        %5080 = sbr.rel (%p5078) target = $region84
      $region83: #{speaker_encoder_forward.1} parent=5 // pred_region
        %s5081 = ssub.s32 %s22, 2
        // Predicated region
        $region85: #{speaker_encoder_forward.1} parent=83 // pred_check
          %p5082 = pneg %p287
        $region86: #{speaker_encoder_forward.1} parent=83 // pred_check_branch
          %5084 = sbr.rel (%p5082) target = $region88
        $region87: #{speaker_encoder_forward.1} parent=83 // pred_region
          %s5085 = sand.u32 %s272, 1
          %s5086 = scalar_lea.sflag [#allocation5], %s5085
          %s5087 = sand.u32 %s272, 1
          %s5088 = scalar_lea.vmem [#allocation9], %s5087
          %5089 = dma.done %s5086, 16
        $region88: #{speaker_encoder_forward.1} parent=83 // pred_fallthru
          _
      $region84: #{speaker_encoder_forward.1} parent=5 // pred_fallthru
        _
    $region6: #{speaker_encoder_forward.1} parent=1 // loop_footer
      %s26 = sadd.s32 1, %s22
    $region7: #{speaker_encoder_forward.1} parent=1 // loop_footer_branch
      %21 = sbr.rel target = $region3
    $region8: #{speaker_encoder_forward.1} parent=1 // loop_exit
      _
    %5090 = vsyncpa [#allocation4], 1
    %s5091 = scalar_lea.sflag [#allocation4], 1
    %5092 = vsyncpa %s5091, 1
    %5093 = vsyncpa [#allocation7], 1
    %5094 = vsyncpa [#allocation5], 1
    %s5095 = scalar_lea.sflag [#allocation5], 1
    %5096 = vsyncpa %s5095, 1

</llo_original>
